<compile_context>
chip_gen: v5e
topology: v5e:2x2
jax: 0.10.0
libtpu: 0.0.40
codegen_flags: <defaults>
</compile_context>

<pallas_src>
import functools
import math

import jax
import jax.numpy as jnp
from jax.experimental import pallas as pl
from jax.experimental.pallas import tpu as pltpu


# ---------------------------------------------------------------------------
# Fused pair of convs as matmuls: relu(relu(a @ w1 + b1) @ w2 + b2)
# (used for conv1+conv2 and conv3+conv4; single full-K / full-N blocks)
# ---------------------------------------------------------------------------
def _conv_pair_kernel(a_ref, w1_ref, b1_ref, w2_ref, b2_ref, o_ref):
    h = jnp.dot(a_ref[...], w1_ref[...], preferred_element_type=jnp.float32)
    h = jnp.maximum(h + b1_ref[...], 0.0).astype(jnp.bfloat16)   # relu(conv a)
    h = jnp.dot(h, w2_ref[...], preferred_element_type=jnp.float32)
    o_ref[...] = jnp.maximum(h + b2_ref[...], 0.0)               # relu(conv b)


def conv_pair(a, w1, b1, w2, b2, *, m_tiles=1):
    """a: (M, K) bf16; w1: (K, N1) bf16; w2: (N1, N2) bf16; biases f32 (1, N)."""
    M, K = a.shape
    N1 = w1.shape[1]
    N2 = w2.shape[1]
    assert M % m_tiles == 0
    tm = M // m_tiles
    return pl.pallas_call(
        _conv_pair_kernel,
        out_shape=jax.ShapeDtypeStruct((M, N2), jnp.float32),
        grid_spec=pltpu.PrefetchScalarGridSpec(
            num_scalar_prefetch=0,
            grid=(m_tiles,),
            in_specs=[
                pl.BlockSpec((tm, K), lambda i: (i, 0)),
                pl.BlockSpec((K, N1), lambda i: (0, 0)),
                pl.BlockSpec((1, N1), lambda i: (0, 0)),
                pl.BlockSpec((N1, N2), lambda i: (0, 0)),
                pl.BlockSpec((1, N2), lambda i: (0, 0)),
            ],
            out_specs=pl.BlockSpec((tm, N2), lambda i: (i, 0)),
        ),
        compiler_params=pltpu.CompilerParams(
            dimension_semantics=("parallel",)),
    )(a, w1, b1, w2, b2)


# ---------------------------------------------------------------------------
# 3x3 max-pool, stride 2 (PyTorch floor mode), fused stride:
# wrapper packs adjacent W columns into the lane dim (free reshape), kernel
# computes only the strided output positions.
# ---------------------------------------------------------------------------
def _maxpool_3x3_s2_kernel(x_ref, o_ref):
    x = x_ref[...]                                   # (B, H, Wp//2, 2C)
    _, Ho, Wo, C = o_ref.shape
    a = x[:, :, 0:Wo, 0:C]                           # original cols 2j
    b = x[:, :, 0:Wo, C:2 * C]                       # original cols 2j+1
    c = x[:, :, 1:Wo + 1, 0:C]                       # original cols 2j+2
    colmax = jnp.maximum(jnp.maximum(a, b), c)       # (B, H, Wo, C)
    for i in range(Ho):                              # rows 2i, 2i+1, 2i+2
        r = jnp.maximum(
            jnp.maximum(colmax[:, 2 * i:2 * i + 1],
                        colmax[:, 2 * i + 1:2 * i + 2]),
            colmax[:, 2 * i + 2:2 * i + 3])
        o_ref[:, i:i + 1, :, :] = r


def maxpool_3x3_s2(x):
    """x: (B, H, W, C) NHWC, C a multiple of 128."""
    B, H, W, C = x.shape
    Ho, Wo = (H - 3) // 2 + 1, (W - 3) // 2 + 1
    Wp = W + (W % 2)                                 # even W for pair-packing
    if Wp != W:
        x = jnp.pad(x, ((0, 0), (0, 0), (0, Wp - W), (0, 0)))
    xr = x.reshape(B, H, Wp // 2, 2 * C)             # pack column pairs into lanes
    return pl.pallas_call(
        _maxpool_3x3_s2_kernel,
        out_shape=jax.ShapeDtypeStruct((B, Ho, Wo, C), x.dtype),
    )(xr)


# ---------------------------------------------------------------------------
# Fused tail: conv5 (via im2col patches) + conv6 + conv7 (+ReLU each),
# mean over spatial, masked softmax over the 10 real classes.
# ---------------------------------------------------------------------------
def _tail_kernel(p_ref, w5_ref, b5_ref, w6_ref, b6_ref, w7_ref, b7_ref, o_ref,
                 *, num_classes):
    h = jnp.dot(p_ref[...], w5_ref[...], preferred_element_type=jnp.float32)
    h = jnp.maximum(h + b5_ref[...], 0.0).astype(jnp.bfloat16)   # relu(conv5)
    h = jnp.dot(h, w6_ref[...], preferred_element_type=jnp.float32)
    h = jnp.maximum(h + b6_ref[...], 0.0).astype(jnp.bfloat16)   # relu(conv6)
    h = jnp.dot(h, w7_ref[...], preferred_element_type=jnp.float32)
    h = jnp.maximum(h + b7_ref[...], 0.0)                        # relu(conv7): (B*S, Cpad)

    B, cpad = o_ref.shape
    spatial = h.shape[0] // B
    lane = jax.lax.broadcasted_iota(jnp.int32, (1, cpad), 1)
    valid = lane < num_classes
    for b in range(B):
        logits = jnp.mean(h[b * spatial:(b + 1) * spatial, :], axis=0,
                          keepdims=True)                         # mean over H, W
        logits = jnp.where(valid, logits, -1e30)                 # mask padded classes
        logits = logits - jnp.max(logits, axis=1, keepdims=True)
        e = jnp.where(valid, jnp.exp(logits), 0.0)
        o_ref[b:b + 1, :] = e / jnp.sum(e, axis=1, keepdims=True)


def tail_head(patches, p5, p6, p7, *, batch, num_classes):
    w5, b5 = p5
    w6, b6 = p6
    w7, b7 = p7
    return pl.pallas_call(
        functools.partial(_tail_kernel, num_classes=num_classes),
        out_shape=jax.ShapeDtypeStruct((batch, w7.shape[1]), jnp.float32),
    )(patches, w5, b5, w6, b6, w7, b7)


# ---------------------------------------------------------------------------
# im2col glue (wrapper-side; convolution compute itself runs in Pallas)
# ---------------------------------------------------------------------------
def _im2col(x, kh, kw):
    """x: (B, H, W, C) -> ((B*Ho*Wo, kh*kw*C), (B, Ho, Wo))."""
    B, H, W, C = x.shape
    Ho, Wo = H - kh + 1, W - kw + 1
    cols = [x[:, di:di + Ho, dj:dj + Wo, :]
            for di in range(kh) for dj in range(kw)]
    patches = jnp.concatenate(cols, axis=-1).reshape(B * Ho * Wo, kh * kw * C)
    return patches, (B, Ho, Wo)


# ---------------------------------------------------------------------------
# Parameters (deterministic, mimics PyTorch Conv2d default U(-1/sqrt(fan_in),.))
# ---------------------------------------------------------------------------
_LAYER_CFG = {
    "conv1": (96, 3, 5),
    "conv2": (96, 96, 1),
    "conv3": (192, 96, 5),
    "conv4": (192, 192, 1),
    "conv5": (192, 192, 3),
    "conv6": (192, 192, 1),
    "conv7": (10, 192, 1),
}

# (cin_pad, cout_pad, k_pad) per layer: channels padded to lane multiples once.
_PREP_CFG = {
    "conv1": (3,   128, 128),   # K = 5*5*3 = 75 -> pad to 128
    "conv2": (128, 128, None),  # K = 128
    "conv3": (128, 256, None),  # K = 5*5*128 = 3200
    "conv4": (256, 256, None),  # K = 256
    "conv5": (256, 256, None),  # K = 3*3*256 = 2304
    "conv6": (256, 256, None),  # K = 256
    "conv7": (256, 128, None),  # 10 classes padded to 128 lanes
}


def init_params(key):
    params = {}
    for name, (cout, cin, k) in _LAYER_CFG.items():
        key, kw_, kb_ = jax.random.split(key, 3)
        fan_in = cin * k * k
        bound = 1.0 / math.sqrt(fan_in)
        w = jax.random.uniform(kw_, (cout, cin, k, k), jnp.float32, -bound, bound)
        b = jax.random.uniform(kb_, (cout,), jnp.float32, -bound, bound)
        params[name] = (w, b)
    return params


def prepare_params(params):
    """One-time weight prep: transpose to (K, N), zero-pad channels, cast bf16."""
    prep = {}
    for name, (cin_pad, cout_pad, k_pad) in _PREP_CFG.items():
        w, b = params[name]
        cout, cin, kh, kw = w.shape
        wt = jnp.transpose(w, (2, 3, 1, 0))                       # (kh, kw, cin, cout)
        wt = jnp.pad(wt, ((0, 0), (0, 0),
                          (0, cin_pad - cin), (0, cout_pad - cout)))
        wm = wt.reshape(kh * kw * cin_pad, cout_pad)
        if k_pad is not None and k_pad > wm.shape[0]:
            wm = jnp.pad(wm, ((0, k_pad - wm.shape[0]), (0, 0)))
        bm = jnp.pad(b, (0, cout_pad - cout)).reshape(1, cout_pad).astype(jnp.float32)
        prep[name] = (wm.astype(jnp.bfloat16), bm)
    return prep


# ---------------------------------------------------------------------------
# Forward pass (matches NetB.forward)
# ---------------------------------------------------------------------------
def net_b_forward(prep, x_nchw):
    x = jnp.transpose(x_nchw, (0, 2, 3, 1))                       # NCHW -> NHWC

    # relu(conv1) + relu(conv2), one fused kernel (2 M-tiles for megacore)
    p1, (B, H1, W1) = _im2col(x, 5, 5)                            # (1568, 75)
    k1 = prep["conv1"][0].shape[0]
    p1 = jnp.pad(p1, ((0, 0), (0, k1 - p1.shape[1]))).astype(jnp.bfloat16)
    h = conv_pair(p1, *prep["conv1"], *prep["conv2"], m_tiles=2)  # (1568, 128)
    h = h.reshape(B, H1, W1, h.shape[-1])

    h = maxpool_3x3_s2(h)                                         # (2, 13, 13, 128)

    # relu(conv3) + relu(conv4), one fused kernel, single grid point
    p3, (B, H3, W3) = _im2col(h, 5, 5)                            # (162, 3200)
    h = conv_pair(p3.astype(jnp.bfloat16),
                  *prep["conv3"], *prep["conv4"], m_tiles=1)      # (162, 256)
    h = h.reshape(B, H3, W3, h.shape[-1])

    h = maxpool_3x3_s2(h)                                         # (2, 4, 4, 256)

    # relu(conv5)+relu(conv6)+relu(conv7)+mean(H,W)+softmax, one fused kernel
    p5, (B, H5, W5) = _im2col(h, 3, 3)                            # (8, 2304)
    probs = tail_head(p5.astype(jnp.bfloat16),
                      prep["conv5"], prep["conv6"], prep["conv7"],
                      batch=B, num_classes=10)                    # (2, 128)
    return probs[:, :10]


if __name__ == "__main__":
    key = jax.random.PRNGKey(0)
    k_params, k_x = jax.random.split(key)
    params = init_params(k_params)
    prep = prepare_params(params)          # weight prep hoisted out of forward
    x = jax.random.normal(k_x, (2, 3, 32, 32), jnp.float32)       # NCHW input

    fwd = jax.jit(net_b_forward)
    out = jax.block_until_ready(fwd(prep, x))

    assert out.shape == (2, 10), out.shape
    assert bool(jnp.all(jnp.isfinite(out)))
    row_sums = jnp.sum(out, axis=1)
    assert bool(jnp.all(jnp.abs(row_sums - 1.0) < 1e-4)), row_sums
    print("KERNEL_OK")
</pallas_src>

<mosaic_0001>
module attributes {stable_mosaic.version = 11 : i64} {
  func.func @_conv_pair_kernel(%arg0: i32, %arg1: memref<784x128xbf16, #tpu.memory_space<vmem>>, %arg2: memref<128x128xbf16, #tpu.memory_space<vmem>>, %arg3: memref<1x128xf32, #tpu.memory_space<vmem>>, %arg4: memref<128x128xbf16, #tpu.memory_space<vmem>>, %arg5: memref<1x128xf32, #tpu.memory_space<vmem>>, %arg6: memref<784x128xf32, #tpu.memory_space<vmem>>) attributes {dimension_semantics = [#tpu.dimension_semantics<parallel>], iteration_bounds = array<i64: 2>, scalar_prefetch = 0 : i64, scratch_operands = 0 : i64, tpu.core_type = #tpu.core_type<tc>, window_params = [{transform_indices = @transform_0, window_bounds = array<i64: 784, 128>}, {pipeline_mode = #tpu.pipeline_mode<synchronous>, transform_indices = @transform_1, window_bounds = array<i64: 128, 128>}, {pipeline_mode = #tpu.pipeline_mode<synchronous>, transform_indices = @transform_2, window_bounds = array<i64: 1, 128>}, {pipeline_mode = #tpu.pipeline_mode<synchronous>, transform_indices = @transform_3, window_bounds = array<i64: 128, 128>}, {pipeline_mode = #tpu.pipeline_mode<synchronous>, transform_indices = @transform_4, window_bounds = array<i64: 1, 128>}, {transform_indices = @transform_5, window_bounds = array<i64: 784, 128>}]} {
    %c0 = arith.constant 0 : index
    %c0_0 = arith.constant 0 : index
    %0 = vector.load %arg1[%c0, %c0_0] : memref<784x128xbf16, #tpu.memory_space<vmem>>, vector<784x128xbf16>
    %c0_1 = arith.constant 0 : index
    %c0_2 = arith.constant 0 : index
    %1 = vector.load %arg2[%c0_1, %c0_2] : memref<128x128xbf16, #tpu.memory_space<vmem>>, vector<128x128xbf16>
    %cst = arith.constant dense<0.000000e+00> : vector<784x128xf32>
    %2 = tpu.matmul %0, %1, %cst {dimension_numbers = #tpu.dot_dimension_numbers<[1], [0], [0], [1], [0, 0, 1, 1], [], []>} : vector<784x128xbf16>, vector<128x128xbf16>, vector<784x128xf32> -> vector<784x128xf32>
    %c0_3 = arith.constant 0 : index
    %c0_4 = arith.constant 0 : index
    %3 = vector.load %arg3[%c0_3, %c0_4] : memref<1x128xf32, #tpu.memory_space<vmem>>, vector<1x128xf32>
    %4 = vector.broadcast %3 : vector<1x128xf32> to vector<784x128xf32>
    %5 = arith.addf %2, %4 : vector<784x128xf32>
    %cst_5 = arith.constant 0.000000e+00 : f32
    %6 = vector.broadcast %cst_5 : f32 to vector<784x128xf32>
    %7 = arith.maximumf %5, %6 : vector<784x128xf32>
    %8 = arith.truncf %7 : vector<784x128xf32> to vector<784x128xbf16>
    %c0_6 = arith.constant 0 : index
    %c0_7 = arith.constant 0 : index
    %9 = vector.load %arg4[%c0_6, %c0_7] : memref<128x128xbf16, #tpu.memory_space<vmem>>, vector<128x128xbf16>
    %cst_8 = arith.constant dense<0.000000e+00> : vector<784x128xf32>
    %10 = tpu.matmul %8, %9, %cst_8 {dimension_numbers = #tpu.dot_dimension_numbers<[1], [0], [0], [1], [0, 0, 1, 1], [], []>} : vector<784x128xbf16>, vector<128x128xbf16>, vector<784x128xf32> -> vector<784x128xf32>
    %c0_9 = arith.constant 0 : index
    %c0_10 = arith.constant 0 : index
    %11 = vector.load %arg5[%c0_9, %c0_10] : memref<1x128xf32, #tpu.memory_space<vmem>>, vector<1x128xf32>
    %12 = vector.broadcast %11 : vector<1x128xf32> to vector<784x128xf32>
    %13 = arith.addf %10, %12 : vector<784x128xf32>
    %cst_11 = arith.constant 0.000000e+00 : f32
    %14 = vector.broadcast %cst_11 : f32 to vector<784x128xf32>
    %15 = arith.maximumf %13, %14 : vector<784x128xf32>
    %c0_12 = arith.constant 0 : index
    %c0_13 = arith.constant 0 : index
    %16 = vector.load %arg6[%c0_12, %c0_13] : memref<784x128xf32, #tpu.memory_space<vmem>>, vector<784x128xf32>
    tpu.vector_store %arg6[%c0_12, %c0_13], %15 {strides = array<i32>} : memref<784x128xf32, #tpu.memory_space<vmem>>, vector<784x128xf32>,
    return
  }
  func.func @transform_0(%arg0: i32) -> (i32, i32) {
    %c0_i32 = arith.constant 0 : i32
    %c0_i32_0 = arith.constant 0 : i32
    return %arg0, %c0_i32 : i32, i32
  }
  func.func @transform_1(%arg0: i32) -> (i32, i32) {
    %c0_i32 = arith.constant 0 : i32
    %c0_i32_0 = arith.constant 0 : i32
    %c0_i32_1 = arith.constant 0 : i32
    return %c0_i32, %c0_i32_0 : i32, i32
  }
  func.func @transform_2(%arg0: i32) -> (i32, i32) {
    %c0_i32 = arith.constant 0 : i32
    %c0_i32_0 = arith.constant 0 : i32
    %c0_i32_1 = arith.constant 0 : i32
    return %c0_i32, %c0_i32_0 : i32, i32
  }
  func.func @transform_3(%arg0: i32) -> (i32, i32) {
    %c0_i32 = arith.constant 0 : i32
    %c0_i32_0 = arith.constant 0 : i32
    %c0_i32_1 = arith.constant 0 : i32
    return %c0_i32, %c0_i32_0 : i32, i32
  }
  func.func @transform_4(%arg0: i32) -> (i32, i32) {
    %c0_i32 = arith.constant 0 : i32
    %c0_i32_0 = arith.constant 0 : i32
    %c0_i32_1 = arith.constant 0 : i32
    return %c0_i32, %c0_i32_0 : i32, i32
  }
  func.func @transform_5(%arg0: i32) -> (i32, i32) {
    %c0_i32 = arith.constant 0 : i32
    %c0_i32_0 = arith.constant 0 : i32
    return %arg0, %c0_i32 : i32, i32
  }
}

module attributes {stable_mosaic.version = 11 : i64} {
  func.func @_maxpool_3x3_s2_kernel(%arg0: memref<2x28x14x256xf32, #tpu.memory_space<vmem>>, %arg1: memref<2x13x13x128xf32, #tpu.memory_space<vmem>>) attributes {dimension_semantics = [], scalar_prefetch = 0 : i64, scratch_operands = 0 : i64, tpu.core_type = #tpu.core_type<tc>} {
    %c0 = arith.constant 0 : index
    %c0_0 = arith.constant 0 : index
    %c0_1 = arith.constant 0 : index
    %c0_2 = arith.constant 0 : index
    %0 = vector.load %arg0[%c0, %c0_0, %c0_1, %c0_2] : memref<2x28x14x256xf32, #tpu.memory_space<vmem>>, vector<2x28x14x256xf32>
    %1 = vector.extract_strided_slice %0 {offsets = [0, 0, 0, 0], sizes = [2, 28, 13, 128], strides = [1, 1, 1, 1]} : vector<2x28x14x256xf32> to vector<2x28x13x128xf32>
    %2 = vector.extract_strided_slice %0 {offsets = [0, 0, 0, 128], sizes = [2, 28, 13, 128], strides = [1, 1, 1, 1]} : vector<2x28x14x256xf32> to vector<2x28x13x128xf32>
    %3 = vector.extract_strided_slice %0 {offsets = [0, 0, 1, 0], sizes = [2, 28, 13, 128], strides = [1, 1, 1, 1]} : vector<2x28x14x256xf32> to vector<2x28x13x128xf32>
    %4 = arith.maximumf %1, %2 : vector<2x28x13x128xf32>
    %5 = arith.maximumf %4, %3 : vector<2x28x13x128xf32>
    %6 = vector.extract_strided_slice %5 {offsets = [0, 0, 0, 0], sizes = [2, 1, 13, 128], strides = [1, 1, 1, 1]} : vector<2x28x13x128xf32> to vector<2x1x13x128xf32>
    %7 = vector.extract_strided_slice %5 {offsets = [0, 1, 0, 0], sizes = [2, 1, 13, 128], strides = [1, 1, 1, 1]} : vector<2x28x13x128xf32> to vector<2x1x13x128xf32>
    %8 = arith.maximumf %6, %7 : vector<2x1x13x128xf32>
    %9 = vector.extract_strided_slice %5 {offsets = [0, 2, 0, 0], sizes = [2, 1, 13, 128], strides = [1, 1, 1, 1]} : vector<2x28x13x128xf32> to vector<2x1x13x128xf32>
    %10 = arith.maximumf %8, %9 : vector<2x1x13x128xf32>
    %c0_3 = arith.constant 0 : index
    %c0_4 = arith.constant 0 : index
    %c0_5 = arith.constant 0 : index
    %c0_6 = arith.constant 0 : index
    %11 = vector.load %arg1[%c0_3, %c0_4, %c0_5, %c0_6] : memref<2x13x13x128xf32, #tpu.memory_space<vmem>>, vector<2x1x13x128xf32>
    tpu.vector_store %arg1[%c0_3, %c0_4, %c0_5, %c0_6], %10 {strides = array<i32>} : memref<2x13x13x128xf32, #tpu.memory_space<vmem>>, vector<2x1x13x128xf32>,
    %12 = vector.extract_strided_slice %5 {offsets = [0, 2, 0, 0], sizes = [2, 1, 13, 128], strides = [1, 1, 1, 1]} : vector<2x28x13x128xf32> to vector<2x1x13x128xf32>
    %13 = vector.extract_strided_slice %5 {offsets = [0, 3, 0, 0], sizes = [2, 1, 13, 128], strides = [1, 1, 1, 1]} : vector<2x28x13x128xf32> to vector<2x1x13x128xf32>
    %14 = arith.maximumf %12, %13 : vector<2x1x13x128xf32>
    %15 = vector.extract_strided_slice %5 {offsets = [0, 4, 0, 0], sizes = [2, 1, 13, 128], strides = [1, 1, 1, 1]} : vector<2x28x13x128xf32> to vector<2x1x13x128xf32>
    %16 = arith.maximumf %14, %15 : vector<2x1x13x128xf32>
    %c0_7 = arith.constant 0 : index
    %c1 = arith.constant 1 : index
    %c0_8 = arith.constant 0 : index
    %c0_9 = arith.constant 0 : index
    %17 = vector.load %arg1[%c0_7, %c1, %c0_8, %c0_9] : memref<2x13x13x128xf32, #tpu.memory_space<vmem>>, vector<2x1x13x128xf32>
    tpu.vector_store %arg1[%c0_7, %c1, %c0_8, %c0_9], %16 {strides = array<i32>} : memref<2x13x13x128xf32, #tpu.memory_space<vmem>>, vector<2x1x13x128xf32>,
    %18 = vector.extract_strided_slice %5 {offsets = [0, 4, 0, 0], sizes = [2, 1, 13, 128], strides = [1, 1, 1, 1]} : vector<2x28x13x128xf32> to vector<2x1x13x128xf32>
    %19 = vector.extract_strided_slice %5 {offsets = [0, 5, 0, 0], sizes = [2, 1, 13, 128], strides = [1, 1, 1, 1]} : vector<2x28x13x128xf32> to vector<2x1x13x128xf32>
    %20 = arith.maximumf %18, %19 : vector<2x1x13x128xf32>
    %21 = vector.extract_strided_slice %5 {offsets = [0, 6, 0, 0], sizes = [2, 1, 13, 128], strides = [1, 1, 1, 1]} : vector<2x28x13x128xf32> to vector<2x1x13x128xf32>
    %22 = arith.maximumf %20, %21 : vector<2x1x13x128xf32>
    %c0_10 = arith.constant 0 : index
    %c2 = arith.constant 2 : index
    %c0_11 = arith.constant 0 : index
    %c0_12 = arith.constant 0 : index
    %23 = vector.load %arg1[%c0_10, %c2, %c0_11, %c0_12] : memref<2x13x13x128xf32, #tpu.memory_space<vmem>>, vector<2x1x13x128xf32>
    tpu.vector_store %arg1[%c0_10, %c2, %c0_11, %c0_12], %22 {strides = array<i32>} : memref<2x13x13x128xf32, #tpu.memory_space<vmem>>, vector<2x1x13x128xf32>,
    %24 = vector.extract_strided_slice %5 {offsets = [0, 6, 0, 0], sizes = [2, 1, 13, 128], strides = [1, 1, 1, 1]} : vector<2x28x13x128xf32> to vector<2x1x13x128xf32>
    %25 = vector.extract_strided_slice %5 {offsets = [0, 7, 0, 0], sizes = [2, 1, 13, 128], strides = [1, 1, 1, 1]} : vector<2x28x13x128xf32> to vector<2x1x13x128xf32>
    %26 = arith.maximumf %24, %25 : vector<2x1x13x128xf32>
    %27 = vector.extract_strided_slice %5 {offsets = [0, 8, 0, 0], sizes = [2, 1, 13, 128], strides = [1, 1, 1, 1]} : vector<2x28x13x128xf32> to vector<2x1x13x128xf32>
    %28 = arith.maximumf %26, %27 : vector<2x1x13x128xf32>
    %c0_13 = arith.constant 0 : index
    %c3 = arith.constant 3 : index
    %c0_14 = arith.constant 0 : index
    %c0_15 = arith.constant 0 : index
    %29 = vector.load %arg1[%c0_13, %c3, %c0_14, %c0_15] : memref<2x13x13x128xf32, #tpu.memory_space<vmem>>, vector<2x1x13x128xf32>
    tpu.vector_store %arg1[%c0_13, %c3, %c0_14, %c0_15], %28 {strides = array<i32>} : memref<2x13x13x128xf32, #tpu.memory_space<vmem>>, vector<2x1x13x128xf32>,
    %30 = vector.extract_strided_slice %5 {offsets = [0, 8, 0, 0], sizes = [2, 1, 13, 128], strides = [1, 1, 1, 1]} : vector<2x28x13x128xf32> to vector<2x1x13x128xf32>
    %31 = vector.extract_strided_slice %5 {offsets = [0, 9, 0, 0], sizes = [2, 1, 13, 128], strides = [1, 1, 1, 1]} : vector<2x28x13x128xf32> to vector<2x1x13x128xf32>
    %32 = arith.maximumf %30, %31 : vector<2x1x13x128xf32>
    %33 = vector.extract_strided_slice %5 {offsets = [0, 10, 0, 0], sizes = [2, 1, 13, 128], strides = [1, 1, 1, 1]} : vector<2x28x13x128xf32> to vector<2x1x13x128xf32>
    %34 = arith.maximumf %32, %33 : vector<2x1x13x128xf32>
    %c0_16 = arith.constant 0 : index
    %c4 = arith.constant 4 : index
    %c0_17 = arith.constant 0 : index
    %c0_18 = arith.constant 0 : index
    %35 = vector.load %arg1[%c0_16, %c4, %c0_17, %c0_18] : memref<2x13x13x128xf32, #tpu.memory_space<vmem>>, vector<2x1x13x128xf32>
    tpu.vector_store %arg1[%c0_16, %c4, %c0_17, %c0_18], %34 {strides = array<i32>} : memref<2x13x13x128xf32, #tpu.memory_space<vmem>>, vector<2x1x13x128xf32>,
    %36 = vector.extract_strided_slice %5 {offsets = [0, 10, 0, 0], sizes = [2, 1, 13, 128], strides = [1, 1, 1, 1]} : vector<2x28x13x128xf32> to vector<2x1x13x128xf32>
    %37 = vector.extract_strided_slice %5 {offsets = [0, 11, 0, 0], sizes = [2, 1, 13, 128], strides = [1, 1, 1, 1]} : vector<2x28x13x128xf32> to vector<2x1x13x128xf32>
    %38 = arith.maximumf %36, %37 : vector<2x1x13x128xf32>
    %39 = vector.extract_strided_slice %5 {offsets = [0, 12, 0, 0], sizes = [2, 1, 13, 128], strides = [1, 1, 1, 1]} : vector<2x28x13x128xf32> to vector<2x1x13x128xf32>
    %40 = arith.maximumf %38, %39 : vector<2x1x13x128xf32>
    %c0_19 = arith.constant 0 : index
    %c5 = arith.constant 5 : index
    %c0_20 = arith.constant 0 : index
    %c0_21 = arith.constant 0 : index
    %41 = vector.load %arg1[%c0_19, %c5, %c0_20, %c0_21] : memref<2x13x13x128xf32, #tpu.memory_space<vmem>>, vector<2x1x13x128xf32>
    tpu.vector_store %arg1[%c0_19, %c5, %c0_20, %c0_21], %40 {strides = array<i32>} : memref<2x13x13x128xf32, #tpu.memory_space<vmem>>, vector<2x1x13x128xf32>,
    %42 = vector.extract_strided_slice %5 {offsets = [0, 12, 0, 0], sizes = [2, 1, 13, 128], strides = [1, 1, 1, 1]} : vector<2x28x13x128xf32> to vector<2x1x13x128xf32>
    %43 = vector.extract_strided_slice %5 {offsets = [0, 13, 0, 0], sizes = [2, 1, 13, 128], strides = [1, 1, 1, 1]} : vector<2x28x13x128xf32> to vector<2x1x13x128xf32>
    %44 = arith.maximumf %42, %43 : vector<2x1x13x128xf32>
    %45 = vector.extract_strided_slice %5 {offsets = [0, 14, 0, 0], sizes = [2, 1, 13, 128], strides = [1, 1, 1, 1]} : vector<2x28x13x128xf32> to vector<2x1x13x128xf32>
    %46 = arith.maximumf %44, %45 : vector<2x1x13x128xf32>
    %c0_22 = arith.constant 0 : index
    %c6 = arith.constant 6 : index
    %c0_23 = arith.constant 0 : index
    %c0_24 = arith.constant 0 : index
    %47 = vector.load %arg1[%c0_22, %c6, %c0_23, %c0_24] : memref<2x13x13x128xf32, #tpu.memory_space<vmem>>, vector<2x1x13x128xf32>
    tpu.vector_store %arg1[%c0_22, %c6, %c0_23, %c0_24], %46 {strides = array<i32>} : memref<2x13x13x128xf32, #tpu.memory_space<vmem>>, vector<2x1x13x128xf32>,
    %48 = vector.extract_strided_slice %5 {offsets = [0, 14, 0, 0], sizes = [2, 1, 13, 128], strides = [1, 1, 1, 1]} : vector<2x28x13x128xf32> to vector<2x1x13x128xf32>
    %49 = vector.extract_strided_slice %5 {offsets = [0, 15, 0, 0], sizes = [2, 1, 13, 128], strides = [1, 1, 1, 1]} : vector<2x28x13x128xf32> to vector<2x1x13x128xf32>
    %50 = arith.maximumf %48, %49 : vector<2x1x13x128xf32>
    %51 = vector.extract_strided_slice %5 {offsets = [0, 16, 0, 0], sizes = [2, 1, 13, 128], strides = [1, 1, 1, 1]} : vector<2x28x13x128xf32> to vector<2x1x13x128xf32>
    %52 = arith.maximumf %50, %51 : vector<2x1x13x128xf32>
    %c0_25 = arith.constant 0 : index
    %c7 = arith.constant 7 : index
    %c0_26 = arith.constant 0 : index
    %c0_27 = arith.constant 0 : index
    %53 = vector.load %arg1[%c0_25, %c7, %c0_26, %c0_27] : memref<2x13x13x128xf32, #tpu.memory_space<vmem>>, vector<2x1x13x128xf32>
    tpu.vector_store %arg1[%c0_25, %c7, %c0_26, %c0_27], %52 {strides = array<i32>} : memref<2x13x13x128xf32, #tpu.memory_space<vmem>>, vector<2x1x13x128xf32>,
    %54 = vector.extract_strided_slice %5 {offsets = [0, 16, 0, 0], sizes = [2, 1, 13, 128], strides = [1, 1, 1, 1]} : vector<2x28x13x128xf32> to vector<2x1x13x128xf32>
    %55 = vector.extract_strided_slice %5 {offsets = [0, 17, 0, 0], sizes = [2, 1, 13, 128], strides = [1, 1, 1, 1]} : vector<2x28x13x128xf32> to vector<2x1x13x128xf32>
    %56 = arith.maximumf %54, %55 : vector<2x1x13x128xf32>
    %57 = vector.extract_strided_slice %5 {offsets = [0, 18, 0, 0], sizes = [2, 1, 13, 128], strides = [1, 1, 1, 1]} : vector<2x28x13x128xf32> to vector<2x1x13x128xf32>
    %58 = arith.maximumf %56, %57 : vector<2x1x13x128xf32>
    %c0_28 = arith.constant 0 : index
    %c8 = arith.constant 8 : index
    %c0_29 = arith.constant 0 : index
    %c0_30 = arith.constant 0 : index
    %59 = vector.load %arg1[%c0_28, %c8, %c0_29, %c0_30] : memref<2x13x13x128xf32, #tpu.memory_space<vmem>>, vector<2x1x13x128xf32>
    tpu.vector_store %arg1[%c0_28, %c8, %c0_29, %c0_30], %58 {strides = array<i32>} : memref<2x13x13x128xf32, #tpu.memory_space<vmem>>, vector<2x1x13x128xf32>,
    %60 = vector.extract_strided_slice %5 {offsets = [0, 18, 0, 0], sizes = [2, 1, 13, 128], strides = [1, 1, 1, 1]} : vector<2x28x13x128xf32> to vector<2x1x13x128xf32>
    %61 = vector.extract_strided_slice %5 {offsets = [0, 19, 0, 0], sizes = [2, 1, 13, 128], strides = [1, 1, 1, 1]} : vector<2x28x13x128xf32> to vector<2x1x13x128xf32>
    %62 = arith.maximumf %60, %61 : vector<2x1x13x128xf32>
    %63 = vector.extract_strided_slice %5 {offsets = [0, 20, 0, 0], sizes = [2, 1, 13, 128], strides = [1, 1, 1, 1]} : vector<2x28x13x128xf32> to vector<2x1x13x128xf32>
    %64 = arith.maximumf %62, %63 : vector<2x1x13x128xf32>
    %c0_31 = arith.constant 0 : index
    %c9 = arith.constant 9 : index
    %c0_32 = arith.constant 0 : index
    %c0_33 = arith.constant 0 : index
    %65 = vector.load %arg1[%c0_31, %c9, %c0_32, %c0_33] : memref<2x13x13x128xf32, #tpu.memory_space<vmem>>, vector<2x1x13x128xf32>
    tpu.vector_store %arg1[%c0_31, %c9, %c0_32, %c0_33], %64 {strides = array<i32>} : memref<2x13x13x128xf32, #tpu.memory_space<vmem>>, vector<2x1x13x128xf32>,
    %66 = vector.extract_strided_slice %5 {offsets = [0, 20, 0, 0], sizes = [2, 1, 13, 128], strides = [1, 1, 1, 1]} : vector<2x28x13x128xf32> to vector<2x1x13x128xf32>
    %67 = vector.extract_strided_slice %5 {offsets = [0, 21, 0, 0], sizes = [2, 1, 13, 128], strides = [1, 1, 1, 1]} : vector<2x28x13x128xf32> to vector<2x1x13x128xf32>
    %68 = arith.maximumf %66, %67 : vector<2x1x13x128xf32>
    %69 = vector.extract_strided_slice %5 {offsets = [0, 22, 0, 0], sizes = [2, 1, 13, 128], strides = [1, 1, 1, 1]} : vector<2x28x13x128xf32> to vector<2x1x13x128xf32>
    %70 = arith.maximumf %68, %69 : vector<2x1x13x128xf32>
    %c0_34 = arith.constant 0 : index
    %c10 = arith.constant 10 : index
    %c0_35 = arith.constant 0 : index
    %c0_36 = arith.constant 0 : index
    %71 = vector.load %arg1[%c0_34, %c10, %c0_35, %c0_36] : memref<2x13x13x128xf32, #tpu.memory_space<vmem>>, vector<2x1x13x128xf32>
    tpu.vector_store %arg1[%c0_34, %c10, %c0_35, %c0_36], %70 {strides = array<i32>} : memref<2x13x13x128xf32, #tpu.memory_space<vmem>>, vector<2x1x13x128xf32>,
    %72 = vector.extract_strided_slice %5 {offsets = [0, 22, 0, 0], sizes = [2, 1, 13, 128], strides = [1, 1, 1, 1]} : vector<2x28x13x128xf32> to vector<2x1x13x128xf32>
    %73 = vector.extract_strided_slice %5 {offsets = [0, 23, 0, 0], sizes = [2, 1, 13, 128], strides = [1, 1, 1, 1]} : vector<2x28x13x128xf32> to vector<2x1x13x128xf32>
    %74 = arith.maximumf %72, %73 : vector<2x1x13x128xf32>
    %75 = vector.extract_strided_slice %5 {offsets = [0, 24, 0, 0], sizes = [2, 1, 13, 128], strides = [1, 1, 1, 1]} : vector<2x28x13x128xf32> to vector<2x1x13x128xf32>
    %76 = arith.maximumf %74, %75 : vector<2x1x13x128xf32>
    %c0_37 = arith.constant 0 : index
    %c11 = arith.constant 11 : index
    %c0_38 = arith.constant 0 : index
    %c0_39 = arith.constant 0 : index
    %77 = vector.load %arg1[%c0_37, %c11, %c0_38, %c0_39] : memref<2x13x13x128xf32, #tpu.memory_space<vmem>>, vector<2x1x13x128xf32>
    tpu.vector_store %arg1[%c0_37, %c11, %c0_38, %c0_39], %76 {strides = array<i32>} : memref<2x13x13x128xf32, #tpu.memory_space<vmem>>, vector<2x1x13x128xf32>,
    %78 = vector.extract_strided_slice %5 {offsets = [0, 24, 0, 0], sizes = [2, 1, 13, 128], strides = [1, 1, 1, 1]} : vector<2x28x13x128xf32> to vector<2x1x13x128xf32>
    %79 = vector.extract_strided_slice %5 {offsets = [0, 25, 0, 0], sizes = [2, 1, 13, 128], strides = [1, 1, 1, 1]} : vector<2x28x13x128xf32> to vector<2x1x13x128xf32>
    %80 = arith.maximumf %78, %79 : vector<2x1x13x128xf32>
    %81 = vector.extract_strided_slice %5 {offsets = [0, 26, 0, 0], sizes = [2, 1, 13, 128], strides = [1, 1, 1, 1]} : vector<2x28x13x128xf32> to vector<2x1x13x128xf32>
    %82 = arith.maximumf %80, %81 : vector<2x1x13x128xf32>
    %c0_40 = arith.constant 0 : index
    %c12 = arith.constant 12 : index
    %c0_41 = arith.constant 0 : index
    %c0_42 = arith.constant 0 : index
    %83 = vector.load %arg1[%c0_40, %c12, %c0_41, %c0_42] : memref<2x13x13x128xf32, #tpu.memory_space<vmem>>, vector<2x1x13x128xf32>
    tpu.vector_store %arg1[%c0_40, %c12, %c0_41, %c0_42], %82 {strides = array<i32>} : memref<2x13x13x128xf32, #tpu.memory_space<vmem>>, vector<2x1x13x128xf32>,
    return
  }
}

module attributes {stable_mosaic.version = 11 : i64} {
  func.func @_conv_pair_kernel(%arg0: i32, %arg1: memref<162x3200xbf16, #tpu.memory_space<vmem>>, %arg2: memref<3200x256xbf16, #tpu.memory_space<vmem>>, %arg3: memref<1x256xf32, #tpu.memory_space<vmem>>, %arg4: memref<256x256xbf16, #tpu.memory_space<vmem>>, %arg5: memref<1x256xf32, #tpu.memory_space<vmem>>, %arg6: memref<162x256xf32, #tpu.memory_space<vmem>>) attributes {dimension_semantics = [#tpu.dimension_semantics<parallel>], iteration_bounds = array<i64: 1>, scalar_prefetch = 0 : i64, scratch_operands = 0 : i64, tpu.core_type = #tpu.core_type<tc>, window_params = [{transform_indices = @transform_0, window_bounds = array<i64: 162, 3200>}, {pipeline_mode = #tpu.pipeline_mode<synchronous>, transform_indices = @transform_1, window_bounds = array<i64: 3200, 256>}, {pipeline_mode = #tpu.pipeline_mode<synchronous>, transform_indices = @transform_2, window_bounds = array<i64: 1, 256>}, {pipeline_mode = #tpu.pipeline_mode<synchronous>, transform_indices = @transform_3, window_bounds = array<i64: 256, 256>}, {pipeline_mode = #tpu.pipeline_mode<synchronous>, transform_indices = @transform_4, window_bounds = array<i64: 1, 256>}, {transform_indices = @transform_5, window_bounds = array<i64: 162, 256>}]} {
    %c0 = arith.constant 0 : index
    %c0_0 = arith.constant 0 : index
    %0 = vector.load %arg1[%c0, %c0_0] : memref<162x3200xbf16, #tpu.memory_space<vmem>>, vector<162x3200xbf16>
    %c0_1 = arith.constant 0 : index
    %c0_2 = arith.constant 0 : index
    %1 = vector.load %arg2[%c0_1, %c0_2] : memref<3200x256xbf16, #tpu.memory_space<vmem>>, vector<3200x256xbf16>
    %cst = arith.constant dense<0.000000e+00> : vector<162x256xf32>
    %2 = tpu.matmul %0, %1, %cst {dimension_numbers = #tpu.dot_dimension_numbers<[1], [0], [0], [1], [0, 0, 1, 1], [], []>} : vector<162x3200xbf16>, vector<3200x256xbf16>, vector<162x256xf32> -> vector<162x256xf32>
    %c0_3 = arith.constant 0 : index
    %c0_4 = arith.constant 0 : index
    %3 = vector.load %arg3[%c0_3, %c0_4] : memref<1x256xf32, #tpu.memory_space<vmem>>, vector<1x256xf32>
    %4 = vector.broadcast %3 : vector<1x256xf32> to vector<162x256xf32>
    %5 = arith.addf %2, %4 : vector<162x256xf32>
    %cst_5 = arith.constant 0.000000e+00 : f32
    %6 = vector.broadcast %cst_5 : f32 to vector<162x256xf32>
    %7 = arith.maximumf %5, %6 : vector<162x256xf32>
    %8 = arith.truncf %7 : vector<162x256xf32> to vector<162x256xbf16>
    %c0_6 = arith.constant 0 : index
    %c0_7 = arith.constant 0 : index
    %9 = vector.load %arg4[%c0_6, %c0_7] : memref<256x256xbf16, #tpu.memory_space<vmem>>, vector<256x256xbf16>
    %cst_8 = arith.constant dense<0.000000e+00> : vector<162x256xf32>
    %10 = tpu.matmul %8, %9, %cst_8 {dimension_numbers = #tpu.dot_dimension_numbers<[1], [0], [0], [1], [0, 0, 1, 1], [], []>} : vector<162x256xbf16>, vector<256x256xbf16>, vector<162x256xf32> -> vector<162x256xf32>
    %c0_9 = arith.constant 0 : index
    %c0_10 = arith.constant 0 : index
    %11 = vector.load %arg5[%c0_9, %c0_10] : memref<1x256xf32, #tpu.memory_space<vmem>>, vector<1x256xf32>
    %12 = vector.broadcast %11 : vector<1x256xf32> to vector<162x256xf32>
    %13 = arith.addf %10, %12 : vector<162x256xf32>
    %cst_11 = arith.constant 0.000000e+00 : f32
    %14 = vector.broadcast %cst_11 : f32 to vector<162x256xf32>
    %15 = arith.maximumf %13, %14 : vector<162x256xf32>
    %c0_12 = arith.constant 0 : index
    %c0_13 = arith.constant 0 : index
    %16 = vector.load %arg6[%c0_12, %c0_13] : memref<162x256xf32, #tpu.memory_space<vmem>>, vector<162x256xf32>
    tpu.vector_store %arg6[%c0_12, %c0_13], %15 {strides = array<i32>} : memref<162x256xf32, #tpu.memory_space<vmem>>, vector<162x256xf32>,
    return
  }
  func.func @transform_0(%arg0: i32) -> (i32, i32) {
    %c0_i32 = arith.constant 0 : i32
    %c0_i32_0 = arith.constant 0 : i32
    return %arg0, %c0_i32 : i32, i32
  }
  func.func @transform_1(%arg0: i32) -> (i32, i32) {
    %c0_i32 = arith.constant 0 : i32
    %c0_i32_0 = arith.constant 0 : i32
    %c0_i32_1 = arith.constant 0 : i32
    return %c0_i32, %c0_i32_0 : i32, i32
  }
  func.func @transform_2(%arg0: i32) -> (i32, i32) {
    %c0_i32 = arith.constant 0 : i32
    %c0_i32_0 = arith.constant 0 : i32
    %c0_i32_1 = arith.constant 0 : i32
    return %c0_i32, %c0_i32_0 : i32, i32
  }
  func.func @transform_3(%arg0: i32) -> (i32, i32) {
    %c0_i32 = arith.constant 0 : i32
    %c0_i32_0 = arith.constant 0 : i32
    %c0_i32_1 = arith.constant 0 : i32
    return %c0_i32, %c0_i32_0 : i32, i32
  }
  func.func @transform_4(%arg0: i32) -> (i32, i32) {
    %c0_i32 = arith.constant 0 : i32
    %c0_i32_0 = arith.constant 0 : i32
    %c0_i32_1 = arith.constant 0 : i32
    return %c0_i32, %c0_i32_0 : i32, i32
  }
  func.func @transform_5(%arg0: i32) -> (i32, i32) {
    %c0_i32 = arith.constant 0 : i32
    %c0_i32_0 = arith.constant 0 : i32
    return %arg0, %c0_i32 : i32, i32
  }
}

module attributes {stable_mosaic.version = 11 : i64} {
  func.func @_maxpool_3x3_s2_kernel(%arg0: memref<2x9x5x512xf32, #tpu.memory_space<vmem>>, %arg1: memref<2x4x4x256xf32, #tpu.memory_space<vmem>>) attributes {dimension_semantics = [], scalar_prefetch = 0 : i64, scratch_operands = 0 : i64, tpu.core_type = #tpu.core_type<tc>} {
    %c0 = arith.constant 0 : index
    %c0_0 = arith.constant 0 : index
    %c0_1 = arith.constant 0 : index
    %c0_2 = arith.constant 0 : index
    %0 = vector.load %arg0[%c0, %c0_0, %c0_1, %c0_2] : memref<2x9x5x512xf32, #tpu.memory_space<vmem>>, vector<2x9x5x512xf32>
    %1 = vector.extract_strided_slice %0 {offsets = [0, 0, 0, 0], sizes = [2, 9, 4, 256], strides = [1, 1, 1, 1]} : vector<2x9x5x512xf32> to vector<2x9x4x256xf32>
    %2 = vector.extract_strided_slice %0 {offsets = [0, 0, 0, 256], sizes = [2, 9, 4, 256], strides = [1, 1, 1, 1]} : vector<2x9x5x512xf32> to vector<2x9x4x256xf32>
    %3 = vector.extract_strided_slice %0 {offsets = [0, 0, 1, 0], sizes = [2, 9, 4, 256], strides = [1, 1, 1, 1]} : vector<2x9x5x512xf32> to vector<2x9x4x256xf32>
    %4 = arith.maximumf %1, %2 : vector<2x9x4x256xf32>
    %5 = arith.maximumf %4, %3 : vector<2x9x4x256xf32>
    %6 = vector.extract_strided_slice %5 {offsets = [0, 0, 0, 0], sizes = [2, 1, 4, 256], strides = [1, 1, 1, 1]} : vector<2x9x4x256xf32> to vector<2x1x4x256xf32>
    %7 = vector.extract_strided_slice %5 {offsets = [0, 1, 0, 0], sizes = [2, 1, 4, 256], strides = [1, 1, 1, 1]} : vector<2x9x4x256xf32> to vector<2x1x4x256xf32>
    %8 = arith.maximumf %6, %7 : vector<2x1x4x256xf32>
    %9 = vector.extract_strided_slice %5 {offsets = [0, 2, 0, 0], sizes = [2, 1, 4, 256], strides = [1, 1, 1, 1]} : vector<2x9x4x256xf32> to vector<2x1x4x256xf32>
    %10 = arith.maximumf %8, %9 : vector<2x1x4x256xf32>
    %c0_3 = arith.constant 0 : index
    %c0_4 = arith.constant 0 : index
    %c0_5 = arith.constant 0 : index
    %c0_6 = arith.constant 0 : index
    %11 = vector.load %arg1[%c0_3, %c0_4, %c0_5, %c0_6] : memref<2x4x4x256xf32, #tpu.memory_space<vmem>>, vector<2x1x4x256xf32>
    tpu.vector_store %arg1[%c0_3, %c0_4, %c0_5, %c0_6], %10 {strides = array<i32>} : memref<2x4x4x256xf32, #tpu.memory_space<vmem>>, vector<2x1x4x256xf32>,
    %12 = vector.extract_strided_slice %5 {offsets = [0, 2, 0, 0], sizes = [2, 1, 4, 256], strides = [1, 1, 1, 1]} : vector<2x9x4x256xf32> to vector<2x1x4x256xf32>
    %13 = vector.extract_strided_slice %5 {offsets = [0, 3, 0, 0], sizes = [2, 1, 4, 256], strides = [1, 1, 1, 1]} : vector<2x9x4x256xf32> to vector<2x1x4x256xf32>
    %14 = arith.maximumf %12, %13 : vector<2x1x4x256xf32>
    %15 = vector.extract_strided_slice %5 {offsets = [0, 4, 0, 0], sizes = [2, 1, 4, 256], strides = [1, 1, 1, 1]} : vector<2x9x4x256xf32> to vector<2x1x4x256xf32>
    %16 = arith.maximumf %14, %15 : vector<2x1x4x256xf32>
    %c0_7 = arith.constant 0 : index
    %c1 = arith.constant 1 : index
    %c0_8 = arith.constant 0 : index
    %c0_9 = arith.constant 0 : index
    %17 = vector.load %arg1[%c0_7, %c1, %c0_8, %c0_9] : memref<2x4x4x256xf32, #tpu.memory_space<vmem>>, vector<2x1x4x256xf32>
    tpu.vector_store %arg1[%c0_7, %c1, %c0_8, %c0_9], %16 {strides = array<i32>} : memref<2x4x4x256xf32, #tpu.memory_space<vmem>>, vector<2x1x4x256xf32>,
    %18 = vector.extract_strided_slice %5 {offsets = [0, 4, 0, 0], sizes = [2, 1, 4, 256], strides = [1, 1, 1, 1]} : vector<2x9x4x256xf32> to vector<2x1x4x256xf32>
    %19 = vector.extract_strided_slice %5 {offsets = [0, 5, 0, 0], sizes = [2, 1, 4, 256], strides = [1, 1, 1, 1]} : vector<2x9x4x256xf32> to vector<2x1x4x256xf32>
    %20 = arith.maximumf %18, %19 : vector<2x1x4x256xf32>
    %21 = vector.extract_strided_slice %5 {offsets = [0, 6, 0, 0], sizes = [2, 1, 4, 256], strides = [1, 1, 1, 1]} : vector<2x9x4x256xf32> to vector<2x1x4x256xf32>
    %22 = arith.maximumf %20, %21 : vector<2x1x4x256xf32>
    %c0_10 = arith.constant 0 : index
    %c2 = arith.constant 2 : index
    %c0_11 = arith.constant 0 : index
    %c0_12 = arith.constant 0 : index
    %23 = vector.load %arg1[%c0_10, %c2, %c0_11, %c0_12] : memref<2x4x4x256xf32, #tpu.memory_space<vmem>>, vector<2x1x4x256xf32>
    tpu.vector_store %arg1[%c0_10, %c2, %c0_11, %c0_12], %22 {strides = array<i32>} : memref<2x4x4x256xf32, #tpu.memory_space<vmem>>, vector<2x1x4x256xf32>,
    %24 = vector.extract_strided_slice %5 {offsets = [0, 6, 0, 0], sizes = [2, 1, 4, 256], strides = [1, 1, 1, 1]} : vector<2x9x4x256xf32> to vector<2x1x4x256xf32>
    %25 = vector.extract_strided_slice %5 {offsets = [0, 7, 0, 0], sizes = [2, 1, 4, 256], strides = [1, 1, 1, 1]} : vector<2x9x4x256xf32> to vector<2x1x4x256xf32>
    %26 = arith.maximumf %24, %25 : vector<2x1x4x256xf32>
    %27 = vector.extract_strided_slice %5 {offsets = [0, 8, 0, 0], sizes = [2, 1, 4, 256], strides = [1, 1, 1, 1]} : vector<2x9x4x256xf32> to vector<2x1x4x256xf32>
    %28 = arith.maximumf %26, %27 : vector<2x1x4x256xf32>
    %c0_13 = arith.constant 0 : index
    %c3 = arith.constant 3 : index
    %c0_14 = arith.constant 0 : index
    %c0_15 = arith.constant 0 : index
    %29 = vector.load %arg1[%c0_13, %c3, %c0_14, %c0_15] : memref<2x4x4x256xf32, #tpu.memory_space<vmem>>, vector<2x1x4x256xf32>
    tpu.vector_store %arg1[%c0_13, %c3, %c0_14, %c0_15], %28 {strides = array<i32>} : memref<2x4x4x256xf32, #tpu.memory_space<vmem>>, vector<2x1x4x256xf32>,
    return
  }
}

module attributes {stable_mosaic.version = 11 : i64} {
  func.func @_tail_kernel(%arg0: memref<8x2304xbf16, #tpu.memory_space<vmem>>, %arg1: memref<2304x256xbf16, #tpu.memory_space<vmem>>, %arg2: memref<1x256xf32, #tpu.memory_space<vmem>>, %arg3: memref<256x256xbf16, #tpu.memory_space<vmem>>, %arg4: memref<1x256xf32, #tpu.memory_space<vmem>>, %arg5: memref<256x128xbf16, #tpu.memory_space<vmem>>, %arg6: memref<1x128xf32, #tpu.memory_space<vmem>>, %arg7: memref<2x128xf32, #tpu.memory_space<vmem>>) attributes {dimension_semantics = [], scalar_prefetch = 0 : i64, scratch_operands = 0 : i64, tpu.core_type = #tpu.core_type<tc>} {
    %c0 = arith.constant 0 : index
    %c0_0 = arith.constant 0 : index
    %0 = vector.load %arg0[%c0, %c0_0] : memref<8x2304xbf16, #tpu.memory_space<vmem>>, vector<8x2304xbf16>
    %c0_1 = arith.constant 0 : index
    %c0_2 = arith.constant 0 : index
    %1 = vector.load %arg1[%c0_1, %c0_2] : memref<2304x256xbf16, #tpu.memory_space<vmem>>, vector<2304x256xbf16>
    %cst = arith.constant dense<0.000000e+00> : vector<8x256xf32>
    %2 = tpu.matmul %0, %1, %cst {dimension_numbers = #tpu.dot_dimension_numbers<[1], [0], [0], [1], [0, 0, 1, 1], [], []>} : vector<8x2304xbf16>, vector<2304x256xbf16>, vector<8x256xf32> -> vector<8x256xf32>
    %c0_3 = arith.constant 0 : index
    %c0_4 = arith.constant 0 : index
    %3 = vector.load %arg2[%c0_3, %c0_4] : memref<1x256xf32, #tpu.memory_space<vmem>>, vector<1x256xf32>
    %4 = vector.broadcast %3 : vector<1x256xf32> to vector<8x256xf32>
    %5 = arith.addf %2, %4 : vector<8x256xf32>
    %cst_5 = arith.constant 0.000000e+00 : f32
    %6 = vector.broadcast %cst_5 : f32 to vector<8x256xf32>
    %7 = arith.maximumf %5, %6 : vector<8x256xf32>
    %8 = arith.truncf %7 : vector<8x256xf32> to vector<8x256xbf16>
    %c0_6 = arith.constant 0 : index
    %c0_7 = arith.constant 0 : index
    %9 = vector.load %arg3[%c0_6, %c0_7] : memref<256x256xbf16, #tpu.memory_space<vmem>>, vector<256x256xbf16>
    %cst_8 = arith.constant dense<0.000000e+00> : vector<8x256xf32>
    %10 = tpu.matmul %8, %9, %cst_8 {dimension_numbers = #tpu.dot_dimension_numbers<[1], [0], [0], [1], [0, 0, 1, 1], [], []>} : vector<8x256xbf16>, vector<256x256xbf16>, vector<8x256xf32> -> vector<8x256xf32>
    %c0_9 = arith.constant 0 : index
    %c0_10 = arith.constant 0 : index
    %11 = vector.load %arg4[%c0_9, %c0_10] : memref<1x256xf32, #tpu.memory_space<vmem>>, vector<1x256xf32>
    %12 = vector.broadcast %11 : vector<1x256xf32> to vector<8x256xf32>
    %13 = arith.addf %10, %12 : vector<8x256xf32>
    %cst_11 = arith.constant 0.000000e+00 : f32
    %14 = vector.broadcast %cst_11 : f32 to vector<8x256xf32>
    %15 = arith.maximumf %13, %14 : vector<8x256xf32>
    %16 = arith.truncf %15 : vector<8x256xf32> to vector<8x256xbf16>
    %c0_12 = arith.constant 0 : index
    %c0_13 = arith.constant 0 : index
    %17 = vector.load %arg5[%c0_12, %c0_13] : memref<256x128xbf16, #tpu.memory_space<vmem>>, vector<256x128xbf16>
    %cst_14 = arith.constant dense<0.000000e+00> : vector<8x128xf32>
    %18 = tpu.matmul %16, %17, %cst_14 {dimension_numbers = #tpu.dot_dimension_numbers<[1], [0], [0], [1], [0, 0, 1, 1], [], []>} : vector<8x256xbf16>, vector<256x128xbf16>, vector<8x128xf32> -> vector<8x128xf32>
    %c0_15 = arith.constant 0 : index
    %c0_16 = arith.constant 0 : index
    %19 = vector.load %arg6[%c0_15, %c0_16] : memref<1x128xf32, #tpu.memory_space<vmem>>, vector<1x128xf32>
    %20 = vector.broadcast %19 : vector<1x128xf32> to vector<8x128xf32>
    %21 = arith.addf %18, %20 : vector<8x128xf32>
    %cst_17 = arith.constant 0.000000e+00 : f32
    %22 = vector.broadcast %cst_17 : f32 to vector<8x128xf32>
    %23 = arith.maximumf %21, %22 : vector<8x128xf32>
    %24 = tpu.iota {dimensions = array<i32: 1>} : vector<1x128xi32>
    %c10_i32 = arith.constant 10 : i32
    %25 = vector.broadcast %c10_i32 : i32 to vector<1x128xi32>
    %26 = arith.cmpi slt, %24, %25 : vector<1x128xi32>
    %27 = vector.extract_strided_slice %23 {offsets = [0, 0], sizes = [4, 128], strides = [1, 1]} : vector<8x128xf32> to vector<4x128xf32>
    %cst_18 = arith.constant dense<0.000000e+00> : vector<128xf32>
    %28 = vector.multi_reduction <add>, %27, %cst_18 [0] : vector<4x128xf32> to vector<128xf32>
    %29 = vector.shape_cast %28 : vector<128xf32> to vector<1x128xf32>
    %cst_19 = arith.constant 4.000000e+00 : f32
    %30 = vector.broadcast %cst_19 : f32 to vector<1x128xf32>
    %31 = arith.divf %29, %30 : vector<1x128xf32>
    %cst_20 = arith.constant -1.000000e+30 : f32
    %32 = vector.broadcast %cst_20 : f32 to vector<1x128xf32>
    %33 = arith.select %26, %31, %32 : vector<1x128xi1>, vector<1x128xf32>
    %cst_21 = arith.constant dense<0xFF800000> : vector<1xf32>
    %34 = vector.multi_reduction <maximumf>, %33, %cst_21 [1] : vector<1x128xf32> to vector<1xf32>
    %35 = vector.shape_cast %34 : vector<1xf32> to vector<1x1xf32>
    %36 = vector.broadcast %35 : vector<1x1xf32> to vector<1x128xf32>
    %37 = arith.subf %33, %36 : vector<1x128xf32>
    %38 = math.exp %37 : vector<1x128xf32>
    %cst_22 = arith.constant 0.000000e+00 : f32
    %39 = vector.broadcast %cst_22 : f32 to vector<1x128xf32>
    %40 = arith.select %26, %38, %39 : vector<1x128xi1>, vector<1x128xf32>
    %cst_23 = arith.constant dense<0.000000e+00> : vector<1xf32>
    %41 = vector.multi_reduction <add>, %40, %cst_23 [1] : vector<1x128xf32> to vector<1xf32>
    %42 = vector.shape_cast %41 : vector<1xf32> to vector<1x1xf32>
    %43 = vector.broadcast %42 : vector<1x1xf32> to vector<1x128xf32>
    %44 = arith.divf %40, %43 : vector<1x128xf32>
    %c0_24 = arith.constant 0 : index
    %c0_25 = arith.constant 0 : index
    %45 = vector.load %arg7[%c0_24, %c0_25] : memref<2x128xf32, #tpu.memory_space<vmem>>, vector<1x128xf32>
    tpu.vector_store %arg7[%c0_24, %c0_25], %44 {strides = array<i32>} : memref<2x128xf32, #tpu.memory_space<vmem>>, vector<1x128xf32>,
    %46 = vector.extract_strided_slice %23 {offsets = [4, 0], sizes = [4, 128], strides = [1, 1]} : vector<8x128xf32> to vector<4x128xf32>
    %cst_26 = arith.constant dense<0.000000e+00> : vector<128xf32>
    %47 = vector.multi_reduction <add>, %46, %cst_26 [0] : vector<4x128xf32> to vector<128xf32>
    %48 = vector.shape_cast %47 : vector<128xf32> to vector<1x128xf32>
    %cst_27 = arith.constant 4.000000e+00 : f32
    %49 = vector.broadcast %cst_27 : f32 to vector<1x128xf32>
    %50 = arith.divf %48, %49 : vector<1x128xf32>
    %cst_28 = arith.constant -1.000000e+30 : f32
    %51 = vector.broadcast %cst_28 : f32 to vector<1x128xf32>
    %52 = arith.select %26, %50, %51 : vector<1x128xi1>, vector<1x128xf32>
    %cst_29 = arith.constant dense<0xFF800000> : vector<1xf32>
    %53 = vector.multi_reduction <maximumf>, %52, %cst_29 [1] : vector<1x128xf32> to vector<1xf32>
    %54 = vector.shape_cast %53 : vector<1xf32> to vector<1x1xf32>
    %55 = vector.broadcast %54 : vector<1x1xf32> to vector<1x128xf32>
    %56 = arith.subf %52, %55 : vector<1x128xf32>
    %57 = math.exp %56 : vector<1x128xf32>
    %cst_30 = arith.constant 0.000000e+00 : f32
    %58 = vector.broadcast %cst_30 : f32 to vector<1x128xf32>
    %59 = arith.select %26, %57, %58 : vector<1x128xi1>, vector<1x128xf32>
    %cst_31 = arith.constant dense<0.000000e+00> : vector<1xf32>
    %60 = vector.multi_reduction <add>, %59, %cst_31 [1] : vector<1x128xf32> to vector<1xf32>
    %61 = vector.shape_cast %60 : vector<1xf32> to vector<1x1xf32>
    %62 = vector.broadcast %61 : vector<1x1xf32> to vector<1x128xf32>
    %63 = arith.divf %59, %62 : vector<1x128xf32>
    %c1 = arith.constant 1 : index
    %c0_32 = arith.constant 0 : index
    %64 = vector.load %arg7[%c1, %c0_32] : memref<2x128xf32, #tpu.memory_space<vmem>>, vector<1x128xf32>
    tpu.vector_store %arg7[%c1, %c0_32], %63 {strides = array<i32>} : memref<2x128xf32, #tpu.memory_space<vmem>>, vector<1x128xf32>,
    return
  }
}

</mosaic_0001>

<llo_original>
// kernel: net_b_forward.5
$region0: #{net_b_forward.5}
  #allocation0 [shape = 'u32[]', space=smem, size = 0x4, offset = 0x4, fixed_abs, tag = 'smem constant byte address 0x4 - core index']
  #allocation1 [shape = 'u32[72,128]{1,0:T(1,128)}', space=vmem, size = 0x9000, scoped, tag = 'internal scratch']
  %s0 = inlined_call_operand.vmem [shape: bf16[1568,128], index: 0, kind: input, shape index: {}]
  %s1 = inlined_call_operand.vmem [shape: bf16[128,128], index: 1, kind: input, shape index: {}]
  %s2 = inlined_call_operand.vmem [shape: f32[1,128], index: 2, kind: input, shape index: {}]
  %s3 = inlined_call_operand.vmem [shape: bf16[128,128], index: 3, kind: input, shape index: {}]
  %s4 = inlined_call_operand.vmem [shape: f32[1,128], index: 4, kind: input, shape index: {}]
  %s5 = inlined_call_operand.vmem [shape: f32[1568,128], index: 5, kind: output, shape index: {}]
  %s6 = sld [smem:[#allocation0]]
  $region53: #{net_b_forward.5} parent=0
    _
  %s8 = ssub.s32 1, %s6
  %s9 = scalar_select 0, %s8, %s6
  loop: start=0, step=1, limit=4
  $region2: #{net_b_forward.5} parent=0 // loop_pre_header
    _
  $region3: #{net_b_forward.5} parent=0 // loop_header
    %s11 = sphi 0, %s15
    %p12 = scmp.ge.s32.totalorder %s11, 4
    %s21 = sphi 0, %s23
    %s24 = sphi 0, %s21
    %s25 = sphi 0, %s24
    %s41 = sphi 0, %s25
    %s45 = sphi 0, %s45
    %s47 = sphi 0, %s45
    %s48 = sphi 0, %s47
    %s62 = sphi 0, %s48
    %s66 = sphi 0, %s66
    %s68 = sphi 0, %s66
    %s69 = sphi 0, %s68
    %s83 = sphi 0, %s69
    %s87 = sphi 0, %s87
    %s89 = sphi 0, %s87
    %s90 = sphi 0, %s89
    %s104 = sphi 0, %s90
    %s108 = sphi 0, %s108
    %s110 = sphi 0, %s108
    %s111 = sphi 0, %s110
    %s125 = sphi 0, %s111
    %s131 = sphi 0, %s133
    %s134 = sphi 0, %s131
    %s135 = sphi 0, %s134
    %s151 = sphi 0, %s135
  $region4: #{net_b_forward.5} parent=0 // loop_header_branch
    %14 = sbr.rel (%p12) target = $region8
  $region5: #{net_b_forward.5} parent=0 // loop_body
    %s16 = ssub.s32 %s11, 1
    %s17 = ssub.s32 %s11, 2
    %s18 = sadd.s32 %s11, 1
    %s19 = ssub.s32 %s11, %s18
    %p20 = scmp.eq.s32.totalorder %s19, 0
    %s22 = sadd.s32 %s21, 1
    %s23 = scalar_select %p20, %s21, %s22
    %p26 = pneg %p20
    %p27 = scmp.eq.s32.totalorder %s11, 1
    %p28 = por %p26, %p27
    %p29 = scmp.ne.s32.totalorder %s21, %s24
    %p30 = scmp.eq.s32.totalorder %s11, 0
    %p31 = por %p29, %p30
    %p32 = scmp.ne.s32.totalorder %s21, %s24
    %p33 = scmp.eq.s32.totalorder %s16, 1
    %p34 = por %p32, %p33
    %p35 = scmp.ne.s32.totalorder %s24, %s25
    %p36 = scmp.eq.s32.totalorder %s16, 0
    %p37 = por %p35, %p36
    %p38 = scmp.ne.s32.totalorder %s24, %s25
    %p39 = scmp.eq.s32.totalorder %s17, 1
    %p40 = por %p38, %p39
    %p42 = scmp.ne.s32.totalorder %s25, %s41
    %p43 = scmp.eq.s32.totalorder %s17, 0
    %p44 = por %p42, %p43
    %s46 = sadd.s32 %s45, 1
    %p49 = scmp.eq.s32.totalorder %s11, 1
    %p50 = scmp.ne.s32.totalorder %s45, %s47
    %p51 = scmp.eq.s32.totalorder %s11, 0
    %p52 = por %p50, %p51
    %p53 = scmp.ne.s32.totalorder %s45, %s47
    %p54 = scmp.eq.s32.totalorder %s16, 1
    %p55 = por %p53, %p54
    %p56 = scmp.ne.s32.totalorder %s47, %s48
    %p57 = scmp.eq.s32.totalorder %s16, 0
    %p58 = por %p56, %p57
    %p59 = scmp.ne.s32.totalorder %s47, %s48
    %p60 = scmp.eq.s32.totalorder %s17, 1
    %p61 = por %p59, %p60
    %p63 = scmp.ne.s32.totalorder %s48, %s62
    %p64 = scmp.eq.s32.totalorder %s17, 0
    %p65 = por %p63, %p64
    %s67 = sadd.s32 %s66, 1
    %p70 = scmp.eq.s32.totalorder %s11, 1
    %p71 = scmp.ne.s32.totalorder %s66, %s68
    %p72 = scmp.eq.s32.totalorder %s11, 0
    %p73 = por %p71, %p72
    %p74 = scmp.ne.s32.totalorder %s66, %s68
    %p75 = scmp.eq.s32.totalorder %s16, 1
    %p76 = por %p74, %p75
    %p77 = scmp.ne.s32.totalorder %s68, %s69
    %p78 = scmp.eq.s32.totalorder %s16, 0
    %p79 = por %p77, %p78
    %p80 = scmp.ne.s32.totalorder %s68, %s69
    %p81 = scmp.eq.s32.totalorder %s17, 1
    %p82 = por %p80, %p81
    %p84 = scmp.ne.s32.totalorder %s69, %s83
    %p85 = scmp.eq.s32.totalorder %s17, 0
    %p86 = por %p84, %p85
    %s88 = sadd.s32 %s87, 1
    %p91 = scmp.eq.s32.totalorder %s11, 1
    %p92 = scmp.ne.s32.totalorder %s87, %s89
    %p93 = scmp.eq.s32.totalorder %s11, 0
    %p94 = por %p92, %p93
    %p95 = scmp.ne.s32.totalorder %s87, %s89
    %p96 = scmp.eq.s32.totalorder %s16, 1
    %p97 = por %p95, %p96
    %p98 = scmp.ne.s32.totalorder %s89, %s90
    %p99 = scmp.eq.s32.totalorder %s16, 0
    %p100 = por %p98, %p99
    %p101 = scmp.ne.s32.totalorder %s89, %s90
    %p102 = scmp.eq.s32.totalorder %s17, 1
    %p103 = por %p101, %p102
    %p105 = scmp.ne.s32.totalorder %s90, %s104
    %p106 = scmp.eq.s32.totalorder %s17, 0
    %p107 = por %p105, %p106
    %s109 = sadd.s32 %s108, 1
    %p112 = scmp.eq.s32.totalorder %s11, 1
    %p113 = scmp.ne.s32.totalorder %s108, %s110
    %p114 = scmp.eq.s32.totalorder %s11, 0
    %p115 = por %p113, %p114
    %p116 = scmp.ne.s32.totalorder %s108, %s110
    %p117 = scmp.eq.s32.totalorder %s16, 1
    %p118 = por %p116, %p117
    %p119 = scmp.ne.s32.totalorder %s110, %s111
    %p120 = scmp.eq.s32.totalorder %s16, 0
    %p121 = por %p119, %p120
    %p122 = scmp.ne.s32.totalorder %s110, %s111
    %p123 = scmp.eq.s32.totalorder %s17, 1
    %p124 = por %p122, %p123
    %p126 = scmp.ne.s32.totalorder %s111, %s125
    %p127 = scmp.eq.s32.totalorder %s17, 0
    %p128 = por %p126, %p127
    %s129 = ssub.s32 %s11, %s18
    %p130 = scmp.eq.s32.totalorder %s129, 0
    %s132 = sadd.s32 %s131, 1
    %s133 = scalar_select %p130, %s131, %s132
    %p136 = pneg %p130
    %p137 = scmp.eq.s32.totalorder %s11, 1
    %p138 = por %p136, %p137
    %p139 = scmp.ne.s32.totalorder %s131, %s134
    %p140 = scmp.eq.s32.totalorder %s11, 0
    %p141 = por %p139, %p140
    %p142 = scmp.ne.s32.totalorder %s131, %s134
    %p143 = scmp.eq.s32.totalorder %s16, 1
    %p144 = por %p142, %p143
    %p145 = scmp.ne.s32.totalorder %s134, %s135
    %p146 = scmp.eq.s32.totalorder %s16, 0
    %p147 = por %p145, %p146
    %p148 = scmp.ne.s32.totalorder %s134, %s135
    %p149 = scmp.eq.s32.totalorder %s17, 1
    %p150 = por %p148, %p149
    %p152 = scmp.ne.s32.totalorder %s135, %s151
    %p153 = scmp.eq.s32.totalorder %s17, 0
    %p154 = por %p152, %p153
    %p155 = scmp.le.s32.totalorder 1, %s11
    %p156 = scmp.lt.s32.totalorder %s11, 3
    %p157 = pnand %p155, %p156
    %p158 = pneg %p157
    // Predicated region
    $region9: #{net_b_forward.5} parent=5 // pred_check
      _
    $region10: #{net_b_forward.5} parent=5 // pred_check_branch
      %160 = sbr.rel (%p157) target = $region12
    $region11: #{net_b_forward.5} parent=5 // pred_region
      %s161 = ssub.s32 %s11, 1
      // Predicated region
      $region13: #{net_b_forward.5} parent=11 // pred_check
        %p162 = pneg %p58
      $region14: #{net_b_forward.5} parent=11 // pred_check_branch
        %164 = sbr.rel (%p162) target = $region16
      $region15: #{net_b_forward.5} parent=11 // pred_region
        _
      $region16: #{net_b_forward.5} parent=11 // pred_fallthru
        _
      // Predicated region
      $region17: #{net_b_forward.5} parent=11 // pred_check
        %p165 = pneg %p79
      $region18: #{net_b_forward.5} parent=11 // pred_check_branch
        %167 = sbr.rel (%p165) target = $region20
      $region19: #{net_b_forward.5} parent=11 // pred_region
        _
      $region20: #{net_b_forward.5} parent=11 // pred_fallthru
        _
      // Predicated region
      $region21: #{net_b_forward.5} parent=11 // pred_check
        %p168 = pneg %p100
      $region22: #{net_b_forward.5} parent=11 // pred_check_branch
        %170 = sbr.rel (%p168) target = $region24
      $region23: #{net_b_forward.5} parent=11 // pred_region
        _
      $region24: #{net_b_forward.5} parent=11 // pred_fallthru
        _
      // Predicated region
      $region25: #{net_b_forward.5} parent=11 // pred_check
        %p171 = pneg %p121
      $region26: #{net_b_forward.5} parent=11 // pred_check_branch
        %173 = sbr.rel (%p171) target = $region28
      $region27: #{net_b_forward.5} parent=11 // pred_region
        _
      $region28: #{net_b_forward.5} parent=11 // pred_fallthru
        _
    $region12: #{net_b_forward.5} parent=5 // pred_fallthru
      _
    %p174 = scmp.lt.s32.totalorder %s11, 2
    // Predicated region
    $region29: #{net_b_forward.5} parent=5 // pred_check
      %p175 = pneg %p174
    $region30: #{net_b_forward.5} parent=5 // pred_check_branch
      %177 = sbr.rel (%p175) target = $region32
    $region31: #{net_b_forward.5} parent=5 // pred_region
      // Predicated region
      $region33: #{net_b_forward.5} parent=31 // pred_check
        %p178 = pneg %p31
      $region34: #{net_b_forward.5} parent=31 // pred_check_branch
        %180 = sbr.rel (%p178) target = $region36
      $region35: #{net_b_forward.5} parent=31 // pred_region
        %s181 = smul.u32 98, %s11
        %p182 = scmp.lt.s32.totalorder %s181, 195
        %s183 = scalar_select %p182, %s181, 195
        %s184 = smul.addr %s183, 4
        %s185 = scalar_lea.vmem %s0, %s184
        %s186 = smul.u32 98, %s11
      $region36: #{net_b_forward.5} parent=31 // pred_fallthru
        _
    $region32: #{net_b_forward.5} parent=5 // pred_fallthru
      _
    %p187 = scmp.le.s32.totalorder 1, %s11
    %p188 = scmp.lt.s32.totalorder %s11, 3
    %p189 = pnand %p187, %p188
    %p190 = pneg %p189
    // Predicated region
    $region37: #{net_b_forward.5} parent=5 // pred_check
      _
    $region38: #{net_b_forward.5} parent=5 // pred_check_branch
      %192 = sbr.rel (%p189) target = $region40
    $region39: #{net_b_forward.5} parent=5 // pred_region
      %s193 = ssub.s32 %s11, 1
      %s194 = smul.u32 98, %s16
      %p195 = scmp.lt.s32.totalorder %s194, 195
      %s196 = scalar_select %p195, %s194, 195
      %s197 = smul.addr %s196, 4
      %s198 = scalar_lea.vmem %s0, %s197
      %p199 = pneg %p37
      %p200 = pneg %p34
      %p201 = pneg %p58
      %p202 = pneg %p55
      %p203 = pneg %p79
      %p204 = pneg %p76
      %p205 = pneg %p100
      %p206 = pneg %p97
      %p207 = pneg %p121
      %p208 = pneg %p118
      %p209 = pneg %p147
      %p210 = pneg %p144
      %s211 = smul.u32 98, %s16
      %p212 = scmp.lt.s32.totalorder %s211, 195
      %s213 = scalar_select %p212, %s211, 195
      %s214 = smul.addr %s213, 8
      %s215 = scalar_lea.vmem %s5, %s214
      %s216 = smul.u32 98, %s16
      %p217 = scmp.lt.s32.totalorder %s216, 195
      %s218 = scalar_select %p217, %s216, 195
      %s219 = smul.addr %s218, 4
      %s220 = scalar_lea.vmem %s0, %s219
      %s221 = smul.u32 98, %s16
      %s222 = smul.u32 98, %s16
      %p223 = scmp.lt.s32.totalorder %s222, 195
      %s224 = scalar_select %p223, %s222, 195
      %s225 = smul.addr %s224, 8
      %s226 = scalar_lea.vmem %s5, %s225
      %s227 = smul.u32 98, %s16
      %v228 = vld [vmem:[%s220] sm:$0xf]
      %v229 = vld [vmem:[%s220 + $0x4] sm:$0xf]
      %v230 = vld [vmem:[%s220 + $0x8] sm:$0xf]
      %v231 = vld [vmem:[%s220 + $0xc] sm:$0xf]
      %v232 = vld [vmem:[%s220 + $0x10] sm:$0xf]
      %v233 = vld [vmem:[%s220 + $0x14] sm:$0xf]
      %v234 = vld [vmem:[%s220 + $0x18] sm:$0xf]
      %v235 = vld [vmem:[%s220 + $0x1c] sm:$0xf]
      %v236 = vld [vmem:[%s220 + $0x20] sm:$0xf]
      %v237 = vld [vmem:[%s220 + $0x24] sm:$0xf]
      %v238 = vld [vmem:[%s220 + $0x28] sm:$0xf]
      %v239 = vld [vmem:[%s220 + $0x2c] sm:$0xf]
      %v240 = vld [vmem:[%s220 + $0x30] sm:$0xf]
      %v241 = vld [vmem:[%s220 + $0x34] sm:$0xf]
      %v242 = vld [vmem:[%s220 + $0x38] sm:$0xf]
      %v243 = vld [vmem:[%s220 + $0x3c] sm:$0xf]
      %v244 = vld [vmem:[%s220 + $0x40] sm:$0xf]
      %v245 = vld [vmem:[%s220 + $0x44] sm:$0xf]
      %v246 = vld [vmem:[%s220 + $0x48] sm:$0xf]
      %v247 = vld [vmem:[%s220 + $0x4c] sm:$0xf]
      %v248 = vld [vmem:[%s220 + $0x50] sm:$0xf]
      %v249 = vld [vmem:[%s220 + $0x54] sm:$0xf]
      %v250 = vld [vmem:[%s220 + $0x58] sm:$0xf]
      %v251 = vld [vmem:[%s220 + $0x5c] sm:$0xf]
      %v252 = vld [vmem:[%s220 + $0x60] sm:$0xf]
      %v253 = vld [vmem:[%s220 + $0x64] sm:$0xf]
      %v254 = vld [vmem:[%s220 + $0x68] sm:$0xf]
      %v255 = vld [vmem:[%s220 + $0x6c] sm:$0xf]
      %v256 = vld [vmem:[%s220 + $0x70] sm:$0xf]
      %v257 = vld [vmem:[%s220 + $0x74] sm:$0xf]
      %v258 = vld [vmem:[%s220 + $0x78] sm:$0xf]
      %v259 = vld [vmem:[%s220 + $0x7c] sm:$0xf]
      %v260 = vld [vmem:[%s220 + $0x80] sm:$0xf]
      %v261 = vld [vmem:[%s220 + $0x84] sm:$0xf]
      %v262 = vld [vmem:[%s220 + $0x88] sm:$0xf]
      %v263 = vld [vmem:[%s220 + $0x8c] sm:$0xf]
      %v264 = vld [vmem:[%s220 + $0x90] sm:$0xf]
      %v265 = vld [vmem:[%s220 + $0x94] sm:$0xf]
      %v266 = vld [vmem:[%s220 + $0x98] sm:$0xf]
      %v267 = vld [vmem:[%s220 + $0x9c] sm:$0xf]
      %v268 = vld [vmem:[%s220 + $0xa0] sm:$0xf]
      %v269 = vld [vmem:[%s220 + $0xa4] sm:$0xf]
      %v270 = vld [vmem:[%s220 + $0xa8] sm:$0xf]
      %v271 = vld [vmem:[%s220 + $0xac] sm:$0xf]
      %v272 = vld [vmem:[%s220 + $0xb0] sm:$0xf]
      %v273 = vld [vmem:[%s220 + $0xb4] sm:$0xf]
      %v274 = vld [vmem:[%s220 + $0xb8] sm:$0xf]
      %v275 = vld [vmem:[%s220 + $0xbc] sm:$0xf]
      %v276 = vld [vmem:[%s220 + $0xc0] sm:$0xf]
      %v277 = vld [vmem:[%s220 + $0xc4] sm:$0xf]
      %v278 = vld [vmem:[%s220 + $0xc8] sm:$0xf]
      %v279 = vld [vmem:[%s220 + $0xcc] sm:$0xf]
      %v280 = vld [vmem:[%s220 + $0xd0] sm:$0xf]
      %v281 = vld [vmem:[%s220 + $0xd4] sm:$0xf]
      %v282 = vld [vmem:[%s220 + $0xd8] sm:$0xf]
      %v283 = vld [vmem:[%s220 + $0xdc] sm:$0xf]
      %v284 = vld [vmem:[%s220 + $0xe0] sm:$0xf]
      %v285 = vld [vmem:[%s220 + $0xe4] sm:$0xf]
      %v286 = vld [vmem:[%s220 + $0xe8] sm:$0xf]
      %v287 = vld [vmem:[%s220 + $0xec] sm:$0xf]
      %v288 = vld [vmem:[%s220 + $0xf0] sm:$0xf]
      %v289 = vld [vmem:[%s220 + $0xf4] sm:$0xf]
      %v290 = vld [vmem:[%s220 + $0xf8] sm:$0xf]
      %v291 = vld [vmem:[%s220 + $0xfc] sm:$0xf]
      %v292 = vld [vmem:[%s220 + $0x100] sm:$0xf]
      %v293 = vld [vmem:[%s220 + $0x104] sm:$0xf]
      %v294 = vld [vmem:[%s220 + $0x108] sm:$0xf]
      %v295 = vld [vmem:[%s220 + $0x10c] sm:$0xf]
      %v296 = vld [vmem:[%s220 + $0x110] sm:$0xf]
      %v297 = vld [vmem:[%s220 + $0x114] sm:$0xf]
      %v298 = vld [vmem:[%s220 + $0x118] sm:$0xf]
      %v299 = vld [vmem:[%s220 + $0x11c] sm:$0xf]
      %v300 = vld [vmem:[%s220 + $0x120] sm:$0xf]
      %v301 = vld [vmem:[%s220 + $0x124] sm:$0xf]
      %v302 = vld [vmem:[%s220 + $0x128] sm:$0xf]
      %v303 = vld [vmem:[%s220 + $0x12c] sm:$0xf]
      %v304 = vld [vmem:[%s220 + $0x130] sm:$0xf]
      %v305 = vld [vmem:[%s220 + $0x134] sm:$0xf]
      %v306 = vld [vmem:[%s220 + $0x138] sm:$0xf]
      %v307 = vld [vmem:[%s220 + $0x13c] sm:$0xf]
      %v308 = vld [vmem:[%s220 + $0x140] sm:$0xf]
      %v309 = vld [vmem:[%s220 + $0x144] sm:$0xf]
      %v310 = vld [vmem:[%s220 + $0x148] sm:$0xf]
      %v311 = vld [vmem:[%s220 + $0x14c] sm:$0xf]
      %v312 = vld [vmem:[%s220 + $0x150] sm:$0xf]
      %v313 = vld [vmem:[%s220 + $0x154] sm:$0xf]
      %v314 = vld [vmem:[%s220 + $0x158] sm:$0xf]
      %v315 = vld [vmem:[%s220 + $0x15c] sm:$0xf]
      %v316 = vld [vmem:[%s220 + $0x160] sm:$0xf]
      %v317 = vld [vmem:[%s220 + $0x164] sm:$0xf]
      %v318 = vld [vmem:[%s220 + $0x168] sm:$0xf]
      %v319 = vld [vmem:[%s220 + $0x16c] sm:$0xf]
      %v320 = vld [vmem:[%s220 + $0x170] sm:$0xf]
      %v321 = vld [vmem:[%s220 + $0x174] sm:$0xf]
      %v322 = vld [vmem:[%s220 + $0x178] sm:$0xf]
      %v323 = vld [vmem:[%s220 + $0x17c] sm:$0xf]
      %v324 = vld [vmem:[%s220 + $0x180] sm:$0xf]
      %v325 = vld [vmem:[%s220 + $0x184] sm:$0xf]
      %v326 = vld [vmem:[%s1] sm:$0xf]
      %v327 = vld [vmem:[%s1 + $0x4] sm:$0xf]
      %v328 = vld [vmem:[%s1 + $0x8] sm:$0xf]
      %v329 = vld [vmem:[%s1 + $0xc] sm:$0xf]
      %v330 = vld [vmem:[%s1 + $0x10] sm:$0xf]
      %v331 = vld [vmem:[%s1 + $0x14] sm:$0xf]
      %v332 = vld [vmem:[%s1 + $0x18] sm:$0xf]
      %v333 = vld [vmem:[%s1 + $0x1c] sm:$0xf]
      %v334 = vld [vmem:[%s1 + $0x20] sm:$0xf]
      %v335 = vld [vmem:[%s1 + $0x24] sm:$0xf]
      %v336 = vld [vmem:[%s1 + $0x28] sm:$0xf]
      %v337 = vld [vmem:[%s1 + $0x2c] sm:$0xf]
      %v338 = vld [vmem:[%s1 + $0x30] sm:$0xf]
      %v339 = vld [vmem:[%s1 + $0x34] sm:$0xf]
      %v340 = vld [vmem:[%s1 + $0x38] sm:$0xf]
      %v341 = vld [vmem:[%s1 + $0x3c] sm:$0xf]
      %v342 = vld [vmem:[%s2] sm:$0x1]
      %v344 = vperm.slane %v342, 0
      %v444 = vunpack.c.l.b16 %v228
      %v445 = vunpack.c.l.b16 %v229
      %v446 = vunpack.c.l.b16 %v230
      %v447 = vunpack.c.l.b16 %v231
      %v448 = vunpack.c.l.b16 %v232
      %v449 = vunpack.c.l.b16 %v233
      %v450 = vunpack.c.l.b16 %v234
      %v451 = vunpack.c.l.b16 %v235
      %v452 = vunpack.c.l.b16 %v236
      %v453 = vunpack.c.l.b16 %v237
      %v454 = vunpack.c.l.b16 %v238
      %v455 = vunpack.c.l.b16 %v239
      %v456 = vunpack.c.l.b16 %v240
      %v457 = vunpack.c.l.b16 %v241
      %v458 = vunpack.c.l.b16 %v242
      %v459 = vunpack.c.l.b16 %v243
      %v460 = vunpack.c.l.b16 %v244
      %v461 = vunpack.c.l.b16 %v245
      %v462 = vunpack.c.l.b16 %v246
      %v463 = vunpack.c.l.b16 %v247
      %v464 = vunpack.c.l.b16 %v248
      %v465 = vunpack.c.l.b16 %v249
      %v466 = vunpack.c.l.b16 %v250
      %v467 = vunpack.c.l.b16 %v251
      %v468 = vunpack.c.l.b16 %v252
      %v469 = vunpack.c.l.b16 %v253
      %v470 = vunpack.c.l.b16 %v254
      %v471 = vunpack.c.l.b16 %v255
      %v472 = vunpack.c.l.b16 %v256
      %v473 = vunpack.c.l.b16 %v257
      %v474 = vunpack.c.l.b16 %v258
      %v475 = vunpack.c.l.b16 %v259
      %v476 = vunpack.c.l.b16 %v260
      %v477 = vunpack.c.l.b16 %v261
      %v478 = vunpack.c.l.b16 %v262
      %v479 = vunpack.c.l.b16 %v263
      %v480 = vunpack.c.l.b16 %v264
      %v481 = vunpack.c.l.b16 %v265
      %v482 = vunpack.c.l.b16 %v266
      %v483 = vunpack.c.l.b16 %v267
      %v484 = vunpack.c.l.b16 %v268
      %v485 = vunpack.c.l.b16 %v269
      %v486 = vunpack.c.l.b16 %v270
      %v487 = vunpack.c.l.b16 %v271
      %v488 = vunpack.c.l.b16 %v272
      %v489 = vunpack.c.l.b16 %v273
      %v490 = vunpack.c.l.b16 %v274
      %v491 = vunpack.c.l.b16 %v275
      %v492 = vunpack.c.l.b16 %v276
      %v493 = vunpack.c.l.b16 %v277
      %v494 = vunpack.c.l.b16 %v278
      %v495 = vunpack.c.l.b16 %v279
      %v496 = vunpack.c.l.b16 %v280
      %v497 = vunpack.c.l.b16 %v281
      %v498 = vunpack.c.l.b16 %v282
      %v499 = vunpack.c.l.b16 %v283
      %v500 = vunpack.c.l.b16 %v284
      %v501 = vunpack.c.l.b16 %v285
      %v502 = vunpack.c.l.b16 %v286
      %v503 = vunpack.c.l.b16 %v287
      %v504 = vunpack.c.l.b16 %v288
      %v505 = vunpack.c.l.b16 %v289
      %v506 = vunpack.c.l.b16 %v290
      %v507 = vunpack.c.l.b16 %v291
      %v508 = vunpack.c.l.b16 %v292
      %v509 = vunpack.c.l.b16 %v293
      %v510 = vunpack.c.l.b16 %v294
      %v511 = vunpack.c.l.b16 %v295
      %v512 = vunpack.c.l.b16 %v296
      %v513 = vunpack.c.l.b16 %v297
      %v514 = vunpack.c.l.b16 %v298
      %v515 = vunpack.c.l.b16 %v299
      %v516 = vunpack.c.l.b16 %v300
      %v517 = vunpack.c.l.b16 %v301
      %v518 = vunpack.c.l.b16 %v302
      %v519 = vunpack.c.l.b16 %v303
      %v520 = vunpack.c.l.b16 %v304
      %v521 = vunpack.c.l.b16 %v305
      %v522 = vunpack.c.l.b16 %v306
      %v523 = vunpack.c.l.b16 %v307
      %v524 = vunpack.c.l.b16 %v308
      %v525 = vunpack.c.l.b16 %v309
      %v526 = vunpack.c.l.b16 %v310
      %v527 = vunpack.c.l.b16 %v311
      %v528 = vunpack.c.l.b16 %v312
      %v529 = vunpack.c.l.b16 %v313
      %v530 = vunpack.c.l.b16 %v314
      %v531 = vunpack.c.l.b16 %v315
      %v532 = vunpack.c.l.b16 %v316
      %v533 = vunpack.c.l.b16 %v317
      %v534 = vunpack.c.l.b16 %v318
      %v535 = vunpack.c.l.b16 %v319
      %v536 = vunpack.c.l.b16 %v320
      %v537 = vunpack.c.l.b16 %v321
      %v538 = vunpack.c.l.b16 %v322
      %v539 = vunpack.c.l.b16 %v323
      %v540 = vunpack.c.l.b16 %v324
      %v541 = vunpack.c.l.b16 %v325
      %v542 = vpack.c.b16 %v445, %v444
      %v543 = vpack.c.b16 %v447, %v446
      %v544 = vpack.c.b16 %v449, %v448
      %v545 = vpack.c.b16 %v451, %v450
      %v546 = vpack.c.b16 %v453, %v452
      %v547 = vpack.c.b16 %v455, %v454
      %v548 = vpack.c.b16 %v457, %v456
      %v549 = vpack.c.b16 %v459, %v458
      %v550 = vpack.c.b16 %v461, %v460
      %v551 = vpack.c.b16 %v463, %v462
      %v552 = vpack.c.b16 %v465, %v464
      %v553 = vpack.c.b16 %v467, %v466
      %v554 = vpack.c.b16 %v469, %v468
      %v555 = vpack.c.b16 %v471, %v470
      %v556 = vpack.c.b16 %v473, %v472
      %v557 = vpack.c.b16 %v475, %v474
      %v558 = vpack.c.b16 %v477, %v476
      %v559 = vpack.c.b16 %v479, %v478
      %v560 = vpack.c.b16 %v481, %v480
      %v561 = vpack.c.b16 %v483, %v482
      %v562 = vpack.c.b16 %v485, %v484
      %v563 = vpack.c.b16 %v487, %v486
      %v564 = vpack.c.b16 %v489, %v488
      %v565 = vpack.c.b16 %v491, %v490
      %v566 = vpack.c.b16 %v493, %v492
      %v567 = vpack.c.b16 %v495, %v494
      %v568 = vpack.c.b16 %v497, %v496
      %v569 = vpack.c.b16 %v499, %v498
      %v570 = vpack.c.b16 %v501, %v500
      %v571 = vpack.c.b16 %v503, %v502
      %v572 = vpack.c.b16 %v505, %v504
      %v573 = vpack.c.b16 %v507, %v506
      %v574 = vpack.c.b16 %v509, %v508
      %v575 = vpack.c.b16 %v511, %v510
      %v576 = vpack.c.b16 %v513, %v512
      %v577 = vpack.c.b16 %v515, %v514
      %v578 = vpack.c.b16 %v517, %v516
      %v579 = vpack.c.b16 %v519, %v518
      %v580 = vpack.c.b16 %v521, %v520
      %v581 = vpack.c.b16 %v523, %v522
      %v582 = vpack.c.b16 %v525, %v524
      %v583 = vpack.c.b16 %v527, %v526
      %v584 = vpack.c.b16 %v529, %v528
      %v585 = vpack.c.b16 %v531, %v530
      %v586 = vpack.c.b16 %v533, %v532
      %v587 = vpack.c.b16 %v535, %v534
      %v588 = vpack.c.b16 %v537, %v536
      %v589 = vpack.c.b16 %v539, %v538
      %v590 = vpack.c.b16 %v541, %v540
      %v656 = vunpack.c.l.b16 %v326
      %v657 = vunpack.c.l.b16 %v327
      %v658 = vunpack.c.l.b16 %v328
      %v659 = vunpack.c.l.b16 %v329
      %v660 = vunpack.c.l.b16 %v330
      %v661 = vunpack.c.l.b16 %v331
      %v662 = vunpack.c.l.b16 %v332
      %v663 = vunpack.c.l.b16 %v333
      %v664 = vunpack.c.l.b16 %v334
      %v665 = vunpack.c.l.b16 %v335
      %v666 = vunpack.c.l.b16 %v336
      %v667 = vunpack.c.l.b16 %v337
      %v668 = vunpack.c.l.b16 %v338
      %v669 = vunpack.c.l.b16 %v339
      %v670 = vunpack.c.l.b16 %v340
      %v671 = vunpack.c.l.b16 %v341
      %v672 = vpack.c.b16 %v657, %v656
      %v673 = vpack.c.b16 %v659, %v658
      %v674 = vpack.c.b16 %v661, %v660
      %v675 = vpack.c.b16 %v663, %v662
      %v676 = vpack.c.b16 %v665, %v664
      %v677 = vpack.c.b16 %v667, %v666
      %v678 = vpack.c.b16 %v669, %v668
      %v679 = vpack.c.b16 %v671, %v670
      %688 = vmatpush.bf16.msra.mxu0 %v679
      %689 = vmatpush.bf16.msra.mxu0 %v678
      %690 = vmatpush.bf16.msra.mxu0 %v677
      %691 = vmatpush.bf16.msra.mxu0 %v676
      %692 = vmatpush.bf16.msra.mxu0 %v675
      %693 = vmatpush.bf16.msra.mxu0 %v674
      %694 = vmatpush.bf16.msra.mxu0 %v673
      %695 = vmatpush.bf16.msra.mxu0 %v672
      %696 = vmatmul.bf16.gmra.mxu0 %v542
      %v697 = vpop.f32.mrf.mxu0
      %v698 = vadd.f32 %v344, %v697
      %v699 = vpop.f32.mrf.mxu0
      %v700 = vadd.f32 %v344, %v699
      %701 = vmatmul.bf16.gmra.mxu0 %v543
      %v702 = vpop.f32.mrf.mxu0
      %v703 = vadd.f32 %v344, %v702
      %v704 = vpop.f32.mrf.mxu0
      %v705 = vadd.f32 %v344, %v704
      %706 = vmatmul.bf16.gmra.mxu0 %v544
      %v707 = vpop.f32.mrf.mxu0
      %v708 = vadd.f32 %v344, %v707
      %v709 = vpop.f32.mrf.mxu0
      %v710 = vadd.f32 %v344, %v709
      %711 = vmatmul.bf16.gmra.mxu0 %v545
      %v712 = vpop.f32.mrf.mxu0
      %v713 = vadd.f32 %v344, %v712
      %v714 = vpop.f32.mrf.mxu0
      %v715 = vadd.f32 %v344, %v714
      %716 = vmatmul.bf16.gmra.mxu0 %v546
      %v717 = vpop.f32.mrf.mxu0
      %v718 = vadd.f32 %v344, %v717
      %v719 = vpop.f32.mrf.mxu0
      %v720 = vadd.f32 %v344, %v719
      %721 = vmatmul.bf16.gmra.mxu0 %v547
      %v722 = vpop.f32.mrf.mxu0
      %v723 = vadd.f32 %v344, %v722
      %v724 = vpop.f32.mrf.mxu0
      %v725 = vadd.f32 %v344, %v724
      %726 = vmatmul.bf16.gmra.mxu0 %v548
      %v727 = vpop.f32.mrf.mxu0
      %v728 = vadd.f32 %v344, %v727
      %v729 = vpop.f32.mrf.mxu0
      %v730 = vadd.f32 %v344, %v729
      %731 = vmatmul.bf16.gmra.mxu0 %v549
      %v732 = vpop.f32.mrf.mxu0
      %v733 = vadd.f32 %v344, %v732
      %v734 = vpop.f32.mrf.mxu0
      %v735 = vadd.f32 %v344, %v734
      %736 = vmatmul.bf16.gmra.mxu0 %v550
      %v737 = vpop.f32.mrf.mxu0
      %v738 = vadd.f32 %v344, %v737
      %v739 = vpop.f32.mrf.mxu0
      %v740 = vadd.f32 %v344, %v739
      %741 = vmatmul.bf16.gmra.mxu0 %v551
      %v742 = vpop.f32.mrf.mxu0
      %v743 = vadd.f32 %v344, %v742
      %v744 = vpop.f32.mrf.mxu0
      %v745 = vadd.f32 %v344, %v744
      %746 = vmatmul.bf16.gmra.mxu0 %v552
      %v747 = vpop.f32.mrf.mxu0
      %v748 = vadd.f32 %v344, %v747
      %v749 = vpop.f32.mrf.mxu0
      %v750 = vadd.f32 %v344, %v749
      %751 = vmatmul.bf16.gmra.mxu0 %v553
      %v752 = vpop.f32.mrf.mxu0
      %v753 = vadd.f32 %v344, %v752
      %v754 = vpop.f32.mrf.mxu0
      %v755 = vadd.f32 %v344, %v754
      %756 = vmatmul.bf16.gmra.mxu0 %v554
      %v757 = vpop.f32.mrf.mxu0
      %v758 = vadd.f32 %v344, %v757
      %v759 = vpop.f32.mrf.mxu0
      %v760 = vadd.f32 %v344, %v759
      %761 = vmatmul.bf16.gmra.mxu0 %v555
      %v762 = vpop.f32.mrf.mxu0
      %v763 = vadd.f32 %v344, %v762
      %v764 = vpop.f32.mrf.mxu0
      %v765 = vadd.f32 %v344, %v764
      %766 = vmatmul.bf16.gmra.mxu0 %v556
      %v767 = vpop.f32.mrf.mxu0
      %v768 = vadd.f32 %v344, %v767
      %v769 = vpop.f32.mrf.mxu0
      %v770 = vadd.f32 %v344, %v769
      %771 = vmatmul.bf16.gmra.mxu0 %v557
      %v772 = vpop.f32.mrf.mxu0
      %v773 = vadd.f32 %v344, %v772
      %v774 = vpop.f32.mrf.mxu0
      %v775 = vadd.f32 %v344, %v774
      %776 = vmatmul.bf16.gmra.mxu0 %v558
      %v777 = vpop.f32.mrf.mxu0
      %v778 = vadd.f32 %v344, %v777
      %v779 = vpop.f32.mrf.mxu0
      %v780 = vadd.f32 %v344, %v779
      %781 = vmatmul.bf16.gmra.mxu0 %v559
      %v782 = vpop.f32.mrf.mxu0
      %v783 = vadd.f32 %v344, %v782
      %v784 = vpop.f32.mrf.mxu0
      %v785 = vadd.f32 %v344, %v784
      %786 = vmatmul.bf16.gmra.mxu0 %v560
      %v787 = vpop.f32.mrf.mxu0
      %v788 = vadd.f32 %v344, %v787
      %v789 = vpop.f32.mrf.mxu0
      %v790 = vadd.f32 %v344, %v789
      %791 = vmatmul.bf16.gmra.mxu0 %v561
      %v792 = vpop.f32.mrf.mxu0
      %v793 = vadd.f32 %v344, %v792
      %v794 = vpop.f32.mrf.mxu0
      %v795 = vadd.f32 %v344, %v794
      %796 = vmatmul.bf16.gmra.mxu0 %v562
      %v797 = vpop.f32.mrf.mxu0
      %v798 = vadd.f32 %v344, %v797
      %v799 = vpop.f32.mrf.mxu0
      %v800 = vadd.f32 %v344, %v799
      %801 = vmatmul.bf16.gmra.mxu0 %v563
      %v802 = vpop.f32.mrf.mxu0
      %v803 = vadd.f32 %v344, %v802
      %v804 = vpop.f32.mrf.mxu0
      %v805 = vadd.f32 %v344, %v804
      %806 = vmatmul.bf16.gmra.mxu0 %v564
      %v807 = vpop.f32.mrf.mxu0
      %v808 = vadd.f32 %v344, %v807
      %v809 = vpop.f32.mrf.mxu0
      %v810 = vadd.f32 %v344, %v809
      %811 = vmatmul.bf16.gmra.mxu0 %v565
      %v812 = vpop.f32.mrf.mxu0
      %v813 = vadd.f32 %v344, %v812
      %v814 = vpop.f32.mrf.mxu0
      %v815 = vadd.f32 %v344, %v814
      %816 = vmatmul.bf16.gmra.mxu0 %v566
      %v817 = vpop.f32.mrf.mxu0
      %v818 = vadd.f32 %v344, %v817
      %v819 = vpop.f32.mrf.mxu0
      %v820 = vadd.f32 %v344, %v819
      %821 = vmatmul.bf16.gmra.mxu0 %v567
      %v822 = vpop.f32.mrf.mxu0
      %v823 = vadd.f32 %v344, %v822
      %v824 = vpop.f32.mrf.mxu0
      %v825 = vadd.f32 %v344, %v824
      %826 = vmatmul.bf16.gmra.mxu0 %v568
      %v827 = vpop.f32.mrf.mxu0
      %v828 = vadd.f32 %v344, %v827
      %v829 = vpop.f32.mrf.mxu0
      %v830 = vadd.f32 %v344, %v829
      %831 = vmatmul.bf16.gmra.mxu0 %v569
      %v832 = vpop.f32.mrf.mxu0
      %v833 = vadd.f32 %v344, %v832
      %v834 = vpop.f32.mrf.mxu0
      %v835 = vadd.f32 %v344, %v834
      %836 = vmatmul.bf16.gmra.mxu0 %v570
      %v837 = vpop.f32.mrf.mxu0
      %v838 = vadd.f32 %v344, %v837
      %v839 = vpop.f32.mrf.mxu0
      %v840 = vadd.f32 %v344, %v839
      %841 = vmatmul.bf16.gmra.mxu0 %v571
      %v842 = vpop.f32.mrf.mxu0
      %v843 = vadd.f32 %v344, %v842
      %v844 = vpop.f32.mrf.mxu0
      %v845 = vadd.f32 %v344, %v844
      %846 = vmatmul.bf16.gmra.mxu0 %v572
      %v847 = vpop.f32.mrf.mxu0
      %v848 = vadd.f32 %v344, %v847
      %v849 = vpop.f32.mrf.mxu0
      %v850 = vadd.f32 %v344, %v849
      %851 = vmatmul.bf16.gmra.mxu0 %v573
      %v852 = vpop.f32.mrf.mxu0
      %v853 = vadd.f32 %v344, %v852
      %v854 = vpop.f32.mrf.mxu0
      %v855 = vadd.f32 %v344, %v854
      %856 = vmatmul.bf16.gmra.mxu0 %v574
      %v857 = vpop.f32.mrf.mxu0
      %v858 = vadd.f32 %v344, %v857
      %v859 = vpop.f32.mrf.mxu0
      %v860 = vadd.f32 %v344, %v859
      %861 = vmatmul.bf16.gmra.mxu0 %v575
      %v862 = vpop.f32.mrf.mxu0
      %v863 = vadd.f32 %v344, %v862
      %v864 = vpop.f32.mrf.mxu0
      %v865 = vadd.f32 %v344, %v864
      %866 = vmatmul.bf16.gmra.mxu0 %v576
      %v867 = vpop.f32.mrf.mxu0
      %v868 = vadd.f32 %v344, %v867
      %v869 = vpop.f32.mrf.mxu0
      %v870 = vadd.f32 %v344, %v869
      %871 = vmatmul.bf16.gmra.mxu0 %v577
      %v872 = vpop.f32.mrf.mxu0
      %v873 = vadd.f32 %v344, %v872
      %v874 = vpop.f32.mrf.mxu0
      %v875 = vadd.f32 %v344, %v874
      %876 = vmatmul.bf16.gmra.mxu0 %v578
      %v877 = vpop.f32.mrf.mxu0
      %v878 = vadd.f32 %v344, %v877
      %v879 = vpop.f32.mrf.mxu0
      %v880 = vadd.f32 %v344, %v879
      %881 = vmatmul.bf16.gmra.mxu0 %v579
      %v882 = vpop.f32.mrf.mxu0
      %v883 = vadd.f32 %v344, %v882
      %v884 = vpop.f32.mrf.mxu0
      %v885 = vadd.f32 %v344, %v884
      %886 = vmatmul.bf16.gmra.mxu0 %v580
      %v887 = vpop.f32.mrf.mxu0
      %v888 = vadd.f32 %v344, %v887
      %v889 = vpop.f32.mrf.mxu0
      %v890 = vadd.f32 %v344, %v889
      %891 = vmatmul.bf16.gmra.mxu0 %v581
      %v892 = vpop.f32.mrf.mxu0
      %v893 = vadd.f32 %v344, %v892
      %v894 = vpop.f32.mrf.mxu0
      %v895 = vadd.f32 %v344, %v894
      %896 = vmatmul.bf16.gmra.mxu0 %v582
      %v897 = vpop.f32.mrf.mxu0
      %v898 = vadd.f32 %v344, %v897
      %v899 = vpop.f32.mrf.mxu0
      %v900 = vadd.f32 %v344, %v899
      %901 = vmatmul.bf16.gmra.mxu0 %v583
      %v902 = vpop.f32.mrf.mxu0
      %v903 = vadd.f32 %v344, %v902
      %v904 = vpop.f32.mrf.mxu0
      %v905 = vadd.f32 %v344, %v904
      %906 = vmatmul.bf16.gmra.mxu0 %v584
      %v907 = vpop.f32.mrf.mxu0
      %v908 = vadd.f32 %v344, %v907
      %v909 = vpop.f32.mrf.mxu0
      %v910 = vadd.f32 %v344, %v909
      %911 = vmatmul.bf16.gmra.mxu0 %v585
      %v912 = vpop.f32.mrf.mxu0
      %v913 = vadd.f32 %v344, %v912
      %v914 = vpop.f32.mrf.mxu0
      %v915 = vadd.f32 %v344, %v914
      %916 = vmatmul.bf16.gmra.mxu0 %v586
      %v917 = vpop.f32.mrf.mxu0
      %v918 = vadd.f32 %v344, %v917
      %v919 = vpop.f32.mrf.mxu0
      %v920 = vadd.f32 %v344, %v919
      %921 = vmatmul.bf16.gmra.mxu0 %v587
      %v922 = vpop.f32.mrf.mxu0
      %v923 = vadd.f32 %v344, %v922
      %v924 = vpop.f32.mrf.mxu0
      %v925 = vadd.f32 %v344, %v924
      %926 = vmatmul.bf16.gmra.mxu0 %v588
      %v927 = vpop.f32.mrf.mxu0
      %v928 = vadd.f32 %v344, %v927
      %v929 = vpop.f32.mrf.mxu0
      %v930 = vadd.f32 %v344, %v929
      %931 = vmatmul.bf16.gmra.mxu0 %v589
      %v932 = vpop.f32.mrf.mxu0
      %v933 = vadd.f32 %v344, %v932
      %v934 = vpop.f32.mrf.mxu0
      %v935 = vadd.f32 %v344, %v934
      %936 = vmatmul.bf16.gmra.mxu0 %v590
      %v937 = vpop.f32.mrf.mxu0
      %v938 = vadd.f32 %v344, %v937
      %v939 = vpop.f32.mrf.mxu0
      %v940 = vadd.f32 %v344, %v939
      %941 = vdwg.mxu0
      %v942 = vmax.f32 %v698, 0.0
      %v943 = vmax.f32 %v700, 0.0
      %v944 = vmax.f32 %v703, 0.0
      %v945 = vmax.f32 %v705, 0.0
      %v946 = vmax.f32 %v708, 0.0
      %v947 = vmax.f32 %v710, 0.0
      %v948 = vmax.f32 %v713, 0.0
      %v949 = vmax.f32 %v715, 0.0
      %v950 = vmax.f32 %v718, 0.0
      %v951 = vmax.f32 %v720, 0.0
      %v952 = vmax.f32 %v723, 0.0
      %v953 = vmax.f32 %v725, 0.0
      %v954 = vmax.f32 %v728, 0.0
      %v955 = vmax.f32 %v730, 0.0
      %v956 = vmax.f32 %v733, 0.0
      %v957 = vmax.f32 %v735, 0.0
      %v958 = vmax.f32 %v738, 0.0
      %v959 = vmax.f32 %v740, 0.0
      %v960 = vmax.f32 %v743, 0.0
      %v961 = vmax.f32 %v745, 0.0
      %v962 = vmax.f32 %v748, 0.0
      %v963 = vmax.f32 %v750, 0.0
      %v964 = vmax.f32 %v753, 0.0
      %v965 = vmax.f32 %v755, 0.0
      %v966 = vmax.f32 %v758, 0.0
      %v967 = vmax.f32 %v760, 0.0
      %v968 = vmax.f32 %v763, 0.0
      %v969 = vmax.f32 %v765, 0.0
      %v970 = vmax.f32 %v768, 0.0
      %v971 = vmax.f32 %v770, 0.0
      %v972 = vmax.f32 %v773, 0.0
      %v973 = vmax.f32 %v775, 0.0
      %v974 = vmax.f32 %v778, 0.0
      %v975 = vmax.f32 %v780, 0.0
      %v976 = vmax.f32 %v783, 0.0
      %v977 = vmax.f32 %v785, 0.0
      %v978 = vmax.f32 %v788, 0.0
      %v979 = vmax.f32 %v790, 0.0
      %v980 = vmax.f32 %v793, 0.0
      %v981 = vmax.f32 %v795, 0.0
      %v982 = vmax.f32 %v798, 0.0
      %v983 = vmax.f32 %v800, 0.0
      %v984 = vmax.f32 %v803, 0.0
      %v985 = vmax.f32 %v805, 0.0
      %v986 = vmax.f32 %v808, 0.0
      %v987 = vmax.f32 %v810, 0.0
      %v988 = vmax.f32 %v813, 0.0
      %v989 = vmax.f32 %v815, 0.0
      %v990 = vmax.f32 %v818, 0.0
      %v991 = vmax.f32 %v820, 0.0
      %v992 = vmax.f32 %v823, 0.0
      %v993 = vmax.f32 %v825, 0.0
      %v994 = vmax.f32 %v828, 0.0
      %v995 = vmax.f32 %v830, 0.0
      %v996 = vmax.f32 %v833, 0.0
      %v997 = vmax.f32 %v835, 0.0
      %v998 = vmax.f32 %v838, 0.0
      %v999 = vmax.f32 %v840, 0.0
      %v1000 = vmax.f32 %v843, 0.0
      %v1001 = vmax.f32 %v845, 0.0
      %v1002 = vmax.f32 %v848, 0.0
      %v1003 = vmax.f32 %v850, 0.0
      %v1004 = vmax.f32 %v853, 0.0
      %v1005 = vmax.f32 %v855, 0.0
      %v1006 = vmax.f32 %v858, 0.0
      %v1007 = vmax.f32 %v860, 0.0
      %v1008 = vmax.f32 %v863, 0.0
      %v1009 = vmax.f32 %v865, 0.0
      %v1010 = vmax.f32 %v868, 0.0
      %v1011 = vmax.f32 %v870, 0.0
      %v1012 = vmax.f32 %v873, 0.0
      %v1013 = vmax.f32 %v875, 0.0
      %v1014 = vmax.f32 %v878, 0.0
      %v1015 = vmax.f32 %v880, 0.0
      %v1016 = vmax.f32 %v883, 0.0
      %v1017 = vmax.f32 %v885, 0.0
      %v1018 = vmax.f32 %v888, 0.0
      %v1019 = vmax.f32 %v890, 0.0
      %v1020 = vmax.f32 %v893, 0.0
      %v1021 = vmax.f32 %v895, 0.0
      %v1022 = vmax.f32 %v898, 0.0
      %v1023 = vmax.f32 %v900, 0.0
      %v1024 = vmax.f32 %v903, 0.0
      %v1025 = vmax.f32 %v905, 0.0
      %v1026 = vmax.f32 %v908, 0.0
      %v1027 = vmax.f32 %v910, 0.0
      %v1028 = vmax.f32 %v913, 0.0
      %v1029 = vmax.f32 %v915, 0.0
      %v1030 = vmax.f32 %v918, 0.0
      %v1031 = vmax.f32 %v920, 0.0
      %v1032 = vmax.f32 %v923, 0.0
      %v1033 = vmax.f32 %v925, 0.0
      %v1034 = vmax.f32 %v928, 0.0
      %v1035 = vmax.f32 %v930, 0.0
      %v1036 = vmax.f32 %v933, 0.0
      %v1037 = vmax.f32 %v935, 0.0
      %v1038 = vmax.f32 %v938, 0.0
      %v1039 = vmax.f32 %v940, 0.0
      %v1040 = vpack.c.bf16 %v943, %v942
      %v1041 = vpack.c.bf16 %v945, %v944
      %v1042 = vpack.c.bf16 %v947, %v946
      %v1043 = vpack.c.bf16 %v949, %v948
      %v1044 = vpack.c.bf16 %v951, %v950
      %v1045 = vpack.c.bf16 %v953, %v952
      %v1046 = vpack.c.bf16 %v955, %v954
      %v1047 = vpack.c.bf16 %v957, %v956
      %v1048 = vpack.c.bf16 %v959, %v958
      %v1049 = vpack.c.bf16 %v961, %v960
      %v1050 = vpack.c.bf16 %v963, %v962
      %v1051 = vpack.c.bf16 %v965, %v964
      %v1052 = vpack.c.bf16 %v967, %v966
      %v1053 = vpack.c.bf16 %v969, %v968
      %v1054 = vpack.c.bf16 %v971, %v970
      %v1055 = vpack.c.bf16 %v973, %v972
      %v1056 = vpack.c.bf16 %v975, %v974
      %v1057 = vpack.c.bf16 %v977, %v976
      %v1058 = vpack.c.bf16 %v979, %v978
      %v1059 = vpack.c.bf16 %v981, %v980
      %v1060 = vpack.c.bf16 %v983, %v982
      %v1061 = vpack.c.bf16 %v985, %v984
      %v1062 = vpack.c.bf16 %v987, %v986
      %v1063 = vpack.c.bf16 %v989, %v988
      %v1064 = vpack.c.bf16 %v991, %v990
      %v1065 = vpack.c.bf16 %v993, %v992
      %v1066 = vpack.c.bf16 %v995, %v994
      %v1067 = vpack.c.bf16 %v997, %v996
      %v1068 = vpack.c.bf16 %v999, %v998
      %v1069 = vpack.c.bf16 %v1001, %v1000
      %v1070 = vpack.c.bf16 %v1003, %v1002
      %v1071 = vpack.c.bf16 %v1005, %v1004
      %v1072 = vpack.c.bf16 %v1007, %v1006
      %v1073 = vpack.c.bf16 %v1009, %v1008
      %v1074 = vpack.c.bf16 %v1011, %v1010
      %v1075 = vpack.c.bf16 %v1013, %v1012
      %v1076 = vpack.c.bf16 %v1015, %v1014
      %v1077 = vpack.c.bf16 %v1017, %v1016
      %v1078 = vpack.c.bf16 %v1019, %v1018
      %v1079 = vpack.c.bf16 %v1021, %v1020
      %v1080 = vpack.c.bf16 %v1023, %v1022
      %v1081 = vpack.c.bf16 %v1025, %v1024
      %v1082 = vpack.c.bf16 %v1027, %v1026
      %v1083 = vpack.c.bf16 %v1029, %v1028
      %v1084 = vpack.c.bf16 %v1031, %v1030
      %v1085 = vpack.c.bf16 %v1033, %v1032
      %v1086 = vpack.c.bf16 %v1035, %v1034
      %v1087 = vpack.c.bf16 %v1037, %v1036
      %v1088 = vpack.c.bf16 %v1039, %v1038
      %v1089 = vld [vmem:[%s3] sm:$0xf]
      %v1090 = vld [vmem:[%s3 + $0x4] sm:$0xf]
      %v1091 = vld [vmem:[%s3 + $0x8] sm:$0xf]
      %v1092 = vld [vmem:[%s3 + $0xc] sm:$0xf]
      %v1093 = vld [vmem:[%s3 + $0x10] sm:$0xf]
      %v1094 = vld [vmem:[%s3 + $0x14] sm:$0xf]
      %v1095 = vld [vmem:[%s3 + $0x18] sm:$0xf]
      %v1096 = vld [vmem:[%s3 + $0x1c] sm:$0xf]
      %v1097 = vld [vmem:[%s3 + $0x20] sm:$0xf]
      %v1098 = vld [vmem:[%s3 + $0x24] sm:$0xf]
      %v1099 = vld [vmem:[%s3 + $0x28] sm:$0xf]
      %v1100 = vld [vmem:[%s3 + $0x2c] sm:$0xf]
      %v1101 = vld [vmem:[%s3 + $0x30] sm:$0xf]
      %v1102 = vld [vmem:[%s3 + $0x34] sm:$0xf]
      %v1103 = vld [vmem:[%s3 + $0x38] sm:$0xf]
      %v1104 = vld [vmem:[%s3 + $0x3c] sm:$0xf]
      %v1105 = vld [vmem:[%s4] sm:$0x1]
      %v1107 = vperm.slane %v1105, 0
      %v1125 = vunpack.c.l.b16 %v1089
      %v1126 = vunpack.c.l.b16 %v1090
      %v1127 = vunpack.c.l.b16 %v1091
      %v1128 = vunpack.c.l.b16 %v1092
      %v1129 = vunpack.c.l.b16 %v1093
      %v1130 = vunpack.c.l.b16 %v1094
      %v1131 = vunpack.c.l.b16 %v1095
      %v1132 = vunpack.c.l.b16 %v1096
      %v1133 = vunpack.c.l.b16 %v1097
      %v1134 = vunpack.c.l.b16 %v1098
      %v1135 = vunpack.c.l.b16 %v1099
      %v1136 = vunpack.c.l.b16 %v1100
      %v1137 = vunpack.c.l.b16 %v1101
      %v1138 = vunpack.c.l.b16 %v1102
      %v1139 = vunpack.c.l.b16 %v1103
      %v1140 = vunpack.c.l.b16 %v1104
      %v1141 = vpack.c.b16 %v1126, %v1125
      %v1142 = vpack.c.b16 %v1128, %v1127
      %v1143 = vpack.c.b16 %v1130, %v1129
      %v1144 = vpack.c.b16 %v1132, %v1131
      %v1145 = vpack.c.b16 %v1134, %v1133
      %v1146 = vpack.c.b16 %v1136, %v1135
      %v1147 = vpack.c.b16 %v1138, %v1137
      %v1148 = vpack.c.b16 %v1140, %v1139
      %1157 = vmatpush.bf16.msra.mxu0 %v1148
      %1158 = vmatpush.bf16.msra.mxu0 %v1147
      %1159 = vmatpush.bf16.msra.mxu0 %v1146
      %1160 = vmatpush.bf16.msra.mxu0 %v1145
      %1161 = vmatpush.bf16.msra.mxu0 %v1144
      %1162 = vmatpush.bf16.msra.mxu0 %v1143
      %1163 = vmatpush.bf16.msra.mxu0 %v1142
      %1164 = vmatpush.bf16.msra.mxu0 %v1141
      %1165 = vmatmul.bf16.gmra.mxu0 %v1040
      %v1166 = vpop.f32.mrf.mxu0
      %v1167 = vadd.f32 %v1107, %v1166
      %v1168 = vpop.f32.mrf.mxu0
      %v1169 = vadd.f32 %v1107, %v1168
      %1170 = vmatmul.bf16.gmra.mxu0 %v1041
      %v1171 = vpop.f32.mrf.mxu0
      %v1172 = vadd.f32 %v1107, %v1171
      %v1173 = vpop.f32.mrf.mxu0
      %v1174 = vadd.f32 %v1107, %v1173
      %1175 = vmatmul.bf16.gmra.mxu0 %v1042
      %v1176 = vpop.f32.mrf.mxu0
      %v1177 = vadd.f32 %v1107, %v1176
      %v1178 = vpop.f32.mrf.mxu0
      %v1179 = vadd.f32 %v1107, %v1178
      %1180 = vmatmul.bf16.gmra.mxu0 %v1043
      %v1181 = vpop.f32.mrf.mxu0
      %v1182 = vadd.f32 %v1107, %v1181
      %v1183 = vpop.f32.mrf.mxu0
      %v1184 = vadd.f32 %v1107, %v1183
      %1185 = vmatmul.bf16.gmra.mxu0 %v1044
      %v1186 = vpop.f32.mrf.mxu0
      %v1187 = vadd.f32 %v1107, %v1186
      %v1188 = vpop.f32.mrf.mxu0
      %v1189 = vadd.f32 %v1107, %v1188
      %1190 = vmatmul.bf16.gmra.mxu0 %v1045
      %v1191 = vpop.f32.mrf.mxu0
      %v1192 = vadd.f32 %v1107, %v1191
      %v1193 = vpop.f32.mrf.mxu0
      %v1194 = vadd.f32 %v1107, %v1193
      %1195 = vmatmul.bf16.gmra.mxu0 %v1046
      %v1196 = vpop.f32.mrf.mxu0
      %v1197 = vadd.f32 %v1107, %v1196
      %v1198 = vpop.f32.mrf.mxu0
      %v1199 = vadd.f32 %v1107, %v1198
      %1200 = vmatmul.bf16.gmra.mxu0 %v1047
      %v1201 = vpop.f32.mrf.mxu0
      %v1202 = vadd.f32 %v1107, %v1201
      %v1203 = vpop.f32.mrf.mxu0
      %v1204 = vadd.f32 %v1107, %v1203
      %1205 = vmatmul.bf16.gmra.mxu0 %v1048
      %v1206 = vpop.f32.mrf.mxu0
      %v1207 = vadd.f32 %v1107, %v1206
      %v1208 = vpop.f32.mrf.mxu0
      %v1209 = vadd.f32 %v1107, %v1208
      %1210 = vmatmul.bf16.gmra.mxu0 %v1049
      %v1211 = vpop.f32.mrf.mxu0
      %v1212 = vadd.f32 %v1107, %v1211
      %v1213 = vpop.f32.mrf.mxu0
      %v1214 = vadd.f32 %v1107, %v1213
      %1215 = vmatmul.bf16.gmra.mxu0 %v1050
      %v1216 = vpop.f32.mrf.mxu0
      %v1217 = vadd.f32 %v1107, %v1216
      %v1218 = vpop.f32.mrf.mxu0
      %v1219 = vadd.f32 %v1107, %v1218
      %1220 = vmatmul.bf16.gmra.mxu0 %v1051
      %v1221 = vpop.f32.mrf.mxu0
      %v1222 = vadd.f32 %v1107, %v1221
      %v1223 = vpop.f32.mrf.mxu0
      %v1224 = vadd.f32 %v1107, %v1223
      %1225 = vmatmul.bf16.gmra.mxu0 %v1052
      %v1226 = vpop.f32.mrf.mxu0
      %v1227 = vadd.f32 %v1107, %v1226
      %v1228 = vpop.f32.mrf.mxu0
      %v1229 = vadd.f32 %v1107, %v1228
      %1230 = vmatmul.bf16.gmra.mxu0 %v1053
      %v1231 = vpop.f32.mrf.mxu0
      %v1232 = vadd.f32 %v1107, %v1231
      %v1233 = vpop.f32.mrf.mxu0
      %v1234 = vadd.f32 %v1107, %v1233
      %1235 = vmatmul.bf16.gmra.mxu0 %v1054
      %v1236 = vpop.f32.mrf.mxu0
      %v1237 = vadd.f32 %v1107, %v1236
      %v1238 = vpop.f32.mrf.mxu0
      %v1239 = vadd.f32 %v1107, %v1238
      %1240 = vmatmul.bf16.gmra.mxu0 %v1055
      %v1241 = vpop.f32.mrf.mxu0
      %v1242 = vadd.f32 %v1107, %v1241
      %v1243 = vpop.f32.mrf.mxu0
      %v1244 = vadd.f32 %v1107, %v1243
      %1245 = vmatmul.bf16.gmra.mxu0 %v1056
      %v1246 = vpop.f32.mrf.mxu0
      %v1247 = vadd.f32 %v1107, %v1246
      %v1248 = vpop.f32.mrf.mxu0
      %v1249 = vadd.f32 %v1107, %v1248
      %1250 = vmatmul.bf16.gmra.mxu0 %v1057
      %v1251 = vpop.f32.mrf.mxu0
      %v1252 = vadd.f32 %v1107, %v1251
      %v1253 = vpop.f32.mrf.mxu0
      %v1254 = vadd.f32 %v1107, %v1253
      %1255 = vmatmul.bf16.gmra.mxu0 %v1058
      %v1256 = vpop.f32.mrf.mxu0
      %v1257 = vadd.f32 %v1107, %v1256
      %v1258 = vpop.f32.mrf.mxu0
      %v1259 = vadd.f32 %v1107, %v1258
      %1260 = vmatmul.bf16.gmra.mxu0 %v1059
      %v1261 = vpop.f32.mrf.mxu0
      %v1262 = vadd.f32 %v1107, %v1261
      %v1263 = vpop.f32.mrf.mxu0
      %v1264 = vadd.f32 %v1107, %v1263
      %1265 = vmatmul.bf16.gmra.mxu0 %v1060
      %v1266 = vpop.f32.mrf.mxu0
      %v1267 = vadd.f32 %v1107, %v1266
      %v1268 = vpop.f32.mrf.mxu0
      %v1269 = vadd.f32 %v1107, %v1268
      %1270 = vmatmul.bf16.gmra.mxu0 %v1061
      %v1271 = vpop.f32.mrf.mxu0
      %v1272 = vadd.f32 %v1107, %v1271
      %v1273 = vpop.f32.mrf.mxu0
      %v1274 = vadd.f32 %v1107, %v1273
      %1275 = vmatmul.bf16.gmra.mxu0 %v1062
      %v1276 = vpop.f32.mrf.mxu0
      %v1277 = vadd.f32 %v1107, %v1276
      %v1278 = vpop.f32.mrf.mxu0
      %v1279 = vadd.f32 %v1107, %v1278
      %1280 = vmatmul.bf16.gmra.mxu0 %v1063
      %v1281 = vpop.f32.mrf.mxu0
      %v1282 = vadd.f32 %v1107, %v1281
      %v1283 = vpop.f32.mrf.mxu0
      %v1284 = vadd.f32 %v1107, %v1283
      %1285 = vmatmul.bf16.gmra.mxu0 %v1064
      %v1286 = vpop.f32.mrf.mxu0
      %v1287 = vadd.f32 %v1107, %v1286
      %v1288 = vpop.f32.mrf.mxu0
      %v1289 = vadd.f32 %v1107, %v1288
      %1290 = vmatmul.bf16.gmra.mxu0 %v1065
      %v1291 = vpop.f32.mrf.mxu0
      %v1292 = vadd.f32 %v1107, %v1291
      %v1293 = vpop.f32.mrf.mxu0
      %v1294 = vadd.f32 %v1107, %v1293
      %1295 = vmatmul.bf16.gmra.mxu0 %v1066
      %v1296 = vpop.f32.mrf.mxu0
      %v1297 = vadd.f32 %v1107, %v1296
      %v1298 = vpop.f32.mrf.mxu0
      %v1299 = vadd.f32 %v1107, %v1298
      %1300 = vmatmul.bf16.gmra.mxu0 %v1067
      %v1301 = vpop.f32.mrf.mxu0
      %v1302 = vadd.f32 %v1107, %v1301
      %v1303 = vpop.f32.mrf.mxu0
      %v1304 = vadd.f32 %v1107, %v1303
      %1305 = vmatmul.bf16.gmra.mxu0 %v1068
      %v1306 = vpop.f32.mrf.mxu0
      %v1307 = vadd.f32 %v1107, %v1306
      %v1308 = vpop.f32.mrf.mxu0
      %v1309 = vadd.f32 %v1107, %v1308
      %1310 = vmatmul.bf16.gmra.mxu0 %v1069
      %v1311 = vpop.f32.mrf.mxu0
      %v1312 = vadd.f32 %v1107, %v1311
      %v1313 = vpop.f32.mrf.mxu0
      %v1314 = vadd.f32 %v1107, %v1313
      %1315 = vmatmul.bf16.gmra.mxu0 %v1070
      %v1316 = vpop.f32.mrf.mxu0
      %v1317 = vadd.f32 %v1107, %v1316
      %v1318 = vpop.f32.mrf.mxu0
      %v1319 = vadd.f32 %v1107, %v1318
      %1320 = vmatmul.bf16.gmra.mxu0 %v1071
      %v1321 = vpop.f32.mrf.mxu0
      %v1322 = vadd.f32 %v1107, %v1321
      %v1323 = vpop.f32.mrf.mxu0
      %v1324 = vadd.f32 %v1107, %v1323
      %1325 = vmatmul.bf16.gmra.mxu0 %v1072
      %v1326 = vpop.f32.mrf.mxu0
      %v1327 = vadd.f32 %v1107, %v1326
      %v1328 = vpop.f32.mrf.mxu0
      %v1329 = vadd.f32 %v1107, %v1328
      %1330 = vmatmul.bf16.gmra.mxu0 %v1073
      %v1331 = vpop.f32.mrf.mxu0
      %v1332 = vadd.f32 %v1107, %v1331
      %v1333 = vpop.f32.mrf.mxu0
      %v1334 = vadd.f32 %v1107, %v1333
      %1335 = vmatmul.bf16.gmra.mxu0 %v1074
      %v1336 = vpop.f32.mrf.mxu0
      %v1337 = vadd.f32 %v1107, %v1336
      %v1338 = vpop.f32.mrf.mxu0
      %v1339 = vadd.f32 %v1107, %v1338
      %1340 = vmatmul.bf16.gmra.mxu0 %v1075
      %v1341 = vpop.f32.mrf.mxu0
      %v1342 = vadd.f32 %v1107, %v1341
      %v1343 = vpop.f32.mrf.mxu0
      %v1344 = vadd.f32 %v1107, %v1343
      %1345 = vmatmul.bf16.gmra.mxu0 %v1076
      %v1346 = vpop.f32.mrf.mxu0
      %v1347 = vadd.f32 %v1107, %v1346
      %v1348 = vpop.f32.mrf.mxu0
      %v1349 = vadd.f32 %v1107, %v1348
      %1350 = vmatmul.bf16.gmra.mxu0 %v1077
      %v1351 = vpop.f32.mrf.mxu0
      %v1352 = vadd.f32 %v1107, %v1351
      %v1353 = vpop.f32.mrf.mxu0
      %v1354 = vadd.f32 %v1107, %v1353
      %1355 = vmatmul.bf16.gmra.mxu0 %v1078
      %v1356 = vpop.f32.mrf.mxu0
      %v1357 = vadd.f32 %v1107, %v1356
      %v1358 = vpop.f32.mrf.mxu0
      %v1359 = vadd.f32 %v1107, %v1358
      %1360 = vmatmul.bf16.gmra.mxu0 %v1079
      %v1361 = vpop.f32.mrf.mxu0
      %v1362 = vadd.f32 %v1107, %v1361
      %v1363 = vpop.f32.mrf.mxu0
      %v1364 = vadd.f32 %v1107, %v1363
      %1365 = vmatmul.bf16.gmra.mxu0 %v1080
      %v1366 = vpop.f32.mrf.mxu0
      %v1367 = vadd.f32 %v1107, %v1366
      %v1368 = vpop.f32.mrf.mxu0
      %v1369 = vadd.f32 %v1107, %v1368
      %1370 = vmatmul.bf16.gmra.mxu0 %v1081
      %v1371 = vpop.f32.mrf.mxu0
      %v1372 = vadd.f32 %v1107, %v1371
      %v1373 = vpop.f32.mrf.mxu0
      %v1374 = vadd.f32 %v1107, %v1373
      %1375 = vmatmul.bf16.gmra.mxu0 %v1082
      %v1376 = vpop.f32.mrf.mxu0
      %v1377 = vadd.f32 %v1107, %v1376
      %v1378 = vpop.f32.mrf.mxu0
      %v1379 = vadd.f32 %v1107, %v1378
      %1380 = vmatmul.bf16.gmra.mxu0 %v1083
      %v1381 = vpop.f32.mrf.mxu0
      %v1382 = vadd.f32 %v1107, %v1381
      %v1383 = vpop.f32.mrf.mxu0
      %v1384 = vadd.f32 %v1107, %v1383
      %1385 = vmatmul.bf16.gmra.mxu0 %v1084
      %v1386 = vpop.f32.mrf.mxu0
      %v1387 = vadd.f32 %v1107, %v1386
      %v1388 = vpop.f32.mrf.mxu0
      %v1389 = vadd.f32 %v1107, %v1388
      %1390 = vmatmul.bf16.gmra.mxu0 %v1085
      %v1391 = vpop.f32.mrf.mxu0
      %v1392 = vadd.f32 %v1107, %v1391
      %v1393 = vpop.f32.mrf.mxu0
      %v1394 = vadd.f32 %v1107, %v1393
      %1395 = vmatmul.bf16.gmra.mxu0 %v1086
      %v1396 = vpop.f32.mrf.mxu0
      %v1397 = vadd.f32 %v1107, %v1396
      %v1398 = vpop.f32.mrf.mxu0
      %v1399 = vadd.f32 %v1107, %v1398
      %1400 = vmatmul.bf16.gmra.mxu0 %v1087
      %v1401 = vpop.f32.mrf.mxu0
      %v1402 = vadd.f32 %v1107, %v1401
      %v1403 = vpop.f32.mrf.mxu0
      %v1404 = vadd.f32 %v1107, %v1403
      %1405 = vmatmul.bf16.gmra.mxu0 %v1088
      %v1406 = vpop.f32.mrf.mxu0
      %v1407 = vadd.f32 %v1107, %v1406
      %v1408 = vpop.f32.mrf.mxu0
      %v1409 = vadd.f32 %v1107, %v1408
      %1410 = vdwg.mxu0
      %v1411 = vmax.f32 %v1167, 0.0
      %v1412 = vmax.f32 %v1169, 0.0
      %v1413 = vmax.f32 %v1172, 0.0
      %v1414 = vmax.f32 %v1174, 0.0
      %v1415 = vmax.f32 %v1177, 0.0
      %v1416 = vmax.f32 %v1179, 0.0
      %v1417 = vmax.f32 %v1182, 0.0
      %v1418 = vmax.f32 %v1184, 0.0
      %v1419 = vmax.f32 %v1187, 0.0
      %v1420 = vmax.f32 %v1189, 0.0
      %v1421 = vmax.f32 %v1192, 0.0
      %v1422 = vmax.f32 %v1194, 0.0
      %v1423 = vmax.f32 %v1197, 0.0
      %v1424 = vmax.f32 %v1199, 0.0
      %v1425 = vmax.f32 %v1202, 0.0
      %v1426 = vmax.f32 %v1204, 0.0
      %v1427 = vmax.f32 %v1207, 0.0
      %v1428 = vmax.f32 %v1209, 0.0
      %v1429 = vmax.f32 %v1212, 0.0
      %v1430 = vmax.f32 %v1214, 0.0
      %v1431 = vmax.f32 %v1217, 0.0
      %v1432 = vmax.f32 %v1219, 0.0
      %v1433 = vmax.f32 %v1222, 0.0
      %v1434 = vmax.f32 %v1224, 0.0
      %v1435 = vmax.f32 %v1227, 0.0
      %v1436 = vmax.f32 %v1229, 0.0
      %v1437 = vmax.f32 %v1232, 0.0
      %v1438 = vmax.f32 %v1234, 0.0
      %v1439 = vmax.f32 %v1237, 0.0
      %v1440 = vmax.f32 %v1239, 0.0
      %v1441 = vmax.f32 %v1242, 0.0
      %v1442 = vmax.f32 %v1244, 0.0
      %v1443 = vmax.f32 %v1247, 0.0
      %v1444 = vmax.f32 %v1249, 0.0
      %v1445 = vmax.f32 %v1252, 0.0
      %v1446 = vmax.f32 %v1254, 0.0
      %v1447 = vmax.f32 %v1257, 0.0
      %v1448 = vmax.f32 %v1259, 0.0
      %v1449 = vmax.f32 %v1262, 0.0
      %v1450 = vmax.f32 %v1264, 0.0
      %v1451 = vmax.f32 %v1267, 0.0
      %v1452 = vmax.f32 %v1269, 0.0
      %v1453 = vmax.f32 %v1272, 0.0
      %v1454 = vmax.f32 %v1274, 0.0
      %v1455 = vmax.f32 %v1277, 0.0
      %v1456 = vmax.f32 %v1279, 0.0
      %v1457 = vmax.f32 %v1282, 0.0
      %v1458 = vmax.f32 %v1284, 0.0
      %v1459 = vmax.f32 %v1287, 0.0
      %v1460 = vmax.f32 %v1289, 0.0
      %v1461 = vmax.f32 %v1292, 0.0
      %v1462 = vmax.f32 %v1294, 0.0
      %v1463 = vmax.f32 %v1297, 0.0
      %v1464 = vmax.f32 %v1299, 0.0
      %v1465 = vmax.f32 %v1302, 0.0
      %v1466 = vmax.f32 %v1304, 0.0
      %v1467 = vmax.f32 %v1307, 0.0
      %v1468 = vmax.f32 %v1309, 0.0
      %v1469 = vmax.f32 %v1312, 0.0
      %v1470 = vmax.f32 %v1314, 0.0
      %v1471 = vmax.f32 %v1317, 0.0
      %v1472 = vmax.f32 %v1319, 0.0
      %v1473 = vmax.f32 %v1322, 0.0
      %v1474 = vmax.f32 %v1324, 0.0
      %v1475 = vmax.f32 %v1327, 0.0
      %v1476 = vmax.f32 %v1329, 0.0
      %v1477 = vmax.f32 %v1332, 0.0
      %v1478 = vmax.f32 %v1334, 0.0
      %v1479 = vmax.f32 %v1337, 0.0
      %v1480 = vmax.f32 %v1339, 0.0
      %v1481 = vmax.f32 %v1342, 0.0
      %v1482 = vmax.f32 %v1344, 0.0
      %v1483 = vmax.f32 %v1347, 0.0
      %v1484 = vmax.f32 %v1349, 0.0
      %v1485 = vmax.f32 %v1352, 0.0
      %v1486 = vmax.f32 %v1354, 0.0
      %v1487 = vmax.f32 %v1357, 0.0
      %v1488 = vmax.f32 %v1359, 0.0
      %v1489 = vmax.f32 %v1362, 0.0
      %v1490 = vmax.f32 %v1364, 0.0
      %v1491 = vmax.f32 %v1367, 0.0
      %v1492 = vmax.f32 %v1369, 0.0
      %v1493 = vmax.f32 %v1372, 0.0
      %v1494 = vmax.f32 %v1374, 0.0
      %v1495 = vmax.f32 %v1377, 0.0
      %v1496 = vmax.f32 %v1379, 0.0
      %v1497 = vmax.f32 %v1382, 0.0
      %v1498 = vmax.f32 %v1384, 0.0
      %v1499 = vmax.f32 %v1387, 0.0
      %v1500 = vmax.f32 %v1389, 0.0
      %v1501 = vmax.f32 %v1392, 0.0
      %v1502 = vmax.f32 %v1394, 0.0
      %v1503 = vmax.f32 %v1397, 0.0
      %v1504 = vmax.f32 %v1399, 0.0
      %v1505 = vmax.f32 %v1402, 0.0
      %v1506 = vmax.f32 %v1404, 0.0
      %v1507 = vmax.f32 %v1407, 0.0
      %v1508 = vmax.f32 %v1409, 0.0
      %1509 = vst [vmem:[%s226] sm:$0xff] %v1411
      %1510 = vst [vmem:[%s226 + $0x8] sm:$0xff] %v1412
      %1511 = vst [vmem:[%s226 + $0x10] sm:$0xff] %v1413
      %1512 = vst [vmem:[%s226 + $0x18] sm:$0xff] %v1414
      %1513 = vst [vmem:[%s226 + $0x20] sm:$0xff] %v1415
      %1514 = vst [vmem:[%s226 + $0x28] sm:$0xff] %v1416
      %1515 = vst [vmem:[%s226 + $0x30] sm:$0xff] %v1417
      %1516 = vst [vmem:[%s226 + $0x38] sm:$0xff] %v1418
      %1517 = vst [vmem:[%s226 + $0x40] sm:$0xff] %v1419
      %1518 = vst [vmem:[%s226 + $0x48] sm:$0xff] %v1420
      %1519 = vst [vmem:[%s226 + $0x50] sm:$0xff] %v1421
      %1520 = vst [vmem:[%s226 + $0x58] sm:$0xff] %v1422
      %1521 = vst [vmem:[%s226 + $0x60] sm:$0xff] %v1423
      %1522 = vst [vmem:[%s226 + $0x68] sm:$0xff] %v1424
      %1523 = vst [vmem:[%s226 + $0x70] sm:$0xff] %v1425
      %1524 = vst [vmem:[%s226 + $0x78] sm:$0xff] %v1426
      %1525 = vst [vmem:[%s226 + $0x80] sm:$0xff] %v1427
      %1526 = vst [vmem:[%s226 + $0x88] sm:$0xff] %v1428
      %1527 = vst [vmem:[%s226 + $0x90] sm:$0xff] %v1429
      %1528 = vst [vmem:[%s226 + $0x98] sm:$0xff] %v1430
      %1529 = vst [vmem:[%s226 + $0xa0] sm:$0xff] %v1431
      %1530 = vst [vmem:[%s226 + $0xa8] sm:$0xff] %v1432
      %1531 = vst [vmem:[%s226 + $0xb0] sm:$0xff] %v1433
      %1532 = vst [vmem:[%s226 + $0xb8] sm:$0xff] %v1434
      %1533 = vst [vmem:[%s226 + $0xc0] sm:$0xff] %v1435
      %1534 = vst [vmem:[%s226 + $0xc8] sm:$0xff] %v1436
      %1535 = vst [vmem:[%s226 + $0xd0] sm:$0xff] %v1437
      %1536 = vst [vmem:[%s226 + $0xd8] sm:$0xff] %v1438
      %1537 = vst [vmem:[%s226 + $0xe0] sm:$0xff] %v1439
      %1538 = vst [vmem:[%s226 + $0xe8] sm:$0xff] %v1440
      %1539 = vst [vmem:[%s226 + $0xf0] sm:$0xff] %v1441
      %1540 = vst [vmem:[%s226 + $0xf8] sm:$0xff] %v1442
      %1541 = vst [vmem:[%s226 + $0x100] sm:$0xff] %v1443
      %1542 = vst [vmem:[%s226 + $0x108] sm:$0xff] %v1444
      %1543 = vst [vmem:[%s226 + $0x110] sm:$0xff] %v1445
      %1544 = vst [vmem:[%s226 + $0x118] sm:$0xff] %v1446
      %1545 = vst [vmem:[%s226 + $0x120] sm:$0xff] %v1447
      %1546 = vst [vmem:[%s226 + $0x128] sm:$0xff] %v1448
      %1547 = vst [vmem:[%s226 + $0x130] sm:$0xff] %v1449
      %1548 = vst [vmem:[%s226 + $0x138] sm:$0xff] %v1450
      %1549 = vst [vmem:[%s226 + $0x140] sm:$0xff] %v1451
      %1550 = vst [vmem:[%s226 + $0x148] sm:$0xff] %v1452
      %1551 = vst [vmem:[%s226 + $0x150] sm:$0xff] %v1453
      %1552 = vst [vmem:[%s226 + $0x158] sm:$0xff] %v1454
      %1553 = vst [vmem:[%s226 + $0x160] sm:$0xff] %v1455
      %1554 = vst [vmem:[%s226 + $0x168] sm:$0xff] %v1456
      %1555 = vst [vmem:[%s226 + $0x170] sm:$0xff] %v1457
      %1556 = vst [vmem:[%s226 + $0x178] sm:$0xff] %v1458
      %1557 = vst [vmem:[%s226 + $0x180] sm:$0xff] %v1459
      %1558 = vst [vmem:[%s226 + $0x188] sm:$0xff] %v1460
      %1559 = vst [vmem:[%s226 + $0x190] sm:$0xff] %v1461
      %1560 = vst [vmem:[%s226 + $0x198] sm:$0xff] %v1462
      %1561 = vst [vmem:[%s226 + $0x1a0] sm:$0xff] %v1463
      %1562 = vst [vmem:[%s226 + $0x1a8] sm:$0xff] %v1464
      %1563 = vst [vmem:[%s226 + $0x1b0] sm:$0xff] %v1465
      %1564 = vst [vmem:[%s226 + $0x1b8] sm:$0xff] %v1466
      %1565 = vst [vmem:[%s226 + $0x1c0] sm:$0xff] %v1467
      %1566 = vst [vmem:[%s226 + $0x1c8] sm:$0xff] %v1468
      %1567 = vst [vmem:[%s226 + $0x1d0] sm:$0xff] %v1469
      %1568 = vst [vmem:[%s226 + $0x1d8] sm:$0xff] %v1470
      %1569 = vst [vmem:[%s226 + $0x1e0] sm:$0xff] %v1471
      %1570 = vst [vmem:[%s226 + $0x1e8] sm:$0xff] %v1472
      %1571 = vst [vmem:[%s226 + $0x1f0] sm:$0xff] %v1473
      %1572 = vst [vmem:[%s226 + $0x1f8] sm:$0xff] %v1474
      %1573 = vst [vmem:[%s226 + $0x200] sm:$0xff] %v1475
      %1574 = vst [vmem:[%s226 + $0x208] sm:$0xff] %v1476
      %1575 = vst [vmem:[%s226 + $0x210] sm:$0xff] %v1477
      %1576 = vst [vmem:[%s226 + $0x218] sm:$0xff] %v1478
      %1577 = vst [vmem:[%s226 + $0x220] sm:$0xff] %v1479
      %1578 = vst [vmem:[%s226 + $0x228] sm:$0xff] %v1480
      %1579 = vst [vmem:[%s226 + $0x230] sm:$0xff] %v1481
      %1580 = vst [vmem:[%s226 + $0x238] sm:$0xff] %v1482
      %1581 = vst [vmem:[%s226 + $0x240] sm:$0xff] %v1483
      %1582 = vst [vmem:[%s226 + $0x248] sm:$0xff] %v1484
      %1583 = vst [vmem:[%s226 + $0x250] sm:$0xff] %v1485
      %1584 = vst [vmem:[%s226 + $0x258] sm:$0xff] %v1486
      %1585 = vst [vmem:[%s226 + $0x260] sm:$0xff] %v1487
      %1586 = vst [vmem:[%s226 + $0x268] sm:$0xff] %v1488
      %1587 = vst [vmem:[%s226 + $0x270] sm:$0xff] %v1489
      %1588 = vst [vmem:[%s226 + $0x278] sm:$0xff] %v1490
      %1589 = vst [vmem:[%s226 + $0x280] sm:$0xff] %v1491
      %1590 = vst [vmem:[%s226 + $0x288] sm:$0xff] %v1492
      %1591 = vst [vmem:[%s226 + $0x290] sm:$0xff] %v1493
      %1592 = vst [vmem:[%s226 + $0x298] sm:$0xff] %v1494
      %1593 = vst [vmem:[%s226 + $0x2a0] sm:$0xff] %v1495
      %1594 = vst [vmem:[%s226 + $0x2a8] sm:$0xff] %v1496
      %1595 = vst [vmem:[%s226 + $0x2b0] sm:$0xff] %v1497
      %1596 = vst [vmem:[%s226 + $0x2b8] sm:$0xff] %v1498
      %1597 = vst [vmem:[%s226 + $0x2c0] sm:$0xff] %v1499
      %1598 = vst [vmem:[%s226 + $0x2c8] sm:$0xff] %v1500
      %1599 = vst [vmem:[%s226 + $0x2d0] sm:$0xff] %v1501
      %1600 = vst [vmem:[%s226 + $0x2d8] sm:$0xff] %v1502
      %1601 = vst [vmem:[%s226 + $0x2e0] sm:$0xff] %v1503
      %1602 = vst [vmem:[%s226 + $0x2e8] sm:$0xff] %v1504
      %1603 = vst [vmem:[%s226 + $0x2f0] sm:$0xff] %v1505
      %1604 = vst [vmem:[%s226 + $0x2f8] sm:$0xff] %v1506
      %1605 = vst [vmem:[%s226 + $0x300] sm:$0xff] %v1507
      %1606 = vst [vmem:[%s226 + $0x308] sm:$0xff] %v1508
      %s1607 = smul.u32 98, %s16
      %p1608 = scmp.lt.s32.totalorder %s1607, 195
      %s1609 = scalar_select %p1608, %s1607, 195
      %s1610 = smul.addr %s1609, 8
      %s1611 = scalar_lea.vmem %s5, %s1610
      // Predicated region
      $region41: #{net_b_forward.5} parent=39 // pred_check
        %p1612 = pneg %p144
      $region42: #{net_b_forward.5} parent=39 // pred_check_branch
        %1614 = sbr.rel (%p1612) target = $region44
      $region43: #{net_b_forward.5} parent=39 // pred_region
        %s1615 = smul.u32 98, %s16
      $region44: #{net_b_forward.5} parent=39 // pred_fallthru
        _
    $region40: #{net_b_forward.5} parent=5 // pred_fallthru
      _
    %p1616 = scmp.le.s32.totalorder 2, %s11
    // Predicated region
    $region45: #{net_b_forward.5} parent=5 // pred_check
      %p1617 = pneg %p1616
    $region46: #{net_b_forward.5} parent=5 // pred_check_branch
      %1619 = sbr.rel (%p1617) target = $region48
    $region47: #{net_b_forward.5} parent=5 // pred_region
      %s1620 = ssub.s32 %s11, 2
      // Predicated region
      $region49: #{net_b_forward.5} parent=47 // pred_check
        %p1621 = pneg %p150
      $region50: #{net_b_forward.5} parent=47 // pred_check_branch
        %1623 = sbr.rel (%p1621) target = $region52
      $region51: #{net_b_forward.5} parent=47 // pred_region
        %s1624 = smul.u32 98, %s17
        %p1625 = scmp.lt.s32.totalorder %s1624, 195
        %s1626 = scalar_select %p1625, %s1624, 195
        %s1627 = smul.addr %s1626, 8
        %s1628 = scalar_lea.vmem %s5, %s1627
      $region52: #{net_b_forward.5} parent=47 // pred_fallthru
        _
    $region48: #{net_b_forward.5} parent=5 // pred_fallthru
      _
  $region6: #{net_b_forward.5} parent=0 // loop_footer
    %s15 = sadd.s32 1, %s11
  $region7: #{net_b_forward.5} parent=0 // loop_footer_branch
    %10 = sbr.rel target = $region3
  $region8: #{net_b_forward.5} parent=0 // loop_exit
    _

// kernel: net_b_forward.6
$region0: #{net_b_forward.6}
  #allocation0 [shape = 'u32[]', space=smem, size = 0x4, offset = 0x4, fixed_abs, tag = 'smem constant byte address 0x4 - core index']
  #allocation1 [shape = 'u32[72,128]{1,0:T(1,128)}', space=vmem, size = 0x9000, scoped, tag = 'internal scratch']
  %s0 = inlined_call_operand.vmem [shape: f32[2,28,14,256], index: 0, kind: input, shape index: {}]
  %s1 = inlined_call_operand.vmem [shape: f32[2,13,13,128], index: 1, kind: output, shape index: {}]
  %s2 = sld [smem:[#allocation0]]
  $region14: #{net_b_forward.6} parent=0
    _
  %s4 = ssub.s32 1, %s2
  %s5 = scalar_select 0, %s4, %s2
  // Predicated region
  $region2: #{net_b_forward.6} parent=0 // pred_check
    _
  $region3: #{net_b_forward.6} parent=0 // pred_check_branch
    %7 = sbr.rel (0) target = $region5
  $region4: #{net_b_forward.6} parent=0 // pred_region
    _
  $region5: #{net_b_forward.6} parent=0 // pred_fallthru
    _
  %v8 = vld [vmem:[%s0] sm:$0xff]
  %v9 = vld [vmem:[%s0 + $0x8] sm:$0xff]
  %v10 = vld [vmem:[%s0 + $0x10] sm:$0x3f]
  %v11 = vld [vmem:[%s0 + $0x18] sm:$0x3f]
  %v12 = vld [vmem:[%s0 + $0x20] sm:$0xff]
  %v13 = vld [vmem:[%s0 + $0x28] sm:$0xff]
  %v14 = vld [vmem:[%s0 + $0x30] sm:$0x3f]
  %v15 = vld [vmem:[%s0 + $0x38] sm:$0x3f]
  %v16 = vld [vmem:[%s0 + $0x40] sm:$0xff]
  %v17 = vld [vmem:[%s0 + $0x48] sm:$0xff]
  %v18 = vld [vmem:[%s0 + $0x50] sm:$0x3f]
  %v19 = vld [vmem:[%s0 + $0x58] sm:$0x3f]
  %v20 = vld [vmem:[%s0 + $0x60] sm:$0xff]
  %v21 = vld [vmem:[%s0 + $0x68] sm:$0xff]
  %v22 = vld [vmem:[%s0 + $0x70] sm:$0x3f]
  %v23 = vld [vmem:[%s0 + $0x78] sm:$0x3f]
  %v24 = vld [vmem:[%s0 + $0x80] sm:$0xff]
  %v25 = vld [vmem:[%s0 + $0x88] sm:$0xff]
  %v26 = vld [vmem:[%s0 + $0x90] sm:$0x3f]
  %v27 = vld [vmem:[%s0 + $0x98] sm:$0x3f]
  %v28 = vld [vmem:[%s0 + $0xa0] sm:$0xff]
  %v29 = vld [vmem:[%s0 + $0xa8] sm:$0xff]
  %v30 = vld [vmem:[%s0 + $0xb0] sm:$0x3f]
  %v31 = vld [vmem:[%s0 + $0xb8] sm:$0x3f]
  %v32 = vld [vmem:[%s0 + $0xc0] sm:$0xff]
  %v33 = vld [vmem:[%s0 + $0xc8] sm:$0xff]
  %v34 = vld [vmem:[%s0 + $0xd0] sm:$0x3f]
  %v35 = vld [vmem:[%s0 + $0xd8] sm:$0x3f]
  %v36 = vld [vmem:[%s0 + $0xe0] sm:$0xff]
  %v37 = vld [vmem:[%s0 + $0xe8] sm:$0xff]
  %v38 = vld [vmem:[%s0 + $0xf0] sm:$0x3f]
  %v39 = vld [vmem:[%s0 + $0xf8] sm:$0x3f]
  %v40 = vld [vmem:[%s0 + $0x100] sm:$0xff]
  %v41 = vld [vmem:[%s0 + $0x108] sm:$0xff]
  %v42 = vld [vmem:[%s0 + $0x110] sm:$0x3f]
  %v43 = vld [vmem:[%s0 + $0x118] sm:$0x3f]
  %v44 = vld [vmem:[%s0 + $0x120] sm:$0xff]
  %v45 = vld [vmem:[%s0 + $0x128] sm:$0xff]
  %v46 = vld [vmem:[%s0 + $0x130] sm:$0x3f]
  %v47 = vld [vmem:[%s0 + $0x138] sm:$0x3f]
  %v48 = vld [vmem:[%s0 + $0x140] sm:$0xff]
  %v49 = vld [vmem:[%s0 + $0x148] sm:$0xff]
  %v50 = vld [vmem:[%s0 + $0x150] sm:$0x3f]
  %v51 = vld [vmem:[%s0 + $0x158] sm:$0x3f]
  %v52 = vld [vmem:[%s0 + $0x160] sm:$0xff]
  %v53 = vld [vmem:[%s0 + $0x168] sm:$0xff]
  %v54 = vld [vmem:[%s0 + $0x170] sm:$0x3f]
  %v55 = vld [vmem:[%s0 + $0x178] sm:$0x3f]
  %v56 = vld [vmem:[%s0 + $0x180] sm:$0xff]
  %v57 = vld [vmem:[%s0 + $0x188] sm:$0xff]
  %v58 = vld [vmem:[%s0 + $0x190] sm:$0x3f]
  %v59 = vld [vmem:[%s0 + $0x198] sm:$0x3f]
  %v60 = vld [vmem:[%s0 + $0x1a0] sm:$0xff]
  %v61 = vld [vmem:[%s0 + $0x1a8] sm:$0xff]
  %v62 = vld [vmem:[%s0 + $0x1b0] sm:$0x3f]
  %v63 = vld [vmem:[%s0 + $0x1b8] sm:$0x3f]
  %v64 = vld [vmem:[%s0 + $0x1c0] sm:$0xff]
  %v65 = vld [vmem:[%s0 + $0x1c8] sm:$0xff]
  %v66 = vld [vmem:[%s0 + $0x1d0] sm:$0x3f]
  %v67 = vld [vmem:[%s0 + $0x1d8] sm:$0x3f]
  %v68 = vld [vmem:[%s0 + $0x1e0] sm:$0xff]
  %v69 = vld [vmem:[%s0 + $0x1e8] sm:$0xff]
  %v70 = vld [vmem:[%s0 + $0x1f0] sm:$0x3f]
  %v71 = vld [vmem:[%s0 + $0x1f8] sm:$0x3f]
  %v72 = vld [vmem:[%s0 + $0x200] sm:$0xff]
  %v73 = vld [vmem:[%s0 + $0x208] sm:$0xff]
  %v74 = vld [vmem:[%s0 + $0x210] sm:$0x3f]
  %v75 = vld [vmem:[%s0 + $0x218] sm:$0x3f]
  %v76 = vld [vmem:[%s0 + $0x220] sm:$0xff]
  %v77 = vld [vmem:[%s0 + $0x228] sm:$0xff]
  %v78 = vld [vmem:[%s0 + $0x230] sm:$0x3f]
  %v79 = vld [vmem:[%s0 + $0x238] sm:$0x3f]
  %v80 = vld [vmem:[%s0 + $0x240] sm:$0xff]
  %v81 = vld [vmem:[%s0 + $0x248] sm:$0xff]
  %v82 = vld [vmem:[%s0 + $0x250] sm:$0x3f]
  %v83 = vld [vmem:[%s0 + $0x258] sm:$0x3f]
  %v84 = vld [vmem:[%s0 + $0x260] sm:$0xff]
  %v85 = vld [vmem:[%s0 + $0x268] sm:$0xff]
  %v86 = vld [vmem:[%s0 + $0x270] sm:$0x3f]
  %v87 = vld [vmem:[%s0 + $0x278] sm:$0x3f]
  %v88 = vld [vmem:[%s0 + $0x280] sm:$0xff]
  %v89 = vld [vmem:[%s0 + $0x288] sm:$0xff]
  %v90 = vld [vmem:[%s0 + $0x290] sm:$0x3f]
  %v91 = vld [vmem:[%s0 + $0x298] sm:$0x3f]
  %v92 = vld [vmem:[%s0 + $0x2a0] sm:$0xff]
  %v93 = vld [vmem:[%s0 + $0x2a8] sm:$0xff]
  %v94 = vld [vmem:[%s0 + $0x2b0] sm:$0x3f]
  %v95 = vld [vmem:[%s0 + $0x2b8] sm:$0x3f]
  %v96 = vld [vmem:[%s0 + $0x2c0] sm:$0xff]
  %v97 = vld [vmem:[%s0 + $0x2c8] sm:$0xff]
  %v98 = vld [vmem:[%s0 + $0x2d0] sm:$0x3f]
  %v99 = vld [vmem:[%s0 + $0x2d8] sm:$0x3f]
  %v100 = vld [vmem:[%s0 + $0x2e0] sm:$0xff]
  %v101 = vld [vmem:[%s0 + $0x2e8] sm:$0xff]
  %v102 = vld [vmem:[%s0 + $0x2f0] sm:$0x3f]
  %v103 = vld [vmem:[%s0 + $0x2f8] sm:$0x3f]
  %v104 = vld [vmem:[%s0 + $0x300] sm:$0xff]
  %v105 = vld [vmem:[%s0 + $0x308] sm:$0xff]
  %v106 = vld [vmem:[%s0 + $0x310] sm:$0x3f]
  %v107 = vld [vmem:[%s0 + $0x318] sm:$0x3f]
  %v108 = vld [vmem:[%s0 + $0x320] sm:$0xff]
  %v109 = vld [vmem:[%s0 + $0x328] sm:$0xff]
  %v110 = vld [vmem:[%s0 + $0x330] sm:$0x3f]
  %v111 = vld [vmem:[%s0 + $0x338] sm:$0x3f]
  %v112 = vld [vmem:[%s0 + $0x340] sm:$0xff]
  %v113 = vld [vmem:[%s0 + $0x348] sm:$0xff]
  %v114 = vld [vmem:[%s0 + $0x350] sm:$0x3f]
  %v115 = vld [vmem:[%s0 + $0x358] sm:$0x3f]
  %v116 = vld [vmem:[%s0 + $0x380] sm:$0xff]
  %v117 = vld [vmem:[%s0 + $0x388] sm:$0xff]
  %v118 = vld [vmem:[%s0 + $0x390] sm:$0x3f]
  %v119 = vld [vmem:[%s0 + $0x398] sm:$0x3f]
  %v120 = vld [vmem:[%s0 + $0x3a0] sm:$0xff]
  %v121 = vld [vmem:[%s0 + $0x3a8] sm:$0xff]
  %v122 = vld [vmem:[%s0 + $0x3b0] sm:$0x3f]
  %v123 = vld [vmem:[%s0 + $0x3b8] sm:$0x3f]
  %v124 = vld [vmem:[%s0 + $0x3c0] sm:$0xff]
  %v125 = vld [vmem:[%s0 + $0x3c8] sm:$0xff]
  %v126 = vld [vmem:[%s0 + $0x3d0] sm:$0x3f]
  %v127 = vld [vmem:[%s0 + $0x3d8] sm:$0x3f]
  %v128 = vld [vmem:[%s0 + $0x3e0] sm:$0xff]
  %v129 = vld [vmem:[%s0 + $0x3e8] sm:$0xff]
  %v130 = vld [vmem:[%s0 + $0x3f0] sm:$0x3f]
  %v131 = vld [vmem:[%s0 + $0x3f8] sm:$0x3f]
  %v132 = vld [vmem:[%s0 + $0x400] sm:$0xff]
  %v133 = vld [vmem:[%s0 + $0x408] sm:$0xff]
  %v134 = vld [vmem:[%s0 + $0x410] sm:$0x3f]
  %v135 = vld [vmem:[%s0 + $0x418] sm:$0x3f]
  %v136 = vld [vmem:[%s0 + $0x420] sm:$0xff]
  %v137 = vld [vmem:[%s0 + $0x428] sm:$0xff]
  %v138 = vld [vmem:[%s0 + $0x430] sm:$0x3f]
  %v139 = vld [vmem:[%s0 + $0x438] sm:$0x3f]
  %v140 = vld [vmem:[%s0 + $0x440] sm:$0xff]
  %v141 = vld [vmem:[%s0 + $0x448] sm:$0xff]
  %v142 = vld [vmem:[%s0 + $0x450] sm:$0x3f]
  %v143 = vld [vmem:[%s0 + $0x458] sm:$0x3f]
  %v144 = vld [vmem:[%s0 + $0x460] sm:$0xff]
  %v145 = vld [vmem:[%s0 + $0x468] sm:$0xff]
  %v146 = vld [vmem:[%s0 + $0x470] sm:$0x3f]
  %v147 = vld [vmem:[%s0 + $0x478] sm:$0x3f]
  %v148 = vld [vmem:[%s0 + $0x480] sm:$0xff]
  %v149 = vld [vmem:[%s0 + $0x488] sm:$0xff]
  %v150 = vld [vmem:[%s0 + $0x490] sm:$0x3f]
  %v151 = vld [vmem:[%s0 + $0x498] sm:$0x3f]
  %v152 = vld [vmem:[%s0 + $0x4a0] sm:$0xff]
  %v153 = vld [vmem:[%s0 + $0x4a8] sm:$0xff]
  %v154 = vld [vmem:[%s0 + $0x4b0] sm:$0x3f]
  %v155 = vld [vmem:[%s0 + $0x4b8] sm:$0x3f]
  %v156 = vld [vmem:[%s0 + $0x4c0] sm:$0xff]
  %v157 = vld [vmem:[%s0 + $0x4c8] sm:$0xff]
  %v158 = vld [vmem:[%s0 + $0x4d0] sm:$0x3f]
  %v159 = vld [vmem:[%s0 + $0x4d8] sm:$0x3f]
  %v160 = vld [vmem:[%s0 + $0x4e0] sm:$0xff]
  %v161 = vld [vmem:[%s0 + $0x4e8] sm:$0xff]
  %v162 = vld [vmem:[%s0 + $0x4f0] sm:$0x3f]
  %v163 = vld [vmem:[%s0 + $0x4f8] sm:$0x3f]
  %v164 = vld [vmem:[%s0 + $0x500] sm:$0xff]
  %v165 = vld [vmem:[%s0 + $0x508] sm:$0xff]
  %v166 = vld [vmem:[%s0 + $0x510] sm:$0x3f]
  %v167 = vld [vmem:[%s0 + $0x518] sm:$0x3f]
  %v168 = vld [vmem:[%s0 + $0x520] sm:$0xff]
  %v169 = vld [vmem:[%s0 + $0x528] sm:$0xff]
  %v170 = vld [vmem:[%s0 + $0x530] sm:$0x3f]
  %v171 = vld [vmem:[%s0 + $0x538] sm:$0x3f]
  %v172 = vld [vmem:[%s0 + $0x540] sm:$0xff]
  %v173 = vld [vmem:[%s0 + $0x548] sm:$0xff]
  %v174 = vld [vmem:[%s0 + $0x550] sm:$0x3f]
  %v175 = vld [vmem:[%s0 + $0x558] sm:$0x3f]
  %v176 = vld [vmem:[%s0 + $0x560] sm:$0xff]
  %v177 = vld [vmem:[%s0 + $0x568] sm:$0xff]
  %v178 = vld [vmem:[%s0 + $0x570] sm:$0x3f]
  %v179 = vld [vmem:[%s0 + $0x578] sm:$0x3f]
  %v180 = vld [vmem:[%s0 + $0x580] sm:$0xff]
  %v181 = vld [vmem:[%s0 + $0x588] sm:$0xff]
  %v182 = vld [vmem:[%s0 + $0x590] sm:$0x3f]
  %v183 = vld [vmem:[%s0 + $0x598] sm:$0x3f]
  %v184 = vld [vmem:[%s0 + $0x5a0] sm:$0xff]
  %v185 = vld [vmem:[%s0 + $0x5a8] sm:$0xff]
  %v186 = vld [vmem:[%s0 + $0x5b0] sm:$0x3f]
  %v187 = vld [vmem:[%s0 + $0x5b8] sm:$0x3f]
  %v188 = vld [vmem:[%s0 + $0x5c0] sm:$0xff]
  %v189 = vld [vmem:[%s0 + $0x5c8] sm:$0xff]
  %v190 = vld [vmem:[%s0 + $0x5d0] sm:$0x3f]
  %v191 = vld [vmem:[%s0 + $0x5d8] sm:$0x3f]
  %v192 = vld [vmem:[%s0 + $0x5e0] sm:$0xff]
  %v193 = vld [vmem:[%s0 + $0x5e8] sm:$0xff]
  %v194 = vld [vmem:[%s0 + $0x5f0] sm:$0x3f]
  %v195 = vld [vmem:[%s0 + $0x5f8] sm:$0x3f]
  %v196 = vld [vmem:[%s0 + $0x600] sm:$0xff]
  %v197 = vld [vmem:[%s0 + $0x608] sm:$0xff]
  %v198 = vld [vmem:[%s0 + $0x610] sm:$0x3f]
  %v199 = vld [vmem:[%s0 + $0x618] sm:$0x3f]
  %v200 = vld [vmem:[%s0 + $0x620] sm:$0xff]
  %v201 = vld [vmem:[%s0 + $0x628] sm:$0xff]
  %v202 = vld [vmem:[%s0 + $0x630] sm:$0x3f]
  %v203 = vld [vmem:[%s0 + $0x638] sm:$0x3f]
  %v204 = vld [vmem:[%s0 + $0x640] sm:$0xff]
  %v205 = vld [vmem:[%s0 + $0x648] sm:$0xff]
  %v206 = vld [vmem:[%s0 + $0x650] sm:$0x3f]
  %v207 = vld [vmem:[%s0 + $0x658] sm:$0x3f]
  %v208 = vld [vmem:[%s0 + $0x660] sm:$0xff]
  %v209 = vld [vmem:[%s0 + $0x668] sm:$0xff]
  %v210 = vld [vmem:[%s0 + $0x670] sm:$0x3f]
  %v211 = vld [vmem:[%s0 + $0x678] sm:$0x3f]
  %v212 = vld [vmem:[%s0 + $0x680] sm:$0xff]
  %v213 = vld [vmem:[%s0 + $0x688] sm:$0xff]
  %v214 = vld [vmem:[%s0 + $0x690] sm:$0x3f]
  %v215 = vld [vmem:[%s0 + $0x698] sm:$0x3f]
  %v216 = vld [vmem:[%s0 + $0x6a0] sm:$0xff]
  %v217 = vld [vmem:[%s0 + $0x6a8] sm:$0xff]
  %v218 = vld [vmem:[%s0 + $0x6b0] sm:$0x3f]
  %v219 = vld [vmem:[%s0 + $0x6b8] sm:$0x3f]
  %v220 = vld [vmem:[%s0 + $0x6c0] sm:$0xff]
  %v221 = vld [vmem:[%s0 + $0x6c8] sm:$0xff]
  %v222 = vld [vmem:[%s0 + $0x6d0] sm:$0x3f]
  %v223 = vld [vmem:[%s0 + $0x6d8] sm:$0x3f]
  %v224 = vmax.f32 %v8, %v9
  %v225 = vmax.f32 %v10, %v11
  %v226 = vmax.f32 %v12, %v13
  %v227 = vmax.f32 %v14, %v15
  %v228 = vmax.f32 %v16, %v17
  %v229 = vmax.f32 %v18, %v19
  %v230 = vmax.f32 %v20, %v21
  %v231 = vmax.f32 %v22, %v23
  %v232 = vmax.f32 %v24, %v25
  %v233 = vmax.f32 %v26, %v27
  %v234 = vmax.f32 %v28, %v29
  %v235 = vmax.f32 %v30, %v31
  %v236 = vmax.f32 %v32, %v33
  %v237 = vmax.f32 %v34, %v35
  %v238 = vmax.f32 %v36, %v37
  %v239 = vmax.f32 %v38, %v39
  %v240 = vmax.f32 %v40, %v41
  %v241 = vmax.f32 %v42, %v43
  %v242 = vmax.f32 %v44, %v45
  %v243 = vmax.f32 %v46, %v47
  %v244 = vmax.f32 %v48, %v49
  %v245 = vmax.f32 %v50, %v51
  %v246 = vmax.f32 %v52, %v53
  %v247 = vmax.f32 %v54, %v55
  %v248 = vmax.f32 %v56, %v57
  %v249 = vmax.f32 %v58, %v59
  %v250 = vmax.f32 %v60, %v61
  %v251 = vmax.f32 %v62, %v63
  %v252 = vmax.f32 %v64, %v65
  %v253 = vmax.f32 %v66, %v67
  %v254 = vmax.f32 %v68, %v69
  %v255 = vmax.f32 %v70, %v71
  %v256 = vmax.f32 %v72, %v73
  %v257 = vmax.f32 %v74, %v75
  %v258 = vmax.f32 %v76, %v77
  %v259 = vmax.f32 %v78, %v79
  %v260 = vmax.f32 %v80, %v81
  %v261 = vmax.f32 %v82, %v83
  %v262 = vmax.f32 %v84, %v85
  %v263 = vmax.f32 %v86, %v87
  %v264 = vmax.f32 %v88, %v89
  %v265 = vmax.f32 %v90, %v91
  %v266 = vmax.f32 %v92, %v93
  %v267 = vmax.f32 %v94, %v95
  %v268 = vmax.f32 %v96, %v97
  %v269 = vmax.f32 %v98, %v99
  %v270 = vmax.f32 %v100, %v101
  %v271 = vmax.f32 %v102, %v103
  %v272 = vmax.f32 %v104, %v105
  %v273 = vmax.f32 %v106, %v107
  %v274 = vmax.f32 %v108, %v109
  %v275 = vmax.f32 %v110, %v111
  %v276 = vmax.f32 %v112, %v113
  %v277 = vmax.f32 %v114, %v115
  %v278 = vmax.f32 %v116, %v117
  %v279 = vmax.f32 %v118, %v119
  %v280 = vmax.f32 %v120, %v121
  %v281 = vmax.f32 %v122, %v123
  %v282 = vmax.f32 %v124, %v125
  %v283 = vmax.f32 %v126, %v127
  %v284 = vmax.f32 %v128, %v129
  %v285 = vmax.f32 %v130, %v131
  %v286 = vmax.f32 %v132, %v133
  %v287 = vmax.f32 %v134, %v135
  %v288 = vmax.f32 %v136, %v137
  %v289 = vmax.f32 %v138, %v139
  %v290 = vmax.f32 %v140, %v141
  %v291 = vmax.f32 %v142, %v143
  %v292 = vmax.f32 %v144, %v145
  %v293 = vmax.f32 %v146, %v147
  %v294 = vmax.f32 %v148, %v149
  %v295 = vmax.f32 %v150, %v151
  %v296 = vmax.f32 %v152, %v153
  %v297 = vmax.f32 %v154, %v155
  %v298 = vmax.f32 %v156, %v157
  %v299 = vmax.f32 %v158, %v159
  %v300 = vmax.f32 %v160, %v161
  %v301 = vmax.f32 %v162, %v163
  %v302 = vmax.f32 %v164, %v165
  %v303 = vmax.f32 %v166, %v167
  %v304 = vmax.f32 %v168, %v169
  %v305 = vmax.f32 %v170, %v171
  %v306 = vmax.f32 %v172, %v173
  %v307 = vmax.f32 %v174, %v175
  %v308 = vmax.f32 %v176, %v177
  %v309 = vmax.f32 %v178, %v179
  %v310 = vmax.f32 %v180, %v181
  %v311 = vmax.f32 %v182, %v183
  %v312 = vmax.f32 %v184, %v185
  %v313 = vmax.f32 %v186, %v187
  %v314 = vmax.f32 %v188, %v189
  %v315 = vmax.f32 %v190, %v191
  %v316 = vmax.f32 %v192, %v193
  %v317 = vmax.f32 %v194, %v195
  %v318 = vmax.f32 %v196, %v197
  %v319 = vmax.f32 %v198, %v199
  %v320 = vmax.f32 %v200, %v201
  %v321 = vmax.f32 %v202, %v203
  %v322 = vmax.f32 %v204, %v205
  %v323 = vmax.f32 %v206, %v207
  %v324 = vmax.f32 %v208, %v209
  %v325 = vmax.f32 %v210, %v211
  %v326 = vmax.f32 %v212, %v213
  %v327 = vmax.f32 %v214, %v215
  %v328 = vmax.f32 %v216, %v217
  %v329 = vmax.f32 %v218, %v219
  %v330 = vmax.f32 %v220, %v221
  %v331 = vmax.f32 %v222, %v223
  %vm440 = vcmask 1046528
  %v441 = vrot.slane %v8, 1
  %v442 = vrot.slane %v10, 1
  %v443 = vsel %vm440, %v441, %v442
  %v444 = vrot.slane %v12, 1
  %v445 = vrot.slane %v14, 1
  %v446 = vsel %vm440, %v444, %v445
  %v447 = vrot.slane %v16, 1
  %v448 = vrot.slane %v18, 1
  %v449 = vsel %vm440, %v447, %v448
  %v450 = vrot.slane %v20, 1
  %v451 = vrot.slane %v22, 1
  %v452 = vsel %vm440, %v450, %v451
  %v453 = vrot.slane %v24, 1
  %v454 = vrot.slane %v26, 1
  %v455 = vsel %vm440, %v453, %v454
  %v456 = vrot.slane %v28, 1
  %v457 = vrot.slane %v30, 1
  %v458 = vsel %vm440, %v456, %v457
  %v459 = vrot.slane %v32, 1
  %v460 = vrot.slane %v34, 1
  %v461 = vsel %vm440, %v459, %v460
  %v462 = vrot.slane %v36, 1
  %v463 = vrot.slane %v38, 1
  %v464 = vsel %vm440, %v462, %v463
  %v465 = vrot.slane %v40, 1
  %v466 = vrot.slane %v42, 1
  %v467 = vsel %vm440, %v465, %v466
  %v468 = vrot.slane %v44, 1
  %v469 = vrot.slane %v46, 1
  %v470 = vsel %vm440, %v468, %v469
  %v471 = vrot.slane %v48, 1
  %v472 = vrot.slane %v50, 1
  %v473 = vsel %vm440, %v471, %v472
  %v474 = vrot.slane %v52, 1
  %v475 = vrot.slane %v54, 1
  %v476 = vsel %vm440, %v474, %v475
  %v477 = vrot.slane %v56, 1
  %v478 = vrot.slane %v58, 1
  %v479 = vsel %vm440, %v477, %v478
  %v480 = vrot.slane %v60, 1
  %v481 = vrot.slane %v62, 1
  %v482 = vsel %vm440, %v480, %v481
  %v483 = vrot.slane %v64, 1
  %v484 = vrot.slane %v66, 1
  %v485 = vsel %vm440, %v483, %v484
  %v486 = vrot.slane %v68, 1
  %v487 = vrot.slane %v70, 1
  %v488 = vsel %vm440, %v486, %v487
  %v489 = vrot.slane %v72, 1
  %v490 = vrot.slane %v74, 1
  %v491 = vsel %vm440, %v489, %v490
  %v492 = vrot.slane %v76, 1
  %v493 = vrot.slane %v78, 1
  %v494 = vsel %vm440, %v492, %v493
  %v495 = vrot.slane %v80, 1
  %v496 = vrot.slane %v82, 1
  %v497 = vsel %vm440, %v495, %v496
  %v498 = vrot.slane %v84, 1
  %v499 = vrot.slane %v86, 1
  %v500 = vsel %vm440, %v498, %v499
  %v501 = vrot.slane %v88, 1
  %v502 = vrot.slane %v90, 1
  %v503 = vsel %vm440, %v501, %v502
  %v504 = vrot.slane %v92, 1
  %v505 = vrot.slane %v94, 1
  %v506 = vsel %vm440, %v504, %v505
  %v507 = vrot.slane %v96, 1
  %v508 = vrot.slane %v98, 1
  %v509 = vsel %vm440, %v507, %v508
  %v510 = vrot.slane %v100, 1
  %v511 = vrot.slane %v102, 1
  %v512 = vsel %vm440, %v510, %v511
  %v513 = vrot.slane %v104, 1
  %v514 = vrot.slane %v106, 1
  %v515 = vsel %vm440, %v513, %v514
  %v516 = vrot.slane %v108, 1
  %v517 = vrot.slane %v110, 1
  %v518 = vsel %vm440, %v516, %v517
  %v519 = vrot.slane %v112, 1
  %v520 = vrot.slane %v114, 1
  %v521 = vsel %vm440, %v519, %v520
  %v522 = vrot.slane %v116, 1
  %v523 = vrot.slane %v118, 1
  %v524 = vsel %vm440, %v522, %v523
  %v525 = vrot.slane %v120, 1
  %v526 = vrot.slane %v122, 1
  %v527 = vsel %vm440, %v525, %v526
  %v528 = vrot.slane %v124, 1
  %v529 = vrot.slane %v126, 1
  %v530 = vsel %vm440, %v528, %v529
  %v531 = vrot.slane %v128, 1
  %v532 = vrot.slane %v130, 1
  %v533 = vsel %vm440, %v531, %v532
  %v534 = vrot.slane %v132, 1
  %v535 = vrot.slane %v134, 1
  %v536 = vsel %vm440, %v534, %v535
  %v537 = vrot.slane %v136, 1
  %v538 = vrot.slane %v138, 1
  %v539 = vsel %vm440, %v537, %v538
  %v540 = vrot.slane %v140, 1
  %v541 = vrot.slane %v142, 1
  %v542 = vsel %vm440, %v540, %v541
  %v543 = vrot.slane %v144, 1
  %v544 = vrot.slane %v146, 1
  %v545 = vsel %vm440, %v543, %v544
  %v546 = vrot.slane %v148, 1
  %v547 = vrot.slane %v150, 1
  %v548 = vsel %vm440, %v546, %v547
  %v549 = vrot.slane %v152, 1
  %v550 = vrot.slane %v154, 1
  %v551 = vsel %vm440, %v549, %v550
  %v552 = vrot.slane %v156, 1
  %v553 = vrot.slane %v158, 1
  %v554 = vsel %vm440, %v552, %v553
  %v555 = vrot.slane %v160, 1
  %v556 = vrot.slane %v162, 1
  %v557 = vsel %vm440, %v555, %v556
  %v558 = vrot.slane %v164, 1
  %v559 = vrot.slane %v166, 1
  %v560 = vsel %vm440, %v558, %v559
  %v561 = vrot.slane %v168, 1
  %v562 = vrot.slane %v170, 1
  %v563 = vsel %vm440, %v561, %v562
  %v564 = vrot.slane %v172, 1
  %v565 = vrot.slane %v174, 1
  %v566 = vsel %vm440, %v564, %v565
  %v567 = vrot.slane %v176, 1
  %v568 = vrot.slane %v178, 1
  %v569 = vsel %vm440, %v567, %v568
  %v570 = vrot.slane %v180, 1
  %v571 = vrot.slane %v182, 1
  %v572 = vsel %vm440, %v570, %v571
  %v573 = vrot.slane %v184, 1
  %v574 = vrot.slane %v186, 1
  %v575 = vsel %vm440, %v573, %v574
  %v576 = vrot.slane %v188, 1
  %v577 = vrot.slane %v190, 1
  %v578 = vsel %vm440, %v576, %v577
  %v579 = vrot.slane %v192, 1
  %v580 = vrot.slane %v194, 1
  %v581 = vsel %vm440, %v579, %v580
  %v582 = vrot.slane %v196, 1
  %v583 = vrot.slane %v198, 1
  %v584 = vsel %vm440, %v582, %v583
  %v585 = vrot.slane %v200, 1
  %v586 = vrot.slane %v202, 1
  %v587 = vsel %vm440, %v585, %v586
  %v588 = vrot.slane %v204, 1
  %v589 = vrot.slane %v206, 1
  %v590 = vsel %vm440, %v588, %v589
  %v591 = vrot.slane %v208, 1
  %v592 = vrot.slane %v210, 1
  %v593 = vsel %vm440, %v591, %v592
  %v594 = vrot.slane %v212, 1
  %v595 = vrot.slane %v214, 1
  %v596 = vsel %vm440, %v594, %v595
  %v597 = vrot.slane %v216, 1
  %v598 = vrot.slane %v218, 1
  %v599 = vsel %vm440, %v597, %v598
  %v600 = vrot.slane %v220, 1
  %v601 = vrot.slane %v222, 1
  %v602 = vsel %vm440, %v600, %v601
  %v711 = vmax.f32 %v224, %v443
  %v712 = vmax.f32 %v225, %v442
  %v713 = vmax.f32 %v226, %v446
  %v714 = vmax.f32 %v227, %v445
  %v715 = vmax.f32 %v228, %v449
  %v716 = vmax.f32 %v229, %v448
  %v717 = vmax.f32 %v230, %v452
  %v718 = vmax.f32 %v231, %v451
  %v719 = vmax.f32 %v232, %v455
  %v720 = vmax.f32 %v233, %v454
  %v721 = vmax.f32 %v234, %v458
  %v722 = vmax.f32 %v235, %v457
  %v723 = vmax.f32 %v236, %v461
  %v724 = vmax.f32 %v237, %v460
  %v725 = vmax.f32 %v238, %v464
  %v726 = vmax.f32 %v239, %v463
  %v727 = vmax.f32 %v240, %v467
  %v728 = vmax.f32 %v241, %v466
  %v729 = vmax.f32 %v242, %v470
  %v730 = vmax.f32 %v243, %v469
  %v731 = vmax.f32 %v244, %v473
  %v732 = vmax.f32 %v245, %v472
  %v733 = vmax.f32 %v246, %v476
  %v734 = vmax.f32 %v247, %v475
  %v735 = vmax.f32 %v248, %v479
  %v736 = vmax.f32 %v249, %v478
  %v737 = vmax.f32 %v250, %v482
  %v738 = vmax.f32 %v251, %v481
  %v739 = vmax.f32 %v252, %v485
  %v740 = vmax.f32 %v253, %v484
  %v741 = vmax.f32 %v254, %v488
  %v742 = vmax.f32 %v255, %v487
  %v743 = vmax.f32 %v256, %v491
  %v744 = vmax.f32 %v257, %v490
  %v745 = vmax.f32 %v258, %v494
  %v746 = vmax.f32 %v259, %v493
  %v747 = vmax.f32 %v260, %v497
  %v748 = vmax.f32 %v261, %v496
  %v749 = vmax.f32 %v262, %v500
  %v750 = vmax.f32 %v263, %v499
  %v751 = vmax.f32 %v264, %v503
  %v752 = vmax.f32 %v265, %v502
  %v753 = vmax.f32 %v266, %v506
  %v754 = vmax.f32 %v267, %v505
  %v755 = vmax.f32 %v268, %v509
  %v756 = vmax.f32 %v269, %v508
  %v757 = vmax.f32 %v270, %v512
  %v758 = vmax.f32 %v271, %v511
  %v759 = vmax.f32 %v272, %v515
  %v760 = vmax.f32 %v273, %v514
  %v761 = vmax.f32 %v274, %v518
  %v762 = vmax.f32 %v275, %v517
  %v763 = vmax.f32 %v276, %v521
  %v764 = vmax.f32 %v277, %v520
  %v765 = vmax.f32 %v278, %v524
  %v766 = vmax.f32 %v279, %v523
  %v767 = vmax.f32 %v280, %v527
  %v768 = vmax.f32 %v281, %v526
  %v769 = vmax.f32 %v282, %v530
  %v770 = vmax.f32 %v283, %v529
  %v771 = vmax.f32 %v284, %v533
  %v772 = vmax.f32 %v285, %v532
  %v773 = vmax.f32 %v286, %v536
  %v774 = vmax.f32 %v287, %v535
  %v775 = vmax.f32 %v288, %v539
  %v776 = vmax.f32 %v289, %v538
  %v777 = vmax.f32 %v290, %v542
  %v778 = vmax.f32 %v291, %v541
  %v779 = vmax.f32 %v292, %v545
  %v780 = vmax.f32 %v293, %v544
  %v781 = vmax.f32 %v294, %v548
  %v782 = vmax.f32 %v295, %v547
  %v783 = vmax.f32 %v296, %v551
  %v784 = vmax.f32 %v297, %v550
  %v785 = vmax.f32 %v298, %v554
  %v786 = vmax.f32 %v299, %v553
  %v787 = vmax.f32 %v300, %v557
  %v788 = vmax.f32 %v301, %v556
  %v789 = vmax.f32 %v302, %v560
  %v790 = vmax.f32 %v303, %v559
  %v791 = vmax.f32 %v304, %v563
  %v792 = vmax.f32 %v305, %v562
  %v793 = vmax.f32 %v306, %v566
  %v794 = vmax.f32 %v307, %v565
  %v795 = vmax.f32 %v308, %v569
  %v796 = vmax.f32 %v309, %v568
  %v797 = vmax.f32 %v310, %v572
  %v798 = vmax.f32 %v311, %v571
  %v799 = vmax.f32 %v312, %v575
  %v800 = vmax.f32 %v313, %v574
  %v801 = vmax.f32 %v314, %v578
  %v802 = vmax.f32 %v315, %v577
  %v803 = vmax.f32 %v316, %v581
  %v804 = vmax.f32 %v317, %v580
  %v805 = vmax.f32 %v318, %v584
  %v806 = vmax.f32 %v319, %v583
  %v807 = vmax.f32 %v320, %v587
  %v808 = vmax.f32 %v321, %v586
  %v809 = vmax.f32 %v322, %v590
  %v810 = vmax.f32 %v323, %v589
  %v811 = vmax.f32 %v324, %v593
  %v812 = vmax.f32 %v325, %v592
  %v813 = vmax.f32 %v326, %v596
  %v814 = vmax.f32 %v327, %v595
  %v815 = vmax.f32 %v328, %v599
  %v816 = vmax.f32 %v329, %v598
  %v817 = vmax.f32 %v330, %v602
  %v818 = vmax.f32 %v331, %v601
  %v819 = vmax.f32 %v711, %v713
  %v820 = vmax.f32 %v712, %v714
  %v821 = vmax.f32 %v765, %v767
  %v822 = vmax.f32 %v766, %v768
  %v823 = vmax.f32 %v819, %v715
  %v824 = vmax.f32 %v820, %v716
  %v825 = vmax.f32 %v821, %v769
  %v826 = vmax.f32 %v822, %v770
  %827 = vst [vmem:[%s1] sm:$0xff] %v823
  %828 = vst [vmem:[%s1 + $0x8] sm:$0x1f] %v824
  %829 = vst [vmem:[%s1 + $0xd0] sm:$0xff] %v825
  %830 = vst [vmem:[%s1 + $0xd8] sm:$0x1f] %v826
  %v831 = vmax.f32 %v715, %v717
  %v832 = vmax.f32 %v716, %v718
  %v833 = vmax.f32 %v769, %v771
  %v834 = vmax.f32 %v770, %v772
  %v835 = vmax.f32 %v831, %v719
  %v836 = vmax.f32 %v832, %v720
  %v837 = vmax.f32 %v833, %v773
  %v838 = vmax.f32 %v834, %v774
  %s839 = scalar_lea.vmem %s1, 16
  %840 = vst [vmem:[%s839] sm:$0xff] %v835
  %841 = vst [vmem:[%s839 + $0x8] sm:$0x1f] %v836
  %842 = vst [vmem:[%s839 + $0xd0] sm:$0xff] %v837
  %843 = vst [vmem:[%s839 + $0xd8] sm:$0x1f] %v838
  %v844 = vmax.f32 %v719, %v721
  %v845 = vmax.f32 %v720, %v722
  %v846 = vmax.f32 %v773, %v775
  %v847 = vmax.f32 %v774, %v776
  %v848 = vmax.f32 %v844, %v723
  %v849 = vmax.f32 %v845, %v724
  %v850 = vmax.f32 %v846, %v777
  %v851 = vmax.f32 %v847, %v778
  %s852 = scalar_lea.vmem %s1, 32
  %853 = vst [vmem:[%s852] sm:$0xff] %v848
  %854 = vst [vmem:[%s852 + $0x8] sm:$0x1f] %v849
  %855 = vst [vmem:[%s852 + $0xd0] sm:$0xff] %v850
  %856 = vst [vmem:[%s852 + $0xd8] sm:$0x1f] %v851
  %v857 = vmax.f32 %v723, %v725
  %v858 = vmax.f32 %v724, %v726
  %v859 = vmax.f32 %v777, %v779
  %v860 = vmax.f32 %v778, %v780
  %v861 = vmax.f32 %v857, %v727
  %v862 = vmax.f32 %v858, %v728
  %v863 = vmax.f32 %v859, %v781
  %v864 = vmax.f32 %v860, %v782
  %s865 = scalar_lea.vmem %s1, 48
  %866 = vst [vmem:[%s865] sm:$0xff] %v861
  %867 = vst [vmem:[%s865 + $0x8] sm:$0x1f] %v862
  %868 = vst [vmem:[%s865 + $0xd0] sm:$0xff] %v863
  %869 = vst [vmem:[%s865 + $0xd8] sm:$0x1f] %v864
  %v870 = vmax.f32 %v727, %v729
  %v871 = vmax.f32 %v728, %v730
  %v872 = vmax.f32 %v781, %v783
  %v873 = vmax.f32 %v782, %v784
  %v874 = vmax.f32 %v870, %v731
  %v875 = vmax.f32 %v871, %v732
  %v876 = vmax.f32 %v872, %v785
  %v877 = vmax.f32 %v873, %v786
  %s878 = scalar_lea.vmem %s1, 64
  %879 = vst [vmem:[%s878] sm:$0xff] %v874
  %880 = vst [vmem:[%s878 + $0x8] sm:$0x1f] %v875
  %881 = vst [vmem:[%s878 + $0xd0] sm:$0xff] %v876
  %882 = vst [vmem:[%s878 + $0xd8] sm:$0x1f] %v877
  %v883 = vmax.f32 %v731, %v733
  %v884 = vmax.f32 %v732, %v734
  %v885 = vmax.f32 %v785, %v787
  %v886 = vmax.f32 %v786, %v788
  %v887 = vmax.f32 %v883, %v735
  %v888 = vmax.f32 %v884, %v736
  %v889 = vmax.f32 %v885, %v789
  %v890 = vmax.f32 %v886, %v790
  %s891 = scalar_lea.vmem %s1, 80
  %892 = vst [vmem:[%s891] sm:$0xff] %v887
  %893 = vst [vmem:[%s891 + $0x8] sm:$0x1f] %v888
  %894 = vst [vmem:[%s891 + $0xd0] sm:$0xff] %v889
  %895 = vst [vmem:[%s891 + $0xd8] sm:$0x1f] %v890
  %v896 = vmax.f32 %v735, %v737
  %v897 = vmax.f32 %v736, %v738
  %v898 = vmax.f32 %v789, %v791
  %v899 = vmax.f32 %v790, %v792
  %v900 = vmax.f32 %v896, %v739
  %v901 = vmax.f32 %v897, %v740
  %v902 = vmax.f32 %v898, %v793
  %v903 = vmax.f32 %v899, %v794
  %s904 = scalar_lea.vmem %s1, 96
  %905 = vst [vmem:[%s904] sm:$0xff] %v900
  %906 = vst [vmem:[%s904 + $0x8] sm:$0x1f] %v901
  %907 = vst [vmem:[%s904 + $0xd0] sm:$0xff] %v902
  %908 = vst [vmem:[%s904 + $0xd8] sm:$0x1f] %v903
  %v909 = vmax.f32 %v739, %v741
  %v910 = vmax.f32 %v740, %v742
  %v911 = vmax.f32 %v793, %v795
  %v912 = vmax.f32 %v794, %v796
  %v913 = vmax.f32 %v909, %v743
  %v914 = vmax.f32 %v910, %v744
  %v915 = vmax.f32 %v911, %v797
  %v916 = vmax.f32 %v912, %v798
  %s917 = scalar_lea.vmem %s1, 112
  %918 = vst [vmem:[%s917] sm:$0xff] %v913
  %919 = vst [vmem:[%s917 + $0x8] sm:$0x1f] %v914
  %920 = vst [vmem:[%s917 + $0xd0] sm:$0xff] %v915
  %921 = vst [vmem:[%s917 + $0xd8] sm:$0x1f] %v916
  %v922 = vmax.f32 %v743, %v745
  %v923 = vmax.f32 %v744, %v746
  %v924 = vmax.f32 %v797, %v799
  %v925 = vmax.f32 %v798, %v800
  %v926 = vmax.f32 %v922, %v747
  %v927 = vmax.f32 %v923, %v748
  %v928 = vmax.f32 %v924, %v801
  %v929 = vmax.f32 %v925, %v802
  %s930 = scalar_lea.vmem %s1, 128
  %931 = vst [vmem:[%s930] sm:$0xff] %v926
  %932 = vst [vmem:[%s930 + $0x8] sm:$0x1f] %v927
  %933 = vst [vmem:[%s930 + $0xd0] sm:$0xff] %v928
  %934 = vst [vmem:[%s930 + $0xd8] sm:$0x1f] %v929
  %v935 = vmax.f32 %v747, %v749
  %v936 = vmax.f32 %v748, %v750
  %v937 = vmax.f32 %v801, %v803
  %v938 = vmax.f32 %v802, %v804
  %v939 = vmax.f32 %v935, %v751
  %v940 = vmax.f32 %v936, %v752
  %v941 = vmax.f32 %v937, %v805
  %v942 = vmax.f32 %v938, %v806
  %s943 = scalar_lea.vmem %s1, 144
  %944 = vst [vmem:[%s943] sm:$0xff] %v939
  %945 = vst [vmem:[%s943 + $0x8] sm:$0x1f] %v940
  %946 = vst [vmem:[%s943 + $0xd0] sm:$0xff] %v941
  %947 = vst [vmem:[%s943 + $0xd8] sm:$0x1f] %v942
  %v948 = vmax.f32 %v751, %v753
  %v949 = vmax.f32 %v752, %v754
  %v950 = vmax.f32 %v805, %v807
  %v951 = vmax.f32 %v806, %v808
  %v952 = vmax.f32 %v948, %v755
  %v953 = vmax.f32 %v949, %v756
  %v954 = vmax.f32 %v950, %v809
  %v955 = vmax.f32 %v951, %v810
  %s956 = scalar_lea.vmem %s1, 160
  %957 = vst [vmem:[%s956] sm:$0xff] %v952
  %958 = vst [vmem:[%s956 + $0x8] sm:$0x1f] %v953
  %959 = vst [vmem:[%s956 + $0xd0] sm:$0xff] %v954
  %960 = vst [vmem:[%s956 + $0xd8] sm:$0x1f] %v955
  %v961 = vmax.f32 %v755, %v757
  %v962 = vmax.f32 %v756, %v758
  %v963 = vmax.f32 %v809, %v811
  %v964 = vmax.f32 %v810, %v812
  %v965 = vmax.f32 %v961, %v759
  %v966 = vmax.f32 %v962, %v760
  %v967 = vmax.f32 %v963, %v813
  %v968 = vmax.f32 %v964, %v814
  %s969 = scalar_lea.vmem %s1, 176
  %970 = vst [vmem:[%s969] sm:$0xff] %v965
  %971 = vst [vmem:[%s969 + $0x8] sm:$0x1f] %v966
  %972 = vst [vmem:[%s969 + $0xd0] sm:$0xff] %v967
  %973 = vst [vmem:[%s969 + $0xd8] sm:$0x1f] %v968
  %v974 = vmax.f32 %v759, %v761
  %v975 = vmax.f32 %v760, %v762
  %v976 = vmax.f32 %v813, %v815
  %v977 = vmax.f32 %v814, %v816
  %v978 = vmax.f32 %v974, %v763
  %v979 = vmax.f32 %v975, %v764
  %v980 = vmax.f32 %v976, %v817
  %v981 = vmax.f32 %v977, %v818
  %s982 = scalar_lea.vmem %s1, 192
  %983 = vst [vmem:[%s982] sm:$0xff] %v978
  %984 = vst [vmem:[%s982 + $0x8] sm:$0x1f] %v979
  %985 = vst [vmem:[%s982 + $0xd0] sm:$0xff] %v980
  %986 = vst [vmem:[%s982 + $0xd8] sm:$0x1f] %v981
  // Predicated region
  $region6: #{net_b_forward.6} parent=0 // pred_check
    _
  $region7: #{net_b_forward.6} parent=0 // pred_check_branch
    %988 = sbr.rel (0) target = $region9
  $region8: #{net_b_forward.6} parent=0 // pred_region
    _
  $region9: #{net_b_forward.6} parent=0 // pred_fallthru
    _
  // Predicated region
  $region10: #{net_b_forward.6} parent=0 // pred_check
    _
  $region11: #{net_b_forward.6} parent=0 // pred_check_branch
    %990 = sbr.rel (0) target = $region13
  $region12: #{net_b_forward.6} parent=0 // pred_region
    _
  $region13: #{net_b_forward.6} parent=0 // pred_fallthru
    _

// kernel: net_b_forward.8
$region0: #{net_b_forward.8}
  #allocation0 [shape = 'u32[]', space=smem, size = 0x4, offset = 0x4, fixed_abs, tag = 'smem constant byte address 0x4 - core index']
  #allocation1 [shape = 'u32[72,128]{1,0:T(1,128)}', space=vmem, size = 0x9000, scoped, tag = 'internal scratch']
  %s0 = inlined_call_operand.vmem [shape: f32[2,9,5,512], index: 0, kind: input, shape index: {}]
  %s1 = inlined_call_operand.vmem [shape: f32[2,4,4,256], index: 1, kind: output, shape index: {}]
  %s2 = sld [smem:[#allocation0]]
  $region14: #{net_b_forward.8} parent=0
    _
  %s4 = ssub.s32 1, %s2
  %s5 = scalar_select 0, %s4, %s2
  // Predicated region
  $region2: #{net_b_forward.8} parent=0 // pred_check
    _
  $region3: #{net_b_forward.8} parent=0 // pred_check_branch
    %7 = sbr.rel (0) target = $region5
  $region4: #{net_b_forward.8} parent=0 // pred_region
    _
  $region5: #{net_b_forward.8} parent=0 // pred_fallthru
    _
  %v8 = vld [vmem:[%s0] sm:$0x1f]
  %v9 = vld [vmem:[%s0 + $0x8] sm:$0x1f]
  %v10 = vld [vmem:[%s0 + $0x10] sm:$0x1f]
  %v11 = vld [vmem:[%s0 + $0x18] sm:$0x1f]
  %v12 = vld [vmem:[%s0 + $0x20] sm:$0x1f]
  %v13 = vld [vmem:[%s0 + $0x28] sm:$0x1f]
  %v14 = vld [vmem:[%s0 + $0x30] sm:$0x1f]
  %v15 = vld [vmem:[%s0 + $0x38] sm:$0x1f]
  %v16 = vld [vmem:[%s0 + $0x40] sm:$0x1f]
  %v17 = vld [vmem:[%s0 + $0x48] sm:$0x1f]
  %v18 = vld [vmem:[%s0 + $0x50] sm:$0x1f]
  %v19 = vld [vmem:[%s0 + $0x58] sm:$0x1f]
  %v20 = vld [vmem:[%s0 + $0x60] sm:$0x1f]
  %v21 = vld [vmem:[%s0 + $0x68] sm:$0x1f]
  %v22 = vld [vmem:[%s0 + $0x70] sm:$0x1f]
  %v23 = vld [vmem:[%s0 + $0x78] sm:$0x1f]
  %v24 = vld [vmem:[%s0 + $0x80] sm:$0x1f]
  %v25 = vld [vmem:[%s0 + $0x88] sm:$0x1f]
  %v26 = vld [vmem:[%s0 + $0x90] sm:$0x1f]
  %v27 = vld [vmem:[%s0 + $0x98] sm:$0x1f]
  %v28 = vld [vmem:[%s0 + $0xa0] sm:$0x1f]
  %v29 = vld [vmem:[%s0 + $0xa8] sm:$0x1f]
  %v30 = vld [vmem:[%s0 + $0xb0] sm:$0x1f]
  %v31 = vld [vmem:[%s0 + $0xb8] sm:$0x1f]
  %v32 = vld [vmem:[%s0 + $0xc0] sm:$0x1f]
  %v33 = vld [vmem:[%s0 + $0xc8] sm:$0x1f]
  %v34 = vld [vmem:[%s0 + $0xd0] sm:$0x1f]
  %v35 = vld [vmem:[%s0 + $0xd8] sm:$0x1f]
  %v36 = vld [vmem:[%s0 + $0xe0] sm:$0x1f]
  %v37 = vld [vmem:[%s0 + $0xe8] sm:$0x1f]
  %v38 = vld [vmem:[%s0 + $0xf0] sm:$0x1f]
  %v39 = vld [vmem:[%s0 + $0xf8] sm:$0x1f]
  %v40 = vld [vmem:[%s0 + $0x100] sm:$0x1f]
  %v41 = vld [vmem:[%s0 + $0x108] sm:$0x1f]
  %v42 = vld [vmem:[%s0 + $0x110] sm:$0x1f]
  %v43 = vld [vmem:[%s0 + $0x118] sm:$0x1f]
  %v44 = vld [vmem:[%s0 + $0x120] sm:$0x1f]
  %v45 = vld [vmem:[%s0 + $0x128] sm:$0x1f]
  %v46 = vld [vmem:[%s0 + $0x130] sm:$0x1f]
  %v47 = vld [vmem:[%s0 + $0x138] sm:$0x1f]
  %v48 = vld [vmem:[%s0 + $0x140] sm:$0x1f]
  %v49 = vld [vmem:[%s0 + $0x148] sm:$0x1f]
  %v50 = vld [vmem:[%s0 + $0x150] sm:$0x1f]
  %v51 = vld [vmem:[%s0 + $0x158] sm:$0x1f]
  %v52 = vld [vmem:[%s0 + $0x160] sm:$0x1f]
  %v53 = vld [vmem:[%s0 + $0x168] sm:$0x1f]
  %v54 = vld [vmem:[%s0 + $0x170] sm:$0x1f]
  %v55 = vld [vmem:[%s0 + $0x178] sm:$0x1f]
  %v56 = vld [vmem:[%s0 + $0x180] sm:$0x1f]
  %v57 = vld [vmem:[%s0 + $0x188] sm:$0x1f]
  %v58 = vld [vmem:[%s0 + $0x190] sm:$0x1f]
  %v59 = vld [vmem:[%s0 + $0x198] sm:$0x1f]
  %v60 = vld [vmem:[%s0 + $0x1a0] sm:$0x1f]
  %v61 = vld [vmem:[%s0 + $0x1a8] sm:$0x1f]
  %v62 = vld [vmem:[%s0 + $0x1b0] sm:$0x1f]
  %v63 = vld [vmem:[%s0 + $0x1b8] sm:$0x1f]
  %v64 = vld [vmem:[%s0 + $0x1c0] sm:$0x1f]
  %v65 = vld [vmem:[%s0 + $0x1c8] sm:$0x1f]
  %v66 = vld [vmem:[%s0 + $0x1d0] sm:$0x1f]
  %v67 = vld [vmem:[%s0 + $0x1d8] sm:$0x1f]
  %v68 = vld [vmem:[%s0 + $0x1e0] sm:$0x1f]
  %v69 = vld [vmem:[%s0 + $0x1e8] sm:$0x1f]
  %v70 = vld [vmem:[%s0 + $0x1f0] sm:$0x1f]
  %v71 = vld [vmem:[%s0 + $0x1f8] sm:$0x1f]
  %v72 = vld [vmem:[%s0 + $0x200] sm:$0x1f]
  %v73 = vld [vmem:[%s0 + $0x208] sm:$0x1f]
  %v74 = vld [vmem:[%s0 + $0x210] sm:$0x1f]
  %v75 = vld [vmem:[%s0 + $0x218] sm:$0x1f]
  %v76 = vld [vmem:[%s0 + $0x220] sm:$0x1f]
  %v77 = vld [vmem:[%s0 + $0x228] sm:$0x1f]
  %v78 = vld [vmem:[%s0 + $0x230] sm:$0x1f]
  %v79 = vld [vmem:[%s0 + $0x238] sm:$0x1f]
  %v80 = vmax.f32 %v8, %v10
  %v81 = vmax.f32 %v9, %v11
  %v82 = vmax.f32 %v12, %v14
  %v83 = vmax.f32 %v13, %v15
  %v84 = vmax.f32 %v16, %v18
  %v85 = vmax.f32 %v17, %v19
  %v86 = vmax.f32 %v20, %v22
  %v87 = vmax.f32 %v21, %v23
  %v88 = vmax.f32 %v24, %v26
  %v89 = vmax.f32 %v25, %v27
  %v90 = vmax.f32 %v28, %v30
  %v91 = vmax.f32 %v29, %v31
  %v92 = vmax.f32 %v32, %v34
  %v93 = vmax.f32 %v33, %v35
  %v94 = vmax.f32 %v36, %v38
  %v95 = vmax.f32 %v37, %v39
  %v96 = vmax.f32 %v40, %v42
  %v97 = vmax.f32 %v41, %v43
  %v98 = vmax.f32 %v44, %v46
  %v99 = vmax.f32 %v45, %v47
  %v100 = vmax.f32 %v48, %v50
  %v101 = vmax.f32 %v49, %v51
  %v102 = vmax.f32 %v52, %v54
  %v103 = vmax.f32 %v53, %v55
  %v104 = vmax.f32 %v56, %v58
  %v105 = vmax.f32 %v57, %v59
  %v106 = vmax.f32 %v60, %v62
  %v107 = vmax.f32 %v61, %v63
  %v108 = vmax.f32 %v64, %v66
  %v109 = vmax.f32 %v65, %v67
  %v110 = vmax.f32 %v68, %v70
  %v111 = vmax.f32 %v69, %v71
  %v112 = vmax.f32 %v72, %v74
  %v113 = vmax.f32 %v73, %v75
  %v114 = vmax.f32 %v76, %v78
  %v115 = vmax.f32 %v77, %v79
  %v152 = vrot.slane %v8, 1
  %v153 = vrot.slane %v9, 1
  %v154 = vrot.slane %v12, 1
  %v155 = vrot.slane %v13, 1
  %v156 = vrot.slane %v16, 1
  %v157 = vrot.slane %v17, 1
  %v158 = vrot.slane %v20, 1
  %v159 = vrot.slane %v21, 1
  %v160 = vrot.slane %v24, 1
  %v161 = vrot.slane %v25, 1
  %v162 = vrot.slane %v28, 1
  %v163 = vrot.slane %v29, 1
  %v164 = vrot.slane %v32, 1
  %v165 = vrot.slane %v33, 1
  %v166 = vrot.slane %v36, 1
  %v167 = vrot.slane %v37, 1
  %v168 = vrot.slane %v40, 1
  %v169 = vrot.slane %v41, 1
  %v170 = vrot.slane %v44, 1
  %v171 = vrot.slane %v45, 1
  %v172 = vrot.slane %v48, 1
  %v173 = vrot.slane %v49, 1
  %v174 = vrot.slane %v52, 1
  %v175 = vrot.slane %v53, 1
  %v176 = vrot.slane %v56, 1
  %v177 = vrot.slane %v57, 1
  %v178 = vrot.slane %v60, 1
  %v179 = vrot.slane %v61, 1
  %v180 = vrot.slane %v64, 1
  %v181 = vrot.slane %v65, 1
  %v182 = vrot.slane %v68, 1
  %v183 = vrot.slane %v69, 1
  %v184 = vrot.slane %v72, 1
  %v185 = vrot.slane %v73, 1
  %v186 = vrot.slane %v76, 1
  %v187 = vrot.slane %v77, 1
  %v224 = vmax.f32 %v80, %v152
  %v225 = vmax.f32 %v81, %v153
  %v226 = vmax.f32 %v82, %v154
  %v227 = vmax.f32 %v83, %v155
  %v228 = vmax.f32 %v84, %v156
  %v229 = vmax.f32 %v85, %v157
  %v230 = vmax.f32 %v86, %v158
  %v231 = vmax.f32 %v87, %v159
  %v232 = vmax.f32 %v88, %v160
  %v233 = vmax.f32 %v89, %v161
  %v234 = vmax.f32 %v90, %v162
  %v235 = vmax.f32 %v91, %v163
  %v236 = vmax.f32 %v92, %v164
  %v237 = vmax.f32 %v93, %v165
  %v238 = vmax.f32 %v94, %v166
  %v239 = vmax.f32 %v95, %v167
  %v240 = vmax.f32 %v96, %v168
  %v241 = vmax.f32 %v97, %v169
  %v242 = vmax.f32 %v98, %v170
  %v243 = vmax.f32 %v99, %v171
  %v244 = vmax.f32 %v100, %v172
  %v245 = vmax.f32 %v101, %v173
  %v246 = vmax.f32 %v102, %v174
  %v247 = vmax.f32 %v103, %v175
  %v248 = vmax.f32 %v104, %v176
  %v249 = vmax.f32 %v105, %v177
  %v250 = vmax.f32 %v106, %v178
  %v251 = vmax.f32 %v107, %v179
  %v252 = vmax.f32 %v108, %v180
  %v253 = vmax.f32 %v109, %v181
  %v254 = vmax.f32 %v110, %v182
  %v255 = vmax.f32 %v111, %v183
  %v256 = vmax.f32 %v112, %v184
  %v257 = vmax.f32 %v113, %v185
  %v258 = vmax.f32 %v114, %v186
  %v259 = vmax.f32 %v115, %v187
  %v260 = vmax.f32 %v224, %v226
  %v261 = vmax.f32 %v225, %v227
  %v262 = vmax.f32 %v242, %v244
  %v263 = vmax.f32 %v243, %v245
  %v264 = vmax.f32 %v260, %v228
  %v265 = vmax.f32 %v261, %v229
  %v266 = vmax.f32 %v262, %v246
  %v267 = vmax.f32 %v263, %v247
  %v272 = vrot.slane %v265, 4
  %v273 = vrot.slane %v267, 4
  %vm274 = vcmask 1043456
  %v275 = vsel %vm274, %v264, %v272
  %v276 = vsel %vm274, %v266, %v273
  %279 = vst [vmem:[%s1] sm:$0xff] %v275
  %280 = vst [vmem:[%s1 + $0x20] sm:$0xff] %v276
  %v281 = vmax.f32 %v228, %v230
  %v282 = vmax.f32 %v229, %v231
  %v283 = vmax.f32 %v246, %v248
  %v284 = vmax.f32 %v247, %v249
  %v285 = vmax.f32 %v281, %v232
  %v286 = vmax.f32 %v282, %v233
  %v287 = vmax.f32 %v283, %v250
  %v288 = vmax.f32 %v284, %v251
  %v293 = vrot.slane %v286, 4
  %v294 = vrot.slane %v288, 4
  %v295 = vsel %vm274, %v285, %v293
  %v296 = vsel %vm274, %v287, %v294
  %s299 = scalar_lea.vmem %s1, 8
  %300 = vst [vmem:[%s299] sm:$0xff] %v295
  %301 = vst [vmem:[%s299 + $0x20] sm:$0xff] %v296
  %v302 = vmax.f32 %v232, %v234
  %v303 = vmax.f32 %v233, %v235
  %v304 = vmax.f32 %v250, %v252
  %v305 = vmax.f32 %v251, %v253
  %v306 = vmax.f32 %v302, %v236
  %v307 = vmax.f32 %v303, %v237
  %v308 = vmax.f32 %v304, %v254
  %v309 = vmax.f32 %v305, %v255
  %v314 = vrot.slane %v307, 4
  %v315 = vrot.slane %v309, 4
  %v316 = vsel %vm274, %v306, %v314
  %v317 = vsel %vm274, %v308, %v315
  %s320 = scalar_lea.vmem %s1, 16
  %321 = vst [vmem:[%s320] sm:$0xff] %v316
  %322 = vst [vmem:[%s320 + $0x20] sm:$0xff] %v317
  %v323 = vmax.f32 %v236, %v238
  %v324 = vmax.f32 %v237, %v239
  %v325 = vmax.f32 %v254, %v256
  %v326 = vmax.f32 %v255, %v257
  %v327 = vmax.f32 %v323, %v240
  %v328 = vmax.f32 %v324, %v241
  %v329 = vmax.f32 %v325, %v258
  %v330 = vmax.f32 %v326, %v259
  %v335 = vrot.slane %v328, 4
  %v336 = vrot.slane %v330, 4
  %v337 = vsel %vm274, %v327, %v335
  %v338 = vsel %vm274, %v329, %v336
  %s341 = scalar_lea.vmem %s1, 24
  %342 = vst [vmem:[%s341] sm:$0xff] %v337
  %343 = vst [vmem:[%s341 + $0x20] sm:$0xff] %v338
  // Predicated region
  $region6: #{net_b_forward.8} parent=0 // pred_check
    _
  $region7: #{net_b_forward.8} parent=0 // pred_check_branch
    %345 = sbr.rel (0) target = $region9
  $region8: #{net_b_forward.8} parent=0 // pred_region
    _
  $region9: #{net_b_forward.8} parent=0 // pred_fallthru
    _
  // Predicated region
  $region10: #{net_b_forward.8} parent=0 // pred_check
    _
  $region11: #{net_b_forward.8} parent=0 // pred_check_branch
    %347 = sbr.rel (0) target = $region13
  $region12: #{net_b_forward.8} parent=0 // pred_region
    _
  $region13: #{net_b_forward.8} parent=0 // pred_fallthru
    _

// kernel: net_b_forward.7
$region0: #{net_b_forward.7}
  #allocation0 [shape = 'u32[]', space=smem, size = 0x4, offset = 0x4, fixed_abs, tag = 'smem constant byte address 0x4 - core index']
  #allocation1 [shape = 'u32[72,128]{1,0:T(1,128)}', space=vmem, size = 0x9000, scoped, tag = 'internal scratch']
  %s0 = inlined_call_operand.vmem [shape: bf16[162,3200], index: 0, kind: input, shape index: {}]
  %s1 = inlined_call_operand.vmem [shape: bf16[3200,256], index: 1, kind: input, shape index: {}]
  %s2 = inlined_call_operand.vmem [shape: f32[1,256], index: 2, kind: input, shape index: {}]
  %s3 = inlined_call_operand.vmem [shape: bf16[256,256], index: 3, kind: input, shape index: {}]
  %s4 = inlined_call_operand.vmem [shape: f32[1,256], index: 4, kind: input, shape index: {}]
  %s5 = inlined_call_operand.vmem [shape: f32[162,256], index: 5, kind: output, shape index: {}]
  %s6 = sld [smem:[#allocation0]]
  $region30: #{net_b_forward.7} parent=0
    _
  %s8 = ssub.s32 1, %s6
  %s9 = scalar_select 0, %s8, %s6
  // Predicated region
  $region2: #{net_b_forward.7} parent=0 // pred_check
    _
  $region3: #{net_b_forward.7} parent=0 // pred_check_branch
    %11 = sbr.rel (0) target = $region5
  $region4: #{net_b_forward.7} parent=0 // pred_region
    _
  $region5: #{net_b_forward.7} parent=0 // pred_fallthru
    _
  // Predicated region
  $region6: #{net_b_forward.7} parent=0 // pred_check
    _
  $region7: #{net_b_forward.7} parent=0 // pred_check_branch
    %13 = sbr.rel (0) target = $region9
  $region8: #{net_b_forward.7} parent=0 // pred_region
    _
  $region9: #{net_b_forward.7} parent=0 // pred_fallthru
    _
  // Predicated region
  $region10: #{net_b_forward.7} parent=0 // pred_check
    _
  $region11: #{net_b_forward.7} parent=0 // pred_check_branch
    %15 = sbr.rel (0) target = $region13
  $region12: #{net_b_forward.7} parent=0 // pred_region
    _
  $region13: #{net_b_forward.7} parent=0 // pred_fallthru
    _
  // Predicated region
  $region14: #{net_b_forward.7} parent=0 // pred_check
    _
  $region15: #{net_b_forward.7} parent=0 // pred_check_branch
    %17 = sbr.rel (0) target = $region17
  $region16: #{net_b_forward.7} parent=0 // pred_region
    _
  $region17: #{net_b_forward.7} parent=0 // pred_fallthru
    _
  // Predicated region
  $region18: #{net_b_forward.7} parent=0 // pred_check
    _
  $region19: #{net_b_forward.7} parent=0 // pred_check_branch
    %19 = sbr.rel (0) target = $region21
  $region20: #{net_b_forward.7} parent=0 // pred_region
    _
  $region21: #{net_b_forward.7} parent=0 // pred_fallthru
    _
  %v20 = vld [vmem:[%s0] sm:$0xff]
  %v21 = vld [vmem:[%s0 + $0x8] sm:$0xff]
  %v22 = vld [vmem:[%s0 + $0x10] sm:$0xff]
  %v23 = vld [vmem:[%s0 + $0x18] sm:$0xff]
  %v24 = vld [vmem:[%s0 + $0x20] sm:$0xff]
  %v25 = vld [vmem:[%s0 + $0x28] sm:$0xff]
  %v26 = vld [vmem:[%s0 + $0x30] sm:$0xff]
  %v27 = vld [vmem:[%s0 + $0x38] sm:$0xff]
  %v28 = vld [vmem:[%s0 + $0x40] sm:$0xff]
  %v29 = vld [vmem:[%s0 + $0x48] sm:$0xff]
  %v30 = vld [vmem:[%s0 + $0x50] sm:$0xff]
  %v31 = vld [vmem:[%s0 + $0x58] sm:$0xff]
  %v32 = vld [vmem:[%s0 + $0x60] sm:$0xf]
  %v33 = vld [vmem:[%s0 + $0x64] sm:$0xff]
  %v34 = vld [vmem:[%s0 + $0x6c] sm:$0xff]
  %v35 = vld [vmem:[%s0 + $0x74] sm:$0xff]
  %v36 = vld [vmem:[%s0 + $0x7c] sm:$0xff]
  %v37 = vld [vmem:[%s0 + $0x84] sm:$0xff]
  %v38 = vld [vmem:[%s0 + $0x8c] sm:$0xff]
  %v39 = vld [vmem:[%s0 + $0x94] sm:$0xff]
  %v40 = vld [vmem:[%s0 + $0x9c] sm:$0xff]
  %v41 = vld [vmem:[%s0 + $0xa4] sm:$0xff]
  %v42 = vld [vmem:[%s0 + $0xac] sm:$0xff]
  %v43 = vld [vmem:[%s0 + $0xb4] sm:$0xff]
  %v44 = vld [vmem:[%s0 + $0xbc] sm:$0xff]
  %v45 = vld [vmem:[%s0 + $0xc4] sm:$0xf]
  %v46 = vld [vmem:[%s0 + $0xc8] sm:$0xff]
  %v47 = vld [vmem:[%s0 + $0xd0] sm:$0xff]
  %v48 = vld [vmem:[%s0 + $0xd8] sm:$0xff]
  %v49 = vld [vmem:[%s0 + $0xe0] sm:$0xff]
  %v50 = vld [vmem:[%s0 + $0xe8] sm:$0xff]
  %v51 = vld [vmem:[%s0 + $0xf0] sm:$0xff]
  %v52 = vld [vmem:[%s0 + $0xf8] sm:$0xff]
  %v53 = vld [vmem:[%s0 + $0x100] sm:$0xff]
  %v54 = vld [vmem:[%s0 + $0x108] sm:$0xff]
  %v55 = vld [vmem:[%s0 + $0x110] sm:$0xff]
  %v56 = vld [vmem:[%s0 + $0x118] sm:$0xff]
  %v57 = vld [vmem:[%s0 + $0x120] sm:$0xff]
  %v58 = vld [vmem:[%s0 + $0x128] sm:$0xf]
  %v59 = vld [vmem:[%s0 + $0x12c] sm:$0xff]
  %v60 = vld [vmem:[%s0 + $0x134] sm:$0xff]
  %v61 = vld [vmem:[%s0 + $0x13c] sm:$0xff]
  %v62 = vld [vmem:[%s0 + $0x144] sm:$0xff]
  %v63 = vld [vmem:[%s0 + $0x14c] sm:$0xff]
  %v64 = vld [vmem:[%s0 + $0x154] sm:$0xff]
  %v65 = vld [vmem:[%s0 + $0x15c] sm:$0xff]
  %v66 = vld [vmem:[%s0 + $0x164] sm:$0xff]
  %v67 = vld [vmem:[%s0 + $0x16c] sm:$0xff]
  %v68 = vld [vmem:[%s0 + $0x174] sm:$0xff]
  %v69 = vld [vmem:[%s0 + $0x17c] sm:$0xff]
  %v70 = vld [vmem:[%s0 + $0x184] sm:$0xff]
  %v71 = vld [vmem:[%s0 + $0x18c] sm:$0xf]
  %v72 = vld [vmem:[%s0 + $0x190] sm:$0xff]
  %v73 = vld [vmem:[%s0 + $0x198] sm:$0xff]
  %v74 = vld [vmem:[%s0 + $0x1a0] sm:$0xff]
  %v75 = vld [vmem:[%s0 + $0x1a8] sm:$0xff]
  %v76 = vld [vmem:[%s0 + $0x1b0] sm:$0xff]
  %v77 = vld [vmem:[%s0 + $0x1b8] sm:$0xff]
  %v78 = vld [vmem:[%s0 + $0x1c0] sm:$0xff]
  %v79 = vld [vmem:[%s0 + $0x1c8] sm:$0xff]
  %v80 = vld [vmem:[%s0 + $0x1d0] sm:$0xff]
  %v81 = vld [vmem:[%s0 + $0x1d8] sm:$0xff]
  %v82 = vld [vmem:[%s0 + $0x1e0] sm:$0xff]
  %v83 = vld [vmem:[%s0 + $0x1e8] sm:$0xff]
  %v84 = vld [vmem:[%s0 + $0x1f0] sm:$0xf]
  %v85 = vld [vmem:[%s0 + $0x1f4] sm:$0xff]
  %v86 = vld [vmem:[%s0 + $0x1fc] sm:$0xff]
  %v87 = vld [vmem:[%s0 + $0x204] sm:$0xff]
  %v88 = vld [vmem:[%s0 + $0x20c] sm:$0xff]
  %v89 = vld [vmem:[%s0 + $0x214] sm:$0xff]
  %v90 = vld [vmem:[%s0 + $0x21c] sm:$0xff]
  %v91 = vld [vmem:[%s0 + $0x224] sm:$0xff]
  %v92 = vld [vmem:[%s0 + $0x22c] sm:$0xff]
  %v93 = vld [vmem:[%s0 + $0x234] sm:$0xff]
  %v94 = vld [vmem:[%s0 + $0x23c] sm:$0xff]
  %v95 = vld [vmem:[%s0 + $0x244] sm:$0xff]
  %v96 = vld [vmem:[%s0 + $0x24c] sm:$0xff]
  %v97 = vld [vmem:[%s0 + $0x254] sm:$0xf]
  %v98 = vld [vmem:[%s0 + $0x258] sm:$0xff]
  %v99 = vld [vmem:[%s0 + $0x260] sm:$0xff]
  %v100 = vld [vmem:[%s0 + $0x268] sm:$0xff]
  %v101 = vld [vmem:[%s0 + $0x270] sm:$0xff]
  %v102 = vld [vmem:[%s0 + $0x278] sm:$0xff]
  %v103 = vld [vmem:[%s0 + $0x280] sm:$0xff]
  %v104 = vld [vmem:[%s0 + $0x288] sm:$0xff]
  %v105 = vld [vmem:[%s0 + $0x290] sm:$0xff]
  %v106 = vld [vmem:[%s0 + $0x298] sm:$0xff]
  %v107 = vld [vmem:[%s0 + $0x2a0] sm:$0xff]
  %v108 = vld [vmem:[%s0 + $0x2a8] sm:$0xff]
  %v109 = vld [vmem:[%s0 + $0x2b0] sm:$0xff]
  %v110 = vld [vmem:[%s0 + $0x2b8] sm:$0xf]
  %v111 = vld [vmem:[%s0 + $0x2bc] sm:$0xff]
  %v112 = vld [vmem:[%s0 + $0x2c4] sm:$0xff]
  %v113 = vld [vmem:[%s0 + $0x2cc] sm:$0xff]
  %v114 = vld [vmem:[%s0 + $0x2d4] sm:$0xff]
  %v115 = vld [vmem:[%s0 + $0x2dc] sm:$0xff]
  %v116 = vld [vmem:[%s0 + $0x2e4] sm:$0xff]
  %v117 = vld [vmem:[%s0 + $0x2ec] sm:$0xff]
  %v118 = vld [vmem:[%s0 + $0x2f4] sm:$0xff]
  %v119 = vld [vmem:[%s0 + $0x2fc] sm:$0xff]
  %v120 = vld [vmem:[%s0 + $0x304] sm:$0xff]
  %v121 = vld [vmem:[%s0 + $0x30c] sm:$0xff]
  %v122 = vld [vmem:[%s0 + $0x314] sm:$0xff]
  %v123 = vld [vmem:[%s0 + $0x31c] sm:$0xf]
  %v124 = vld [vmem:[%s0 + $0x320] sm:$0xff]
  %v125 = vld [vmem:[%s0 + $0x328] sm:$0xff]
  %v126 = vld [vmem:[%s0 + $0x330] sm:$0xff]
  %v127 = vld [vmem:[%s0 + $0x338] sm:$0xff]
  %v128 = vld [vmem:[%s0 + $0x340] sm:$0xff]
  %v129 = vld [vmem:[%s0 + $0x348] sm:$0xff]
  %v130 = vld [vmem:[%s0 + $0x350] sm:$0xff]
  %v131 = vld [vmem:[%s0 + $0x358] sm:$0xff]
  %v132 = vld [vmem:[%s0 + $0x360] sm:$0xff]
  %v133 = vld [vmem:[%s0 + $0x368] sm:$0xff]
  %v134 = vld [vmem:[%s0 + $0x370] sm:$0xff]
  %v135 = vld [vmem:[%s0 + $0x378] sm:$0xff]
  %v136 = vld [vmem:[%s0 + $0x380] sm:$0xf]
  %v137 = vld [vmem:[%s0 + $0x384] sm:$0xff]
  %v138 = vld [vmem:[%s0 + $0x38c] sm:$0xff]
  %v139 = vld [vmem:[%s0 + $0x394] sm:$0xff]
  %v140 = vld [vmem:[%s0 + $0x39c] sm:$0xff]
  %v141 = vld [vmem:[%s0 + $0x3a4] sm:$0xff]
  %v142 = vld [vmem:[%s0 + $0x3ac] sm:$0xff]
  %v143 = vld [vmem:[%s0 + $0x3b4] sm:$0xff]
  %v144 = vld [vmem:[%s0 + $0x3bc] sm:$0xff]
  %v145 = vld [vmem:[%s0 + $0x3c4] sm:$0xff]
  %v146 = vld [vmem:[%s0 + $0x3cc] sm:$0xff]
  %v147 = vld [vmem:[%s0 + $0x3d4] sm:$0xff]
  %v148 = vld [vmem:[%s0 + $0x3dc] sm:$0xff]
  %v149 = vld [vmem:[%s0 + $0x3e4] sm:$0xf]
  %v150 = vld [vmem:[%s0 + $0x3e8] sm:$0xff]
  %v151 = vld [vmem:[%s0 + $0x3f0] sm:$0xff]
  %v152 = vld [vmem:[%s0 + $0x3f8] sm:$0xff]
  %v153 = vld [vmem:[%s0 + $0x400] sm:$0xff]
  %v154 = vld [vmem:[%s0 + $0x408] sm:$0xff]
  %v155 = vld [vmem:[%s0 + $0x410] sm:$0xff]
  %v156 = vld [vmem:[%s0 + $0x418] sm:$0xff]
  %v157 = vld [vmem:[%s0 + $0x420] sm:$0xff]
  %v158 = vld [vmem:[%s0 + $0x428] sm:$0xff]
  %v159 = vld [vmem:[%s0 + $0x430] sm:$0xff]
  %v160 = vld [vmem:[%s0 + $0x438] sm:$0xff]
  %v161 = vld [vmem:[%s0 + $0x440] sm:$0xff]
  %v162 = vld [vmem:[%s0 + $0x448] sm:$0xf]
  %v163 = vld [vmem:[%s0 + $0x44c] sm:$0xff]
  %v164 = vld [vmem:[%s0 + $0x454] sm:$0xff]
  %v165 = vld [vmem:[%s0 + $0x45c] sm:$0xff]
  %v166 = vld [vmem:[%s0 + $0x464] sm:$0xff]
  %v167 = vld [vmem:[%s0 + $0x46c] sm:$0xff]
  %v168 = vld [vmem:[%s0 + $0x474] sm:$0xff]
  %v169 = vld [vmem:[%s0 + $0x47c] sm:$0xff]
  %v170 = vld [vmem:[%s0 + $0x484] sm:$0xff]
  %v171 = vld [vmem:[%s0 + $0x48c] sm:$0xff]
  %v172 = vld [vmem:[%s0 + $0x494] sm:$0xff]
  %v173 = vld [vmem:[%s0 + $0x49c] sm:$0xff]
  %v174 = vld [vmem:[%s0 + $0x4a4] sm:$0xff]
  %v175 = vld [vmem:[%s0 + $0x4ac] sm:$0xf]
  %v176 = vld [vmem:[%s0 + $0x4b0] sm:$0xff]
  %v177 = vld [vmem:[%s0 + $0x4b8] sm:$0xff]
  %v178 = vld [vmem:[%s0 + $0x4c0] sm:$0xff]
  %v179 = vld [vmem:[%s0 + $0x4c8] sm:$0xff]
  %v180 = vld [vmem:[%s0 + $0x4d0] sm:$0xff]
  %v181 = vld [vmem:[%s0 + $0x4d8] sm:$0xff]
  %v182 = vld [vmem:[%s0 + $0x4e0] sm:$0xff]
  %v183 = vld [vmem:[%s0 + $0x4e8] sm:$0xff]
  %v184 = vld [vmem:[%s0 + $0x4f0] sm:$0xff]
  %v185 = vld [vmem:[%s0 + $0x4f8] sm:$0xff]
  %v186 = vld [vmem:[%s0 + $0x500] sm:$0xff]
  %v187 = vld [vmem:[%s0 + $0x508] sm:$0xff]
  %v188 = vld [vmem:[%s0 + $0x510] sm:$0xf]
  %v189 = vld [vmem:[%s0 + $0x514] sm:$0xff]
  %v190 = vld [vmem:[%s0 + $0x51c] sm:$0xff]
  %v191 = vld [vmem:[%s0 + $0x524] sm:$0xff]
  %v192 = vld [vmem:[%s0 + $0x52c] sm:$0xff]
  %v193 = vld [vmem:[%s0 + $0x534] sm:$0xff]
  %v194 = vld [vmem:[%s0 + $0x53c] sm:$0xff]
  %v195 = vld [vmem:[%s0 + $0x544] sm:$0xff]
  %v196 = vld [vmem:[%s0 + $0x54c] sm:$0xff]
  %v197 = vld [vmem:[%s0 + $0x554] sm:$0xff]
  %v198 = vld [vmem:[%s0 + $0x55c] sm:$0xff]
  %v199 = vld [vmem:[%s0 + $0x564] sm:$0xff]
  %v200 = vld [vmem:[%s0 + $0x56c] sm:$0xff]
  %v201 = vld [vmem:[%s0 + $0x574] sm:$0xf]
  %v202 = vld [vmem:[%s0 + $0x578] sm:$0xff]
  %v203 = vld [vmem:[%s0 + $0x580] sm:$0xff]
  %v204 = vld [vmem:[%s0 + $0x588] sm:$0xff]
  %v205 = vld [vmem:[%s0 + $0x590] sm:$0xff]
  %v206 = vld [vmem:[%s0 + $0x598] sm:$0xff]
  %v207 = vld [vmem:[%s0 + $0x5a0] sm:$0xff]
  %v208 = vld [vmem:[%s0 + $0x5a8] sm:$0xff]
  %v209 = vld [vmem:[%s0 + $0x5b0] sm:$0xff]
  %v210 = vld [vmem:[%s0 + $0x5b8] sm:$0xff]
  %v211 = vld [vmem:[%s0 + $0x5c0] sm:$0xff]
  %v212 = vld [vmem:[%s0 + $0x5c8] sm:$0xff]
  %v213 = vld [vmem:[%s0 + $0x5d0] sm:$0xff]
  %v214 = vld [vmem:[%s0 + $0x5d8] sm:$0xf]
  %v215 = vld [vmem:[%s0 + $0x5dc] sm:$0xff]
  %v216 = vld [vmem:[%s0 + $0x5e4] sm:$0xff]
  %v217 = vld [vmem:[%s0 + $0x5ec] sm:$0xff]
  %v218 = vld [vmem:[%s0 + $0x5f4] sm:$0xff]
  %v219 = vld [vmem:[%s0 + $0x5fc] sm:$0xff]
  %v220 = vld [vmem:[%s0 + $0x604] sm:$0xff]
  %v221 = vld [vmem:[%s0 + $0x60c] sm:$0xff]
  %v222 = vld [vmem:[%s0 + $0x614] sm:$0xff]
  %v223 = vld [vmem:[%s0 + $0x61c] sm:$0xff]
  %v224 = vld [vmem:[%s0 + $0x624] sm:$0xff]
  %v225 = vld [vmem:[%s0 + $0x62c] sm:$0xff]
  %v226 = vld [vmem:[%s0 + $0x634] sm:$0xff]
  %v227 = vld [vmem:[%s0 + $0x63c] sm:$0xf]
  %v228 = vld [vmem:[%s0 + $0x640] sm:$0xff]
  %v229 = vld [vmem:[%s0 + $0x648] sm:$0xff]
  %v230 = vld [vmem:[%s0 + $0x650] sm:$0xff]
  %v231 = vld [vmem:[%s0 + $0x658] sm:$0xff]
  %v232 = vld [vmem:[%s0 + $0x660] sm:$0xff]
  %v233 = vld [vmem:[%s0 + $0x668] sm:$0xff]
  %v234 = vld [vmem:[%s0 + $0x670] sm:$0xff]
  %v235 = vld [vmem:[%s0 + $0x678] sm:$0xff]
  %v236 = vld [vmem:[%s0 + $0x680] sm:$0xff]
  %v237 = vld [vmem:[%s0 + $0x688] sm:$0xff]
  %v238 = vld [vmem:[%s0 + $0x690] sm:$0xff]
  %v239 = vld [vmem:[%s0 + $0x698] sm:$0xff]
  %v240 = vld [vmem:[%s0 + $0x6a0] sm:$0xf]
  %v241 = vld [vmem:[%s0 + $0x6a4] sm:$0xff]
  %v242 = vld [vmem:[%s0 + $0x6ac] sm:$0xff]
  %v243 = vld [vmem:[%s0 + $0x6b4] sm:$0xff]
  %v244 = vld [vmem:[%s0 + $0x6bc] sm:$0xff]
  %v245 = vld [vmem:[%s0 + $0x6c4] sm:$0xff]
  %v246 = vld [vmem:[%s0 + $0x6cc] sm:$0xff]
  %v247 = vld [vmem:[%s0 + $0x6d4] sm:$0xff]
  %v248 = vld [vmem:[%s0 + $0x6dc] sm:$0xff]
  %v249 = vld [vmem:[%s0 + $0x6e4] sm:$0xff]
  %v250 = vld [vmem:[%s0 + $0x6ec] sm:$0xff]
  %v251 = vld [vmem:[%s0 + $0x6f4] sm:$0xff]
  %v252 = vld [vmem:[%s0 + $0x6fc] sm:$0xff]
  %v253 = vld [vmem:[%s0 + $0x704] sm:$0xf]
  %v254 = vld [vmem:[%s0 + $0x708] sm:$0xff]
  %v255 = vld [vmem:[%s0 + $0x710] sm:$0xff]
  %v256 = vld [vmem:[%s0 + $0x718] sm:$0xff]
  %v257 = vld [vmem:[%s0 + $0x720] sm:$0xff]
  %v258 = vld [vmem:[%s0 + $0x728] sm:$0xff]
  %v259 = vld [vmem:[%s0 + $0x730] sm:$0xff]
  %v260 = vld [vmem:[%s0 + $0x738] sm:$0xff]
  %v261 = vld [vmem:[%s0 + $0x740] sm:$0xff]
  %v262 = vld [vmem:[%s0 + $0x748] sm:$0xff]
  %v263 = vld [vmem:[%s0 + $0x750] sm:$0xff]
  %v264 = vld [vmem:[%s0 + $0x758] sm:$0xff]
  %v265 = vld [vmem:[%s0 + $0x760] sm:$0xff]
  %v266 = vld [vmem:[%s0 + $0x768] sm:$0xf]
  %v267 = vld [vmem:[%s0 + $0x76c] sm:$0xff]
  %v268 = vld [vmem:[%s0 + $0x774] sm:$0xff]
  %v269 = vld [vmem:[%s0 + $0x77c] sm:$0xff]
  %v270 = vld [vmem:[%s0 + $0x784] sm:$0xff]
  %v271 = vld [vmem:[%s0 + $0x78c] sm:$0xff]
  %v272 = vld [vmem:[%s0 + $0x794] sm:$0xff]
  %v273 = vld [vmem:[%s0 + $0x79c] sm:$0xff]
  %v274 = vld [vmem:[%s0 + $0x7a4] sm:$0xff]
  %v275 = vld [vmem:[%s0 + $0x7ac] sm:$0xff]
  %v276 = vld [vmem:[%s0 + $0x7b4] sm:$0xff]
  %v277 = vld [vmem:[%s0 + $0x7bc] sm:$0xff]
  %v278 = vld [vmem:[%s0 + $0x7c4] sm:$0xff]
  %v279 = vld [vmem:[%s0 + $0x7cc] sm:$0xf]
  %v280 = vld [vmem:[%s0 + $0x7d0] sm:$0x11]
  %v281 = vld [vmem:[%s0 + $0x7d8] sm:$0x11]
  %v282 = vld [vmem:[%s0 + $0x7e0] sm:$0x11]
  %v283 = vld [vmem:[%s0 + $0x7e8] sm:$0x11]
  %v284 = vld [vmem:[%s0 + $0x7f0] sm:$0x11]
  %v285 = vld [vmem:[%s0 + $0x7f8] sm:$0x11]
  %v286 = vld [vmem:[%s0 + $0x800] sm:$0x11]
  %v287 = vld [vmem:[%s0 + $0x808] sm:$0x11]
  %v288 = vld [vmem:[%s0 + $0x810] sm:$0x11]
  %v289 = vld [vmem:[%s0 + $0x818] sm:$0x11]
  %v290 = vld [vmem:[%s0 + $0x820] sm:$0x11]
  %v291 = vld [vmem:[%s0 + $0x828] sm:$0x11]
  %v292 = vld [vmem:[%s0 + $0x830] sm:$0x1]
  %v293 = vld [vmem:[%s1] sm:$0xff]
  %v294 = vld [vmem:[%s1 + $0x8] sm:$0xff]
  %v295 = vld [vmem:[%s1 + $0x10] sm:$0xff]
  %v296 = vld [vmem:[%s1 + $0x18] sm:$0xff]
  %v297 = vld [vmem:[%s1 + $0x20] sm:$0xff]
  %v298 = vld [vmem:[%s1 + $0x28] sm:$0xff]
  %v299 = vld [vmem:[%s1 + $0x30] sm:$0xff]
  %v300 = vld [vmem:[%s1 + $0x38] sm:$0xff]
  %v301 = vld [vmem:[%s1 + $0x40] sm:$0xff]
  %v302 = vld [vmem:[%s1 + $0x48] sm:$0xff]
  %v303 = vld [vmem:[%s1 + $0x50] sm:$0xff]
  %v304 = vld [vmem:[%s1 + $0x58] sm:$0xff]
  %v305 = vld [vmem:[%s1 + $0x60] sm:$0xff]
  %v306 = vld [vmem:[%s1 + $0x68] sm:$0xff]
  %v307 = vld [vmem:[%s1 + $0x70] sm:$0xff]
  %v308 = vld [vmem:[%s1 + $0x78] sm:$0xff]
  %v309 = vld [vmem:[%s1 + $0x80] sm:$0xff]
  %v310 = vld [vmem:[%s1 + $0x88] sm:$0xff]
  %v311 = vld [vmem:[%s1 + $0x90] sm:$0xff]
  %v312 = vld [vmem:[%s1 + $0x98] sm:$0xff]
  %v313 = vld [vmem:[%s1 + $0xa0] sm:$0xff]
  %v314 = vld [vmem:[%s1 + $0xa8] sm:$0xff]
  %v315 = vld [vmem:[%s1 + $0xb0] sm:$0xff]
  %v316 = vld [vmem:[%s1 + $0xb8] sm:$0xff]
  %v317 = vld [vmem:[%s1 + $0xc0] sm:$0xff]
  %v318 = vld [vmem:[%s1 + $0xc8] sm:$0xff]
  %v319 = vld [vmem:[%s1 + $0xd0] sm:$0xff]
  %v320 = vld [vmem:[%s1 + $0xd8] sm:$0xff]
  %v321 = vld [vmem:[%s1 + $0xe0] sm:$0xff]
  %v322 = vld [vmem:[%s1 + $0xe8] sm:$0xff]
  %v323 = vld [vmem:[%s1 + $0xf0] sm:$0xff]
  %v324 = vld [vmem:[%s1 + $0xf8] sm:$0xff]
  %v325 = vld [vmem:[%s1 + $0x100] sm:$0xff]
  %v326 = vld [vmem:[%s1 + $0x108] sm:$0xff]
  %v327 = vld [vmem:[%s1 + $0x110] sm:$0xff]
  %v328 = vld [vmem:[%s1 + $0x118] sm:$0xff]
  %v329 = vld [vmem:[%s1 + $0x120] sm:$0xff]
  %v330 = vld [vmem:[%s1 + $0x128] sm:$0xff]
  %v331 = vld [vmem:[%s1 + $0x130] sm:$0xff]
  %v332 = vld [vmem:[%s1 + $0x138] sm:$0xff]
  %v333 = vld [vmem:[%s1 + $0x140] sm:$0xff]
  %v334 = vld [vmem:[%s1 + $0x148] sm:$0xff]
  %v335 = vld [vmem:[%s1 + $0x150] sm:$0xff]
  %v336 = vld [vmem:[%s1 + $0x158] sm:$0xff]
  %v337 = vld [vmem:[%s1 + $0x160] sm:$0xff]
  %v338 = vld [vmem:[%s1 + $0x168] sm:$0xff]
  %v339 = vld [vmem:[%s1 + $0x170] sm:$0xff]
  %v340 = vld [vmem:[%s1 + $0x178] sm:$0xff]
  %v341 = vld [vmem:[%s1 + $0x180] sm:$0xff]
  %v342 = vld [vmem:[%s1 + $0x188] sm:$0xff]
  %v343 = vld [vmem:[%s1 + $0x190] sm:$0xff]
  %v344 = vld [vmem:[%s1 + $0x198] sm:$0xff]
  %v345 = vld [vmem:[%s1 + $0x1a0] sm:$0xff]
  %v346 = vld [vmem:[%s1 + $0x1a8] sm:$0xff]
  %v347 = vld [vmem:[%s1 + $0x1b0] sm:$0xff]
  %v348 = vld [vmem:[%s1 + $0x1b8] sm:$0xff]
  %v349 = vld [vmem:[%s1 + $0x1c0] sm:$0xff]
  %v350 = vld [vmem:[%s1 + $0x1c8] sm:$0xff]
  %v351 = vld [vmem:[%s1 + $0x1d0] sm:$0xff]
  %v352 = vld [vmem:[%s1 + $0x1d8] sm:$0xff]
  %v353 = vld [vmem:[%s1 + $0x1e0] sm:$0xff]
  %v354 = vld [vmem:[%s1 + $0x1e8] sm:$0xff]
  %v355 = vld [vmem:[%s1 + $0x1f0] sm:$0xff]
  %v356 = vld [vmem:[%s1 + $0x1f8] sm:$0xff]
  %v357 = vld [vmem:[%s1 + $0x200] sm:$0xff]
  %v358 = vld [vmem:[%s1 + $0x208] sm:$0xff]
  %v359 = vld [vmem:[%s1 + $0x210] sm:$0xff]
  %v360 = vld [vmem:[%s1 + $0x218] sm:$0xff]
  %v361 = vld [vmem:[%s1 + $0x220] sm:$0xff]
  %v362 = vld [vmem:[%s1 + $0x228] sm:$0xff]
  %v363 = vld [vmem:[%s1 + $0x230] sm:$0xff]
  %v364 = vld [vmem:[%s1 + $0x238] sm:$0xff]
  %v365 = vld [vmem:[%s1 + $0x240] sm:$0xff]
  %v366 = vld [vmem:[%s1 + $0x248] sm:$0xff]
  %v367 = vld [vmem:[%s1 + $0x250] sm:$0xff]
  %v368 = vld [vmem:[%s1 + $0x258] sm:$0xff]
  %v369 = vld [vmem:[%s1 + $0x260] sm:$0xff]
  %v370 = vld [vmem:[%s1 + $0x268] sm:$0xff]
  %v371 = vld [vmem:[%s1 + $0x270] sm:$0xff]
  %v372 = vld [vmem:[%s1 + $0x278] sm:$0xff]
  %v373 = vld [vmem:[%s1 + $0x280] sm:$0xff]
  %v374 = vld [vmem:[%s1 + $0x288] sm:$0xff]
  %v375 = vld [vmem:[%s1 + $0x290] sm:$0xff]
  %v376 = vld [vmem:[%s1 + $0x298] sm:$0xff]
  %v377 = vld [vmem:[%s1 + $0x2a0] sm:$0xff]
  %v378 = vld [vmem:[%s1 + $0x2a8] sm:$0xff]
  %v379 = vld [vmem:[%s1 + $0x2b0] sm:$0xff]
  %v380 = vld [vmem:[%s1 + $0x2b8] sm:$0xff]
  %v381 = vld [vmem:[%s1 + $0x2c0] sm:$0xff]
  %v382 = vld [vmem:[%s1 + $0x2c8] sm:$0xff]
  %v383 = vld [vmem:[%s1 + $0x2d0] sm:$0xff]
  %v384 = vld [vmem:[%s1 + $0x2d8] sm:$0xff]
  %v385 = vld [vmem:[%s1 + $0x2e0] sm:$0xff]
  %v386 = vld [vmem:[%s1 + $0x2e8] sm:$0xff]
  %v387 = vld [vmem:[%s1 + $0x2f0] sm:$0xff]
  %v388 = vld [vmem:[%s1 + $0x2f8] sm:$0xff]
  %v389 = vld [vmem:[%s1 + $0x300] sm:$0xff]
  %v390 = vld [vmem:[%s1 + $0x308] sm:$0xff]
  %v391 = vld [vmem:[%s1 + $0x310] sm:$0xff]
  %v392 = vld [vmem:[%s1 + $0x318] sm:$0xff]
  %v393 = vld [vmem:[%s1 + $0x320] sm:$0xff]
  %v394 = vld [vmem:[%s1 + $0x328] sm:$0xff]
  %v395 = vld [vmem:[%s1 + $0x330] sm:$0xff]
  %v396 = vld [vmem:[%s1 + $0x338] sm:$0xff]
  %v397 = vld [vmem:[%s1 + $0x340] sm:$0xff]
  %v398 = vld [vmem:[%s1 + $0x348] sm:$0xff]
  %v399 = vld [vmem:[%s1 + $0x350] sm:$0xff]
  %v400 = vld [vmem:[%s1 + $0x358] sm:$0xff]
  %v401 = vld [vmem:[%s1 + $0x360] sm:$0xff]
  %v402 = vld [vmem:[%s1 + $0x368] sm:$0xff]
  %v403 = vld [vmem:[%s1 + $0x370] sm:$0xff]
  %v404 = vld [vmem:[%s1 + $0x378] sm:$0xff]
  %v405 = vld [vmem:[%s1 + $0x380] sm:$0xff]
  %v406 = vld [vmem:[%s1 + $0x388] sm:$0xff]
  %v407 = vld [vmem:[%s1 + $0x390] sm:$0xff]
  %v408 = vld [vmem:[%s1 + $0x398] sm:$0xff]
  %v409 = vld [vmem:[%s1 + $0x3a0] sm:$0xff]
  %v410 = vld [vmem:[%s1 + $0x3a8] sm:$0xff]
  %v411 = vld [vmem:[%s1 + $0x3b0] sm:$0xff]
  %v412 = vld [vmem:[%s1 + $0x3b8] sm:$0xff]
  %v413 = vld [vmem:[%s1 + $0x3c0] sm:$0xff]
  %v414 = vld [vmem:[%s1 + $0x3c8] sm:$0xff]
  %v415 = vld [vmem:[%s1 + $0x3d0] sm:$0xff]
  %v416 = vld [vmem:[%s1 + $0x3d8] sm:$0xff]
  %v417 = vld [vmem:[%s1 + $0x3e0] sm:$0xff]
  %v418 = vld [vmem:[%s1 + $0x3e8] sm:$0xff]
  %v419 = vld [vmem:[%s1 + $0x3f0] sm:$0xff]
  %v420 = vld [vmem:[%s1 + $0x3f8] sm:$0xff]
  %v421 = vld [vmem:[%s1 + $0x400] sm:$0xff]
  %v422 = vld [vmem:[%s1 + $0x408] sm:$0xff]
  %v423 = vld [vmem:[%s1 + $0x410] sm:$0xff]
  %v424 = vld [vmem:[%s1 + $0x418] sm:$0xff]
  %v425 = vld [vmem:[%s1 + $0x420] sm:$0xff]
  %v426 = vld [vmem:[%s1 + $0x428] sm:$0xff]
  %v427 = vld [vmem:[%s1 + $0x430] sm:$0xff]
  %v428 = vld [vmem:[%s1 + $0x438] sm:$0xff]
  %v429 = vld [vmem:[%s1 + $0x440] sm:$0xff]
  %v430 = vld [vmem:[%s1 + $0x448] sm:$0xff]
  %v431 = vld [vmem:[%s1 + $0x450] sm:$0xff]
  %v432 = vld [vmem:[%s1 + $0x458] sm:$0xff]
  %v433 = vld [vmem:[%s1 + $0x460] sm:$0xff]
  %v434 = vld [vmem:[%s1 + $0x468] sm:$0xff]
  %v435 = vld [vmem:[%s1 + $0x470] sm:$0xff]
  %v436 = vld [vmem:[%s1 + $0x478] sm:$0xff]
  %v437 = vld [vmem:[%s1 + $0x480] sm:$0xff]
  %v438 = vld [vmem:[%s1 + $0x488] sm:$0xff]
  %v439 = vld [vmem:[%s1 + $0x490] sm:$0xff]
  %v440 = vld [vmem:[%s1 + $0x498] sm:$0xff]
  %v441 = vld [vmem:[%s1 + $0x4a0] sm:$0xff]
  %v442 = vld [vmem:[%s1 + $0x4a8] sm:$0xff]
  %v443 = vld [vmem:[%s1 + $0x4b0] sm:$0xff]
  %v444 = vld [vmem:[%s1 + $0x4b8] sm:$0xff]
  %v445 = vld [vmem:[%s1 + $0x4c0] sm:$0xff]
  %v446 = vld [vmem:[%s1 + $0x4c8] sm:$0xff]
  %v447 = vld [vmem:[%s1 + $0x4d0] sm:$0xff]
  %v448 = vld [vmem:[%s1 + $0x4d8] sm:$0xff]
  %v449 = vld [vmem:[%s1 + $0x4e0] sm:$0xff]
  %v450 = vld [vmem:[%s1 + $0x4e8] sm:$0xff]
  %v451 = vld [vmem:[%s1 + $0x4f0] sm:$0xff]
  %v452 = vld [vmem:[%s1 + $0x4f8] sm:$0xff]
  %v453 = vld [vmem:[%s1 + $0x500] sm:$0xff]
  %v454 = vld [vmem:[%s1 + $0x508] sm:$0xff]
  %v455 = vld [vmem:[%s1 + $0x510] sm:$0xff]
  %v456 = vld [vmem:[%s1 + $0x518] sm:$0xff]
  %v457 = vld [vmem:[%s1 + $0x520] sm:$0xff]
  %v458 = vld [vmem:[%s1 + $0x528] sm:$0xff]
  %v459 = vld [vmem:[%s1 + $0x530] sm:$0xff]
  %v460 = vld [vmem:[%s1 + $0x538] sm:$0xff]
  %v461 = vld [vmem:[%s1 + $0x540] sm:$0xff]
  %v462 = vld [vmem:[%s1 + $0x548] sm:$0xff]
  %v463 = vld [vmem:[%s1 + $0x550] sm:$0xff]
  %v464 = vld [vmem:[%s1 + $0x558] sm:$0xff]
  %v465 = vld [vmem:[%s1 + $0x560] sm:$0xff]
  %v466 = vld [vmem:[%s1 + $0x568] sm:$0xff]
  %v467 = vld [vmem:[%s1 + $0x570] sm:$0xff]
  %v468 = vld [vmem:[%s1 + $0x578] sm:$0xff]
  %v469 = vld [vmem:[%s1 + $0x580] sm:$0xff]
  %v470 = vld [vmem:[%s1 + $0x588] sm:$0xff]
  %v471 = vld [vmem:[%s1 + $0x590] sm:$0xff]
  %v472 = vld [vmem:[%s1 + $0x598] sm:$0xff]
  %v473 = vld [vmem:[%s1 + $0x5a0] sm:$0xff]
  %v474 = vld [vmem:[%s1 + $0x5a8] sm:$0xff]
  %v475 = vld [vmem:[%s1 + $0x5b0] sm:$0xff]
  %v476 = vld [vmem:[%s1 + $0x5b8] sm:$0xff]
  %v477 = vld [vmem:[%s1 + $0x5c0] sm:$0xff]
  %v478 = vld [vmem:[%s1 + $0x5c8] sm:$0xff]
  %v479 = vld [vmem:[%s1 + $0x5d0] sm:$0xff]
  %v480 = vld [vmem:[%s1 + $0x5d8] sm:$0xff]
  %v481 = vld [vmem:[%s1 + $0x5e0] sm:$0xff]
  %v482 = vld [vmem:[%s1 + $0x5e8] sm:$0xff]
  %v483 = vld [vmem:[%s1 + $0x5f0] sm:$0xff]
  %v484 = vld [vmem:[%s1 + $0x5f8] sm:$0xff]
  %v485 = vld [vmem:[%s1 + $0x600] sm:$0xff]
  %v486 = vld [vmem:[%s1 + $0x608] sm:$0xff]
  %v487 = vld [vmem:[%s1 + $0x610] sm:$0xff]
  %v488 = vld [vmem:[%s1 + $0x618] sm:$0xff]
  %v489 = vld [vmem:[%s1 + $0x620] sm:$0xff]
  %v490 = vld [vmem:[%s1 + $0x628] sm:$0xff]
  %v491 = vld [vmem:[%s1 + $0x630] sm:$0xff]
  %v492 = vld [vmem:[%s1 + $0x638] sm:$0xff]
  %v493 = vld [vmem:[%s1 + $0x640] sm:$0xff]
  %v494 = vld [vmem:[%s1 + $0x648] sm:$0xff]
  %v495 = vld [vmem:[%s1 + $0x650] sm:$0xff]
  %v496 = vld [vmem:[%s1 + $0x658] sm:$0xff]
  %v497 = vld [vmem:[%s1 + $0x660] sm:$0xff]
  %v498 = vld [vmem:[%s1 + $0x668] sm:$0xff]
  %v499 = vld [vmem:[%s1 + $0x670] sm:$0xff]
  %v500 = vld [vmem:[%s1 + $0x678] sm:$0xff]
  %v501 = vld [vmem:[%s1 + $0x680] sm:$0xff]
  %v502 = vld [vmem:[%s1 + $0x688] sm:$0xff]
  %v503 = vld [vmem:[%s1 + $0x690] sm:$0xff]
  %v504 = vld [vmem:[%s1 + $0x698] sm:$0xff]
  %v505 = vld [vmem:[%s1 + $0x6a0] sm:$0xff]
  %v506 = vld [vmem:[%s1 + $0x6a8] sm:$0xff]
  %v507 = vld [vmem:[%s1 + $0x6b0] sm:$0xff]
  %v508 = vld [vmem:[%s1 + $0x6b8] sm:$0xff]
  %v509 = vld [vmem:[%s1 + $0x6c0] sm:$0xff]
  %v510 = vld [vmem:[%s1 + $0x6c8] sm:$0xff]
  %v511 = vld [vmem:[%s1 + $0x6d0] sm:$0xff]
  %v512 = vld [vmem:[%s1 + $0x6d8] sm:$0xff]
  %v513 = vld [vmem:[%s1 + $0x6e0] sm:$0xff]
  %v514 = vld [vmem:[%s1 + $0x6e8] sm:$0xff]
  %v515 = vld [vmem:[%s1 + $0x6f0] sm:$0xff]
  %v516 = vld [vmem:[%s1 + $0x6f8] sm:$0xff]
  %v517 = vld [vmem:[%s1 + $0x700] sm:$0xff]
  %v518 = vld [vmem:[%s1 + $0x708] sm:$0xff]
  %v519 = vld [vmem:[%s1 + $0x710] sm:$0xff]
  %v520 = vld [vmem:[%s1 + $0x718] sm:$0xff]
  %v521 = vld [vmem:[%s1 + $0x720] sm:$0xff]
  %v522 = vld [vmem:[%s1 + $0x728] sm:$0xff]
  %v523 = vld [vmem:[%s1 + $0x730] sm:$0xff]
  %v524 = vld [vmem:[%s1 + $0x738] sm:$0xff]
  %v525 = vld [vmem:[%s1 + $0x740] sm:$0xff]
  %v526 = vld [vmem:[%s1 + $0x748] sm:$0xff]
  %v527 = vld [vmem:[%s1 + $0x750] sm:$0xff]
  %v528 = vld [vmem:[%s1 + $0x758] sm:$0xff]
  %v529 = vld [vmem:[%s1 + $0x760] sm:$0xff]
  %v530 = vld [vmem:[%s1 + $0x768] sm:$0xff]
  %v531 = vld [vmem:[%s1 + $0x770] sm:$0xff]
  %v532 = vld [vmem:[%s1 + $0x778] sm:$0xff]
  %v533 = vld [vmem:[%s1 + $0x780] sm:$0xff]
  %v534 = vld [vmem:[%s1 + $0x788] sm:$0xff]
  %v535 = vld [vmem:[%s1 + $0x790] sm:$0xff]
  %v536 = vld [vmem:[%s1 + $0x798] sm:$0xff]
  %v537 = vld [vmem:[%s1 + $0x7a0] sm:$0xff]
  %v538 = vld [vmem:[%s1 + $0x7a8] sm:$0xff]
  %v539 = vld [vmem:[%s1 + $0x7b0] sm:$0xff]
  %v540 = vld [vmem:[%s1 + $0x7b8] sm:$0xff]
  %v541 = vld [vmem:[%s1 + $0x7c0] sm:$0xff]
  %v542 = vld [vmem:[%s1 + $0x7c8] sm:$0xff]
  %v543 = vld [vmem:[%s1 + $0x7d0] sm:$0xff]
  %v544 = vld [vmem:[%s1 + $0x7d8] sm:$0xff]
  %v545 = vld [vmem:[%s1 + $0x7e0] sm:$0xff]
  %v546 = vld [vmem:[%s1 + $0x7e8] sm:$0xff]
  %v547 = vld [vmem:[%s1 + $0x7f0] sm:$0xff]
  %v548 = vld [vmem:[%s1 + $0x7f8] sm:$0xff]
  %v549 = vld [vmem:[%s1 + $0x800] sm:$0xff]
  %v550 = vld [vmem:[%s1 + $0x808] sm:$0xff]
  %v551 = vld [vmem:[%s1 + $0x810] sm:$0xff]
  %v552 = vld [vmem:[%s1 + $0x818] sm:$0xff]
  %v553 = vld [vmem:[%s1 + $0x820] sm:$0xff]
  %v554 = vld [vmem:[%s1 + $0x828] sm:$0xff]
  %v555 = vld [vmem:[%s1 + $0x830] sm:$0xff]
  %v556 = vld [vmem:[%s1 + $0x838] sm:$0xff]
  %v557 = vld [vmem:[%s1 + $0x840] sm:$0xff]
  %v558 = vld [vmem:[%s1 + $0x848] sm:$0xff]
  %v559 = vld [vmem:[%s1 + $0x850] sm:$0xff]
  %v560 = vld [vmem:[%s1 + $0x858] sm:$0xff]
  %v561 = vld [vmem:[%s1 + $0x860] sm:$0xff]
  %v562 = vld [vmem:[%s1 + $0x868] sm:$0xff]
  %v563 = vld [vmem:[%s1 + $0x870] sm:$0xff]
  %v564 = vld [vmem:[%s1 + $0x878] sm:$0xff]
  %v565 = vld [vmem:[%s1 + $0x880] sm:$0xff]
  %v566 = vld [vmem:[%s1 + $0x888] sm:$0xff]
  %v567 = vld [vmem:[%s1 + $0x890] sm:$0xff]
  %v568 = vld [vmem:[%s1 + $0x898] sm:$0xff]
  %v569 = vld [vmem:[%s1 + $0x8a0] sm:$0xff]
  %v570 = vld [vmem:[%s1 + $0x8a8] sm:$0xff]
  %v571 = vld [vmem:[%s1 + $0x8b0] sm:$0xff]
  %v572 = vld [vmem:[%s1 + $0x8b8] sm:$0xff]
  %v573 = vld [vmem:[%s1 + $0x8c0] sm:$0xff]
  %v574 = vld [vmem:[%s1 + $0x8c8] sm:$0xff]
  %v575 = vld [vmem:[%s1 + $0x8d0] sm:$0xff]
  %v576 = vld [vmem:[%s1 + $0x8d8] sm:$0xff]
  %v577 = vld [vmem:[%s1 + $0x8e0] sm:$0xff]
  %v578 = vld [vmem:[%s1 + $0x8e8] sm:$0xff]
  %v579 = vld [vmem:[%s1 + $0x8f0] sm:$0xff]
  %v580 = vld [vmem:[%s1 + $0x8f8] sm:$0xff]
  %v581 = vld [vmem:[%s1 + $0x900] sm:$0xff]
  %v582 = vld [vmem:[%s1 + $0x908] sm:$0xff]
  %v583 = vld [vmem:[%s1 + $0x910] sm:$0xff]
  %v584 = vld [vmem:[%s1 + $0x918] sm:$0xff]
  %v585 = vld [vmem:[%s1 + $0x920] sm:$0xff]
  %v586 = vld [vmem:[%s1 + $0x928] sm:$0xff]
  %v587 = vld [vmem:[%s1 + $0x930] sm:$0xff]
  %v588 = vld [vmem:[%s1 + $0x938] sm:$0xff]
  %v589 = vld [vmem:[%s1 + $0x940] sm:$0xff]
  %v590 = vld [vmem:[%s1 + $0x948] sm:$0xff]
  %v591 = vld [vmem:[%s1 + $0x950] sm:$0xff]
  %v592 = vld [vmem:[%s1 + $0x958] sm:$0xff]
  %v593 = vld [vmem:[%s1 + $0x960] sm:$0xff]
  %v594 = vld [vmem:[%s1 + $0x968] sm:$0xff]
  %v595 = vld [vmem:[%s1 + $0x970] sm:$0xff]
  %v596 = vld [vmem:[%s1 + $0x978] sm:$0xff]
  %v597 = vld [vmem:[%s1 + $0x980] sm:$0xff]
  %v598 = vld [vmem:[%s1 + $0x988] sm:$0xff]
  %v599 = vld [vmem:[%s1 + $0x990] sm:$0xff]
  %v600 = vld [vmem:[%s1 + $0x998] sm:$0xff]
  %v601 = vld [vmem:[%s1 + $0x9a0] sm:$0xff]
  %v602 = vld [vmem:[%s1 + $0x9a8] sm:$0xff]
  %v603 = vld [vmem:[%s1 + $0x9b0] sm:$0xff]
  %v604 = vld [vmem:[%s1 + $0x9b8] sm:$0xff]
  %v605 = vld [vmem:[%s1 + $0x9c0] sm:$0xff]
  %v606 = vld [vmem:[%s1 + $0x9c8] sm:$0xff]
  %v607 = vld [vmem:[%s1 + $0x9d0] sm:$0xff]
  %v608 = vld [vmem:[%s1 + $0x9d8] sm:$0xff]
  %v609 = vld [vmem:[%s1 + $0x9e0] sm:$0xff]
  %v610 = vld [vmem:[%s1 + $0x9e8] sm:$0xff]
  %v611 = vld [vmem:[%s1 + $0x9f0] sm:$0xff]
  %v612 = vld [vmem:[%s1 + $0x9f8] sm:$0xff]
  %v613 = vld [vmem:[%s1 + $0xa00] sm:$0xff]
  %v614 = vld [vmem:[%s1 + $0xa08] sm:$0xff]
  %v615 = vld [vmem:[%s1 + $0xa10] sm:$0xff]
  %v616 = vld [vmem:[%s1 + $0xa18] sm:$0xff]
  %v617 = vld [vmem:[%s1 + $0xa20] sm:$0xff]
  %v618 = vld [vmem:[%s1 + $0xa28] sm:$0xff]
  %v619 = vld [vmem:[%s1 + $0xa30] sm:$0xff]
  %v620 = vld [vmem:[%s1 + $0xa38] sm:$0xff]
  %v621 = vld [vmem:[%s1 + $0xa40] sm:$0xff]
  %v622 = vld [vmem:[%s1 + $0xa48] sm:$0xff]
  %v623 = vld [vmem:[%s1 + $0xa50] sm:$0xff]
  %v624 = vld [vmem:[%s1 + $0xa58] sm:$0xff]
  %v625 = vld [vmem:[%s1 + $0xa60] sm:$0xff]
  %v626 = vld [vmem:[%s1 + $0xa68] sm:$0xff]
  %v627 = vld [vmem:[%s1 + $0xa70] sm:$0xff]
  %v628 = vld [vmem:[%s1 + $0xa78] sm:$0xff]
  %v629 = vld [vmem:[%s1 + $0xa80] sm:$0xff]
  %v630 = vld [vmem:[%s1 + $0xa88] sm:$0xff]
  %v631 = vld [vmem:[%s1 + $0xa90] sm:$0xff]
  %v632 = vld [vmem:[%s1 + $0xa98] sm:$0xff]
  %v633 = vld [vmem:[%s1 + $0xaa0] sm:$0xff]
  %v634 = vld [vmem:[%s1 + $0xaa8] sm:$0xff]
  %v635 = vld [vmem:[%s1 + $0xab0] sm:$0xff]
  %v636 = vld [vmem:[%s1 + $0xab8] sm:$0xff]
  %v637 = vld [vmem:[%s1 + $0xac0] sm:$0xff]
  %v638 = vld [vmem:[%s1 + $0xac8] sm:$0xff]
  %v639 = vld [vmem:[%s1 + $0xad0] sm:$0xff]
  %v640 = vld [vmem:[%s1 + $0xad8] sm:$0xff]
  %v641 = vld [vmem:[%s1 + $0xae0] sm:$0xff]
  %v642 = vld [vmem:[%s1 + $0xae8] sm:$0xff]
  %v643 = vld [vmem:[%s1 + $0xaf0] sm:$0xff]
  %v644 = vld [vmem:[%s1 + $0xaf8] sm:$0xff]
  %v645 = vld [vmem:[%s1 + $0xb00] sm:$0xff]
  %v646 = vld [vmem:[%s1 + $0xb08] sm:$0xff]
  %v647 = vld [vmem:[%s1 + $0xb10] sm:$0xff]
  %v648 = vld [vmem:[%s1 + $0xb18] sm:$0xff]
  %v649 = vld [vmem:[%s1 + $0xb20] sm:$0xff]
  %v650 = vld [vmem:[%s1 + $0xb28] sm:$0xff]
  %v651 = vld [vmem:[%s1 + $0xb30] sm:$0xff]
  %v652 = vld [vmem:[%s1 + $0xb38] sm:$0xff]
  %v653 = vld [vmem:[%s1 + $0xb40] sm:$0xff]
  %v654 = vld [vmem:[%s1 + $0xb48] sm:$0xff]
  %v655 = vld [vmem:[%s1 + $0xb50] sm:$0xff]
  %v656 = vld [vmem:[%s1 + $0xb58] sm:$0xff]
  %v657 = vld [vmem:[%s1 + $0xb60] sm:$0xff]
  %v658 = vld [vmem:[%s1 + $0xb68] sm:$0xff]
  %v659 = vld [vmem:[%s1 + $0xb70] sm:$0xff]
  %v660 = vld [vmem:[%s1 + $0xb78] sm:$0xff]
  %v661 = vld [vmem:[%s1 + $0xb80] sm:$0xff]
  %v662 = vld [vmem:[%s1 + $0xb88] sm:$0xff]
  %v663 = vld [vmem:[%s1 + $0xb90] sm:$0xff]
  %v664 = vld [vmem:[%s1 + $0xb98] sm:$0xff]
  %v665 = vld [vmem:[%s1 + $0xba0] sm:$0xff]
  %v666 = vld [vmem:[%s1 + $0xba8] sm:$0xff]
  %v667 = vld [vmem:[%s1 + $0xbb0] sm:$0xff]
  %v668 = vld [vmem:[%s1 + $0xbb8] sm:$0xff]
  %v669 = vld [vmem:[%s1 + $0xbc0] sm:$0xff]
  %v670 = vld [vmem:[%s1 + $0xbc8] sm:$0xff]
  %v671 = vld [vmem:[%s1 + $0xbd0] sm:$0xff]
  %v672 = vld [vmem:[%s1 + $0xbd8] sm:$0xff]
  %v673 = vld [vmem:[%s1 + $0xbe0] sm:$0xff]
  %v674 = vld [vmem:[%s1 + $0xbe8] sm:$0xff]
  %v675 = vld [vmem:[%s1 + $0xbf0] sm:$0xff]
  %v676 = vld [vmem:[%s1 + $0xbf8] sm:$0xff]
  %v677 = vld [vmem:[%s1 + $0xc00] sm:$0xff]
  %v678 = vld [vmem:[%s1 + $0xc08] sm:$0xff]
  %v679 = vld [vmem:[%s1 + $0xc10] sm:$0xff]
  %v680 = vld [vmem:[%s1 + $0xc18] sm:$0xff]
  %v681 = vld [vmem:[%s1 + $0xc20] sm:$0xff]
  %v682 = vld [vmem:[%s1 + $0xc28] sm:$0xff]
  %v683 = vld [vmem:[%s1 + $0xc30] sm:$0xff]
  %v684 = vld [vmem:[%s1 + $0xc38] sm:$0xff]
  %v685 = vld [vmem:[%s1 + $0xc40] sm:$0xff]
  %v686 = vld [vmem:[%s1 + $0xc48] sm:$0xff]
  %v687 = vld [vmem:[%s1 + $0xc50] sm:$0xff]
  %v688 = vld [vmem:[%s1 + $0xc58] sm:$0xff]
  %v689 = vld [vmem:[%s1 + $0xc60] sm:$0xff]
  %v690 = vld [vmem:[%s1 + $0xc68] sm:$0xff]
  %v691 = vld [vmem:[%s1 + $0xc70] sm:$0xff]
  %v692 = vld [vmem:[%s1 + $0xc78] sm:$0xff]
  %v693 = vld [vmem:[%s2] sm:$0x3]
  %v695 = vperm.slane %v693, 0
  %v696 = vperm.slane %v693, 1
  %v972 = vunpack.c.l.b16 %v20
  %v973 = vunpack.c.h.b16 %v20
  %v974 = vunpack.c.l.b16 %v21
  %v975 = vunpack.c.h.b16 %v21
  %v976 = vunpack.c.l.b16 %v22
  %v977 = vunpack.c.h.b16 %v22
  %v978 = vunpack.c.l.b16 %v23
  %v979 = vunpack.c.h.b16 %v23
  %v980 = vunpack.c.l.b16 %v24
  %v981 = vunpack.c.h.b16 %v24
  %v982 = vunpack.c.l.b16 %v25
  %v983 = vunpack.c.h.b16 %v25
  %v984 = vunpack.c.l.b16 %v26
  %v985 = vunpack.c.h.b16 %v26
  %v986 = vunpack.c.l.b16 %v27
  %v987 = vunpack.c.h.b16 %v27
  %v988 = vunpack.c.l.b16 %v28
  %v989 = vunpack.c.h.b16 %v28
  %v990 = vunpack.c.l.b16 %v29
  %v991 = vunpack.c.h.b16 %v29
  %v992 = vunpack.c.l.b16 %v30
  %v993 = vunpack.c.h.b16 %v30
  %v994 = vunpack.c.l.b16 %v31
  %v995 = vunpack.c.h.b16 %v31
  %v996 = vunpack.c.l.b16 %v32
  %v997 = vunpack.c.l.b16 %v33
  %v998 = vunpack.c.h.b16 %v33
  %v999 = vunpack.c.l.b16 %v34
  %v1000 = vunpack.c.h.b16 %v34
  %v1001 = vunpack.c.l.b16 %v35
  %v1002 = vunpack.c.h.b16 %v35
  %v1003 = vunpack.c.l.b16 %v36
  %v1004 = vunpack.c.h.b16 %v36
  %v1005 = vunpack.c.l.b16 %v37
  %v1006 = vunpack.c.h.b16 %v37
  %v1007 = vunpack.c.l.b16 %v38
  %v1008 = vunpack.c.h.b16 %v38
  %v1009 = vunpack.c.l.b16 %v39
  %v1010 = vunpack.c.h.b16 %v39
  %v1011 = vunpack.c.l.b16 %v40
  %v1012 = vunpack.c.h.b16 %v40
  %v1013 = vunpack.c.l.b16 %v41
  %v1014 = vunpack.c.h.b16 %v41
  %v1015 = vunpack.c.l.b16 %v42
  %v1016 = vunpack.c.h.b16 %v42
  %v1017 = vunpack.c.l.b16 %v43
  %v1018 = vunpack.c.h.b16 %v43
  %v1019 = vunpack.c.l.b16 %v44
  %v1020 = vunpack.c.h.b16 %v44
  %v1021 = vunpack.c.l.b16 %v45
  %v1022 = vunpack.c.l.b16 %v46
  %v1023 = vunpack.c.h.b16 %v46
  %v1024 = vunpack.c.l.b16 %v47
  %v1025 = vunpack.c.h.b16 %v47
  %v1026 = vunpack.c.l.b16 %v48
  %v1027 = vunpack.c.h.b16 %v48
  %v1028 = vunpack.c.l.b16 %v49
  %v1029 = vunpack.c.h.b16 %v49
  %v1030 = vunpack.c.l.b16 %v50
  %v1031 = vunpack.c.h.b16 %v50
  %v1032 = vunpack.c.l.b16 %v51
  %v1033 = vunpack.c.h.b16 %v51
  %v1034 = vunpack.c.l.b16 %v52
  %v1035 = vunpack.c.h.b16 %v52
  %v1036 = vunpack.c.l.b16 %v53
  %v1037 = vunpack.c.h.b16 %v53
  %v1038 = vunpack.c.l.b16 %v54
  %v1039 = vunpack.c.h.b16 %v54
  %v1040 = vunpack.c.l.b16 %v55
  %v1041 = vunpack.c.h.b16 %v55
  %v1042 = vunpack.c.l.b16 %v56
  %v1043 = vunpack.c.h.b16 %v56
  %v1044 = vunpack.c.l.b16 %v57
  %v1045 = vunpack.c.h.b16 %v57
  %v1046 = vunpack.c.l.b16 %v58
  %v1047 = vunpack.c.l.b16 %v59
  %v1048 = vunpack.c.h.b16 %v59
  %v1049 = vunpack.c.l.b16 %v60
  %v1050 = vunpack.c.h.b16 %v60
  %v1051 = vunpack.c.l.b16 %v61
  %v1052 = vunpack.c.h.b16 %v61
  %v1053 = vunpack.c.l.b16 %v62
  %v1054 = vunpack.c.h.b16 %v62
  %v1055 = vunpack.c.l.b16 %v63
  %v1056 = vunpack.c.h.b16 %v63
  %v1057 = vunpack.c.l.b16 %v64
  %v1058 = vunpack.c.h.b16 %v64
  %v1059 = vunpack.c.l.b16 %v65
  %v1060 = vunpack.c.h.b16 %v65
  %v1061 = vunpack.c.l.b16 %v66
  %v1062 = vunpack.c.h.b16 %v66
  %v1063 = vunpack.c.l.b16 %v67
  %v1064 = vunpack.c.h.b16 %v67
  %v1065 = vunpack.c.l.b16 %v68
  %v1066 = vunpack.c.h.b16 %v68
  %v1067 = vunpack.c.l.b16 %v69
  %v1068 = vunpack.c.h.b16 %v69
  %v1069 = vunpack.c.l.b16 %v70
  %v1070 = vunpack.c.h.b16 %v70
  %v1071 = vunpack.c.l.b16 %v71
  %v1072 = vunpack.c.l.b16 %v72
  %v1073 = vunpack.c.h.b16 %v72
  %v1074 = vunpack.c.l.b16 %v73
  %v1075 = vunpack.c.h.b16 %v73
  %v1076 = vunpack.c.l.b16 %v74
  %v1077 = vunpack.c.h.b16 %v74
  %v1078 = vunpack.c.l.b16 %v75
  %v1079 = vunpack.c.h.b16 %v75
  %v1080 = vunpack.c.l.b16 %v76
  %v1081 = vunpack.c.h.b16 %v76
  %v1082 = vunpack.c.l.b16 %v77
  %v1083 = vunpack.c.h.b16 %v77
  %v1084 = vunpack.c.l.b16 %v78
  %v1085 = vunpack.c.h.b16 %v78
  %v1086 = vunpack.c.l.b16 %v79
  %v1087 = vunpack.c.h.b16 %v79
  %v1088 = vunpack.c.l.b16 %v80
  %v1089 = vunpack.c.h.b16 %v80
  %v1090 = vunpack.c.l.b16 %v81
  %v1091 = vunpack.c.h.b16 %v81
  %v1092 = vunpack.c.l.b16 %v82
  %v1093 = vunpack.c.h.b16 %v82
  %v1094 = vunpack.c.l.b16 %v83
  %v1095 = vunpack.c.h.b16 %v83
  %v1096 = vunpack.c.l.b16 %v84
  %v1097 = vunpack.c.l.b16 %v85
  %v1098 = vunpack.c.h.b16 %v85
  %v1099 = vunpack.c.l.b16 %v86
  %v1100 = vunpack.c.h.b16 %v86
  %v1101 = vunpack.c.l.b16 %v87
  %v1102 = vunpack.c.h.b16 %v87
  %v1103 = vunpack.c.l.b16 %v88
  %v1104 = vunpack.c.h.b16 %v88
  %v1105 = vunpack.c.l.b16 %v89
  %v1106 = vunpack.c.h.b16 %v89
  %v1107 = vunpack.c.l.b16 %v90
  %v1108 = vunpack.c.h.b16 %v90
  %v1109 = vunpack.c.l.b16 %v91
  %v1110 = vunpack.c.h.b16 %v91
  %v1111 = vunpack.c.l.b16 %v92
  %v1112 = vunpack.c.h.b16 %v92
  %v1113 = vunpack.c.l.b16 %v93
  %v1114 = vunpack.c.h.b16 %v93
  %v1115 = vunpack.c.l.b16 %v94
  %v1116 = vunpack.c.h.b16 %v94
  %v1117 = vunpack.c.l.b16 %v95
  %v1118 = vunpack.c.h.b16 %v95
  %v1119 = vunpack.c.l.b16 %v96
  %v1120 = vunpack.c.h.b16 %v96
  %v1121 = vunpack.c.l.b16 %v97
  %v1122 = vunpack.c.l.b16 %v98
  %v1123 = vunpack.c.h.b16 %v98
  %v1124 = vunpack.c.l.b16 %v99
  %v1125 = vunpack.c.h.b16 %v99
  %v1126 = vunpack.c.l.b16 %v100
  %v1127 = vunpack.c.h.b16 %v100
  %v1128 = vunpack.c.l.b16 %v101
  %v1129 = vunpack.c.h.b16 %v101
  %v1130 = vunpack.c.l.b16 %v102
  %v1131 = vunpack.c.h.b16 %v102
  %v1132 = vunpack.c.l.b16 %v103
  %v1133 = vunpack.c.h.b16 %v103
  %v1134 = vunpack.c.l.b16 %v104
  %v1135 = vunpack.c.h.b16 %v104
  %v1136 = vunpack.c.l.b16 %v105
  %v1137 = vunpack.c.h.b16 %v105
  %v1138 = vunpack.c.l.b16 %v106
  %v1139 = vunpack.c.h.b16 %v106
  %v1140 = vunpack.c.l.b16 %v107
  %v1141 = vunpack.c.h.b16 %v107
  %v1142 = vunpack.c.l.b16 %v108
  %v1143 = vunpack.c.h.b16 %v108
  %v1144 = vunpack.c.l.b16 %v109
  %v1145 = vunpack.c.h.b16 %v109
  %v1146 = vunpack.c.l.b16 %v110
  %v1147 = vunpack.c.l.b16 %v111
  %v1148 = vunpack.c.h.b16 %v111
  %v1149 = vunpack.c.l.b16 %v112
  %v1150 = vunpack.c.h.b16 %v112
  %v1151 = vunpack.c.l.b16 %v113
  %v1152 = vunpack.c.h.b16 %v113
  %v1153 = vunpack.c.l.b16 %v114
  %v1154 = vunpack.c.h.b16 %v114
  %v1155 = vunpack.c.l.b16 %v115
  %v1156 = vunpack.c.h.b16 %v115
  %v1157 = vunpack.c.l.b16 %v116
  %v1158 = vunpack.c.h.b16 %v116
  %v1159 = vunpack.c.l.b16 %v117
  %v1160 = vunpack.c.h.b16 %v117
  %v1161 = vunpack.c.l.b16 %v118
  %v1162 = vunpack.c.h.b16 %v118
  %v1163 = vunpack.c.l.b16 %v119
  %v1164 = vunpack.c.h.b16 %v119
  %v1165 = vunpack.c.l.b16 %v120
  %v1166 = vunpack.c.h.b16 %v120
  %v1167 = vunpack.c.l.b16 %v121
  %v1168 = vunpack.c.h.b16 %v121
  %v1169 = vunpack.c.l.b16 %v122
  %v1170 = vunpack.c.h.b16 %v122
  %v1171 = vunpack.c.l.b16 %v123
  %v1172 = vunpack.c.l.b16 %v124
  %v1173 = vunpack.c.h.b16 %v124
  %v1174 = vunpack.c.l.b16 %v125
  %v1175 = vunpack.c.h.b16 %v125
  %v1176 = vunpack.c.l.b16 %v126
  %v1177 = vunpack.c.h.b16 %v126
  %v1178 = vunpack.c.l.b16 %v127
  %v1179 = vunpack.c.h.b16 %v127
  %v1180 = vunpack.c.l.b16 %v128
  %v1181 = vunpack.c.h.b16 %v128
  %v1182 = vunpack.c.l.b16 %v129
  %v1183 = vunpack.c.h.b16 %v129
  %v1184 = vunpack.c.l.b16 %v130
  %v1185 = vunpack.c.h.b16 %v130
  %v1186 = vunpack.c.l.b16 %v131
  %v1187 = vunpack.c.h.b16 %v131
  %v1188 = vunpack.c.l.b16 %v132
  %v1189 = vunpack.c.h.b16 %v132
  %v1190 = vunpack.c.l.b16 %v133
  %v1191 = vunpack.c.h.b16 %v133
  %v1192 = vunpack.c.l.b16 %v134
  %v1193 = vunpack.c.h.b16 %v134
  %v1194 = vunpack.c.l.b16 %v135
  %v1195 = vunpack.c.h.b16 %v135
  %v1196 = vunpack.c.l.b16 %v136
  %v1197 = vunpack.c.l.b16 %v137
  %v1198 = vunpack.c.h.b16 %v137
  %v1199 = vunpack.c.l.b16 %v138
  %v1200 = vunpack.c.h.b16 %v138
  %v1201 = vunpack.c.l.b16 %v139
  %v1202 = vunpack.c.h.b16 %v139
  %v1203 = vunpack.c.l.b16 %v140
  %v1204 = vunpack.c.h.b16 %v140
  %v1205 = vunpack.c.l.b16 %v141
  %v1206 = vunpack.c.h.b16 %v141
  %v1207 = vunpack.c.l.b16 %v142
  %v1208 = vunpack.c.h.b16 %v142
  %v1209 = vunpack.c.l.b16 %v143
  %v1210 = vunpack.c.h.b16 %v143
  %v1211 = vunpack.c.l.b16 %v144
  %v1212 = vunpack.c.h.b16 %v144
  %v1213 = vunpack.c.l.b16 %v145
  %v1214 = vunpack.c.h.b16 %v145
  %v1215 = vunpack.c.l.b16 %v146
  %v1216 = vunpack.c.h.b16 %v146
  %v1217 = vunpack.c.l.b16 %v147
  %v1218 = vunpack.c.h.b16 %v147
  %v1219 = vunpack.c.l.b16 %v148
  %v1220 = vunpack.c.h.b16 %v148
  %v1221 = vunpack.c.l.b16 %v149
  %v1222 = vunpack.c.l.b16 %v150
  %v1223 = vunpack.c.h.b16 %v150
  %v1224 = vunpack.c.l.b16 %v151
  %v1225 = vunpack.c.h.b16 %v151
  %v1226 = vunpack.c.l.b16 %v152
  %v1227 = vunpack.c.h.b16 %v152
  %v1228 = vunpack.c.l.b16 %v153
  %v1229 = vunpack.c.h.b16 %v153
  %v1230 = vunpack.c.l.b16 %v154
  %v1231 = vunpack.c.h.b16 %v154
  %v1232 = vunpack.c.l.b16 %v155
  %v1233 = vunpack.c.h.b16 %v155
  %v1234 = vunpack.c.l.b16 %v156
  %v1235 = vunpack.c.h.b16 %v156
  %v1236 = vunpack.c.l.b16 %v157
  %v1237 = vunpack.c.h.b16 %v157
  %v1238 = vunpack.c.l.b16 %v158
  %v1239 = vunpack.c.h.b16 %v158
  %v1240 = vunpack.c.l.b16 %v159
  %v1241 = vunpack.c.h.b16 %v159
  %v1242 = vunpack.c.l.b16 %v160
  %v1243 = vunpack.c.h.b16 %v160
  %v1244 = vunpack.c.l.b16 %v161
  %v1245 = vunpack.c.h.b16 %v161
  %v1246 = vunpack.c.l.b16 %v162
  %v1247 = vunpack.c.l.b16 %v163
  %v1248 = vunpack.c.h.b16 %v163
  %v1249 = vunpack.c.l.b16 %v164
  %v1250 = vunpack.c.h.b16 %v164
  %v1251 = vunpack.c.l.b16 %v165
  %v1252 = vunpack.c.h.b16 %v165
  %v1253 = vunpack.c.l.b16 %v166
  %v1254 = vunpack.c.h.b16 %v166
  %v1255 = vunpack.c.l.b16 %v167
  %v1256 = vunpack.c.h.b16 %v167
  %v1257 = vunpack.c.l.b16 %v168
  %v1258 = vunpack.c.h.b16 %v168
  %v1259 = vunpack.c.l.b16 %v169
  %v1260 = vunpack.c.h.b16 %v169
  %v1261 = vunpack.c.l.b16 %v170
  %v1262 = vunpack.c.h.b16 %v170
  %v1263 = vunpack.c.l.b16 %v171
  %v1264 = vunpack.c.h.b16 %v171
  %v1265 = vunpack.c.l.b16 %v172
  %v1266 = vunpack.c.h.b16 %v172
  %v1267 = vunpack.c.l.b16 %v173
  %v1268 = vunpack.c.h.b16 %v173
  %v1269 = vunpack.c.l.b16 %v174
  %v1270 = vunpack.c.h.b16 %v174
  %v1271 = vunpack.c.l.b16 %v175
  %v1272 = vunpack.c.l.b16 %v176
  %v1273 = vunpack.c.h.b16 %v176
  %v1274 = vunpack.c.l.b16 %v177
  %v1275 = vunpack.c.h.b16 %v177
  %v1276 = vunpack.c.l.b16 %v178
  %v1277 = vunpack.c.h.b16 %v178
  %v1278 = vunpack.c.l.b16 %v179
  %v1279 = vunpack.c.h.b16 %v179
  %v1280 = vunpack.c.l.b16 %v180
  %v1281 = vunpack.c.h.b16 %v180
  %v1282 = vunpack.c.l.b16 %v181
  %v1283 = vunpack.c.h.b16 %v181
  %v1284 = vunpack.c.l.b16 %v182
  %v1285 = vunpack.c.h.b16 %v182
  %v1286 = vunpack.c.l.b16 %v183
  %v1287 = vunpack.c.h.b16 %v183
  %v1288 = vunpack.c.l.b16 %v184
  %v1289 = vunpack.c.h.b16 %v184
  %v1290 = vunpack.c.l.b16 %v185
  %v1291 = vunpack.c.h.b16 %v185
  %v1292 = vunpack.c.l.b16 %v186
  %v1293 = vunpack.c.h.b16 %v186
  %v1294 = vunpack.c.l.b16 %v187
  %v1295 = vunpack.c.h.b16 %v187
  %v1296 = vunpack.c.l.b16 %v188
  %v1297 = vunpack.c.l.b16 %v189
  %v1298 = vunpack.c.h.b16 %v189
  %v1299 = vunpack.c.l.b16 %v190
  %v1300 = vunpack.c.h.b16 %v190
  %v1301 = vunpack.c.l.b16 %v191
  %v1302 = vunpack.c.h.b16 %v191
  %v1303 = vunpack.c.l.b16 %v192
  %v1304 = vunpack.c.h.b16 %v192
  %v1305 = vunpack.c.l.b16 %v193
  %v1306 = vunpack.c.h.b16 %v193
  %v1307 = vunpack.c.l.b16 %v194
  %v1308 = vunpack.c.h.b16 %v194
  %v1309 = vunpack.c.l.b16 %v195
  %v1310 = vunpack.c.h.b16 %v195
  %v1311 = vunpack.c.l.b16 %v196
  %v1312 = vunpack.c.h.b16 %v196
  %v1313 = vunpack.c.l.b16 %v197
  %v1314 = vunpack.c.h.b16 %v197
  %v1315 = vunpack.c.l.b16 %v198
  %v1316 = vunpack.c.h.b16 %v198
  %v1317 = vunpack.c.l.b16 %v199
  %v1318 = vunpack.c.h.b16 %v199
  %v1319 = vunpack.c.l.b16 %v200
  %v1320 = vunpack.c.h.b16 %v200
  %v1321 = vunpack.c.l.b16 %v201
  %v1322 = vunpack.c.l.b16 %v202
  %v1323 = vunpack.c.h.b16 %v202
  %v1324 = vunpack.c.l.b16 %v203
  %v1325 = vunpack.c.h.b16 %v203
  %v1326 = vunpack.c.l.b16 %v204
  %v1327 = vunpack.c.h.b16 %v204
  %v1328 = vunpack.c.l.b16 %v205
  %v1329 = vunpack.c.h.b16 %v205
  %v1330 = vunpack.c.l.b16 %v206
  %v1331 = vunpack.c.h.b16 %v206
  %v1332 = vunpack.c.l.b16 %v207
  %v1333 = vunpack.c.h.b16 %v207
  %v1334 = vunpack.c.l.b16 %v208
  %v1335 = vunpack.c.h.b16 %v208
  %v1336 = vunpack.c.l.b16 %v209
  %v1337 = vunpack.c.h.b16 %v209
  %v1338 = vunpack.c.l.b16 %v210
  %v1339 = vunpack.c.h.b16 %v210
  %v1340 = vunpack.c.l.b16 %v211
  %v1341 = vunpack.c.h.b16 %v211
  %v1342 = vunpack.c.l.b16 %v212
  %v1343 = vunpack.c.h.b16 %v212
  %v1344 = vunpack.c.l.b16 %v213
  %v1345 = vunpack.c.h.b16 %v213
  %v1346 = vunpack.c.l.b16 %v214
  %v1347 = vunpack.c.l.b16 %v215
  %v1348 = vunpack.c.h.b16 %v215
  %v1349 = vunpack.c.l.b16 %v216
  %v1350 = vunpack.c.h.b16 %v216
  %v1351 = vunpack.c.l.b16 %v217
  %v1352 = vunpack.c.h.b16 %v217
  %v1353 = vunpack.c.l.b16 %v218
  %v1354 = vunpack.c.h.b16 %v218
  %v1355 = vunpack.c.l.b16 %v219
  %v1356 = vunpack.c.h.b16 %v219
  %v1357 = vunpack.c.l.b16 %v220
  %v1358 = vunpack.c.h.b16 %v220
  %v1359 = vunpack.c.l.b16 %v221
  %v1360 = vunpack.c.h.b16 %v221
  %v1361 = vunpack.c.l.b16 %v222
  %v1362 = vunpack.c.h.b16 %v222
  %v1363 = vunpack.c.l.b16 %v223
  %v1364 = vunpack.c.h.b16 %v223
  %v1365 = vunpack.c.l.b16 %v224
  %v1366 = vunpack.c.h.b16 %v224
  %v1367 = vunpack.c.l.b16 %v225
  %v1368 = vunpack.c.h.b16 %v225
  %v1369 = vunpack.c.l.b16 %v226
  %v1370 = vunpack.c.h.b16 %v226
  %v1371 = vunpack.c.l.b16 %v227
  %v1372 = vunpack.c.l.b16 %v228
  %v1373 = vunpack.c.h.b16 %v228
  %v1374 = vunpack.c.l.b16 %v229
  %v1375 = vunpack.c.h.b16 %v229
  %v1376 = vunpack.c.l.b16 %v230
  %v1377 = vunpack.c.h.b16 %v230
  %v1378 = vunpack.c.l.b16 %v231
  %v1379 = vunpack.c.h.b16 %v231
  %v1380 = vunpack.c.l.b16 %v232
  %v1381 = vunpack.c.h.b16 %v232
  %v1382 = vunpack.c.l.b16 %v233
  %v1383 = vunpack.c.h.b16 %v233
  %v1384 = vunpack.c.l.b16 %v234
  %v1385 = vunpack.c.h.b16 %v234
  %v1386 = vunpack.c.l.b16 %v235
  %v1387 = vunpack.c.h.b16 %v235
  %v1388 = vunpack.c.l.b16 %v236
  %v1389 = vunpack.c.h.b16 %v236
  %v1390 = vunpack.c.l.b16 %v237
  %v1391 = vunpack.c.h.b16 %v237
  %v1392 = vunpack.c.l.b16 %v238
  %v1393 = vunpack.c.h.b16 %v238
  %v1394 = vunpack.c.l.b16 %v239
  %v1395 = vunpack.c.h.b16 %v239
  %v1396 = vunpack.c.l.b16 %v240
  %v1397 = vunpack.c.l.b16 %v241
  %v1398 = vunpack.c.h.b16 %v241
  %v1399 = vunpack.c.l.b16 %v242
  %v1400 = vunpack.c.h.b16 %v242
  %v1401 = vunpack.c.l.b16 %v243
  %v1402 = vunpack.c.h.b16 %v243
  %v1403 = vunpack.c.l.b16 %v244
  %v1404 = vunpack.c.h.b16 %v244
  %v1405 = vunpack.c.l.b16 %v245
  %v1406 = vunpack.c.h.b16 %v245
  %v1407 = vunpack.c.l.b16 %v246
  %v1408 = vunpack.c.h.b16 %v246
  %v1409 = vunpack.c.l.b16 %v247
  %v1410 = vunpack.c.h.b16 %v247
  %v1411 = vunpack.c.l.b16 %v248
  %v1412 = vunpack.c.h.b16 %v248
  %v1413 = vunpack.c.l.b16 %v249
  %v1414 = vunpack.c.h.b16 %v249
  %v1415 = vunpack.c.l.b16 %v250
  %v1416 = vunpack.c.h.b16 %v250
  %v1417 = vunpack.c.l.b16 %v251
  %v1418 = vunpack.c.h.b16 %v251
  %v1419 = vunpack.c.l.b16 %v252
  %v1420 = vunpack.c.h.b16 %v252
  %v1421 = vunpack.c.l.b16 %v253
  %v1422 = vunpack.c.l.b16 %v254
  %v1423 = vunpack.c.h.b16 %v254
  %v1424 = vunpack.c.l.b16 %v255
  %v1425 = vunpack.c.h.b16 %v255
  %v1426 = vunpack.c.l.b16 %v256
  %v1427 = vunpack.c.h.b16 %v256
  %v1428 = vunpack.c.l.b16 %v257
  %v1429 = vunpack.c.h.b16 %v257
  %v1430 = vunpack.c.l.b16 %v258
  %v1431 = vunpack.c.h.b16 %v258
  %v1432 = vunpack.c.l.b16 %v259
  %v1433 = vunpack.c.h.b16 %v259
  %v1434 = vunpack.c.l.b16 %v260
  %v1435 = vunpack.c.h.b16 %v260
  %v1436 = vunpack.c.l.b16 %v261
  %v1437 = vunpack.c.h.b16 %v261
  %v1438 = vunpack.c.l.b16 %v262
  %v1439 = vunpack.c.h.b16 %v262
  %v1440 = vunpack.c.l.b16 %v263
  %v1441 = vunpack.c.h.b16 %v263
  %v1442 = vunpack.c.l.b16 %v264
  %v1443 = vunpack.c.h.b16 %v264
  %v1444 = vunpack.c.l.b16 %v265
  %v1445 = vunpack.c.h.b16 %v265
  %v1446 = vunpack.c.l.b16 %v266
  %v1447 = vunpack.c.l.b16 %v267
  %v1448 = vunpack.c.h.b16 %v267
  %v1449 = vunpack.c.l.b16 %v268
  %v1450 = vunpack.c.h.b16 %v268
  %v1451 = vunpack.c.l.b16 %v269
  %v1452 = vunpack.c.h.b16 %v269
  %v1453 = vunpack.c.l.b16 %v270
  %v1454 = vunpack.c.h.b16 %v270
  %v1455 = vunpack.c.l.b16 %v271
  %v1456 = vunpack.c.h.b16 %v271
  %v1457 = vunpack.c.l.b16 %v272
  %v1458 = vunpack.c.h.b16 %v272
  %v1459 = vunpack.c.l.b16 %v273
  %v1460 = vunpack.c.h.b16 %v273
  %v1461 = vunpack.c.l.b16 %v274
  %v1462 = vunpack.c.h.b16 %v274
  %v1463 = vunpack.c.l.b16 %v275
  %v1464 = vunpack.c.h.b16 %v275
  %v1465 = vunpack.c.l.b16 %v276
  %v1466 = vunpack.c.h.b16 %v276
  %v1467 = vunpack.c.l.b16 %v277
  %v1468 = vunpack.c.h.b16 %v277
  %v1469 = vunpack.c.l.b16 %v278
  %v1470 = vunpack.c.h.b16 %v278
  %v1471 = vunpack.c.l.b16 %v279
  %v1472 = vunpack.c.l.b16 %v280
  %v1473 = vunpack.c.h.b16 %v280
  %v1474 = vunpack.c.l.b16 %v281
  %v1475 = vunpack.c.h.b16 %v281
  %v1476 = vunpack.c.l.b16 %v282
  %v1477 = vunpack.c.h.b16 %v282
  %v1478 = vunpack.c.l.b16 %v283
  %v1479 = vunpack.c.h.b16 %v283
  %v1480 = vunpack.c.l.b16 %v284
  %v1481 = vunpack.c.h.b16 %v284
  %v1482 = vunpack.c.l.b16 %v285
  %v1483 = vunpack.c.h.b16 %v285
  %v1484 = vunpack.c.l.b16 %v286
  %v1485 = vunpack.c.h.b16 %v286
  %v1486 = vunpack.c.l.b16 %v287
  %v1487 = vunpack.c.h.b16 %v287
  %v1488 = vunpack.c.l.b16 %v288
  %v1489 = vunpack.c.h.b16 %v288
  %v1490 = vunpack.c.l.b16 %v289
  %v1491 = vunpack.c.h.b16 %v289
  %v1492 = vunpack.c.l.b16 %v290
  %v1493 = vunpack.c.h.b16 %v290
  %v1494 = vunpack.c.l.b16 %v291
  %v1495 = vunpack.c.h.b16 %v291
  %v1496 = vunpack.c.l.b16 %v292
  %v1497 = vpack.c.b16 %v997, %v972
  %v1498 = vpack.c.b16 %v998, %v973
  %v1499 = vpack.c.b16 %v999, %v974
  %v1500 = vpack.c.b16 %v1000, %v975
  %v1501 = vpack.c.b16 %v1001, %v976
  %v1502 = vpack.c.b16 %v1002, %v977
  %v1503 = vpack.c.b16 %v1003, %v978
  %v1504 = vpack.c.b16 %v1004, %v979
  %v1505 = vpack.c.b16 %v1005, %v980
  %v1506 = vpack.c.b16 %v1006, %v981
  %v1507 = vpack.c.b16 %v1007, %v982
  %v1508 = vpack.c.b16 %v1008, %v983
  %v1509 = vpack.c.b16 %v1009, %v984
  %v1510 = vpack.c.b16 %v1010, %v985
  %v1511 = vpack.c.b16 %v1011, %v986
  %v1512 = vpack.c.b16 %v1012, %v987
  %v1513 = vpack.c.b16 %v1013, %v988
  %v1514 = vpack.c.b16 %v1014, %v989
  %v1515 = vpack.c.b16 %v1015, %v990
  %v1516 = vpack.c.b16 %v1016, %v991
  %v1517 = vpack.c.b16 %v1017, %v992
  %v1518 = vpack.c.b16 %v1018, %v993
  %v1519 = vpack.c.b16 %v1019, %v994
  %v1520 = vpack.c.b16 %v1020, %v995
  %v1521 = vpack.c.b16 %v1021, %v996
  %v1522 = vpack.c.b16 %v1047, %v1022
  %v1523 = vpack.c.b16 %v1048, %v1023
  %v1524 = vpack.c.b16 %v1049, %v1024
  %v1525 = vpack.c.b16 %v1050, %v1025
  %v1526 = vpack.c.b16 %v1051, %v1026
  %v1527 = vpack.c.b16 %v1052, %v1027
  %v1528 = vpack.c.b16 %v1053, %v1028
  %v1529 = vpack.c.b16 %v1054, %v1029
  %v1530 = vpack.c.b16 %v1055, %v1030
  %v1531 = vpack.c.b16 %v1056, %v1031
  %v1532 = vpack.c.b16 %v1057, %v1032
  %v1533 = vpack.c.b16 %v1058, %v1033
  %v1534 = vpack.c.b16 %v1059, %v1034
  %v1535 = vpack.c.b16 %v1060, %v1035
  %v1536 = vpack.c.b16 %v1061, %v1036
  %v1537 = vpack.c.b16 %v1062, %v1037
  %v1538 = vpack.c.b16 %v1063, %v1038
  %v1539 = vpack.c.b16 %v1064, %v1039
  %v1540 = vpack.c.b16 %v1065, %v1040
  %v1541 = vpack.c.b16 %v1066, %v1041
  %v1542 = vpack.c.b16 %v1067, %v1042
  %v1543 = vpack.c.b16 %v1068, %v1043
  %v1544 = vpack.c.b16 %v1069, %v1044
  %v1545 = vpack.c.b16 %v1070, %v1045
  %v1546 = vpack.c.b16 %v1071, %v1046
  %v1547 = vpack.c.b16 %v1097, %v1072
  %v1548 = vpack.c.b16 %v1098, %v1073
  %v1549 = vpack.c.b16 %v1099, %v1074
  %v1550 = vpack.c.b16 %v1100, %v1075
  %v1551 = vpack.c.b16 %v1101, %v1076
  %v1552 = vpack.c.b16 %v1102, %v1077
  %v1553 = vpack.c.b16 %v1103, %v1078
  %v1554 = vpack.c.b16 %v1104, %v1079
  %v1555 = vpack.c.b16 %v1105, %v1080
  %v1556 = vpack.c.b16 %v1106, %v1081
  %v1557 = vpack.c.b16 %v1107, %v1082
  %v1558 = vpack.c.b16 %v1108, %v1083
  %v1559 = vpack.c.b16 %v1109, %v1084
  %v1560 = vpack.c.b16 %v1110, %v1085
  %v1561 = vpack.c.b16 %v1111, %v1086
  %v1562 = vpack.c.b16 %v1112, %v1087
  %v1563 = vpack.c.b16 %v1113, %v1088
  %v1564 = vpack.c.b16 %v1114, %v1089
  %v1565 = vpack.c.b16 %v1115, %v1090
  %v1566 = vpack.c.b16 %v1116, %v1091
  %v1567 = vpack.c.b16 %v1117, %v1092
  %v1568 = vpack.c.b16 %v1118, %v1093
  %v1569 = vpack.c.b16 %v1119, %v1094
  %v1570 = vpack.c.b16 %v1120, %v1095
  %v1571 = vpack.c.b16 %v1121, %v1096
  %v1572 = vpack.c.b16 %v1147, %v1122
  %v1573 = vpack.c.b16 %v1148, %v1123
  %v1574 = vpack.c.b16 %v1149, %v1124
  %v1575 = vpack.c.b16 %v1150, %v1125
  %v1576 = vpack.c.b16 %v1151, %v1126
  %v1577 = vpack.c.b16 %v1152, %v1127
  %v1578 = vpack.c.b16 %v1153, %v1128
  %v1579 = vpack.c.b16 %v1154, %v1129
  %v1580 = vpack.c.b16 %v1155, %v1130
  %v1581 = vpack.c.b16 %v1156, %v1131
  %v1582 = vpack.c.b16 %v1157, %v1132
  %v1583 = vpack.c.b16 %v1158, %v1133
  %v1584 = vpack.c.b16 %v1159, %v1134
  %v1585 = vpack.c.b16 %v1160, %v1135
  %v1586 = vpack.c.b16 %v1161, %v1136
  %v1587 = vpack.c.b16 %v1162, %v1137
  %v1588 = vpack.c.b16 %v1163, %v1138
  %v1589 = vpack.c.b16 %v1164, %v1139
  %v1590 = vpack.c.b16 %v1165, %v1140
  %v1591 = vpack.c.b16 %v1166, %v1141
  %v1592 = vpack.c.b16 %v1167, %v1142
  %v1593 = vpack.c.b16 %v1168, %v1143
  %v1594 = vpack.c.b16 %v1169, %v1144
  %v1595 = vpack.c.b16 %v1170, %v1145
  %v1596 = vpack.c.b16 %v1171, %v1146
  %v1597 = vpack.c.b16 %v1197, %v1172
  %v1598 = vpack.c.b16 %v1198, %v1173
  %v1599 = vpack.c.b16 %v1199, %v1174
  %v1600 = vpack.c.b16 %v1200, %v1175
  %v1601 = vpack.c.b16 %v1201, %v1176
  %v1602 = vpack.c.b16 %v1202, %v1177
  %v1603 = vpack.c.b16 %v1203, %v1178
  %v1604 = vpack.c.b16 %v1204, %v1179
  %v1605 = vpack.c.b16 %v1205, %v1180
  %v1606 = vpack.c.b16 %v1206, %v1181
  %v1607 = vpack.c.b16 %v1207, %v1182
  %v1608 = vpack.c.b16 %v1208, %v1183
  %v1609 = vpack.c.b16 %v1209, %v1184
  %v1610 = vpack.c.b16 %v1210, %v1185
  %v1611 = vpack.c.b16 %v1211, %v1186
  %v1612 = vpack.c.b16 %v1212, %v1187
  %v1613 = vpack.c.b16 %v1213, %v1188
  %v1614 = vpack.c.b16 %v1214, %v1189
  %v1615 = vpack.c.b16 %v1215, %v1190
  %v1616 = vpack.c.b16 %v1216, %v1191
  %v1617 = vpack.c.b16 %v1217, %v1192
  %v1618 = vpack.c.b16 %v1218, %v1193
  %v1619 = vpack.c.b16 %v1219, %v1194
  %v1620 = vpack.c.b16 %v1220, %v1195
  %v1621 = vpack.c.b16 %v1221, %v1196
  %v1622 = vpack.c.b16 %v1247, %v1222
  %v1623 = vpack.c.b16 %v1248, %v1223
  %v1624 = vpack.c.b16 %v1249, %v1224
  %v1625 = vpack.c.b16 %v1250, %v1225
  %v1626 = vpack.c.b16 %v1251, %v1226
  %v1627 = vpack.c.b16 %v1252, %v1227
  %v1628 = vpack.c.b16 %v1253, %v1228
  %v1629 = vpack.c.b16 %v1254, %v1229
  %v1630 = vpack.c.b16 %v1255, %v1230
  %v1631 = vpack.c.b16 %v1256, %v1231
  %v1632 = vpack.c.b16 %v1257, %v1232
  %v1633 = vpack.c.b16 %v1258, %v1233
  %v1634 = vpack.c.b16 %v1259, %v1234
  %v1635 = vpack.c.b16 %v1260, %v1235
  %v1636 = vpack.c.b16 %v1261, %v1236
  %v1637 = vpack.c.b16 %v1262, %v1237
  %v1638 = vpack.c.b16 %v1263, %v1238
  %v1639 = vpack.c.b16 %v1264, %v1239
  %v1640 = vpack.c.b16 %v1265, %v1240
  %v1641 = vpack.c.b16 %v1266, %v1241
  %v1642 = vpack.c.b16 %v1267, %v1242
  %v1643 = vpack.c.b16 %v1268, %v1243
  %v1644 = vpack.c.b16 %v1269, %v1244
  %v1645 = vpack.c.b16 %v1270, %v1245
  %v1646 = vpack.c.b16 %v1271, %v1246
  %v1647 = vpack.c.b16 %v1297, %v1272
  %v1648 = vpack.c.b16 %v1298, %v1273
  %v1649 = vpack.c.b16 %v1299, %v1274
  %v1650 = vpack.c.b16 %v1300, %v1275
  %v1651 = vpack.c.b16 %v1301, %v1276
  %v1652 = vpack.c.b16 %v1302, %v1277
  %v1653 = vpack.c.b16 %v1303, %v1278
  %v1654 = vpack.c.b16 %v1304, %v1279
  %v1655 = vpack.c.b16 %v1305, %v1280
  %v1656 = vpack.c.b16 %v1306, %v1281
  %v1657 = vpack.c.b16 %v1307, %v1282
  %v1658 = vpack.c.b16 %v1308, %v1283
  %v1659 = vpack.c.b16 %v1309, %v1284
  %v1660 = vpack.c.b16 %v1310, %v1285
  %v1661 = vpack.c.b16 %v1311, %v1286
  %v1662 = vpack.c.b16 %v1312, %v1287
  %v1663 = vpack.c.b16 %v1313, %v1288
  %v1664 = vpack.c.b16 %v1314, %v1289
  %v1665 = vpack.c.b16 %v1315, %v1290
  %v1666 = vpack.c.b16 %v1316, %v1291
  %v1667 = vpack.c.b16 %v1317, %v1292
  %v1668 = vpack.c.b16 %v1318, %v1293
  %v1669 = vpack.c.b16 %v1319, %v1294
  %v1670 = vpack.c.b16 %v1320, %v1295
  %v1671 = vpack.c.b16 %v1321, %v1296
  %v1672 = vpack.c.b16 %v1347, %v1322
  %v1673 = vpack.c.b16 %v1348, %v1323
  %v1674 = vpack.c.b16 %v1349, %v1324
  %v1675 = vpack.c.b16 %v1350, %v1325
  %v1676 = vpack.c.b16 %v1351, %v1326
  %v1677 = vpack.c.b16 %v1352, %v1327
  %v1678 = vpack.c.b16 %v1353, %v1328
  %v1679 = vpack.c.b16 %v1354, %v1329
  %v1680 = vpack.c.b16 %v1355, %v1330
  %v1681 = vpack.c.b16 %v1356, %v1331
  %v1682 = vpack.c.b16 %v1357, %v1332
  %v1683 = vpack.c.b16 %v1358, %v1333
  %v1684 = vpack.c.b16 %v1359, %v1334
  %v1685 = vpack.c.b16 %v1360, %v1335
  %v1686 = vpack.c.b16 %v1361, %v1336
  %v1687 = vpack.c.b16 %v1362, %v1337
  %v1688 = vpack.c.b16 %v1363, %v1338
  %v1689 = vpack.c.b16 %v1364, %v1339
  %v1690 = vpack.c.b16 %v1365, %v1340
  %v1691 = vpack.c.b16 %v1366, %v1341
  %v1692 = vpack.c.b16 %v1367, %v1342
  %v1693 = vpack.c.b16 %v1368, %v1343
  %v1694 = vpack.c.b16 %v1369, %v1344
  %v1695 = vpack.c.b16 %v1370, %v1345
  %v1696 = vpack.c.b16 %v1371, %v1346
  %v1697 = vpack.c.b16 %v1397, %v1372
  %v1698 = vpack.c.b16 %v1398, %v1373
  %v1699 = vpack.c.b16 %v1399, %v1374
  %v1700 = vpack.c.b16 %v1400, %v1375
  %v1701 = vpack.c.b16 %v1401, %v1376
  %v1702 = vpack.c.b16 %v1402, %v1377
  %v1703 = vpack.c.b16 %v1403, %v1378
  %v1704 = vpack.c.b16 %v1404, %v1379
  %v1705 = vpack.c.b16 %v1405, %v1380
  %v1706 = vpack.c.b16 %v1406, %v1381
  %v1707 = vpack.c.b16 %v1407, %v1382
  %v1708 = vpack.c.b16 %v1408, %v1383
  %v1709 = vpack.c.b16 %v1409, %v1384
  %v1710 = vpack.c.b16 %v1410, %v1385
  %v1711 = vpack.c.b16 %v1411, %v1386
  %v1712 = vpack.c.b16 %v1412, %v1387
  %v1713 = vpack.c.b16 %v1413, %v1388
  %v1714 = vpack.c.b16 %v1414, %v1389
  %v1715 = vpack.c.b16 %v1415, %v1390
  %v1716 = vpack.c.b16 %v1416, %v1391
  %v1717 = vpack.c.b16 %v1417, %v1392
  %v1718 = vpack.c.b16 %v1418, %v1393
  %v1719 = vpack.c.b16 %v1419, %v1394
  %v1720 = vpack.c.b16 %v1420, %v1395
  %v1721 = vpack.c.b16 %v1421, %v1396
  %v1722 = vpack.c.b16 %v1447, %v1422
  %v1723 = vpack.c.b16 %v1448, %v1423
  %v1724 = vpack.c.b16 %v1449, %v1424
  %v1725 = vpack.c.b16 %v1450, %v1425
  %v1726 = vpack.c.b16 %v1451, %v1426
  %v1727 = vpack.c.b16 %v1452, %v1427
  %v1728 = vpack.c.b16 %v1453, %v1428
  %v1729 = vpack.c.b16 %v1454, %v1429
  %v1730 = vpack.c.b16 %v1455, %v1430
  %v1731 = vpack.c.b16 %v1456, %v1431
  %v1732 = vpack.c.b16 %v1457, %v1432
  %v1733 = vpack.c.b16 %v1458, %v1433
  %v1734 = vpack.c.b16 %v1459, %v1434
  %v1735 = vpack.c.b16 %v1460, %v1435
  %v1736 = vpack.c.b16 %v1461, %v1436
  %v1737 = vpack.c.b16 %v1462, %v1437
  %v1738 = vpack.c.b16 %v1463, %v1438
  %v1739 = vpack.c.b16 %v1464, %v1439
  %v1740 = vpack.c.b16 %v1465, %v1440
  %v1741 = vpack.c.b16 %v1466, %v1441
  %v1742 = vpack.c.b16 %v1467, %v1442
  %v1743 = vpack.c.b16 %v1468, %v1443
  %v1744 = vpack.c.b16 %v1469, %v1444
  %v1745 = vpack.c.b16 %v1470, %v1445
  %v1746 = vpack.c.b16 %v1471, %v1446
  %v1747 = vpack.c.b16 %v1472, %v1472
  %v1748 = vpack.c.b16 %v1473, %v1473
  %v1749 = vpack.c.b16 %v1474, %v1474
  %v1750 = vpack.c.b16 %v1475, %v1475
  %v1751 = vpack.c.b16 %v1476, %v1476
  %v1752 = vpack.c.b16 %v1477, %v1477
  %v1753 = vpack.c.b16 %v1478, %v1478
  %v1754 = vpack.c.b16 %v1479, %v1479
  %v1755 = vpack.c.b16 %v1480, %v1480
  %v1756 = vpack.c.b16 %v1481, %v1481
  %v1757 = vpack.c.b16 %v1482, %v1482
  %v1758 = vpack.c.b16 %v1483, %v1483
  %v1759 = vpack.c.b16 %v1484, %v1484
  %v1760 = vpack.c.b16 %v1485, %v1485
  %v1761 = vpack.c.b16 %v1486, %v1486
  %v1762 = vpack.c.b16 %v1487, %v1487
  %v1763 = vpack.c.b16 %v1488, %v1488
  %v1764 = vpack.c.b16 %v1489, %v1489
  %v1765 = vpack.c.b16 %v1490, %v1490
  %v1766 = vpack.c.b16 %v1491, %v1491
  %v1767 = vpack.c.b16 %v1492, %v1492
  %v1768 = vpack.c.b16 %v1493, %v1493
  %v1769 = vpack.c.b16 %v1494, %v1494
  %v1770 = vpack.c.b16 %v1495, %v1495
  %v1771 = vpack.c.b16 %v1496, %v1496
  %v2447 = vunpack.c.l.b16 %v293
  %v2448 = vunpack.c.h.b16 %v293
  %v2449 = vunpack.c.l.b16 %v294
  %v2450 = vunpack.c.h.b16 %v294
  %v2451 = vunpack.c.l.b16 %v295
  %v2452 = vunpack.c.h.b16 %v295
  %v2453 = vunpack.c.l.b16 %v296
  %v2454 = vunpack.c.h.b16 %v296
  %v2455 = vunpack.c.l.b16 %v297
  %v2456 = vunpack.c.h.b16 %v297
  %v2457 = vunpack.c.l.b16 %v298
  %v2458 = vunpack.c.h.b16 %v298
  %v2459 = vunpack.c.l.b16 %v299
  %v2460 = vunpack.c.h.b16 %v299
  %v2461 = vunpack.c.l.b16 %v300
  %v2462 = vunpack.c.h.b16 %v300
  %v2463 = vunpack.c.l.b16 %v301
  %v2464 = vunpack.c.h.b16 %v301
  %v2465 = vunpack.c.l.b16 %v302
  %v2466 = vunpack.c.h.b16 %v302
  %v2467 = vunpack.c.l.b16 %v303
  %v2468 = vunpack.c.h.b16 %v303
  %v2469 = vunpack.c.l.b16 %v304
  %v2470 = vunpack.c.h.b16 %v304
  %v2471 = vunpack.c.l.b16 %v305
  %v2472 = vunpack.c.h.b16 %v305
  %v2473 = vunpack.c.l.b16 %v306
  %v2474 = vunpack.c.h.b16 %v306
  %v2475 = vunpack.c.l.b16 %v307
  %v2476 = vunpack.c.h.b16 %v307
  %v2477 = vunpack.c.l.b16 %v308
  %v2478 = vunpack.c.h.b16 %v308
  %v2479 = vunpack.c.l.b16 %v309
  %v2480 = vunpack.c.h.b16 %v309
  %v2481 = vunpack.c.l.b16 %v310
  %v2482 = vunpack.c.h.b16 %v310
  %v2483 = vunpack.c.l.b16 %v311
  %v2484 = vunpack.c.h.b16 %v311
  %v2485 = vunpack.c.l.b16 %v312
  %v2486 = vunpack.c.h.b16 %v312
  %v2487 = vunpack.c.l.b16 %v313
  %v2488 = vunpack.c.h.b16 %v313
  %v2489 = vunpack.c.l.b16 %v314
  %v2490 = vunpack.c.h.b16 %v314
  %v2491 = vunpack.c.l.b16 %v315
  %v2492 = vunpack.c.h.b16 %v315
  %v2493 = vunpack.c.l.b16 %v316
  %v2494 = vunpack.c.h.b16 %v316
  %v2495 = vunpack.c.l.b16 %v317
  %v2496 = vunpack.c.h.b16 %v317
  %v2497 = vunpack.c.l.b16 %v318
  %v2498 = vunpack.c.h.b16 %v318
  %v2499 = vunpack.c.l.b16 %v319
  %v2500 = vunpack.c.h.b16 %v319
  %v2501 = vunpack.c.l.b16 %v320
  %v2502 = vunpack.c.h.b16 %v320
  %v2503 = vunpack.c.l.b16 %v321
  %v2504 = vunpack.c.h.b16 %v321
  %v2505 = vunpack.c.l.b16 %v322
  %v2506 = vunpack.c.h.b16 %v322
  %v2507 = vunpack.c.l.b16 %v323
  %v2508 = vunpack.c.h.b16 %v323
  %v2509 = vunpack.c.l.b16 %v324
  %v2510 = vunpack.c.h.b16 %v324
  %v2511 = vunpack.c.l.b16 %v325
  %v2512 = vunpack.c.h.b16 %v325
  %v2513 = vunpack.c.l.b16 %v326
  %v2514 = vunpack.c.h.b16 %v326
  %v2515 = vunpack.c.l.b16 %v327
  %v2516 = vunpack.c.h.b16 %v327
  %v2517 = vunpack.c.l.b16 %v328
  %v2518 = vunpack.c.h.b16 %v328
  %v2519 = vunpack.c.l.b16 %v329
  %v2520 = vunpack.c.h.b16 %v329
  %v2521 = vunpack.c.l.b16 %v330
  %v2522 = vunpack.c.h.b16 %v330
  %v2523 = vunpack.c.l.b16 %v331
  %v2524 = vunpack.c.h.b16 %v331
  %v2525 = vunpack.c.l.b16 %v332
  %v2526 = vunpack.c.h.b16 %v332
  %v2527 = vunpack.c.l.b16 %v333
  %v2528 = vunpack.c.h.b16 %v333
  %v2529 = vunpack.c.l.b16 %v334
  %v2530 = vunpack.c.h.b16 %v334
  %v2531 = vunpack.c.l.b16 %v335
  %v2532 = vunpack.c.h.b16 %v335
  %v2533 = vunpack.c.l.b16 %v336
  %v2534 = vunpack.c.h.b16 %v336
  %v2535 = vunpack.c.l.b16 %v337
  %v2536 = vunpack.c.h.b16 %v337
  %v2537 = vunpack.c.l.b16 %v338
  %v2538 = vunpack.c.h.b16 %v338
  %v2539 = vunpack.c.l.b16 %v339
  %v2540 = vunpack.c.h.b16 %v339
  %v2541 = vunpack.c.l.b16 %v340
  %v2542 = vunpack.c.h.b16 %v340
  %v2543 = vunpack.c.l.b16 %v341
  %v2544 = vunpack.c.h.b16 %v341
  %v2545 = vunpack.c.l.b16 %v342
  %v2546 = vunpack.c.h.b16 %v342
  %v2547 = vunpack.c.l.b16 %v343
  %v2548 = vunpack.c.h.b16 %v343
  %v2549 = vunpack.c.l.b16 %v344
  %v2550 = vunpack.c.h.b16 %v344
  %v2551 = vunpack.c.l.b16 %v345
  %v2552 = vunpack.c.h.b16 %v345
  %v2553 = vunpack.c.l.b16 %v346
  %v2554 = vunpack.c.h.b16 %v346
  %v2555 = vunpack.c.l.b16 %v347
  %v2556 = vunpack.c.h.b16 %v347
  %v2557 = vunpack.c.l.b16 %v348
  %v2558 = vunpack.c.h.b16 %v348
  %v2559 = vunpack.c.l.b16 %v349
  %v2560 = vunpack.c.h.b16 %v349
  %v2561 = vunpack.c.l.b16 %v350
  %v2562 = vunpack.c.h.b16 %v350
  %v2563 = vunpack.c.l.b16 %v351
  %v2564 = vunpack.c.h.b16 %v351
  %v2565 = vunpack.c.l.b16 %v352
  %v2566 = vunpack.c.h.b16 %v352
  %v2567 = vunpack.c.l.b16 %v353
  %v2568 = vunpack.c.h.b16 %v353
  %v2569 = vunpack.c.l.b16 %v354
  %v2570 = vunpack.c.h.b16 %v354
  %v2571 = vunpack.c.l.b16 %v355
  %v2572 = vunpack.c.h.b16 %v355
  %v2573 = vunpack.c.l.b16 %v356
  %v2574 = vunpack.c.h.b16 %v356
  %v2575 = vunpack.c.l.b16 %v357
  %v2576 = vunpack.c.h.b16 %v357
  %v2577 = vunpack.c.l.b16 %v358
  %v2578 = vunpack.c.h.b16 %v358
  %v2579 = vunpack.c.l.b16 %v359
  %v2580 = vunpack.c.h.b16 %v359
  %v2581 = vunpack.c.l.b16 %v360
  %v2582 = vunpack.c.h.b16 %v360
  %v2583 = vunpack.c.l.b16 %v361
  %v2584 = vunpack.c.h.b16 %v361
  %v2585 = vunpack.c.l.b16 %v362
  %v2586 = vunpack.c.h.b16 %v362
  %v2587 = vunpack.c.l.b16 %v363
  %v2588 = vunpack.c.h.b16 %v363
  %v2589 = vunpack.c.l.b16 %v364
  %v2590 = vunpack.c.h.b16 %v364
  %v2591 = vunpack.c.l.b16 %v365
  %v2592 = vunpack.c.h.b16 %v365
  %v2593 = vunpack.c.l.b16 %v366
  %v2594 = vunpack.c.h.b16 %v366
  %v2595 = vunpack.c.l.b16 %v367
  %v2596 = vunpack.c.h.b16 %v367
  %v2597 = vunpack.c.l.b16 %v368
  %v2598 = vunpack.c.h.b16 %v368
  %v2599 = vunpack.c.l.b16 %v369
  %v2600 = vunpack.c.h.b16 %v369
  %v2601 = vunpack.c.l.b16 %v370
  %v2602 = vunpack.c.h.b16 %v370
  %v2603 = vunpack.c.l.b16 %v371
  %v2604 = vunpack.c.h.b16 %v371
  %v2605 = vunpack.c.l.b16 %v372
  %v2606 = vunpack.c.h.b16 %v372
  %v2607 = vunpack.c.l.b16 %v373
  %v2608 = vunpack.c.h.b16 %v373
  %v2609 = vunpack.c.l.b16 %v374
  %v2610 = vunpack.c.h.b16 %v374
  %v2611 = vunpack.c.l.b16 %v375
  %v2612 = vunpack.c.h.b16 %v375
  %v2613 = vunpack.c.l.b16 %v376
  %v2614 = vunpack.c.h.b16 %v376
  %v2615 = vunpack.c.l.b16 %v377
  %v2616 = vunpack.c.h.b16 %v377
  %v2617 = vunpack.c.l.b16 %v378
  %v2618 = vunpack.c.h.b16 %v378
  %v2619 = vunpack.c.l.b16 %v379
  %v2620 = vunpack.c.h.b16 %v379
  %v2621 = vunpack.c.l.b16 %v380
  %v2622 = vunpack.c.h.b16 %v380
  %v2623 = vunpack.c.l.b16 %v381
  %v2624 = vunpack.c.h.b16 %v381
  %v2625 = vunpack.c.l.b16 %v382
  %v2626 = vunpack.c.h.b16 %v382
  %v2627 = vunpack.c.l.b16 %v383
  %v2628 = vunpack.c.h.b16 %v383
  %v2629 = vunpack.c.l.b16 %v384
  %v2630 = vunpack.c.h.b16 %v384
  %v2631 = vunpack.c.l.b16 %v385
  %v2632 = vunpack.c.h.b16 %v385
  %v2633 = vunpack.c.l.b16 %v386
  %v2634 = vunpack.c.h.b16 %v386
  %v2635 = vunpack.c.l.b16 %v387
  %v2636 = vunpack.c.h.b16 %v387
  %v2637 = vunpack.c.l.b16 %v388
  %v2638 = vunpack.c.h.b16 %v388
  %v2639 = vunpack.c.l.b16 %v389
  %v2640 = vunpack.c.h.b16 %v389
  %v2641 = vunpack.c.l.b16 %v390
  %v2642 = vunpack.c.h.b16 %v390
  %v2643 = vunpack.c.l.b16 %v391
  %v2644 = vunpack.c.h.b16 %v391
  %v2645 = vunpack.c.l.b16 %v392
  %v2646 = vunpack.c.h.b16 %v392
  %v2647 = vunpack.c.l.b16 %v393
  %v2648 = vunpack.c.h.b16 %v393
  %v2649 = vunpack.c.l.b16 %v394
  %v2650 = vunpack.c.h.b16 %v394
  %v2651 = vunpack.c.l.b16 %v395
  %v2652 = vunpack.c.h.b16 %v395
  %v2653 = vunpack.c.l.b16 %v396
  %v2654 = vunpack.c.h.b16 %v396
  %v2655 = vunpack.c.l.b16 %v397
  %v2656 = vunpack.c.h.b16 %v397
  %v2657 = vunpack.c.l.b16 %v398
  %v2658 = vunpack.c.h.b16 %v398
  %v2659 = vunpack.c.l.b16 %v399
  %v2660 = vunpack.c.h.b16 %v399
  %v2661 = vunpack.c.l.b16 %v400
  %v2662 = vunpack.c.h.b16 %v400
  %v2663 = vunpack.c.l.b16 %v401
  %v2664 = vunpack.c.h.b16 %v401
  %v2665 = vunpack.c.l.b16 %v402
  %v2666 = vunpack.c.h.b16 %v402
  %v2667 = vunpack.c.l.b16 %v403
  %v2668 = vunpack.c.h.b16 %v403
  %v2669 = vunpack.c.l.b16 %v404
  %v2670 = vunpack.c.h.b16 %v404
  %v2671 = vunpack.c.l.b16 %v405
  %v2672 = vunpack.c.h.b16 %v405
  %v2673 = vunpack.c.l.b16 %v406
  %v2674 = vunpack.c.h.b16 %v406
  %v2675 = vunpack.c.l.b16 %v407
  %v2676 = vunpack.c.h.b16 %v407
  %v2677 = vunpack.c.l.b16 %v408
  %v2678 = vunpack.c.h.b16 %v408
  %v2679 = vunpack.c.l.b16 %v409
  %v2680 = vunpack.c.h.b16 %v409
  %v2681 = vunpack.c.l.b16 %v410
  %v2682 = vunpack.c.h.b16 %v410
  %v2683 = vunpack.c.l.b16 %v411
  %v2684 = vunpack.c.h.b16 %v411
  %v2685 = vunpack.c.l.b16 %v412
  %v2686 = vunpack.c.h.b16 %v412
  %v2687 = vunpack.c.l.b16 %v413
  %v2688 = vunpack.c.h.b16 %v413
  %v2689 = vunpack.c.l.b16 %v414
  %v2690 = vunpack.c.h.b16 %v414
  %v2691 = vunpack.c.l.b16 %v415
  %v2692 = vunpack.c.h.b16 %v415
  %v2693 = vunpack.c.l.b16 %v416
  %v2694 = vunpack.c.h.b16 %v416
  %v2695 = vunpack.c.l.b16 %v417
  %v2696 = vunpack.c.h.b16 %v417
  %v2697 = vunpack.c.l.b16 %v418
  %v2698 = vunpack.c.h.b16 %v418
  %v2699 = vunpack.c.l.b16 %v419
  %v2700 = vunpack.c.h.b16 %v419
  %v2701 = vunpack.c.l.b16 %v420
  %v2702 = vunpack.c.h.b16 %v420
  %v2703 = vunpack.c.l.b16 %v421
  %v2704 = vunpack.c.h.b16 %v421
  %v2705 = vunpack.c.l.b16 %v422
  %v2706 = vunpack.c.h.b16 %v422
  %v2707 = vunpack.c.l.b16 %v423
  %v2708 = vunpack.c.h.b16 %v423
  %v2709 = vunpack.c.l.b16 %v424
  %v2710 = vunpack.c.h.b16 %v424
  %v2711 = vunpack.c.l.b16 %v425
  %v2712 = vunpack.c.h.b16 %v425
  %v2713 = vunpack.c.l.b16 %v426
  %v2714 = vunpack.c.h.b16 %v426
  %v2715 = vunpack.c.l.b16 %v427
  %v2716 = vunpack.c.h.b16 %v427
  %v2717 = vunpack.c.l.b16 %v428
  %v2718 = vunpack.c.h.b16 %v428
  %v2719 = vunpack.c.l.b16 %v429
  %v2720 = vunpack.c.h.b16 %v429
  %v2721 = vunpack.c.l.b16 %v430
  %v2722 = vunpack.c.h.b16 %v430
  %v2723 = vunpack.c.l.b16 %v431
  %v2724 = vunpack.c.h.b16 %v431
  %v2725 = vunpack.c.l.b16 %v432
  %v2726 = vunpack.c.h.b16 %v432
  %v2727 = vunpack.c.l.b16 %v433
  %v2728 = vunpack.c.h.b16 %v433
  %v2729 = vunpack.c.l.b16 %v434
  %v2730 = vunpack.c.h.b16 %v434
  %v2731 = vunpack.c.l.b16 %v435
  %v2732 = vunpack.c.h.b16 %v435
  %v2733 = vunpack.c.l.b16 %v436
  %v2734 = vunpack.c.h.b16 %v436
  %v2735 = vunpack.c.l.b16 %v437
  %v2736 = vunpack.c.h.b16 %v437
  %v2737 = vunpack.c.l.b16 %v438
  %v2738 = vunpack.c.h.b16 %v438
  %v2739 = vunpack.c.l.b16 %v439
  %v2740 = vunpack.c.h.b16 %v439
  %v2741 = vunpack.c.l.b16 %v440
  %v2742 = vunpack.c.h.b16 %v440
  %v2743 = vunpack.c.l.b16 %v441
  %v2744 = vunpack.c.h.b16 %v441
  %v2745 = vunpack.c.l.b16 %v442
  %v2746 = vunpack.c.h.b16 %v442
  %v2747 = vunpack.c.l.b16 %v443
  %v2748 = vunpack.c.h.b16 %v443
  %v2749 = vunpack.c.l.b16 %v444
  %v2750 = vunpack.c.h.b16 %v444
  %v2751 = vunpack.c.l.b16 %v445
  %v2752 = vunpack.c.h.b16 %v445
  %v2753 = vunpack.c.l.b16 %v446
  %v2754 = vunpack.c.h.b16 %v446
  %v2755 = vunpack.c.l.b16 %v447
  %v2756 = vunpack.c.h.b16 %v447
  %v2757 = vunpack.c.l.b16 %v448
  %v2758 = vunpack.c.h.b16 %v448
  %v2759 = vunpack.c.l.b16 %v449
  %v2760 = vunpack.c.h.b16 %v449
  %v2761 = vunpack.c.l.b16 %v450
  %v2762 = vunpack.c.h.b16 %v450
  %v2763 = vunpack.c.l.b16 %v451
  %v2764 = vunpack.c.h.b16 %v451
  %v2765 = vunpack.c.l.b16 %v452
  %v2766 = vunpack.c.h.b16 %v452
  %v2767 = vunpack.c.l.b16 %v453
  %v2768 = vunpack.c.h.b16 %v453
  %v2769 = vunpack.c.l.b16 %v454
  %v2770 = vunpack.c.h.b16 %v454
  %v2771 = vunpack.c.l.b16 %v455
  %v2772 = vunpack.c.h.b16 %v455
  %v2773 = vunpack.c.l.b16 %v456
  %v2774 = vunpack.c.h.b16 %v456
  %v2775 = vunpack.c.l.b16 %v457
  %v2776 = vunpack.c.h.b16 %v457
  %v2777 = vunpack.c.l.b16 %v458
  %v2778 = vunpack.c.h.b16 %v458
  %v2779 = vunpack.c.l.b16 %v459
  %v2780 = vunpack.c.h.b16 %v459
  %v2781 = vunpack.c.l.b16 %v460
  %v2782 = vunpack.c.h.b16 %v460
  %v2783 = vunpack.c.l.b16 %v461
  %v2784 = vunpack.c.h.b16 %v461
  %v2785 = vunpack.c.l.b16 %v462
  %v2786 = vunpack.c.h.b16 %v462
  %v2787 = vunpack.c.l.b16 %v463
  %v2788 = vunpack.c.h.b16 %v463
  %v2789 = vunpack.c.l.b16 %v464
  %v2790 = vunpack.c.h.b16 %v464
  %v2791 = vunpack.c.l.b16 %v465
  %v2792 = vunpack.c.h.b16 %v465
  %v2793 = vunpack.c.l.b16 %v466
  %v2794 = vunpack.c.h.b16 %v466
  %v2795 = vunpack.c.l.b16 %v467
  %v2796 = vunpack.c.h.b16 %v467
  %v2797 = vunpack.c.l.b16 %v468
  %v2798 = vunpack.c.h.b16 %v468
  %v2799 = vunpack.c.l.b16 %v469
  %v2800 = vunpack.c.h.b16 %v469
  %v2801 = vunpack.c.l.b16 %v470
  %v2802 = vunpack.c.h.b16 %v470
  %v2803 = vunpack.c.l.b16 %v471
  %v2804 = vunpack.c.h.b16 %v471
  %v2805 = vunpack.c.l.b16 %v472
  %v2806 = vunpack.c.h.b16 %v472
  %v2807 = vunpack.c.l.b16 %v473
  %v2808 = vunpack.c.h.b16 %v473
  %v2809 = vunpack.c.l.b16 %v474
  %v2810 = vunpack.c.h.b16 %v474
  %v2811 = vunpack.c.l.b16 %v475
  %v2812 = vunpack.c.h.b16 %v475
  %v2813 = vunpack.c.l.b16 %v476
  %v2814 = vunpack.c.h.b16 %v476
  %v2815 = vunpack.c.l.b16 %v477
  %v2816 = vunpack.c.h.b16 %v477
  %v2817 = vunpack.c.l.b16 %v478
  %v2818 = vunpack.c.h.b16 %v478
  %v2819 = vunpack.c.l.b16 %v479
  %v2820 = vunpack.c.h.b16 %v479
  %v2821 = vunpack.c.l.b16 %v480
  %v2822 = vunpack.c.h.b16 %v480
  %v2823 = vunpack.c.l.b16 %v481
  %v2824 = vunpack.c.h.b16 %v481
  %v2825 = vunpack.c.l.b16 %v482
  %v2826 = vunpack.c.h.b16 %v482
  %v2827 = vunpack.c.l.b16 %v483
  %v2828 = vunpack.c.h.b16 %v483
  %v2829 = vunpack.c.l.b16 %v484
  %v2830 = vunpack.c.h.b16 %v484
  %v2831 = vunpack.c.l.b16 %v485
  %v2832 = vunpack.c.h.b16 %v485
  %v2833 = vunpack.c.l.b16 %v486
  %v2834 = vunpack.c.h.b16 %v486
  %v2835 = vunpack.c.l.b16 %v487
  %v2836 = vunpack.c.h.b16 %v487
  %v2837 = vunpack.c.l.b16 %v488
  %v2838 = vunpack.c.h.b16 %v488
  %v2839 = vunpack.c.l.b16 %v489
  %v2840 = vunpack.c.h.b16 %v489
  %v2841 = vunpack.c.l.b16 %v490
  %v2842 = vunpack.c.h.b16 %v490
  %v2843 = vunpack.c.l.b16 %v491
  %v2844 = vunpack.c.h.b16 %v491
  %v2845 = vunpack.c.l.b16 %v492
  %v2846 = vunpack.c.h.b16 %v492
  %v2847 = vunpack.c.l.b16 %v493
  %v2848 = vunpack.c.h.b16 %v493
  %v2849 = vunpack.c.l.b16 %v494
  %v2850 = vunpack.c.h.b16 %v494
  %v2851 = vunpack.c.l.b16 %v495
  %v2852 = vunpack.c.h.b16 %v495
  %v2853 = vunpack.c.l.b16 %v496
  %v2854 = vunpack.c.h.b16 %v496
  %v2855 = vunpack.c.l.b16 %v497
  %v2856 = vunpack.c.h.b16 %v497
  %v2857 = vunpack.c.l.b16 %v498
  %v2858 = vunpack.c.h.b16 %v498
  %v2859 = vunpack.c.l.b16 %v499
  %v2860 = vunpack.c.h.b16 %v499
  %v2861 = vunpack.c.l.b16 %v500
  %v2862 = vunpack.c.h.b16 %v500
  %v2863 = vunpack.c.l.b16 %v501
  %v2864 = vunpack.c.h.b16 %v501
  %v2865 = vunpack.c.l.b16 %v502
  %v2866 = vunpack.c.h.b16 %v502
  %v2867 = vunpack.c.l.b16 %v503
  %v2868 = vunpack.c.h.b16 %v503
  %v2869 = vunpack.c.l.b16 %v504
  %v2870 = vunpack.c.h.b16 %v504
  %v2871 = vunpack.c.l.b16 %v505
  %v2872 = vunpack.c.h.b16 %v505
  %v2873 = vunpack.c.l.b16 %v506
  %v2874 = vunpack.c.h.b16 %v506
  %v2875 = vunpack.c.l.b16 %v507
  %v2876 = vunpack.c.h.b16 %v507
  %v2877 = vunpack.c.l.b16 %v508
  %v2878 = vunpack.c.h.b16 %v508
  %v2879 = vunpack.c.l.b16 %v509
  %v2880 = vunpack.c.h.b16 %v509
  %v2881 = vunpack.c.l.b16 %v510
  %v2882 = vunpack.c.h.b16 %v510
  %v2883 = vunpack.c.l.b16 %v511
  %v2884 = vunpack.c.h.b16 %v511
  %v2885 = vunpack.c.l.b16 %v512
  %v2886 = vunpack.c.h.b16 %v512
  %v2887 = vunpack.c.l.b16 %v513
  %v2888 = vunpack.c.h.b16 %v513
  %v2889 = vunpack.c.l.b16 %v514
  %v2890 = vunpack.c.h.b16 %v514
  %v2891 = vunpack.c.l.b16 %v515
  %v2892 = vunpack.c.h.b16 %v515
  %v2893 = vunpack.c.l.b16 %v516
  %v2894 = vunpack.c.h.b16 %v516
  %v2895 = vunpack.c.l.b16 %v517
  %v2896 = vunpack.c.h.b16 %v517
  %v2897 = vunpack.c.l.b16 %v518
  %v2898 = vunpack.c.h.b16 %v518
  %v2899 = vunpack.c.l.b16 %v519
  %v2900 = vunpack.c.h.b16 %v519
  %v2901 = vunpack.c.l.b16 %v520
  %v2902 = vunpack.c.h.b16 %v520
  %v2903 = vunpack.c.l.b16 %v521
  %v2904 = vunpack.c.h.b16 %v521
  %v2905 = vunpack.c.l.b16 %v522
  %v2906 = vunpack.c.h.b16 %v522
  %v2907 = vunpack.c.l.b16 %v523
  %v2908 = vunpack.c.h.b16 %v523
  %v2909 = vunpack.c.l.b16 %v524
  %v2910 = vunpack.c.h.b16 %v524
  %v2911 = vunpack.c.l.b16 %v525
  %v2912 = vunpack.c.h.b16 %v525
  %v2913 = vunpack.c.l.b16 %v526
  %v2914 = vunpack.c.h.b16 %v526
  %v2915 = vunpack.c.l.b16 %v527
  %v2916 = vunpack.c.h.b16 %v527
  %v2917 = vunpack.c.l.b16 %v528
  %v2918 = vunpack.c.h.b16 %v528
  %v2919 = vunpack.c.l.b16 %v529
  %v2920 = vunpack.c.h.b16 %v529
  %v2921 = vunpack.c.l.b16 %v530
  %v2922 = vunpack.c.h.b16 %v530
  %v2923 = vunpack.c.l.b16 %v531
  %v2924 = vunpack.c.h.b16 %v531
  %v2925 = vunpack.c.l.b16 %v532
  %v2926 = vunpack.c.h.b16 %v532
  %v2927 = vunpack.c.l.b16 %v533
  %v2928 = vunpack.c.h.b16 %v533
  %v2929 = vunpack.c.l.b16 %v534
  %v2930 = vunpack.c.h.b16 %v534
  %v2931 = vunpack.c.l.b16 %v535
  %v2932 = vunpack.c.h.b16 %v535
  %v2933 = vunpack.c.l.b16 %v536
  %v2934 = vunpack.c.h.b16 %v536
  %v2935 = vunpack.c.l.b16 %v537
  %v2936 = vunpack.c.h.b16 %v537
  %v2937 = vunpack.c.l.b16 %v538
  %v2938 = vunpack.c.h.b16 %v538
  %v2939 = vunpack.c.l.b16 %v539
  %v2940 = vunpack.c.h.b16 %v539
  %v2941 = vunpack.c.l.b16 %v540
  %v2942 = vunpack.c.h.b16 %v540
  %v2943 = vunpack.c.l.b16 %v541
  %v2944 = vunpack.c.h.b16 %v541
  %v2945 = vunpack.c.l.b16 %v542
  %v2946 = vunpack.c.h.b16 %v542
  %v2947 = vunpack.c.l.b16 %v543
  %v2948 = vunpack.c.h.b16 %v543
  %v2949 = vunpack.c.l.b16 %v544
  %v2950 = vunpack.c.h.b16 %v544
  %v2951 = vunpack.c.l.b16 %v545
  %v2952 = vunpack.c.h.b16 %v545
  %v2953 = vunpack.c.l.b16 %v546
  %v2954 = vunpack.c.h.b16 %v546
  %v2955 = vunpack.c.l.b16 %v547
  %v2956 = vunpack.c.h.b16 %v547
  %v2957 = vunpack.c.l.b16 %v548
  %v2958 = vunpack.c.h.b16 %v548
  %v2959 = vunpack.c.l.b16 %v549
  %v2960 = vunpack.c.h.b16 %v549
  %v2961 = vunpack.c.l.b16 %v550
  %v2962 = vunpack.c.h.b16 %v550
  %v2963 = vunpack.c.l.b16 %v551
  %v2964 = vunpack.c.h.b16 %v551
  %v2965 = vunpack.c.l.b16 %v552
  %v2966 = vunpack.c.h.b16 %v552
  %v2967 = vunpack.c.l.b16 %v553
  %v2968 = vunpack.c.h.b16 %v553
  %v2969 = vunpack.c.l.b16 %v554
  %v2970 = vunpack.c.h.b16 %v554
  %v2971 = vunpack.c.l.b16 %v555
  %v2972 = vunpack.c.h.b16 %v555
  %v2973 = vunpack.c.l.b16 %v556
  %v2974 = vunpack.c.h.b16 %v556
  %v2975 = vunpack.c.l.b16 %v557
  %v2976 = vunpack.c.h.b16 %v557
  %v2977 = vunpack.c.l.b16 %v558
  %v2978 = vunpack.c.h.b16 %v558
  %v2979 = vunpack.c.l.b16 %v559
  %v2980 = vunpack.c.h.b16 %v559
  %v2981 = vunpack.c.l.b16 %v560
  %v2982 = vunpack.c.h.b16 %v560
  %v2983 = vunpack.c.l.b16 %v561
  %v2984 = vunpack.c.h.b16 %v561
  %v2985 = vunpack.c.l.b16 %v562
  %v2986 = vunpack.c.h.b16 %v562
  %v2987 = vunpack.c.l.b16 %v563
  %v2988 = vunpack.c.h.b16 %v563
  %v2989 = vunpack.c.l.b16 %v564
  %v2990 = vunpack.c.h.b16 %v564
  %v2991 = vunpack.c.l.b16 %v565
  %v2992 = vunpack.c.h.b16 %v565
  %v2993 = vunpack.c.l.b16 %v566
  %v2994 = vunpack.c.h.b16 %v566
  %v2995 = vunpack.c.l.b16 %v567
  %v2996 = vunpack.c.h.b16 %v567
  %v2997 = vunpack.c.l.b16 %v568
  %v2998 = vunpack.c.h.b16 %v568
  %v2999 = vunpack.c.l.b16 %v569
  %v3000 = vunpack.c.h.b16 %v569
  %v3001 = vunpack.c.l.b16 %v570
  %v3002 = vunpack.c.h.b16 %v570
  %v3003 = vunpack.c.l.b16 %v571
  %v3004 = vunpack.c.h.b16 %v571
  %v3005 = vunpack.c.l.b16 %v572
  %v3006 = vunpack.c.h.b16 %v572
  %v3007 = vunpack.c.l.b16 %v573
  %v3008 = vunpack.c.h.b16 %v573
  %v3009 = vunpack.c.l.b16 %v574
  %v3010 = vunpack.c.h.b16 %v574
  %v3011 = vunpack.c.l.b16 %v575
  %v3012 = vunpack.c.h.b16 %v575
  %v3013 = vunpack.c.l.b16 %v576
  %v3014 = vunpack.c.h.b16 %v576
  %v3015 = vunpack.c.l.b16 %v577
  %v3016 = vunpack.c.h.b16 %v577
  %v3017 = vunpack.c.l.b16 %v578
  %v3018 = vunpack.c.h.b16 %v578
  %v3019 = vunpack.c.l.b16 %v579
  %v3020 = vunpack.c.h.b16 %v579
  %v3021 = vunpack.c.l.b16 %v580
  %v3022 = vunpack.c.h.b16 %v580
  %v3023 = vunpack.c.l.b16 %v581
  %v3024 = vunpack.c.h.b16 %v581
  %v3025 = vunpack.c.l.b16 %v582
  %v3026 = vunpack.c.h.b16 %v582
  %v3027 = vunpack.c.l.b16 %v583
  %v3028 = vunpack.c.h.b16 %v583
  %v3029 = vunpack.c.l.b16 %v584
  %v3030 = vunpack.c.h.b16 %v584
  %v3031 = vunpack.c.l.b16 %v585
  %v3032 = vunpack.c.h.b16 %v585
  %v3033 = vunpack.c.l.b16 %v586
  %v3034 = vunpack.c.h.b16 %v586
  %v3035 = vunpack.c.l.b16 %v587
  %v3036 = vunpack.c.h.b16 %v587
  %v3037 = vunpack.c.l.b16 %v588
  %v3038 = vunpack.c.h.b16 %v588
  %v3039 = vunpack.c.l.b16 %v589
  %v3040 = vunpack.c.h.b16 %v589
  %v3041 = vunpack.c.l.b16 %v590
  %v3042 = vunpack.c.h.b16 %v590
  %v3043 = vunpack.c.l.b16 %v591
  %v3044 = vunpack.c.h.b16 %v591
  %v3045 = vunpack.c.l.b16 %v592
  %v3046 = vunpack.c.h.b16 %v592
  %v3047 = vunpack.c.l.b16 %v593
  %v3048 = vunpack.c.h.b16 %v593
  %v3049 = vunpack.c.l.b16 %v594
  %v3050 = vunpack.c.h.b16 %v594
  %v3051 = vunpack.c.l.b16 %v595
  %v3052 = vunpack.c.h.b16 %v595
  %v3053 = vunpack.c.l.b16 %v596
  %v3054 = vunpack.c.h.b16 %v596
  %v3055 = vunpack.c.l.b16 %v597
  %v3056 = vunpack.c.h.b16 %v597
  %v3057 = vunpack.c.l.b16 %v598
  %v3058 = vunpack.c.h.b16 %v598
  %v3059 = vunpack.c.l.b16 %v599
  %v3060 = vunpack.c.h.b16 %v599
  %v3061 = vunpack.c.l.b16 %v600
  %v3062 = vunpack.c.h.b16 %v600
  %v3063 = vunpack.c.l.b16 %v601
  %v3064 = vunpack.c.h.b16 %v601
  %v3065 = vunpack.c.l.b16 %v602
  %v3066 = vunpack.c.h.b16 %v602
  %v3067 = vunpack.c.l.b16 %v603
  %v3068 = vunpack.c.h.b16 %v603
  %v3069 = vunpack.c.l.b16 %v604
  %v3070 = vunpack.c.h.b16 %v604
  %v3071 = vunpack.c.l.b16 %v605
  %v3072 = vunpack.c.h.b16 %v605
  %v3073 = vunpack.c.l.b16 %v606
  %v3074 = vunpack.c.h.b16 %v606
  %v3075 = vunpack.c.l.b16 %v607
  %v3076 = vunpack.c.h.b16 %v607
  %v3077 = vunpack.c.l.b16 %v608
  %v3078 = vunpack.c.h.b16 %v608
  %v3079 = vunpack.c.l.b16 %v609
  %v3080 = vunpack.c.h.b16 %v609
  %v3081 = vunpack.c.l.b16 %v610
  %v3082 = vunpack.c.h.b16 %v610
  %v3083 = vunpack.c.l.b16 %v611
  %v3084 = vunpack.c.h.b16 %v611
  %v3085 = vunpack.c.l.b16 %v612
  %v3086 = vunpack.c.h.b16 %v612
  %v3087 = vunpack.c.l.b16 %v613
  %v3088 = vunpack.c.h.b16 %v613
  %v3089 = vunpack.c.l.b16 %v614
  %v3090 = vunpack.c.h.b16 %v614
  %v3091 = vunpack.c.l.b16 %v615
  %v3092 = vunpack.c.h.b16 %v615
  %v3093 = vunpack.c.l.b16 %v616
  %v3094 = vunpack.c.h.b16 %v616
  %v3095 = vunpack.c.l.b16 %v617
  %v3096 = vunpack.c.h.b16 %v617
  %v3097 = vunpack.c.l.b16 %v618
  %v3098 = vunpack.c.h.b16 %v618
  %v3099 = vunpack.c.l.b16 %v619
  %v3100 = vunpack.c.h.b16 %v619
  %v3101 = vunpack.c.l.b16 %v620
  %v3102 = vunpack.c.h.b16 %v620
  %v3103 = vunpack.c.l.b16 %v621
  %v3104 = vunpack.c.h.b16 %v621
  %v3105 = vunpack.c.l.b16 %v622
  %v3106 = vunpack.c.h.b16 %v622
  %v3107 = vunpack.c.l.b16 %v623
  %v3108 = vunpack.c.h.b16 %v623
  %v3109 = vunpack.c.l.b16 %v624
  %v3110 = vunpack.c.h.b16 %v624
  %v3111 = vunpack.c.l.b16 %v625
  %v3112 = vunpack.c.h.b16 %v625
  %v3113 = vunpack.c.l.b16 %v626
  %v3114 = vunpack.c.h.b16 %v626
  %v3115 = vunpack.c.l.b16 %v627
  %v3116 = vunpack.c.h.b16 %v627
  %v3117 = vunpack.c.l.b16 %v628
  %v3118 = vunpack.c.h.b16 %v628
  %v3119 = vunpack.c.l.b16 %v629
  %v3120 = vunpack.c.h.b16 %v629
  %v3121 = vunpack.c.l.b16 %v630
  %v3122 = vunpack.c.h.b16 %v630
  %v3123 = vunpack.c.l.b16 %v631
  %v3124 = vunpack.c.h.b16 %v631
  %v3125 = vunpack.c.l.b16 %v632
  %v3126 = vunpack.c.h.b16 %v632
  %v3127 = vunpack.c.l.b16 %v633
  %v3128 = vunpack.c.h.b16 %v633
  %v3129 = vunpack.c.l.b16 %v634
  %v3130 = vunpack.c.h.b16 %v634
  %v3131 = vunpack.c.l.b16 %v635
  %v3132 = vunpack.c.h.b16 %v635
  %v3133 = vunpack.c.l.b16 %v636
  %v3134 = vunpack.c.h.b16 %v636
  %v3135 = vunpack.c.l.b16 %v637
  %v3136 = vunpack.c.h.b16 %v637
  %v3137 = vunpack.c.l.b16 %v638
  %v3138 = vunpack.c.h.b16 %v638
  %v3139 = vunpack.c.l.b16 %v639
  %v3140 = vunpack.c.h.b16 %v639
  %v3141 = vunpack.c.l.b16 %v640
  %v3142 = vunpack.c.h.b16 %v640
  %v3143 = vunpack.c.l.b16 %v641
  %v3144 = vunpack.c.h.b16 %v641
  %v3145 = vunpack.c.l.b16 %v642
  %v3146 = vunpack.c.h.b16 %v642
  %v3147 = vunpack.c.l.b16 %v643
  %v3148 = vunpack.c.h.b16 %v643
  %v3149 = vunpack.c.l.b16 %v644
  %v3150 = vunpack.c.h.b16 %v644
  %v3151 = vunpack.c.l.b16 %v645
  %v3152 = vunpack.c.h.b16 %v645
  %v3153 = vunpack.c.l.b16 %v646
  %v3154 = vunpack.c.h.b16 %v646
  %v3155 = vunpack.c.l.b16 %v647
  %v3156 = vunpack.c.h.b16 %v647
  %v3157 = vunpack.c.l.b16 %v648
  %v3158 = vunpack.c.h.b16 %v648
  %v3159 = vunpack.c.l.b16 %v649
  %v3160 = vunpack.c.h.b16 %v649
  %v3161 = vunpack.c.l.b16 %v650
  %v3162 = vunpack.c.h.b16 %v650
  %v3163 = vunpack.c.l.b16 %v651
  %v3164 = vunpack.c.h.b16 %v651
  %v3165 = vunpack.c.l.b16 %v652
  %v3166 = vunpack.c.h.b16 %v652
  %v3167 = vunpack.c.l.b16 %v653
  %v3168 = vunpack.c.h.b16 %v653
  %v3169 = vunpack.c.l.b16 %v654
  %v3170 = vunpack.c.h.b16 %v654
  %v3171 = vunpack.c.l.b16 %v655
  %v3172 = vunpack.c.h.b16 %v655
  %v3173 = vunpack.c.l.b16 %v656
  %v3174 = vunpack.c.h.b16 %v656
  %v3175 = vunpack.c.l.b16 %v657
  %v3176 = vunpack.c.h.b16 %v657
  %v3177 = vunpack.c.l.b16 %v658
  %v3178 = vunpack.c.h.b16 %v658
  %v3179 = vunpack.c.l.b16 %v659
  %v3180 = vunpack.c.h.b16 %v659
  %v3181 = vunpack.c.l.b16 %v660
  %v3182 = vunpack.c.h.b16 %v660
  %v3183 = vunpack.c.l.b16 %v661
  %v3184 = vunpack.c.h.b16 %v661
  %v3185 = vunpack.c.l.b16 %v662
  %v3186 = vunpack.c.h.b16 %v662
  %v3187 = vunpack.c.l.b16 %v663
  %v3188 = vunpack.c.h.b16 %v663
  %v3189 = vunpack.c.l.b16 %v664
  %v3190 = vunpack.c.h.b16 %v664
  %v3191 = vunpack.c.l.b16 %v665
  %v3192 = vunpack.c.h.b16 %v665
  %v3193 = vunpack.c.l.b16 %v666
  %v3194 = vunpack.c.h.b16 %v666
  %v3195 = vunpack.c.l.b16 %v667
  %v3196 = vunpack.c.h.b16 %v667
  %v3197 = vunpack.c.l.b16 %v668
  %v3198 = vunpack.c.h.b16 %v668
  %v3199 = vunpack.c.l.b16 %v669
  %v3200 = vunpack.c.h.b16 %v669
  %v3201 = vunpack.c.l.b16 %v670
  %v3202 = vunpack.c.h.b16 %v670
  %v3203 = vunpack.c.l.b16 %v671
  %v3204 = vunpack.c.h.b16 %v671
  %v3205 = vunpack.c.l.b16 %v672
  %v3206 = vunpack.c.h.b16 %v672
  %v3207 = vunpack.c.l.b16 %v673
  %v3208 = vunpack.c.h.b16 %v673
  %v3209 = vunpack.c.l.b16 %v674
  %v3210 = vunpack.c.h.b16 %v674
  %v3211 = vunpack.c.l.b16 %v675
  %v3212 = vunpack.c.h.b16 %v675
  %v3213 = vunpack.c.l.b16 %v676
  %v3214 = vunpack.c.h.b16 %v676
  %v3215 = vunpack.c.l.b16 %v677
  %v3216 = vunpack.c.h.b16 %v677
  %v3217 = vunpack.c.l.b16 %v678
  %v3218 = vunpack.c.h.b16 %v678
  %v3219 = vunpack.c.l.b16 %v679
  %v3220 = vunpack.c.h.b16 %v679
  %v3221 = vunpack.c.l.b16 %v680
  %v3222 = vunpack.c.h.b16 %v680
  %v3223 = vunpack.c.l.b16 %v681
  %v3224 = vunpack.c.h.b16 %v681
  %v3225 = vunpack.c.l.b16 %v682
  %v3226 = vunpack.c.h.b16 %v682
  %v3227 = vunpack.c.l.b16 %v683
  %v3228 = vunpack.c.h.b16 %v683
  %v3229 = vunpack.c.l.b16 %v684
  %v3230 = vunpack.c.h.b16 %v684
  %v3231 = vunpack.c.l.b16 %v685
  %v3232 = vunpack.c.h.b16 %v685
  %v3233 = vunpack.c.l.b16 %v686
  %v3234 = vunpack.c.h.b16 %v686
  %v3235 = vunpack.c.l.b16 %v687
  %v3236 = vunpack.c.h.b16 %v687
  %v3237 = vunpack.c.l.b16 %v688
  %v3238 = vunpack.c.h.b16 %v688
  %v3239 = vunpack.c.l.b16 %v689
  %v3240 = vunpack.c.h.b16 %v689
  %v3241 = vunpack.c.l.b16 %v690
  %v3242 = vunpack.c.h.b16 %v690
  %v3243 = vunpack.c.l.b16 %v691
  %v3244 = vunpack.c.h.b16 %v691
  %v3245 = vunpack.c.l.b16 %v692
  %v3246 = vunpack.c.h.b16 %v692
  %v3247 = vpack.c.b16 %v2449, %v2447
  %v3248 = vpack.c.b16 %v2450, %v2448
  %v3249 = vpack.c.b16 %v2453, %v2451
  %v3250 = vpack.c.b16 %v2454, %v2452
  %v3251 = vpack.c.b16 %v2457, %v2455
  %v3252 = vpack.c.b16 %v2458, %v2456
  %v3253 = vpack.c.b16 %v2461, %v2459
  %v3254 = vpack.c.b16 %v2462, %v2460
  %v3255 = vpack.c.b16 %v2465, %v2463
  %v3256 = vpack.c.b16 %v2466, %v2464
  %v3257 = vpack.c.b16 %v2469, %v2467
  %v3258 = vpack.c.b16 %v2470, %v2468
  %v3259 = vpack.c.b16 %v2473, %v2471
  %v3260 = vpack.c.b16 %v2474, %v2472
  %v3261 = vpack.c.b16 %v2477, %v2475
  %v3262 = vpack.c.b16 %v2478, %v2476
  %v3263 = vpack.c.b16 %v2481, %v2479
  %v3264 = vpack.c.b16 %v2482, %v2480
  %v3265 = vpack.c.b16 %v2485, %v2483
  %v3266 = vpack.c.b16 %v2486, %v2484
  %v3267 = vpack.c.b16 %v2489, %v2487
  %v3268 = vpack.c.b16 %v2490, %v2488
  %v3269 = vpack.c.b16 %v2493, %v2491
  %v3270 = vpack.c.b16 %v2494, %v2492
  %v3271 = vpack.c.b16 %v2497, %v2495
  %v3272 = vpack.c.b16 %v2498, %v2496
  %v3273 = vpack.c.b16 %v2501, %v2499
  %v3274 = vpack.c.b16 %v2502, %v2500
  %v3275 = vpack.c.b16 %v2505, %v2503
  %v3276 = vpack.c.b16 %v2506, %v2504
  %v3277 = vpack.c.b16 %v2509, %v2507
  %v3278 = vpack.c.b16 %v2510, %v2508
  %v3279 = vpack.c.b16 %v2513, %v2511
  %v3280 = vpack.c.b16 %v2514, %v2512
  %v3281 = vpack.c.b16 %v2517, %v2515
  %v3282 = vpack.c.b16 %v2518, %v2516
  %v3283 = vpack.c.b16 %v2521, %v2519
  %v3284 = vpack.c.b16 %v2522, %v2520
  %v3285 = vpack.c.b16 %v2525, %v2523
  %v3286 = vpack.c.b16 %v2526, %v2524
  %v3287 = vpack.c.b16 %v2529, %v2527
  %v3288 = vpack.c.b16 %v2530, %v2528
  %v3289 = vpack.c.b16 %v2533, %v2531
  %v3290 = vpack.c.b16 %v2534, %v2532
  %v3291 = vpack.c.b16 %v2537, %v2535
  %v3292 = vpack.c.b16 %v2538, %v2536
  %v3293 = vpack.c.b16 %v2541, %v2539
  %v3294 = vpack.c.b16 %v2542, %v2540
  %v3295 = vpack.c.b16 %v2545, %v2543
  %v3296 = vpack.c.b16 %v2546, %v2544
  %v3297 = vpack.c.b16 %v2549, %v2547
  %v3298 = vpack.c.b16 %v2550, %v2548
  %v3299 = vpack.c.b16 %v2553, %v2551
  %v3300 = vpack.c.b16 %v2554, %v2552
  %v3301 = vpack.c.b16 %v2557, %v2555
  %v3302 = vpack.c.b16 %v2558, %v2556
  %v3303 = vpack.c.b16 %v2561, %v2559
  %v3304 = vpack.c.b16 %v2562, %v2560
  %v3305 = vpack.c.b16 %v2565, %v2563
  %v3306 = vpack.c.b16 %v2566, %v2564
  %v3307 = vpack.c.b16 %v2569, %v2567
  %v3308 = vpack.c.b16 %v2570, %v2568
  %v3309 = vpack.c.b16 %v2573, %v2571
  %v3310 = vpack.c.b16 %v2574, %v2572
  %v3311 = vpack.c.b16 %v2577, %v2575
  %v3312 = vpack.c.b16 %v2578, %v2576
  %v3313 = vpack.c.b16 %v2581, %v2579
  %v3314 = vpack.c.b16 %v2582, %v2580
  %v3315 = vpack.c.b16 %v2585, %v2583
  %v3316 = vpack.c.b16 %v2586, %v2584
  %v3317 = vpack.c.b16 %v2589, %v2587
  %v3318 = vpack.c.b16 %v2590, %v2588
  %v3319 = vpack.c.b16 %v2593, %v2591
  %v3320 = vpack.c.b16 %v2594, %v2592
  %v3321 = vpack.c.b16 %v2597, %v2595
  %v3322 = vpack.c.b16 %v2598, %v2596
  %v3323 = vpack.c.b16 %v2601, %v2599
  %v3324 = vpack.c.b16 %v2602, %v2600
  %v3325 = vpack.c.b16 %v2605, %v2603
  %v3326 = vpack.c.b16 %v2606, %v2604
  %v3327 = vpack.c.b16 %v2609, %v2607
  %v3328 = vpack.c.b16 %v2610, %v2608
  %v3329 = vpack.c.b16 %v2613, %v2611
  %v3330 = vpack.c.b16 %v2614, %v2612
  %v3331 = vpack.c.b16 %v2617, %v2615
  %v3332 = vpack.c.b16 %v2618, %v2616
  %v3333 = vpack.c.b16 %v2621, %v2619
  %v3334 = vpack.c.b16 %v2622, %v2620
  %v3335 = vpack.c.b16 %v2625, %v2623
  %v3336 = vpack.c.b16 %v2626, %v2624
  %v3337 = vpack.c.b16 %v2629, %v2627
  %v3338 = vpack.c.b16 %v2630, %v2628
  %v3339 = vpack.c.b16 %v2633, %v2631
  %v3340 = vpack.c.b16 %v2634, %v2632
  %v3341 = vpack.c.b16 %v2637, %v2635
  %v3342 = vpack.c.b16 %v2638, %v2636
  %v3343 = vpack.c.b16 %v2641, %v2639
  %v3344 = vpack.c.b16 %v2642, %v2640
  %v3345 = vpack.c.b16 %v2645, %v2643
  %v3346 = vpack.c.b16 %v2646, %v2644
  %v3347 = vpack.c.b16 %v2649, %v2647
  %v3348 = vpack.c.b16 %v2650, %v2648
  %v3349 = vpack.c.b16 %v2653, %v2651
  %v3350 = vpack.c.b16 %v2654, %v2652
  %v3351 = vpack.c.b16 %v2657, %v2655
  %v3352 = vpack.c.b16 %v2658, %v2656
  %v3353 = vpack.c.b16 %v2661, %v2659
  %v3354 = vpack.c.b16 %v2662, %v2660
  %v3355 = vpack.c.b16 %v2665, %v2663
  %v3356 = vpack.c.b16 %v2666, %v2664
  %v3357 = vpack.c.b16 %v2669, %v2667
  %v3358 = vpack.c.b16 %v2670, %v2668
  %v3359 = vpack.c.b16 %v2673, %v2671
  %v3360 = vpack.c.b16 %v2674, %v2672
  %v3361 = vpack.c.b16 %v2677, %v2675
  %v3362 = vpack.c.b16 %v2678, %v2676
  %v3363 = vpack.c.b16 %v2681, %v2679
  %v3364 = vpack.c.b16 %v2682, %v2680
  %v3365 = vpack.c.b16 %v2685, %v2683
  %v3366 = vpack.c.b16 %v2686, %v2684
  %v3367 = vpack.c.b16 %v2689, %v2687
  %v3368 = vpack.c.b16 %v2690, %v2688
  %v3369 = vpack.c.b16 %v2693, %v2691
  %v3370 = vpack.c.b16 %v2694, %v2692
  %v3371 = vpack.c.b16 %v2697, %v2695
  %v3372 = vpack.c.b16 %v2698, %v2696
  %v3373 = vpack.c.b16 %v2701, %v2699
  %v3374 = vpack.c.b16 %v2702, %v2700
  %v3375 = vpack.c.b16 %v2705, %v2703
  %v3376 = vpack.c.b16 %v2706, %v2704
  %v3377 = vpack.c.b16 %v2709, %v2707
  %v3378 = vpack.c.b16 %v2710, %v2708
  %v3379 = vpack.c.b16 %v2713, %v2711
  %v3380 = vpack.c.b16 %v2714, %v2712
  %v3381 = vpack.c.b16 %v2717, %v2715
  %v3382 = vpack.c.b16 %v2718, %v2716
  %v3383 = vpack.c.b16 %v2721, %v2719
  %v3384 = vpack.c.b16 %v2722, %v2720
  %v3385 = vpack.c.b16 %v2725, %v2723
  %v3386 = vpack.c.b16 %v2726, %v2724
  %v3387 = vpack.c.b16 %v2729, %v2727
  %v3388 = vpack.c.b16 %v2730, %v2728
  %v3389 = vpack.c.b16 %v2733, %v2731
  %v3390 = vpack.c.b16 %v2734, %v2732
  %v3391 = vpack.c.b16 %v2737, %v2735
  %v3392 = vpack.c.b16 %v2738, %v2736
  %v3393 = vpack.c.b16 %v2741, %v2739
  %v3394 = vpack.c.b16 %v2742, %v2740
  %v3395 = vpack.c.b16 %v2745, %v2743
  %v3396 = vpack.c.b16 %v2746, %v2744
  %v3397 = vpack.c.b16 %v2749, %v2747
  %v3398 = vpack.c.b16 %v2750, %v2748
  %v3399 = vpack.c.b16 %v2753, %v2751
  %v3400 = vpack.c.b16 %v2754, %v2752
  %v3401 = vpack.c.b16 %v2757, %v2755
  %v3402 = vpack.c.b16 %v2758, %v2756
  %v3403 = vpack.c.b16 %v2761, %v2759
  %v3404 = vpack.c.b16 %v2762, %v2760
  %v3405 = vpack.c.b16 %v2765, %v2763
  %v3406 = vpack.c.b16 %v2766, %v2764
  %v3407 = vpack.c.b16 %v2769, %v2767
  %v3408 = vpack.c.b16 %v2770, %v2768
  %v3409 = vpack.c.b16 %v2773, %v2771
  %v3410 = vpack.c.b16 %v2774, %v2772
  %v3411 = vpack.c.b16 %v2777, %v2775
  %v3412 = vpack.c.b16 %v2778, %v2776
  %v3413 = vpack.c.b16 %v2781, %v2779
  %v3414 = vpack.c.b16 %v2782, %v2780
  %v3415 = vpack.c.b16 %v2785, %v2783
  %v3416 = vpack.c.b16 %v2786, %v2784
  %v3417 = vpack.c.b16 %v2789, %v2787
  %v3418 = vpack.c.b16 %v2790, %v2788
  %v3419 = vpack.c.b16 %v2793, %v2791
  %v3420 = vpack.c.b16 %v2794, %v2792
  %v3421 = vpack.c.b16 %v2797, %v2795
  %v3422 = vpack.c.b16 %v2798, %v2796
  %v3423 = vpack.c.b16 %v2801, %v2799
  %v3424 = vpack.c.b16 %v2802, %v2800
  %v3425 = vpack.c.b16 %v2805, %v2803
  %v3426 = vpack.c.b16 %v2806, %v2804
  %v3427 = vpack.c.b16 %v2809, %v2807
  %v3428 = vpack.c.b16 %v2810, %v2808
  %v3429 = vpack.c.b16 %v2813, %v2811
  %v3430 = vpack.c.b16 %v2814, %v2812
  %v3431 = vpack.c.b16 %v2817, %v2815
  %v3432 = vpack.c.b16 %v2818, %v2816
  %v3433 = vpack.c.b16 %v2821, %v2819
  %v3434 = vpack.c.b16 %v2822, %v2820
  %v3435 = vpack.c.b16 %v2825, %v2823
  %v3436 = vpack.c.b16 %v2826, %v2824
  %v3437 = vpack.c.b16 %v2829, %v2827
  %v3438 = vpack.c.b16 %v2830, %v2828
  %v3439 = vpack.c.b16 %v2833, %v2831
  %v3440 = vpack.c.b16 %v2834, %v2832
  %v3441 = vpack.c.b16 %v2837, %v2835
  %v3442 = vpack.c.b16 %v2838, %v2836
  %v3443 = vpack.c.b16 %v2841, %v2839
  %v3444 = vpack.c.b16 %v2842, %v2840
  %v3445 = vpack.c.b16 %v2845, %v2843
  %v3446 = vpack.c.b16 %v2846, %v2844
  %v3447 = vpack.c.b16 %v2849, %v2847
  %v3448 = vpack.c.b16 %v2850, %v2848
  %v3449 = vpack.c.b16 %v2853, %v2851
  %v3450 = vpack.c.b16 %v2854, %v2852
  %v3451 = vpack.c.b16 %v2857, %v2855
  %v3452 = vpack.c.b16 %v2858, %v2856
  %v3453 = vpack.c.b16 %v2861, %v2859
  %v3454 = vpack.c.b16 %v2862, %v2860
  %v3455 = vpack.c.b16 %v2865, %v2863
  %v3456 = vpack.c.b16 %v2866, %v2864
  %v3457 = vpack.c.b16 %v2869, %v2867
  %v3458 = vpack.c.b16 %v2870, %v2868
  %v3459 = vpack.c.b16 %v2873, %v2871
  %v3460 = vpack.c.b16 %v2874, %v2872
  %v3461 = vpack.c.b16 %v2877, %v2875
  %v3462 = vpack.c.b16 %v2878, %v2876
  %v3463 = vpack.c.b16 %v2881, %v2879
  %v3464 = vpack.c.b16 %v2882, %v2880
  %v3465 = vpack.c.b16 %v2885, %v2883
  %v3466 = vpack.c.b16 %v2886, %v2884
  %v3467 = vpack.c.b16 %v2889, %v2887
  %v3468 = vpack.c.b16 %v2890, %v2888
  %v3469 = vpack.c.b16 %v2893, %v2891
  %v3470 = vpack.c.b16 %v2894, %v2892
  %v3471 = vpack.c.b16 %v2897, %v2895
  %v3472 = vpack.c.b16 %v2898, %v2896
  %v3473 = vpack.c.b16 %v2901, %v2899
  %v3474 = vpack.c.b16 %v2902, %v2900
  %v3475 = vpack.c.b16 %v2905, %v2903
  %v3476 = vpack.c.b16 %v2906, %v2904
  %v3477 = vpack.c.b16 %v2909, %v2907
  %v3478 = vpack.c.b16 %v2910, %v2908
  %v3479 = vpack.c.b16 %v2913, %v2911
  %v3480 = vpack.c.b16 %v2914, %v2912
  %v3481 = vpack.c.b16 %v2917, %v2915
  %v3482 = vpack.c.b16 %v2918, %v2916
  %v3483 = vpack.c.b16 %v2921, %v2919
  %v3484 = vpack.c.b16 %v2922, %v2920
  %v3485 = vpack.c.b16 %v2925, %v2923
  %v3486 = vpack.c.b16 %v2926, %v2924
  %v3487 = vpack.c.b16 %v2929, %v2927
  %v3488 = vpack.c.b16 %v2930, %v2928
  %v3489 = vpack.c.b16 %v2933, %v2931
  %v3490 = vpack.c.b16 %v2934, %v2932
  %v3491 = vpack.c.b16 %v2937, %v2935
  %v3492 = vpack.c.b16 %v2938, %v2936
  %v3493 = vpack.c.b16 %v2941, %v2939
  %v3494 = vpack.c.b16 %v2942, %v2940
  %v3495 = vpack.c.b16 %v2945, %v2943
  %v3496 = vpack.c.b16 %v2946, %v2944
  %v3497 = vpack.c.b16 %v2949, %v2947
  %v3498 = vpack.c.b16 %v2950, %v2948
  %v3499 = vpack.c.b16 %v2953, %v2951
  %v3500 = vpack.c.b16 %v2954, %v2952
  %v3501 = vpack.c.b16 %v2957, %v2955
  %v3502 = vpack.c.b16 %v2958, %v2956
  %v3503 = vpack.c.b16 %v2961, %v2959
  %v3504 = vpack.c.b16 %v2962, %v2960
  %v3505 = vpack.c.b16 %v2965, %v2963
  %v3506 = vpack.c.b16 %v2966, %v2964
  %v3507 = vpack.c.b16 %v2969, %v2967
  %v3508 = vpack.c.b16 %v2970, %v2968
  %v3509 = vpack.c.b16 %v2973, %v2971
  %v3510 = vpack.c.b16 %v2974, %v2972
  %v3511 = vpack.c.b16 %v2977, %v2975
  %v3512 = vpack.c.b16 %v2978, %v2976
  %v3513 = vpack.c.b16 %v2981, %v2979
  %v3514 = vpack.c.b16 %v2982, %v2980
  %v3515 = vpack.c.b16 %v2985, %v2983
  %v3516 = vpack.c.b16 %v2986, %v2984
  %v3517 = vpack.c.b16 %v2989, %v2987
  %v3518 = vpack.c.b16 %v2990, %v2988
  %v3519 = vpack.c.b16 %v2993, %v2991
  %v3520 = vpack.c.b16 %v2994, %v2992
  %v3521 = vpack.c.b16 %v2997, %v2995
  %v3522 = vpack.c.b16 %v2998, %v2996
  %v3523 = vpack.c.b16 %v3001, %v2999
  %v3524 = vpack.c.b16 %v3002, %v3000
  %v3525 = vpack.c.b16 %v3005, %v3003
  %v3526 = vpack.c.b16 %v3006, %v3004
  %v3527 = vpack.c.b16 %v3009, %v3007
  %v3528 = vpack.c.b16 %v3010, %v3008
  %v3529 = vpack.c.b16 %v3013, %v3011
  %v3530 = vpack.c.b16 %v3014, %v3012
  %v3531 = vpack.c.b16 %v3017, %v3015
  %v3532 = vpack.c.b16 %v3018, %v3016
  %v3533 = vpack.c.b16 %v3021, %v3019
  %v3534 = vpack.c.b16 %v3022, %v3020
  %v3535 = vpack.c.b16 %v3025, %v3023
  %v3536 = vpack.c.b16 %v3026, %v3024
  %v3537 = vpack.c.b16 %v3029, %v3027
  %v3538 = vpack.c.b16 %v3030, %v3028
  %v3539 = vpack.c.b16 %v3033, %v3031
  %v3540 = vpack.c.b16 %v3034, %v3032
  %v3541 = vpack.c.b16 %v3037, %v3035
  %v3542 = vpack.c.b16 %v3038, %v3036
  %v3543 = vpack.c.b16 %v3041, %v3039
  %v3544 = vpack.c.b16 %v3042, %v3040
  %v3545 = vpack.c.b16 %v3045, %v3043
  %v3546 = vpack.c.b16 %v3046, %v3044
  %v3547 = vpack.c.b16 %v3049, %v3047
  %v3548 = vpack.c.b16 %v3050, %v3048
  %v3549 = vpack.c.b16 %v3053, %v3051
  %v3550 = vpack.c.b16 %v3054, %v3052
  %v3551 = vpack.c.b16 %v3057, %v3055
  %v3552 = vpack.c.b16 %v3058, %v3056
  %v3553 = vpack.c.b16 %v3061, %v3059
  %v3554 = vpack.c.b16 %v3062, %v3060
  %v3555 = vpack.c.b16 %v3065, %v3063
  %v3556 = vpack.c.b16 %v3066, %v3064
  %v3557 = vpack.c.b16 %v3069, %v3067
  %v3558 = vpack.c.b16 %v3070, %v3068
  %v3559 = vpack.c.b16 %v3073, %v3071
  %v3560 = vpack.c.b16 %v3074, %v3072
  %v3561 = vpack.c.b16 %v3077, %v3075
  %v3562 = vpack.c.b16 %v3078, %v3076
  %v3563 = vpack.c.b16 %v3081, %v3079
  %v3564 = vpack.c.b16 %v3082, %v3080
  %v3565 = vpack.c.b16 %v3085, %v3083
  %v3566 = vpack.c.b16 %v3086, %v3084
  %v3567 = vpack.c.b16 %v3089, %v3087
  %v3568 = vpack.c.b16 %v3090, %v3088
  %v3569 = vpack.c.b16 %v3093, %v3091
  %v3570 = vpack.c.b16 %v3094, %v3092
  %v3571 = vpack.c.b16 %v3097, %v3095
  %v3572 = vpack.c.b16 %v3098, %v3096
  %v3573 = vpack.c.b16 %v3101, %v3099
  %v3574 = vpack.c.b16 %v3102, %v3100
  %v3575 = vpack.c.b16 %v3105, %v3103
  %v3576 = vpack.c.b16 %v3106, %v3104
  %v3577 = vpack.c.b16 %v3109, %v3107
  %v3578 = vpack.c.b16 %v3110, %v3108
  %v3579 = vpack.c.b16 %v3113, %v3111
  %v3580 = vpack.c.b16 %v3114, %v3112
  %v3581 = vpack.c.b16 %v3117, %v3115
  %v3582 = vpack.c.b16 %v3118, %v3116
  %v3583 = vpack.c.b16 %v3121, %v3119
  %v3584 = vpack.c.b16 %v3122, %v3120
  %v3585 = vpack.c.b16 %v3125, %v3123
  %v3586 = vpack.c.b16 %v3126, %v3124
  %v3587 = vpack.c.b16 %v3129, %v3127
  %v3588 = vpack.c.b16 %v3130, %v3128
  %v3589 = vpack.c.b16 %v3133, %v3131
  %v3590 = vpack.c.b16 %v3134, %v3132
  %v3591 = vpack.c.b16 %v3137, %v3135
  %v3592 = vpack.c.b16 %v3138, %v3136
  %v3593 = vpack.c.b16 %v3141, %v3139
  %v3594 = vpack.c.b16 %v3142, %v3140
  %v3595 = vpack.c.b16 %v3145, %v3143
  %v3596 = vpack.c.b16 %v3146, %v3144
  %v3597 = vpack.c.b16 %v3149, %v3147
  %v3598 = vpack.c.b16 %v3150, %v3148
  %v3599 = vpack.c.b16 %v3153, %v3151
  %v3600 = vpack.c.b16 %v3154, %v3152
  %v3601 = vpack.c.b16 %v3157, %v3155
  %v3602 = vpack.c.b16 %v3158, %v3156
  %v3603 = vpack.c.b16 %v3161, %v3159
  %v3604 = vpack.c.b16 %v3162, %v3160
  %v3605 = vpack.c.b16 %v3165, %v3163
  %v3606 = vpack.c.b16 %v3166, %v3164
  %v3607 = vpack.c.b16 %v3169, %v3167
  %v3608 = vpack.c.b16 %v3170, %v3168
  %v3609 = vpack.c.b16 %v3173, %v3171
  %v3610 = vpack.c.b16 %v3174, %v3172
  %v3611 = vpack.c.b16 %v3177, %v3175
  %v3612 = vpack.c.b16 %v3178, %v3176
  %v3613 = vpack.c.b16 %v3181, %v3179
  %v3614 = vpack.c.b16 %v3182, %v3180
  %v3615 = vpack.c.b16 %v3185, %v3183
  %v3616 = vpack.c.b16 %v3186, %v3184
  %v3617 = vpack.c.b16 %v3189, %v3187
  %v3618 = vpack.c.b16 %v3190, %v3188
  %v3619 = vpack.c.b16 %v3193, %v3191
  %v3620 = vpack.c.b16 %v3194, %v3192
  %v3621 = vpack.c.b16 %v3197, %v3195
  %v3622 = vpack.c.b16 %v3198, %v3196
  %v3623 = vpack.c.b16 %v3201, %v3199
  %v3624 = vpack.c.b16 %v3202, %v3200
  %v3625 = vpack.c.b16 %v3205, %v3203
  %v3626 = vpack.c.b16 %v3206, %v3204
  %v3627 = vpack.c.b16 %v3209, %v3207
  %v3628 = vpack.c.b16 %v3210, %v3208
  %v3629 = vpack.c.b16 %v3213, %v3211
  %v3630 = vpack.c.b16 %v3214, %v3212
  %v3631 = vpack.c.b16 %v3217, %v3215
  %v3632 = vpack.c.b16 %v3218, %v3216
  %v3633 = vpack.c.b16 %v3221, %v3219
  %v3634 = vpack.c.b16 %v3222, %v3220
  %v3635 = vpack.c.b16 %v3225, %v3223
  %v3636 = vpack.c.b16 %v3226, %v3224
  %v3637 = vpack.c.b16 %v3229, %v3227
  %v3638 = vpack.c.b16 %v3230, %v3228
  %v3639 = vpack.c.b16 %v3233, %v3231
  %v3640 = vpack.c.b16 %v3234, %v3232
  %v3641 = vpack.c.b16 %v3237, %v3235
  %v3642 = vpack.c.b16 %v3238, %v3236
  %v3643 = vpack.c.b16 %v3241, %v3239
  %v3644 = vpack.c.b16 %v3242, %v3240
  %v3645 = vpack.c.b16 %v3245, %v3243
  %v3646 = vpack.c.b16 %v3246, %v3244
  %4047 = vmatpush.bf16.msra.mxu0 %v3261
  %4048 = vmatpush.bf16.msra.mxu0 %v3259
  %4049 = vmatpush.bf16.msra.mxu0 %v3257
  %4050 = vmatpush.bf16.msra.mxu0 %v3255
  %4051 = vmatpush.bf16.msra.mxu0 %v3253
  %4052 = vmatpush.bf16.msra.mxu0 %v3251
  %4053 = vmatpush.bf16.msra.mxu0 %v3249
  %4054 = vmatpush.bf16.msra.mxu0 %v3247
  %4055 = vmatmul.bf16.gmra.mxu0 %v1497
  %v4056 = vpop.f32.mrf.mxu0
  %v4057 = vadd.f32 %v695, %v4056
  %v4058 = vpop.f32.mrf.mxu0
  %v4059 = vadd.f32 %v695, %v4058
  %4060 = vmatmul.bf16.gmra.mxu0 %v1522
  %v4061 = vpop.f32.mrf.mxu0
  %v4062 = vadd.f32 %v695, %v4061
  %v4063 = vpop.f32.mrf.mxu0
  %v4064 = vadd.f32 %v695, %v4063
  %4065 = vmatmul.bf16.gmra.mxu0 %v1547
  %v4066 = vpop.f32.mrf.mxu0
  %v4067 = vadd.f32 %v695, %v4066
  %v4068 = vpop.f32.mrf.mxu0
  %v4069 = vadd.f32 %v695, %v4068
  %4070 = vmatmul.bf16.gmra.mxu0 %v1572
  %v4071 = vpop.f32.mrf.mxu0
  %v4072 = vadd.f32 %v695, %v4071
  %v4073 = vpop.f32.mrf.mxu0
  %v4074 = vadd.f32 %v695, %v4073
  %4075 = vmatmul.bf16.gmra.mxu0 %v1597
  %v4076 = vpop.f32.mrf.mxu0
  %v4077 = vadd.f32 %v695, %v4076
  %v4078 = vpop.f32.mrf.mxu0
  %v4079 = vadd.f32 %v695, %v4078
  %4080 = vmatmul.bf16.gmra.mxu0 %v1622
  %v4081 = vpop.f32.mrf.mxu0
  %v4082 = vadd.f32 %v695, %v4081
  %v4083 = vpop.f32.mrf.mxu0
  %v4084 = vadd.f32 %v695, %v4083
  %4085 = vmatmul.bf16.gmra.mxu0 %v1647
  %v4086 = vpop.f32.mrf.mxu0
  %v4087 = vadd.f32 %v695, %v4086
  %v4088 = vpop.f32.mrf.mxu0
  %v4089 = vadd.f32 %v695, %v4088
  %4090 = vmatmul.bf16.gmra.mxu0 %v1672
  %v4091 = vpop.f32.mrf.mxu0
  %v4092 = vadd.f32 %v695, %v4091
  %v4093 = vpop.f32.mrf.mxu0
  %v4094 = vadd.f32 %v695, %v4093
  %4095 = vmatmul.bf16.gmra.mxu0 %v1697
  %v4096 = vpop.f32.mrf.mxu0
  %v4097 = vadd.f32 %v695, %v4096
  %v4098 = vpop.f32.mrf.mxu0
  %v4099 = vadd.f32 %v695, %v4098
  %4100 = vmatmul.bf16.gmra.mxu0 %v1722
  %v4101 = vpop.f32.mrf.mxu0
  %v4102 = vadd.f32 %v695, %v4101
  %v4103 = vpop.f32.mrf.mxu0
  %v4104 = vadd.f32 %v695, %v4103
  %4105 = vmatmul.bf16.gmra.mxu0 %v1747
  %v4106 = vpop.f32.mrf.mxu0
  %v4107 = vadd.f32 %v695, %v4106
  %v4108 = vpop.f32.mrf.mxu0
  %4109 = vdwg.mxu0
  %4110 = vmatpush.bf16.msra.mxu0 %v3277
  %4111 = vmatpush.bf16.msra.mxu0 %v3275
  %4112 = vmatpush.bf16.msra.mxu0 %v3273
  %4113 = vmatpush.bf16.msra.mxu0 %v3271
  %4114 = vmatpush.bf16.msra.mxu0 %v3269
  %4115 = vmatpush.bf16.msra.mxu0 %v3267
  %4116 = vmatpush.bf16.msra.mxu0 %v3265
  %4117 = vmatpush.bf16.msra.mxu0 %v3263
  %4118 = vmatmul.bf16.gmra.mxu0 %v1498
  %v4119 = vpop.f32.mrf.mxu0
  %v4120 = vadd.f32 %v4057, %v4119
  %v4121 = vpop.f32.mrf.mxu0
  %v4122 = vadd.f32 %v4059, %v4121
  %4123 = vmatmul.bf16.gmra.mxu0 %v1523
  %v4124 = vpop.f32.mrf.mxu0
  %v4125 = vadd.f32 %v4062, %v4124
  %v4126 = vpop.f32.mrf.mxu0
  %v4127 = vadd.f32 %v4064, %v4126
  %4128 = vmatmul.bf16.gmra.mxu0 %v1548
  %v4129 = vpop.f32.mrf.mxu0
  %v4130 = vadd.f32 %v4067, %v4129
  %v4131 = vpop.f32.mrf.mxu0
  %v4132 = vadd.f32 %v4069, %v4131
  %4133 = vmatmul.bf16.gmra.mxu0 %v1573
  %v4134 = vpop.f32.mrf.mxu0
  %v4135 = vadd.f32 %v4072, %v4134
  %v4136 = vpop.f32.mrf.mxu0
  %v4137 = vadd.f32 %v4074, %v4136
  %4138 = vmatmul.bf16.gmra.mxu0 %v1598
  %v4139 = vpop.f32.mrf.mxu0
  %v4140 = vadd.f32 %v4077, %v4139
  %v4141 = vpop.f32.mrf.mxu0
  %v4142 = vadd.f32 %v4079, %v4141
  %4143 = vmatmul.bf16.gmra.mxu0 %v1623
  %v4144 = vpop.f32.mrf.mxu0
  %v4145 = vadd.f32 %v4082, %v4144
  %v4146 = vpop.f32.mrf.mxu0
  %v4147 = vadd.f32 %v4084, %v4146
  %4148 = vmatmul.bf16.gmra.mxu0 %v1648
  %v4149 = vpop.f32.mrf.mxu0
  %v4150 = vadd.f32 %v4087, %v4149
  %v4151 = vpop.f32.mrf.mxu0
  %v4152 = vadd.f32 %v4089, %v4151
  %4153 = vmatmul.bf16.gmra.mxu0 %v1673
  %v4154 = vpop.f32.mrf.mxu0
  %v4155 = vadd.f32 %v4092, %v4154
  %v4156 = vpop.f32.mrf.mxu0
  %v4157 = vadd.f32 %v4094, %v4156
  %4158 = vmatmul.bf16.gmra.mxu0 %v1698
  %v4159 = vpop.f32.mrf.mxu0
  %v4160 = vadd.f32 %v4097, %v4159
  %v4161 = vpop.f32.mrf.mxu0
  %v4162 = vadd.f32 %v4099, %v4161
  %4163 = vmatmul.bf16.gmra.mxu0 %v1723
  %v4164 = vpop.f32.mrf.mxu0
  %v4165 = vadd.f32 %v4102, %v4164
  %v4166 = vpop.f32.mrf.mxu0
  %v4167 = vadd.f32 %v4104, %v4166
  %4168 = vmatmul.bf16.gmra.mxu0 %v1748
  %v4169 = vpop.f32.mrf.mxu0
  %v4170 = vadd.f32 %v4107, %v4169
  %v4171 = vpop.f32.mrf.mxu0
  %4172 = vdwg.mxu0
  %4173 = vmatpush.bf16.msra.mxu0 %v3293
  %4174 = vmatpush.bf16.msra.mxu0 %v3291
  %4175 = vmatpush.bf16.msra.mxu0 %v3289
  %4176 = vmatpush.bf16.msra.mxu0 %v3287
  %4177 = vmatpush.bf16.msra.mxu0 %v3285
  %4178 = vmatpush.bf16.msra.mxu0 %v3283
  %4179 = vmatpush.bf16.msra.mxu0 %v3281
  %4180 = vmatpush.bf16.msra.mxu0 %v3279
  %4181 = vmatmul.bf16.gmra.mxu0 %v1499
  %v4182 = vpop.f32.mrf.mxu0
  %v4183 = vadd.f32 %v4120, %v4182
  %v4184 = vpop.f32.mrf.mxu0
  %v4185 = vadd.f32 %v4122, %v4184
  %4186 = vmatmul.bf16.gmra.mxu0 %v1524
  %v4187 = vpop.f32.mrf.mxu0
  %v4188 = vadd.f32 %v4125, %v4187
  %v4189 = vpop.f32.mrf.mxu0
  %v4190 = vadd.f32 %v4127, %v4189
  %4191 = vmatmul.bf16.gmra.mxu0 %v1549
  %v4192 = vpop.f32.mrf.mxu0
  %v4193 = vadd.f32 %v4130, %v4192
  %v4194 = vpop.f32.mrf.mxu0
  %v4195 = vadd.f32 %v4132, %v4194
  %4196 = vmatmul.bf16.gmra.mxu0 %v1574
  %v4197 = vpop.f32.mrf.mxu0
  %v4198 = vadd.f32 %v4135, %v4197
  %v4199 = vpop.f32.mrf.mxu0
  %v4200 = vadd.f32 %v4137, %v4199
  %4201 = vmatmul.bf16.gmra.mxu0 %v1599
  %v4202 = vpop.f32.mrf.mxu0
  %v4203 = vadd.f32 %v4140, %v4202
  %v4204 = vpop.f32.mrf.mxu0
  %v4205 = vadd.f32 %v4142, %v4204
  %4206 = vmatmul.bf16.gmra.mxu0 %v1624
  %v4207 = vpop.f32.mrf.mxu0
  %v4208 = vadd.f32 %v4145, %v4207
  %v4209 = vpop.f32.mrf.mxu0
  %v4210 = vadd.f32 %v4147, %v4209
  %4211 = vmatmul.bf16.gmra.mxu0 %v1649
  %v4212 = vpop.f32.mrf.mxu0
  %v4213 = vadd.f32 %v4150, %v4212
  %v4214 = vpop.f32.mrf.mxu0
  %v4215 = vadd.f32 %v4152, %v4214
  %4216 = vmatmul.bf16.gmra.mxu0 %v1674
  %v4217 = vpop.f32.mrf.mxu0
  %v4218 = vadd.f32 %v4155, %v4217
  %v4219 = vpop.f32.mrf.mxu0
  %v4220 = vadd.f32 %v4157, %v4219
  %4221 = vmatmul.bf16.gmra.mxu0 %v1699
  %v4222 = vpop.f32.mrf.mxu0
  %v4223 = vadd.f32 %v4160, %v4222
  %v4224 = vpop.f32.mrf.mxu0
  %v4225 = vadd.f32 %v4162, %v4224
  %4226 = vmatmul.bf16.gmra.mxu0 %v1724
  %v4227 = vpop.f32.mrf.mxu0
  %v4228 = vadd.f32 %v4165, %v4227
  %v4229 = vpop.f32.mrf.mxu0
  %v4230 = vadd.f32 %v4167, %v4229
  %4231 = vmatmul.bf16.gmra.mxu0 %v1749
  %v4232 = vpop.f32.mrf.mxu0
  %v4233 = vadd.f32 %v4170, %v4232
  %v4234 = vpop.f32.mrf.mxu0
  %4235 = vdwg.mxu0
  %4236 = vmatpush.bf16.msra.mxu0 %v3309
  %4237 = vmatpush.bf16.msra.mxu0 %v3307
  %4238 = vmatpush.bf16.msra.mxu0 %v3305
  %4239 = vmatpush.bf16.msra.mxu0 %v3303
  %4240 = vmatpush.bf16.msra.mxu0 %v3301
  %4241 = vmatpush.bf16.msra.mxu0 %v3299
  %4242 = vmatpush.bf16.msra.mxu0 %v3297
  %4243 = vmatpush.bf16.msra.mxu0 %v3295
  %4244 = vmatmul.bf16.gmra.mxu0 %v1500
  %v4245 = vpop.f32.mrf.mxu0
  %v4246 = vadd.f32 %v4183, %v4245
  %v4247 = vpop.f32.mrf.mxu0
  %v4248 = vadd.f32 %v4185, %v4247
  %4249 = vmatmul.bf16.gmra.mxu0 %v1525
  %v4250 = vpop.f32.mrf.mxu0
  %v4251 = vadd.f32 %v4188, %v4250
  %v4252 = vpop.f32.mrf.mxu0
  %v4253 = vadd.f32 %v4190, %v4252
  %4254 = vmatmul.bf16.gmra.mxu0 %v1550
  %v4255 = vpop.f32.mrf.mxu0
  %v4256 = vadd.f32 %v4193, %v4255
  %v4257 = vpop.f32.mrf.mxu0
  %v4258 = vadd.f32 %v4195, %v4257
  %4259 = vmatmul.bf16.gmra.mxu0 %v1575
  %v4260 = vpop.f32.mrf.mxu0
  %v4261 = vadd.f32 %v4198, %v4260
  %v4262 = vpop.f32.mrf.mxu0
  %v4263 = vadd.f32 %v4200, %v4262
  %4264 = vmatmul.bf16.gmra.mxu0 %v1600
  %v4265 = vpop.f32.mrf.mxu0
  %v4266 = vadd.f32 %v4203, %v4265
  %v4267 = vpop.f32.mrf.mxu0
  %v4268 = vadd.f32 %v4205, %v4267
  %4269 = vmatmul.bf16.gmra.mxu0 %v1625
  %v4270 = vpop.f32.mrf.mxu0
  %v4271 = vadd.f32 %v4208, %v4270
  %v4272 = vpop.f32.mrf.mxu0
  %v4273 = vadd.f32 %v4210, %v4272
  %4274 = vmatmul.bf16.gmra.mxu0 %v1650
  %v4275 = vpop.f32.mrf.mxu0
  %v4276 = vadd.f32 %v4213, %v4275
  %v4277 = vpop.f32.mrf.mxu0
  %v4278 = vadd.f32 %v4215, %v4277
  %4279 = vmatmul.bf16.gmra.mxu0 %v1675
  %v4280 = vpop.f32.mrf.mxu0
  %v4281 = vadd.f32 %v4218, %v4280
  %v4282 = vpop.f32.mrf.mxu0
  %v4283 = vadd.f32 %v4220, %v4282
  %4284 = vmatmul.bf16.gmra.mxu0 %v1700
  %v4285 = vpop.f32.mrf.mxu0
  %v4286 = vadd.f32 %v4223, %v4285
  %v4287 = vpop.f32.mrf.mxu0
  %v4288 = vadd.f32 %v4225, %v4287
  %4289 = vmatmul.bf16.gmra.mxu0 %v1725
  %v4290 = vpop.f32.mrf.mxu0
  %v4291 = vadd.f32 %v4228, %v4290
  %v4292 = vpop.f32.mrf.mxu0
  %v4293 = vadd.f32 %v4230, %v4292
  %4294 = vmatmul.bf16.gmra.mxu0 %v1750
  %v4295 = vpop.f32.mrf.mxu0
  %v4296 = vadd.f32 %v4233, %v4295
  %v4297 = vpop.f32.mrf.mxu0
  %4298 = vdwg.mxu0
  %4299 = vmatpush.bf16.msra.mxu0 %v3325
  %4300 = vmatpush.bf16.msra.mxu0 %v3323
  %4301 = vmatpush.bf16.msra.mxu0 %v3321
  %4302 = vmatpush.bf16.msra.mxu0 %v3319
  %4303 = vmatpush.bf16.msra.mxu0 %v3317
  %4304 = vmatpush.bf16.msra.mxu0 %v3315
  %4305 = vmatpush.bf16.msra.mxu0 %v3313
  %4306 = vmatpush.bf16.msra.mxu0 %v3311
  %4307 = vmatmul.bf16.gmra.mxu0 %v1501
  %v4308 = vpop.f32.mrf.mxu0
  %v4309 = vadd.f32 %v4246, %v4308
  %v4310 = vpop.f32.mrf.mxu0
  %v4311 = vadd.f32 %v4248, %v4310
  %4312 = vmatmul.bf16.gmra.mxu0 %v1526
  %v4313 = vpop.f32.mrf.mxu0
  %v4314 = vadd.f32 %v4251, %v4313
  %v4315 = vpop.f32.mrf.mxu0
  %v4316 = vadd.f32 %v4253, %v4315
  %4317 = vmatmul.bf16.gmra.mxu0 %v1551
  %v4318 = vpop.f32.mrf.mxu0
  %v4319 = vadd.f32 %v4256, %v4318
  %v4320 = vpop.f32.mrf.mxu0
  %v4321 = vadd.f32 %v4258, %v4320
  %4322 = vmatmul.bf16.gmra.mxu0 %v1576
  %v4323 = vpop.f32.mrf.mxu0
  %v4324 = vadd.f32 %v4261, %v4323
  %v4325 = vpop.f32.mrf.mxu0
  %v4326 = vadd.f32 %v4263, %v4325
  %4327 = vmatmul.bf16.gmra.mxu0 %v1601
  %v4328 = vpop.f32.mrf.mxu0
  %v4329 = vadd.f32 %v4266, %v4328
  %v4330 = vpop.f32.mrf.mxu0
  %v4331 = vadd.f32 %v4268, %v4330
  %4332 = vmatmul.bf16.gmra.mxu0 %v1626
  %v4333 = vpop.f32.mrf.mxu0
  %v4334 = vadd.f32 %v4271, %v4333
  %v4335 = vpop.f32.mrf.mxu0
  %v4336 = vadd.f32 %v4273, %v4335
  %4337 = vmatmul.bf16.gmra.mxu0 %v1651
  %v4338 = vpop.f32.mrf.mxu0
  %v4339 = vadd.f32 %v4276, %v4338
  %v4340 = vpop.f32.mrf.mxu0
  %v4341 = vadd.f32 %v4278, %v4340
  %4342 = vmatmul.bf16.gmra.mxu0 %v1676
  %v4343 = vpop.f32.mrf.mxu0
  %v4344 = vadd.f32 %v4281, %v4343
  %v4345 = vpop.f32.mrf.mxu0
  %v4346 = vadd.f32 %v4283, %v4345
  %4347 = vmatmul.bf16.gmra.mxu0 %v1701
  %v4348 = vpop.f32.mrf.mxu0
  %v4349 = vadd.f32 %v4286, %v4348
  %v4350 = vpop.f32.mrf.mxu0
  %v4351 = vadd.f32 %v4288, %v4350
  %4352 = vmatmul.bf16.gmra.mxu0 %v1726
  %v4353 = vpop.f32.mrf.mxu0
  %v4354 = vadd.f32 %v4291, %v4353
  %v4355 = vpop.f32.mrf.mxu0
  %v4356 = vadd.f32 %v4293, %v4355
  %4357 = vmatmul.bf16.gmra.mxu0 %v1751
  %v4358 = vpop.f32.mrf.mxu0
  %v4359 = vadd.f32 %v4296, %v4358
  %v4360 = vpop.f32.mrf.mxu0
  %4361 = vdwg.mxu0
  %4362 = vmatpush.bf16.msra.mxu0 %v3341
  %4363 = vmatpush.bf16.msra.mxu0 %v3339
  %4364 = vmatpush.bf16.msra.mxu0 %v3337
  %4365 = vmatpush.bf16.msra.mxu0 %v3335
  %4366 = vmatpush.bf16.msra.mxu0 %v3333
  %4367 = vmatpush.bf16.msra.mxu0 %v3331
  %4368 = vmatpush.bf16.msra.mxu0 %v3329
  %4369 = vmatpush.bf16.msra.mxu0 %v3327
  %4370 = vmatmul.bf16.gmra.mxu0 %v1502
  %v4371 = vpop.f32.mrf.mxu0
  %v4372 = vadd.f32 %v4309, %v4371
  %v4373 = vpop.f32.mrf.mxu0
  %v4374 = vadd.f32 %v4311, %v4373
  %4375 = vmatmul.bf16.gmra.mxu0 %v1527
  %v4376 = vpop.f32.mrf.mxu0
  %v4377 = vadd.f32 %v4314, %v4376
  %v4378 = vpop.f32.mrf.mxu0
  %v4379 = vadd.f32 %v4316, %v4378
  %4380 = vmatmul.bf16.gmra.mxu0 %v1552
  %v4381 = vpop.f32.mrf.mxu0
  %v4382 = vadd.f32 %v4319, %v4381
  %v4383 = vpop.f32.mrf.mxu0
  %v4384 = vadd.f32 %v4321, %v4383
  %4385 = vmatmul.bf16.gmra.mxu0 %v1577
  %v4386 = vpop.f32.mrf.mxu0
  %v4387 = vadd.f32 %v4324, %v4386
  %v4388 = vpop.f32.mrf.mxu0
  %v4389 = vadd.f32 %v4326, %v4388
  %4390 = vmatmul.bf16.gmra.mxu0 %v1602
  %v4391 = vpop.f32.mrf.mxu0
  %v4392 = vadd.f32 %v4329, %v4391
  %v4393 = vpop.f32.mrf.mxu0
  %v4394 = vadd.f32 %v4331, %v4393
  %4395 = vmatmul.bf16.gmra.mxu0 %v1627
  %v4396 = vpop.f32.mrf.mxu0
  %v4397 = vadd.f32 %v4334, %v4396
  %v4398 = vpop.f32.mrf.mxu0
  %v4399 = vadd.f32 %v4336, %v4398
  %4400 = vmatmul.bf16.gmra.mxu0 %v1652
  %v4401 = vpop.f32.mrf.mxu0
  %v4402 = vadd.f32 %v4339, %v4401
  %v4403 = vpop.f32.mrf.mxu0
  %v4404 = vadd.f32 %v4341, %v4403
  %4405 = vmatmul.bf16.gmra.mxu0 %v1677
  %v4406 = vpop.f32.mrf.mxu0
  %v4407 = vadd.f32 %v4344, %v4406
  %v4408 = vpop.f32.mrf.mxu0
  %v4409 = vadd.f32 %v4346, %v4408
  %4410 = vmatmul.bf16.gmra.mxu0 %v1702
  %v4411 = vpop.f32.mrf.mxu0
  %v4412 = vadd.f32 %v4349, %v4411
  %v4413 = vpop.f32.mrf.mxu0
  %v4414 = vadd.f32 %v4351, %v4413
  %4415 = vmatmul.bf16.gmra.mxu0 %v1727
  %v4416 = vpop.f32.mrf.mxu0
  %v4417 = vadd.f32 %v4354, %v4416
  %v4418 = vpop.f32.mrf.mxu0
  %v4419 = vadd.f32 %v4356, %v4418
  %4420 = vmatmul.bf16.gmra.mxu0 %v1752
  %v4421 = vpop.f32.mrf.mxu0
  %v4422 = vadd.f32 %v4359, %v4421
  %v4423 = vpop.f32.mrf.mxu0
  %4424 = vdwg.mxu0
  %4425 = vmatpush.bf16.msra.mxu0 %v3357
  %4426 = vmatpush.bf16.msra.mxu0 %v3355
  %4427 = vmatpush.bf16.msra.mxu0 %v3353
  %4428 = vmatpush.bf16.msra.mxu0 %v3351
  %4429 = vmatpush.bf16.msra.mxu0 %v3349
  %4430 = vmatpush.bf16.msra.mxu0 %v3347
  %4431 = vmatpush.bf16.msra.mxu0 %v3345
  %4432 = vmatpush.bf16.msra.mxu0 %v3343
  %4433 = vmatmul.bf16.gmra.mxu0 %v1503
  %v4434 = vpop.f32.mrf.mxu0
  %v4435 = vadd.f32 %v4372, %v4434
  %v4436 = vpop.f32.mrf.mxu0
  %v4437 = vadd.f32 %v4374, %v4436
  %4438 = vmatmul.bf16.gmra.mxu0 %v1528
  %v4439 = vpop.f32.mrf.mxu0
  %v4440 = vadd.f32 %v4377, %v4439
  %v4441 = vpop.f32.mrf.mxu0
  %v4442 = vadd.f32 %v4379, %v4441
  %4443 = vmatmul.bf16.gmra.mxu0 %v1553
  %v4444 = vpop.f32.mrf.mxu0
  %v4445 = vadd.f32 %v4382, %v4444
  %v4446 = vpop.f32.mrf.mxu0
  %v4447 = vadd.f32 %v4384, %v4446
  %4448 = vmatmul.bf16.gmra.mxu0 %v1578
  %v4449 = vpop.f32.mrf.mxu0
  %v4450 = vadd.f32 %v4387, %v4449
  %v4451 = vpop.f32.mrf.mxu0
  %v4452 = vadd.f32 %v4389, %v4451
  %4453 = vmatmul.bf16.gmra.mxu0 %v1603
  %v4454 = vpop.f32.mrf.mxu0
  %v4455 = vadd.f32 %v4392, %v4454
  %v4456 = vpop.f32.mrf.mxu0
  %v4457 = vadd.f32 %v4394, %v4456
  %4458 = vmatmul.bf16.gmra.mxu0 %v1628
  %v4459 = vpop.f32.mrf.mxu0
  %v4460 = vadd.f32 %v4397, %v4459
  %v4461 = vpop.f32.mrf.mxu0
  %v4462 = vadd.f32 %v4399, %v4461
  %4463 = vmatmul.bf16.gmra.mxu0 %v1653
  %v4464 = vpop.f32.mrf.mxu0
  %v4465 = vadd.f32 %v4402, %v4464
  %v4466 = vpop.f32.mrf.mxu0
  %v4467 = vadd.f32 %v4404, %v4466
  %4468 = vmatmul.bf16.gmra.mxu0 %v1678
  %v4469 = vpop.f32.mrf.mxu0
  %v4470 = vadd.f32 %v4407, %v4469
  %v4471 = vpop.f32.mrf.mxu0
  %v4472 = vadd.f32 %v4409, %v4471
  %4473 = vmatmul.bf16.gmra.mxu0 %v1703
  %v4474 = vpop.f32.mrf.mxu0
  %v4475 = vadd.f32 %v4412, %v4474
  %v4476 = vpop.f32.mrf.mxu0
  %v4477 = vadd.f32 %v4414, %v4476
  %4478 = vmatmul.bf16.gmra.mxu0 %v1728
  %v4479 = vpop.f32.mrf.mxu0
  %v4480 = vadd.f32 %v4417, %v4479
  %v4481 = vpop.f32.mrf.mxu0
  %v4482 = vadd.f32 %v4419, %v4481
  %4483 = vmatmul.bf16.gmra.mxu0 %v1753
  %v4484 = vpop.f32.mrf.mxu0
  %v4485 = vadd.f32 %v4422, %v4484
  %v4486 = vpop.f32.mrf.mxu0
  %4487 = vdwg.mxu0
  %4488 = vmatpush.bf16.msra.mxu0 %v3373
  %4489 = vmatpush.bf16.msra.mxu0 %v3371
  %4490 = vmatpush.bf16.msra.mxu0 %v3369
  %4491 = vmatpush.bf16.msra.mxu0 %v3367
  %4492 = vmatpush.bf16.msra.mxu0 %v3365
  %4493 = vmatpush.bf16.msra.mxu0 %v3363
  %4494 = vmatpush.bf16.msra.mxu0 %v3361
  %4495 = vmatpush.bf16.msra.mxu0 %v3359
  %4496 = vmatmul.bf16.gmra.mxu0 %v1504
  %v4497 = vpop.f32.mrf.mxu0
  %v4498 = vadd.f32 %v4435, %v4497
  %v4499 = vpop.f32.mrf.mxu0
  %v4500 = vadd.f32 %v4437, %v4499
  %4501 = vmatmul.bf16.gmra.mxu0 %v1529
  %v4502 = vpop.f32.mrf.mxu0
  %v4503 = vadd.f32 %v4440, %v4502
  %v4504 = vpop.f32.mrf.mxu0
  %v4505 = vadd.f32 %v4442, %v4504
  %4506 = vmatmul.bf16.gmra.mxu0 %v1554
  %v4507 = vpop.f32.mrf.mxu0
  %v4508 = vadd.f32 %v4445, %v4507
  %v4509 = vpop.f32.mrf.mxu0
  %v4510 = vadd.f32 %v4447, %v4509
  %4511 = vmatmul.bf16.gmra.mxu0 %v1579
  %v4512 = vpop.f32.mrf.mxu0
  %v4513 = vadd.f32 %v4450, %v4512
  %v4514 = vpop.f32.mrf.mxu0
  %v4515 = vadd.f32 %v4452, %v4514
  %4516 = vmatmul.bf16.gmra.mxu0 %v1604
  %v4517 = vpop.f32.mrf.mxu0
  %v4518 = vadd.f32 %v4455, %v4517
  %v4519 = vpop.f32.mrf.mxu0
  %v4520 = vadd.f32 %v4457, %v4519
  %4521 = vmatmul.bf16.gmra.mxu0 %v1629
  %v4522 = vpop.f32.mrf.mxu0
  %v4523 = vadd.f32 %v4460, %v4522
  %v4524 = vpop.f32.mrf.mxu0
  %v4525 = vadd.f32 %v4462, %v4524
  %4526 = vmatmul.bf16.gmra.mxu0 %v1654
  %v4527 = vpop.f32.mrf.mxu0
  %v4528 = vadd.f32 %v4465, %v4527
  %v4529 = vpop.f32.mrf.mxu0
  %v4530 = vadd.f32 %v4467, %v4529
  %4531 = vmatmul.bf16.gmra.mxu0 %v1679
  %v4532 = vpop.f32.mrf.mxu0
  %v4533 = vadd.f32 %v4470, %v4532
  %v4534 = vpop.f32.mrf.mxu0
  %v4535 = vadd.f32 %v4472, %v4534
  %4536 = vmatmul.bf16.gmra.mxu0 %v1704
  %v4537 = vpop.f32.mrf.mxu0
  %v4538 = vadd.f32 %v4475, %v4537
  %v4539 = vpop.f32.mrf.mxu0
  %v4540 = vadd.f32 %v4477, %v4539
  %4541 = vmatmul.bf16.gmra.mxu0 %v1729
  %v4542 = vpop.f32.mrf.mxu0
  %v4543 = vadd.f32 %v4480, %v4542
  %v4544 = vpop.f32.mrf.mxu0
  %v4545 = vadd.f32 %v4482, %v4544
  %4546 = vmatmul.bf16.gmra.mxu0 %v1754
  %v4547 = vpop.f32.mrf.mxu0
  %v4548 = vadd.f32 %v4485, %v4547
  %v4549 = vpop.f32.mrf.mxu0
  %4550 = vdwg.mxu0
  %4551 = vmatpush.bf16.msra.mxu0 %v3389
  %4552 = vmatpush.bf16.msra.mxu0 %v3387
  %4553 = vmatpush.bf16.msra.mxu0 %v3385
  %4554 = vmatpush.bf16.msra.mxu0 %v3383
  %4555 = vmatpush.bf16.msra.mxu0 %v3381
  %4556 = vmatpush.bf16.msra.mxu0 %v3379
  %4557 = vmatpush.bf16.msra.mxu0 %v3377
  %4558 = vmatpush.bf16.msra.mxu0 %v3375
  %4559 = vmatmul.bf16.gmra.mxu0 %v1505
  %v4560 = vpop.f32.mrf.mxu0
  %v4561 = vadd.f32 %v4498, %v4560
  %v4562 = vpop.f32.mrf.mxu0
  %v4563 = vadd.f32 %v4500, %v4562
  %4564 = vmatmul.bf16.gmra.mxu0 %v1530
  %v4565 = vpop.f32.mrf.mxu0
  %v4566 = vadd.f32 %v4503, %v4565
  %v4567 = vpop.f32.mrf.mxu0
  %v4568 = vadd.f32 %v4505, %v4567
  %4569 = vmatmul.bf16.gmra.mxu0 %v1555
  %v4570 = vpop.f32.mrf.mxu0
  %v4571 = vadd.f32 %v4508, %v4570
  %v4572 = vpop.f32.mrf.mxu0
  %v4573 = vadd.f32 %v4510, %v4572
  %4574 = vmatmul.bf16.gmra.mxu0 %v1580
  %v4575 = vpop.f32.mrf.mxu0
  %v4576 = vadd.f32 %v4513, %v4575
  %v4577 = vpop.f32.mrf.mxu0
  %v4578 = vadd.f32 %v4515, %v4577
  %4579 = vmatmul.bf16.gmra.mxu0 %v1605
  %v4580 = vpop.f32.mrf.mxu0
  %v4581 = vadd.f32 %v4518, %v4580
  %v4582 = vpop.f32.mrf.mxu0
  %v4583 = vadd.f32 %v4520, %v4582
  %4584 = vmatmul.bf16.gmra.mxu0 %v1630
  %v4585 = vpop.f32.mrf.mxu0
  %v4586 = vadd.f32 %v4523, %v4585
  %v4587 = vpop.f32.mrf.mxu0
  %v4588 = vadd.f32 %v4525, %v4587
  %4589 = vmatmul.bf16.gmra.mxu0 %v1655
  %v4590 = vpop.f32.mrf.mxu0
  %v4591 = vadd.f32 %v4528, %v4590
  %v4592 = vpop.f32.mrf.mxu0
  %v4593 = vadd.f32 %v4530, %v4592
  %4594 = vmatmul.bf16.gmra.mxu0 %v1680
  %v4595 = vpop.f32.mrf.mxu0
  %v4596 = vadd.f32 %v4533, %v4595
  %v4597 = vpop.f32.mrf.mxu0
  %v4598 = vadd.f32 %v4535, %v4597
  %4599 = vmatmul.bf16.gmra.mxu0 %v1705
  %v4600 = vpop.f32.mrf.mxu0
  %v4601 = vadd.f32 %v4538, %v4600
  %v4602 = vpop.f32.mrf.mxu0
  %v4603 = vadd.f32 %v4540, %v4602
  %4604 = vmatmul.bf16.gmra.mxu0 %v1730
  %v4605 = vpop.f32.mrf.mxu0
  %v4606 = vadd.f32 %v4543, %v4605
  %v4607 = vpop.f32.mrf.mxu0
  %v4608 = vadd.f32 %v4545, %v4607
  %4609 = vmatmul.bf16.gmra.mxu0 %v1755
  %v4610 = vpop.f32.mrf.mxu0
  %v4611 = vadd.f32 %v4548, %v4610
  %v4612 = vpop.f32.mrf.mxu0
  %4613 = vdwg.mxu0
  %4614 = vmatpush.bf16.msra.mxu0 %v3405
  %4615 = vmatpush.bf16.msra.mxu0 %v3403
  %4616 = vmatpush.bf16.msra.mxu0 %v3401
  %4617 = vmatpush.bf16.msra.mxu0 %v3399
  %4618 = vmatpush.bf16.msra.mxu0 %v3397
  %4619 = vmatpush.bf16.msra.mxu0 %v3395
  %4620 = vmatpush.bf16.msra.mxu0 %v3393
  %4621 = vmatpush.bf16.msra.mxu0 %v3391
  %4622 = vmatmul.bf16.gmra.mxu0 %v1506
  %v4623 = vpop.f32.mrf.mxu0
  %v4624 = vadd.f32 %v4561, %v4623
  %v4625 = vpop.f32.mrf.mxu0
  %v4626 = vadd.f32 %v4563, %v4625
  %4627 = vmatmul.bf16.gmra.mxu0 %v1531
  %v4628 = vpop.f32.mrf.mxu0
  %v4629 = vadd.f32 %v4566, %v4628
  %v4630 = vpop.f32.mrf.mxu0
  %v4631 = vadd.f32 %v4568, %v4630
  %4632 = vmatmul.bf16.gmra.mxu0 %v1556
  %v4633 = vpop.f32.mrf.mxu0
  %v4634 = vadd.f32 %v4571, %v4633
  %v4635 = vpop.f32.mrf.mxu0
  %v4636 = vadd.f32 %v4573, %v4635
  %4637 = vmatmul.bf16.gmra.mxu0 %v1581
  %v4638 = vpop.f32.mrf.mxu0
  %v4639 = vadd.f32 %v4576, %v4638
  %v4640 = vpop.f32.mrf.mxu0
  %v4641 = vadd.f32 %v4578, %v4640
  %4642 = vmatmul.bf16.gmra.mxu0 %v1606
  %v4643 = vpop.f32.mrf.mxu0
  %v4644 = vadd.f32 %v4581, %v4643
  %v4645 = vpop.f32.mrf.mxu0
  %v4646 = vadd.f32 %v4583, %v4645
  %4647 = vmatmul.bf16.gmra.mxu0 %v1631
  %v4648 = vpop.f32.mrf.mxu0
  %v4649 = vadd.f32 %v4586, %v4648
  %v4650 = vpop.f32.mrf.mxu0
  %v4651 = vadd.f32 %v4588, %v4650
  %4652 = vmatmul.bf16.gmra.mxu0 %v1656
  %v4653 = vpop.f32.mrf.mxu0
  %v4654 = vadd.f32 %v4591, %v4653
  %v4655 = vpop.f32.mrf.mxu0
  %v4656 = vadd.f32 %v4593, %v4655
  %4657 = vmatmul.bf16.gmra.mxu0 %v1681
  %v4658 = vpop.f32.mrf.mxu0
  %v4659 = vadd.f32 %v4596, %v4658
  %v4660 = vpop.f32.mrf.mxu0
  %v4661 = vadd.f32 %v4598, %v4660
  %4662 = vmatmul.bf16.gmra.mxu0 %v1706
  %v4663 = vpop.f32.mrf.mxu0
  %v4664 = vadd.f32 %v4601, %v4663
  %v4665 = vpop.f32.mrf.mxu0
  %v4666 = vadd.f32 %v4603, %v4665
  %4667 = vmatmul.bf16.gmra.mxu0 %v1731
  %v4668 = vpop.f32.mrf.mxu0
  %v4669 = vadd.f32 %v4606, %v4668
  %v4670 = vpop.f32.mrf.mxu0
  %v4671 = vadd.f32 %v4608, %v4670
  %4672 = vmatmul.bf16.gmra.mxu0 %v1756
  %v4673 = vpop.f32.mrf.mxu0
  %v4674 = vadd.f32 %v4611, %v4673
  %v4675 = vpop.f32.mrf.mxu0
  %4676 = vdwg.mxu0
  %4677 = vmatpush.bf16.msra.mxu0 %v3421
  %4678 = vmatpush.bf16.msra.mxu0 %v3419
  %4679 = vmatpush.bf16.msra.mxu0 %v3417
  %4680 = vmatpush.bf16.msra.mxu0 %v3415
  %4681 = vmatpush.bf16.msra.mxu0 %v3413
  %4682 = vmatpush.bf16.msra.mxu0 %v3411
  %4683 = vmatpush.bf16.msra.mxu0 %v3409
  %4684 = vmatpush.bf16.msra.mxu0 %v3407
  %4685 = vmatmul.bf16.gmra.mxu0 %v1507
  %v4686 = vpop.f32.mrf.mxu0
  %v4687 = vadd.f32 %v4624, %v4686
  %v4688 = vpop.f32.mrf.mxu0
  %v4689 = vadd.f32 %v4626, %v4688
  %4690 = vmatmul.bf16.gmra.mxu0 %v1532
  %v4691 = vpop.f32.mrf.mxu0
  %v4692 = vadd.f32 %v4629, %v4691
  %v4693 = vpop.f32.mrf.mxu0
  %v4694 = vadd.f32 %v4631, %v4693
  %4695 = vmatmul.bf16.gmra.mxu0 %v1557
  %v4696 = vpop.f32.mrf.mxu0
  %v4697 = vadd.f32 %v4634, %v4696
  %v4698 = vpop.f32.mrf.mxu0
  %v4699 = vadd.f32 %v4636, %v4698
  %4700 = vmatmul.bf16.gmra.mxu0 %v1582
  %v4701 = vpop.f32.mrf.mxu0
  %v4702 = vadd.f32 %v4639, %v4701
  %v4703 = vpop.f32.mrf.mxu0
  %v4704 = vadd.f32 %v4641, %v4703
  %4705 = vmatmul.bf16.gmra.mxu0 %v1607
  %v4706 = vpop.f32.mrf.mxu0
  %v4707 = vadd.f32 %v4644, %v4706
  %v4708 = vpop.f32.mrf.mxu0
  %v4709 = vadd.f32 %v4646, %v4708
  %4710 = vmatmul.bf16.gmra.mxu0 %v1632
  %v4711 = vpop.f32.mrf.mxu0
  %v4712 = vadd.f32 %v4649, %v4711
  %v4713 = vpop.f32.mrf.mxu0
  %v4714 = vadd.f32 %v4651, %v4713
  %4715 = vmatmul.bf16.gmra.mxu0 %v1657
  %v4716 = vpop.f32.mrf.mxu0
  %v4717 = vadd.f32 %v4654, %v4716
  %v4718 = vpop.f32.mrf.mxu0
  %v4719 = vadd.f32 %v4656, %v4718
  %4720 = vmatmul.bf16.gmra.mxu0 %v1682
  %v4721 = vpop.f32.mrf.mxu0
  %v4722 = vadd.f32 %v4659, %v4721
  %v4723 = vpop.f32.mrf.mxu0
  %v4724 = vadd.f32 %v4661, %v4723
  %4725 = vmatmul.bf16.gmra.mxu0 %v1707
  %v4726 = vpop.f32.mrf.mxu0
  %v4727 = vadd.f32 %v4664, %v4726
  %v4728 = vpop.f32.mrf.mxu0
  %v4729 = vadd.f32 %v4666, %v4728
  %4730 = vmatmul.bf16.gmra.mxu0 %v1732
  %v4731 = vpop.f32.mrf.mxu0
  %v4732 = vadd.f32 %v4669, %v4731
  %v4733 = vpop.f32.mrf.mxu0
  %v4734 = vadd.f32 %v4671, %v4733
  %4735 = vmatmul.bf16.gmra.mxu0 %v1757
  %v4736 = vpop.f32.mrf.mxu0
  %v4737 = vadd.f32 %v4674, %v4736
  %v4738 = vpop.f32.mrf.mxu0
  %4739 = vdwg.mxu0
  %4740 = vmatpush.bf16.msra.mxu0 %v3437
  %4741 = vmatpush.bf16.msra.mxu0 %v3435
  %4742 = vmatpush.bf16.msra.mxu0 %v3433
  %4743 = vmatpush.bf16.msra.mxu0 %v3431
  %4744 = vmatpush.bf16.msra.mxu0 %v3429
  %4745 = vmatpush.bf16.msra.mxu0 %v3427
  %4746 = vmatpush.bf16.msra.mxu0 %v3425
  %4747 = vmatpush.bf16.msra.mxu0 %v3423
  %4748 = vmatmul.bf16.gmra.mxu0 %v1508
  %v4749 = vpop.f32.mrf.mxu0
  %v4750 = vadd.f32 %v4687, %v4749
  %v4751 = vpop.f32.mrf.mxu0
  %v4752 = vadd.f32 %v4689, %v4751
  %4753 = vmatmul.bf16.gmra.mxu0 %v1533
  %v4754 = vpop.f32.mrf.mxu0
  %v4755 = vadd.f32 %v4692, %v4754
  %v4756 = vpop.f32.mrf.mxu0
  %v4757 = vadd.f32 %v4694, %v4756
  %4758 = vmatmul.bf16.gmra.mxu0 %v1558
  %v4759 = vpop.f32.mrf.mxu0
  %v4760 = vadd.f32 %v4697, %v4759
  %v4761 = vpop.f32.mrf.mxu0
  %v4762 = vadd.f32 %v4699, %v4761
  %4763 = vmatmul.bf16.gmra.mxu0 %v1583
  %v4764 = vpop.f32.mrf.mxu0
  %v4765 = vadd.f32 %v4702, %v4764
  %v4766 = vpop.f32.mrf.mxu0
  %v4767 = vadd.f32 %v4704, %v4766
  %4768 = vmatmul.bf16.gmra.mxu0 %v1608
  %v4769 = vpop.f32.mrf.mxu0
  %v4770 = vadd.f32 %v4707, %v4769
  %v4771 = vpop.f32.mrf.mxu0
  %v4772 = vadd.f32 %v4709, %v4771
  %4773 = vmatmul.bf16.gmra.mxu0 %v1633
  %v4774 = vpop.f32.mrf.mxu0
  %v4775 = vadd.f32 %v4712, %v4774
  %v4776 = vpop.f32.mrf.mxu0
  %v4777 = vadd.f32 %v4714, %v4776
  %4778 = vmatmul.bf16.gmra.mxu0 %v1658
  %v4779 = vpop.f32.mrf.mxu0
  %v4780 = vadd.f32 %v4717, %v4779
  %v4781 = vpop.f32.mrf.mxu0
  %v4782 = vadd.f32 %v4719, %v4781
  %4783 = vmatmul.bf16.gmra.mxu0 %v1683
  %v4784 = vpop.f32.mrf.mxu0
  %v4785 = vadd.f32 %v4722, %v4784
  %v4786 = vpop.f32.mrf.mxu0
  %v4787 = vadd.f32 %v4724, %v4786
  %4788 = vmatmul.bf16.gmra.mxu0 %v1708
  %v4789 = vpop.f32.mrf.mxu0
  %v4790 = vadd.f32 %v4727, %v4789
  %v4791 = vpop.f32.mrf.mxu0
  %v4792 = vadd.f32 %v4729, %v4791
  %4793 = vmatmul.bf16.gmra.mxu0 %v1733
  %v4794 = vpop.f32.mrf.mxu0
  %v4795 = vadd.f32 %v4732, %v4794
  %v4796 = vpop.f32.mrf.mxu0
  %v4797 = vadd.f32 %v4734, %v4796
  %4798 = vmatmul.bf16.gmra.mxu0 %v1758
  %v4799 = vpop.f32.mrf.mxu0
  %v4800 = vadd.f32 %v4737, %v4799
  %v4801 = vpop.f32.mrf.mxu0
  %4802 = vdwg.mxu0
  %4803 = vmatpush.bf16.msra.mxu0 %v3453
  %4804 = vmatpush.bf16.msra.mxu0 %v3451
  %4805 = vmatpush.bf16.msra.mxu0 %v3449
  %4806 = vmatpush.bf16.msra.mxu0 %v3447
  %4807 = vmatpush.bf16.msra.mxu0 %v3445
  %4808 = vmatpush.bf16.msra.mxu0 %v3443
  %4809 = vmatpush.bf16.msra.mxu0 %v3441
  %4810 = vmatpush.bf16.msra.mxu0 %v3439
  %4811 = vmatmul.bf16.gmra.mxu0 %v1509
  %v4812 = vpop.f32.mrf.mxu0
  %v4813 = vadd.f32 %v4750, %v4812
  %v4814 = vpop.f32.mrf.mxu0
  %v4815 = vadd.f32 %v4752, %v4814
  %4816 = vmatmul.bf16.gmra.mxu0 %v1534
  %v4817 = vpop.f32.mrf.mxu0
  %v4818 = vadd.f32 %v4755, %v4817
  %v4819 = vpop.f32.mrf.mxu0
  %v4820 = vadd.f32 %v4757, %v4819
  %4821 = vmatmul.bf16.gmra.mxu0 %v1559
  %v4822 = vpop.f32.mrf.mxu0
  %v4823 = vadd.f32 %v4760, %v4822
  %v4824 = vpop.f32.mrf.mxu0
  %v4825 = vadd.f32 %v4762, %v4824
  %4826 = vmatmul.bf16.gmra.mxu0 %v1584
  %v4827 = vpop.f32.mrf.mxu0
  %v4828 = vadd.f32 %v4765, %v4827
  %v4829 = vpop.f32.mrf.mxu0
  %v4830 = vadd.f32 %v4767, %v4829
  %4831 = vmatmul.bf16.gmra.mxu0 %v1609
  %v4832 = vpop.f32.mrf.mxu0
  %v4833 = vadd.f32 %v4770, %v4832
  %v4834 = vpop.f32.mrf.mxu0
  %v4835 = vadd.f32 %v4772, %v4834
  %4836 = vmatmul.bf16.gmra.mxu0 %v1634
  %v4837 = vpop.f32.mrf.mxu0
  %v4838 = vadd.f32 %v4775, %v4837
  %v4839 = vpop.f32.mrf.mxu0
  %v4840 = vadd.f32 %v4777, %v4839
  %4841 = vmatmul.bf16.gmra.mxu0 %v1659
  %v4842 = vpop.f32.mrf.mxu0
  %v4843 = vadd.f32 %v4780, %v4842
  %v4844 = vpop.f32.mrf.mxu0
  %v4845 = vadd.f32 %v4782, %v4844
  %4846 = vmatmul.bf16.gmra.mxu0 %v1684
  %v4847 = vpop.f32.mrf.mxu0
  %v4848 = vadd.f32 %v4785, %v4847
  %v4849 = vpop.f32.mrf.mxu0
  %v4850 = vadd.f32 %v4787, %v4849
  %4851 = vmatmul.bf16.gmra.mxu0 %v1709
  %v4852 = vpop.f32.mrf.mxu0
  %v4853 = vadd.f32 %v4790, %v4852
  %v4854 = vpop.f32.mrf.mxu0
  %v4855 = vadd.f32 %v4792, %v4854
  %4856 = vmatmul.bf16.gmra.mxu0 %v1734
  %v4857 = vpop.f32.mrf.mxu0
  %v4858 = vadd.f32 %v4795, %v4857
  %v4859 = vpop.f32.mrf.mxu0
  %v4860 = vadd.f32 %v4797, %v4859
  %4861 = vmatmul.bf16.gmra.mxu0 %v1759
  %v4862 = vpop.f32.mrf.mxu0
  %v4863 = vadd.f32 %v4800, %v4862
  %v4864 = vpop.f32.mrf.mxu0
  %4865 = vdwg.mxu0
  %4866 = vmatpush.bf16.msra.mxu0 %v3469
  %4867 = vmatpush.bf16.msra.mxu0 %v3467
  %4868 = vmatpush.bf16.msra.mxu0 %v3465
  %4869 = vmatpush.bf16.msra.mxu0 %v3463
  %4870 = vmatpush.bf16.msra.mxu0 %v3461
  %4871 = vmatpush.bf16.msra.mxu0 %v3459
  %4872 = vmatpush.bf16.msra.mxu0 %v3457
  %4873 = vmatpush.bf16.msra.mxu0 %v3455
  %4874 = vmatmul.bf16.gmra.mxu0 %v1510
  %v4875 = vpop.f32.mrf.mxu0
  %v4876 = vadd.f32 %v4813, %v4875
  %v4877 = vpop.f32.mrf.mxu0
  %v4878 = vadd.f32 %v4815, %v4877
  %4879 = vmatmul.bf16.gmra.mxu0 %v1535
  %v4880 = vpop.f32.mrf.mxu0
  %v4881 = vadd.f32 %v4818, %v4880
  %v4882 = vpop.f32.mrf.mxu0
  %v4883 = vadd.f32 %v4820, %v4882
  %4884 = vmatmul.bf16.gmra.mxu0 %v1560
  %v4885 = vpop.f32.mrf.mxu0
  %v4886 = vadd.f32 %v4823, %v4885
  %v4887 = vpop.f32.mrf.mxu0
  %v4888 = vadd.f32 %v4825, %v4887
  %4889 = vmatmul.bf16.gmra.mxu0 %v1585
  %v4890 = vpop.f32.mrf.mxu0
  %v4891 = vadd.f32 %v4828, %v4890
  %v4892 = vpop.f32.mrf.mxu0
  %v4893 = vadd.f32 %v4830, %v4892
  %4894 = vmatmul.bf16.gmra.mxu0 %v1610
  %v4895 = vpop.f32.mrf.mxu0
  %v4896 = vadd.f32 %v4833, %v4895
  %v4897 = vpop.f32.mrf.mxu0
  %v4898 = vadd.f32 %v4835, %v4897
  %4899 = vmatmul.bf16.gmra.mxu0 %v1635
  %v4900 = vpop.f32.mrf.mxu0
  %v4901 = vadd.f32 %v4838, %v4900
  %v4902 = vpop.f32.mrf.mxu0
  %v4903 = vadd.f32 %v4840, %v4902
  %4904 = vmatmul.bf16.gmra.mxu0 %v1660
  %v4905 = vpop.f32.mrf.mxu0
  %v4906 = vadd.f32 %v4843, %v4905
  %v4907 = vpop.f32.mrf.mxu0
  %v4908 = vadd.f32 %v4845, %v4907
  %4909 = vmatmul.bf16.gmra.mxu0 %v1685
  %v4910 = vpop.f32.mrf.mxu0
  %v4911 = vadd.f32 %v4848, %v4910
  %v4912 = vpop.f32.mrf.mxu0
  %v4913 = vadd.f32 %v4850, %v4912
  %4914 = vmatmul.bf16.gmra.mxu0 %v1710
  %v4915 = vpop.f32.mrf.mxu0
  %v4916 = vadd.f32 %v4853, %v4915
  %v4917 = vpop.f32.mrf.mxu0
  %v4918 = vadd.f32 %v4855, %v4917
  %4919 = vmatmul.bf16.gmra.mxu0 %v1735
  %v4920 = vpop.f32.mrf.mxu0
  %v4921 = vadd.f32 %v4858, %v4920
  %v4922 = vpop.f32.mrf.mxu0
  %v4923 = vadd.f32 %v4860, %v4922
  %4924 = vmatmul.bf16.gmra.mxu0 %v1760
  %v4925 = vpop.f32.mrf.mxu0
  %v4926 = vadd.f32 %v4863, %v4925
  %v4927 = vpop.f32.mrf.mxu0
  %4928 = vdwg.mxu0
  %4929 = vmatpush.bf16.msra.mxu0 %v3485
  %4930 = vmatpush.bf16.msra.mxu0 %v3483
  %4931 = vmatpush.bf16.msra.mxu0 %v3481
  %4932 = vmatpush.bf16.msra.mxu0 %v3479
  %4933 = vmatpush.bf16.msra.mxu0 %v3477
  %4934 = vmatpush.bf16.msra.mxu0 %v3475
  %4935 = vmatpush.bf16.msra.mxu0 %v3473
  %4936 = vmatpush.bf16.msra.mxu0 %v3471
  %4937 = vmatmul.bf16.gmra.mxu0 %v1511
  %v4938 = vpop.f32.mrf.mxu0
  %v4939 = vadd.f32 %v4876, %v4938
  %v4940 = vpop.f32.mrf.mxu0
  %v4941 = vadd.f32 %v4878, %v4940
  %4942 = vmatmul.bf16.gmra.mxu0 %v1536
  %v4943 = vpop.f32.mrf.mxu0
  %v4944 = vadd.f32 %v4881, %v4943
  %v4945 = vpop.f32.mrf.mxu0
  %v4946 = vadd.f32 %v4883, %v4945
  %4947 = vmatmul.bf16.gmra.mxu0 %v1561
  %v4948 = vpop.f32.mrf.mxu0
  %v4949 = vadd.f32 %v4886, %v4948
  %v4950 = vpop.f32.mrf.mxu0
  %v4951 = vadd.f32 %v4888, %v4950
  %4952 = vmatmul.bf16.gmra.mxu0 %v1586
  %v4953 = vpop.f32.mrf.mxu0
  %v4954 = vadd.f32 %v4891, %v4953
  %v4955 = vpop.f32.mrf.mxu0
  %v4956 = vadd.f32 %v4893, %v4955
  %4957 = vmatmul.bf16.gmra.mxu0 %v1611
  %v4958 = vpop.f32.mrf.mxu0
  %v4959 = vadd.f32 %v4896, %v4958
  %v4960 = vpop.f32.mrf.mxu0
  %v4961 = vadd.f32 %v4898, %v4960
  %4962 = vmatmul.bf16.gmra.mxu0 %v1636
  %v4963 = vpop.f32.mrf.mxu0
  %v4964 = vadd.f32 %v4901, %v4963
  %v4965 = vpop.f32.mrf.mxu0
  %v4966 = vadd.f32 %v4903, %v4965
  %4967 = vmatmul.bf16.gmra.mxu0 %v1661
  %v4968 = vpop.f32.mrf.mxu0
  %v4969 = vadd.f32 %v4906, %v4968
  %v4970 = vpop.f32.mrf.mxu0
  %v4971 = vadd.f32 %v4908, %v4970
  %4972 = vmatmul.bf16.gmra.mxu0 %v1686
  %v4973 = vpop.f32.mrf.mxu0
  %v4974 = vadd.f32 %v4911, %v4973
  %v4975 = vpop.f32.mrf.mxu0
  %v4976 = vadd.f32 %v4913, %v4975
  %4977 = vmatmul.bf16.gmra.mxu0 %v1711
  %v4978 = vpop.f32.mrf.mxu0
  %v4979 = vadd.f32 %v4916, %v4978
  %v4980 = vpop.f32.mrf.mxu0
  %v4981 = vadd.f32 %v4918, %v4980
  %4982 = vmatmul.bf16.gmra.mxu0 %v1736
  %v4983 = vpop.f32.mrf.mxu0
  %v4984 = vadd.f32 %v4921, %v4983
  %v4985 = vpop.f32.mrf.mxu0
  %v4986 = vadd.f32 %v4923, %v4985
  %4987 = vmatmul.bf16.gmra.mxu0 %v1761
  %v4988 = vpop.f32.mrf.mxu0
  %v4989 = vadd.f32 %v4926, %v4988
  %v4990 = vpop.f32.mrf.mxu0
  %4991 = vdwg.mxu0
  %4992 = vmatpush.bf16.msra.mxu0 %v3501
  %4993 = vmatpush.bf16.msra.mxu0 %v3499
  %4994 = vmatpush.bf16.msra.mxu0 %v3497
  %4995 = vmatpush.bf16.msra.mxu0 %v3495
  %4996 = vmatpush.bf16.msra.mxu0 %v3493
  %4997 = vmatpush.bf16.msra.mxu0 %v3491
  %4998 = vmatpush.bf16.msra.mxu0 %v3489
  %4999 = vmatpush.bf16.msra.mxu0 %v3487
  %5000 = vmatmul.bf16.gmra.mxu0 %v1512
  %v5001 = vpop.f32.mrf.mxu0
  %v5002 = vadd.f32 %v4939, %v5001
  %v5003 = vpop.f32.mrf.mxu0
  %v5004 = vadd.f32 %v4941, %v5003
  %5005 = vmatmul.bf16.gmra.mxu0 %v1537
  %v5006 = vpop.f32.mrf.mxu0
  %v5007 = vadd.f32 %v4944, %v5006
  %v5008 = vpop.f32.mrf.mxu0
  %v5009 = vadd.f32 %v4946, %v5008
  %5010 = vmatmul.bf16.gmra.mxu0 %v1562
  %v5011 = vpop.f32.mrf.mxu0
  %v5012 = vadd.f32 %v4949, %v5011
  %v5013 = vpop.f32.mrf.mxu0
  %v5014 = vadd.f32 %v4951, %v5013
  %5015 = vmatmul.bf16.gmra.mxu0 %v1587
  %v5016 = vpop.f32.mrf.mxu0
  %v5017 = vadd.f32 %v4954, %v5016
  %v5018 = vpop.f32.mrf.mxu0
  %v5019 = vadd.f32 %v4956, %v5018
  %5020 = vmatmul.bf16.gmra.mxu0 %v1612
  %v5021 = vpop.f32.mrf.mxu0
  %v5022 = vadd.f32 %v4959, %v5021
  %v5023 = vpop.f32.mrf.mxu0
  %v5024 = vadd.f32 %v4961, %v5023
  %5025 = vmatmul.bf16.gmra.mxu0 %v1637
  %v5026 = vpop.f32.mrf.mxu0
  %v5027 = vadd.f32 %v4964, %v5026
  %v5028 = vpop.f32.mrf.mxu0
  %v5029 = vadd.f32 %v4966, %v5028
  %5030 = vmatmul.bf16.gmra.mxu0 %v1662
  %v5031 = vpop.f32.mrf.mxu0
  %v5032 = vadd.f32 %v4969, %v5031
  %v5033 = vpop.f32.mrf.mxu0
  %v5034 = vadd.f32 %v4971, %v5033
  %5035 = vmatmul.bf16.gmra.mxu0 %v1687
  %v5036 = vpop.f32.mrf.mxu0
  %v5037 = vadd.f32 %v4974, %v5036
  %v5038 = vpop.f32.mrf.mxu0
  %v5039 = vadd.f32 %v4976, %v5038
  %5040 = vmatmul.bf16.gmra.mxu0 %v1712
  %v5041 = vpop.f32.mrf.mxu0
  %v5042 = vadd.f32 %v4979, %v5041
  %v5043 = vpop.f32.mrf.mxu0
  %v5044 = vadd.f32 %v4981, %v5043
  %5045 = vmatmul.bf16.gmra.mxu0 %v1737
  %v5046 = vpop.f32.mrf.mxu0
  %v5047 = vadd.f32 %v4984, %v5046
  %v5048 = vpop.f32.mrf.mxu0
  %v5049 = vadd.f32 %v4986, %v5048
  %5050 = vmatmul.bf16.gmra.mxu0 %v1762
  %v5051 = vpop.f32.mrf.mxu0
  %v5052 = vadd.f32 %v4989, %v5051
  %v5053 = vpop.f32.mrf.mxu0
  %5054 = vdwg.mxu0
  %5055 = vmatpush.bf16.msra.mxu0 %v3517
  %5056 = vmatpush.bf16.msra.mxu0 %v3515
  %5057 = vmatpush.bf16.msra.mxu0 %v3513
  %5058 = vmatpush.bf16.msra.mxu0 %v3511
  %5059 = vmatpush.bf16.msra.mxu0 %v3509
  %5060 = vmatpush.bf16.msra.mxu0 %v3507
  %5061 = vmatpush.bf16.msra.mxu0 %v3505
  %5062 = vmatpush.bf16.msra.mxu0 %v3503
  %5063 = vmatmul.bf16.gmra.mxu0 %v1513
  %v5064 = vpop.f32.mrf.mxu0
  %v5065 = vadd.f32 %v5002, %v5064
  %v5066 = vpop.f32.mrf.mxu0
  %v5067 = vadd.f32 %v5004, %v5066
  %5068 = vmatmul.bf16.gmra.mxu0 %v1538
  %v5069 = vpop.f32.mrf.mxu0
  %v5070 = vadd.f32 %v5007, %v5069
  %v5071 = vpop.f32.mrf.mxu0
  %v5072 = vadd.f32 %v5009, %v5071
  %5073 = vmatmul.bf16.gmra.mxu0 %v1563
  %v5074 = vpop.f32.mrf.mxu0
  %v5075 = vadd.f32 %v5012, %v5074
  %v5076 = vpop.f32.mrf.mxu0
  %v5077 = vadd.f32 %v5014, %v5076
  %5078 = vmatmul.bf16.gmra.mxu0 %v1588
  %v5079 = vpop.f32.mrf.mxu0
  %v5080 = vadd.f32 %v5017, %v5079
  %v5081 = vpop.f32.mrf.mxu0
  %v5082 = vadd.f32 %v5019, %v5081
  %5083 = vmatmul.bf16.gmra.mxu0 %v1613
  %v5084 = vpop.f32.mrf.mxu0
  %v5085 = vadd.f32 %v5022, %v5084
  %v5086 = vpop.f32.mrf.mxu0
  %v5087 = vadd.f32 %v5024, %v5086
  %5088 = vmatmul.bf16.gmra.mxu0 %v1638
  %v5089 = vpop.f32.mrf.mxu0
  %v5090 = vadd.f32 %v5027, %v5089
  %v5091 = vpop.f32.mrf.mxu0
  %v5092 = vadd.f32 %v5029, %v5091
  %5093 = vmatmul.bf16.gmra.mxu0 %v1663
  %v5094 = vpop.f32.mrf.mxu0
  %v5095 = vadd.f32 %v5032, %v5094
  %v5096 = vpop.f32.mrf.mxu0
  %v5097 = vadd.f32 %v5034, %v5096
  %5098 = vmatmul.bf16.gmra.mxu0 %v1688
  %v5099 = vpop.f32.mrf.mxu0
  %v5100 = vadd.f32 %v5037, %v5099
  %v5101 = vpop.f32.mrf.mxu0
  %v5102 = vadd.f32 %v5039, %v5101
  %5103 = vmatmul.bf16.gmra.mxu0 %v1713
  %v5104 = vpop.f32.mrf.mxu0
  %v5105 = vadd.f32 %v5042, %v5104
  %v5106 = vpop.f32.mrf.mxu0
  %v5107 = vadd.f32 %v5044, %v5106
  %5108 = vmatmul.bf16.gmra.mxu0 %v1738
  %v5109 = vpop.f32.mrf.mxu0
  %v5110 = vadd.f32 %v5047, %v5109
  %v5111 = vpop.f32.mrf.mxu0
  %v5112 = vadd.f32 %v5049, %v5111
  %5113 = vmatmul.bf16.gmra.mxu0 %v1763
  %v5114 = vpop.f32.mrf.mxu0
  %v5115 = vadd.f32 %v5052, %v5114
  %v5116 = vpop.f32.mrf.mxu0
  %5117 = vdwg.mxu0
  %5118 = vmatpush.bf16.msra.mxu0 %v3533
  %5119 = vmatpush.bf16.msra.mxu0 %v3531
  %5120 = vmatpush.bf16.msra.mxu0 %v3529
  %5121 = vmatpush.bf16.msra.mxu0 %v3527
  %5122 = vmatpush.bf16.msra.mxu0 %v3525
  %5123 = vmatpush.bf16.msra.mxu0 %v3523
  %5124 = vmatpush.bf16.msra.mxu0 %v3521
  %5125 = vmatpush.bf16.msra.mxu0 %v3519
  %5126 = vmatmul.bf16.gmra.mxu0 %v1514
  %v5127 = vpop.f32.mrf.mxu0
  %v5128 = vadd.f32 %v5065, %v5127
  %v5129 = vpop.f32.mrf.mxu0
  %v5130 = vadd.f32 %v5067, %v5129
  %5131 = vmatmul.bf16.gmra.mxu0 %v1539
  %v5132 = vpop.f32.mrf.mxu0
  %v5133 = vadd.f32 %v5070, %v5132
  %v5134 = vpop.f32.mrf.mxu0
  %v5135 = vadd.f32 %v5072, %v5134
  %5136 = vmatmul.bf16.gmra.mxu0 %v1564
  %v5137 = vpop.f32.mrf.mxu0
  %v5138 = vadd.f32 %v5075, %v5137
  %v5139 = vpop.f32.mrf.mxu0
  %v5140 = vadd.f32 %v5077, %v5139
  %5141 = vmatmul.bf16.gmra.mxu0 %v1589
  %v5142 = vpop.f32.mrf.mxu0
  %v5143 = vadd.f32 %v5080, %v5142
  %v5144 = vpop.f32.mrf.mxu0
  %v5145 = vadd.f32 %v5082, %v5144
  %5146 = vmatmul.bf16.gmra.mxu0 %v1614
  %v5147 = vpop.f32.mrf.mxu0
  %v5148 = vadd.f32 %v5085, %v5147
  %v5149 = vpop.f32.mrf.mxu0
  %v5150 = vadd.f32 %v5087, %v5149
  %5151 = vmatmul.bf16.gmra.mxu0 %v1639
  %v5152 = vpop.f32.mrf.mxu0
  %v5153 = vadd.f32 %v5090, %v5152
  %v5154 = vpop.f32.mrf.mxu0
  %v5155 = vadd.f32 %v5092, %v5154
  %5156 = vmatmul.bf16.gmra.mxu0 %v1664
  %v5157 = vpop.f32.mrf.mxu0
  %v5158 = vadd.f32 %v5095, %v5157
  %v5159 = vpop.f32.mrf.mxu0
  %v5160 = vadd.f32 %v5097, %v5159
  %5161 = vmatmul.bf16.gmra.mxu0 %v1689
  %v5162 = vpop.f32.mrf.mxu0
  %v5163 = vadd.f32 %v5100, %v5162
  %v5164 = vpop.f32.mrf.mxu0
  %v5165 = vadd.f32 %v5102, %v5164
  %5166 = vmatmul.bf16.gmra.mxu0 %v1714
  %v5167 = vpop.f32.mrf.mxu0
  %v5168 = vadd.f32 %v5105, %v5167
  %v5169 = vpop.f32.mrf.mxu0
  %v5170 = vadd.f32 %v5107, %v5169
  %5171 = vmatmul.bf16.gmra.mxu0 %v1739
  %v5172 = vpop.f32.mrf.mxu0
  %v5173 = vadd.f32 %v5110, %v5172
  %v5174 = vpop.f32.mrf.mxu0
  %v5175 = vadd.f32 %v5112, %v5174
  %5176 = vmatmul.bf16.gmra.mxu0 %v1764
  %v5177 = vpop.f32.mrf.mxu0
  %v5178 = vadd.f32 %v5115, %v5177
  %v5179 = vpop.f32.mrf.mxu0
  %5180 = vdwg.mxu0
  %5181 = vmatpush.bf16.msra.mxu0 %v3549
  %5182 = vmatpush.bf16.msra.mxu0 %v3547
  %5183 = vmatpush.bf16.msra.mxu0 %v3545
  %5184 = vmatpush.bf16.msra.mxu0 %v3543
  %5185 = vmatpush.bf16.msra.mxu0 %v3541
  %5186 = vmatpush.bf16.msra.mxu0 %v3539
  %5187 = vmatpush.bf16.msra.mxu0 %v3537
  %5188 = vmatpush.bf16.msra.mxu0 %v3535
  %5189 = vmatmul.bf16.gmra.mxu0 %v1515
  %v5190 = vpop.f32.mrf.mxu0
  %v5191 = vadd.f32 %v5128, %v5190
  %v5192 = vpop.f32.mrf.mxu0
  %v5193 = vadd.f32 %v5130, %v5192
  %5194 = vmatmul.bf16.gmra.mxu0 %v1540
  %v5195 = vpop.f32.mrf.mxu0
  %v5196 = vadd.f32 %v5133, %v5195
  %v5197 = vpop.f32.mrf.mxu0
  %v5198 = vadd.f32 %v5135, %v5197
  %5199 = vmatmul.bf16.gmra.mxu0 %v1565
  %v5200 = vpop.f32.mrf.mxu0
  %v5201 = vadd.f32 %v5138, %v5200
  %v5202 = vpop.f32.mrf.mxu0
  %v5203 = vadd.f32 %v5140, %v5202
  %5204 = vmatmul.bf16.gmra.mxu0 %v1590
  %v5205 = vpop.f32.mrf.mxu0
  %v5206 = vadd.f32 %v5143, %v5205
  %v5207 = vpop.f32.mrf.mxu0
  %v5208 = vadd.f32 %v5145, %v5207
  %5209 = vmatmul.bf16.gmra.mxu0 %v1615
  %v5210 = vpop.f32.mrf.mxu0
  %v5211 = vadd.f32 %v5148, %v5210
  %v5212 = vpop.f32.mrf.mxu0
  %v5213 = vadd.f32 %v5150, %v5212
  %5214 = vmatmul.bf16.gmra.mxu0 %v1640
  %v5215 = vpop.f32.mrf.mxu0
  %v5216 = vadd.f32 %v5153, %v5215
  %v5217 = vpop.f32.mrf.mxu0
  %v5218 = vadd.f32 %v5155, %v5217
  %5219 = vmatmul.bf16.gmra.mxu0 %v1665
  %v5220 = vpop.f32.mrf.mxu0
  %v5221 = vadd.f32 %v5158, %v5220
  %v5222 = vpop.f32.mrf.mxu0
  %v5223 = vadd.f32 %v5160, %v5222
  %5224 = vmatmul.bf16.gmra.mxu0 %v1690
  %v5225 = vpop.f32.mrf.mxu0
  %v5226 = vadd.f32 %v5163, %v5225
  %v5227 = vpop.f32.mrf.mxu0
  %v5228 = vadd.f32 %v5165, %v5227
  %5229 = vmatmul.bf16.gmra.mxu0 %v1715
  %v5230 = vpop.f32.mrf.mxu0
  %v5231 = vadd.f32 %v5168, %v5230
  %v5232 = vpop.f32.mrf.mxu0
  %v5233 = vadd.f32 %v5170, %v5232
  %5234 = vmatmul.bf16.gmra.mxu0 %v1740
  %v5235 = vpop.f32.mrf.mxu0
  %v5236 = vadd.f32 %v5173, %v5235
  %v5237 = vpop.f32.mrf.mxu0
  %v5238 = vadd.f32 %v5175, %v5237
  %5239 = vmatmul.bf16.gmra.mxu0 %v1765
  %v5240 = vpop.f32.mrf.mxu0
  %v5241 = vadd.f32 %v5178, %v5240
  %v5242 = vpop.f32.mrf.mxu0
  %5243 = vdwg.mxu0
  %5244 = vmatpush.bf16.msra.mxu0 %v3565
  %5245 = vmatpush.bf16.msra.mxu0 %v3563
  %5246 = vmatpush.bf16.msra.mxu0 %v3561
  %5247 = vmatpush.bf16.msra.mxu0 %v3559
  %5248 = vmatpush.bf16.msra.mxu0 %v3557
  %5249 = vmatpush.bf16.msra.mxu0 %v3555
  %5250 = vmatpush.bf16.msra.mxu0 %v3553
  %5251 = vmatpush.bf16.msra.mxu0 %v3551
  %5252 = vmatmul.bf16.gmra.mxu0 %v1516
  %v5253 = vpop.f32.mrf.mxu0
  %v5254 = vadd.f32 %v5191, %v5253
  %v5255 = vpop.f32.mrf.mxu0
  %v5256 = vadd.f32 %v5193, %v5255
  %5257 = vmatmul.bf16.gmra.mxu0 %v1541
  %v5258 = vpop.f32.mrf.mxu0
  %v5259 = vadd.f32 %v5196, %v5258
  %v5260 = vpop.f32.mrf.mxu0
  %v5261 = vadd.f32 %v5198, %v5260
  %5262 = vmatmul.bf16.gmra.mxu0 %v1566
  %v5263 = vpop.f32.mrf.mxu0
  %v5264 = vadd.f32 %v5201, %v5263
  %v5265 = vpop.f32.mrf.mxu0
  %v5266 = vadd.f32 %v5203, %v5265
  %5267 = vmatmul.bf16.gmra.mxu0 %v1591
  %v5268 = vpop.f32.mrf.mxu0
  %v5269 = vadd.f32 %v5206, %v5268
  %v5270 = vpop.f32.mrf.mxu0
  %v5271 = vadd.f32 %v5208, %v5270
  %5272 = vmatmul.bf16.gmra.mxu0 %v1616
  %v5273 = vpop.f32.mrf.mxu0
  %v5274 = vadd.f32 %v5211, %v5273
  %v5275 = vpop.f32.mrf.mxu0
  %v5276 = vadd.f32 %v5213, %v5275
  %5277 = vmatmul.bf16.gmra.mxu0 %v1641
  %v5278 = vpop.f32.mrf.mxu0
  %v5279 = vadd.f32 %v5216, %v5278
  %v5280 = vpop.f32.mrf.mxu0
  %v5281 = vadd.f32 %v5218, %v5280
  %5282 = vmatmul.bf16.gmra.mxu0 %v1666
  %v5283 = vpop.f32.mrf.mxu0
  %v5284 = vadd.f32 %v5221, %v5283
  %v5285 = vpop.f32.mrf.mxu0
  %v5286 = vadd.f32 %v5223, %v5285
  %5287 = vmatmul.bf16.gmra.mxu0 %v1691
  %v5288 = vpop.f32.mrf.mxu0
  %v5289 = vadd.f32 %v5226, %v5288
  %v5290 = vpop.f32.mrf.mxu0
  %v5291 = vadd.f32 %v5228, %v5290
  %5292 = vmatmul.bf16.gmra.mxu0 %v1716
  %v5293 = vpop.f32.mrf.mxu0
  %v5294 = vadd.f32 %v5231, %v5293
  %v5295 = vpop.f32.mrf.mxu0
  %v5296 = vadd.f32 %v5233, %v5295
  %5297 = vmatmul.bf16.gmra.mxu0 %v1741
  %v5298 = vpop.f32.mrf.mxu0
  %v5299 = vadd.f32 %v5236, %v5298
  %v5300 = vpop.f32.mrf.mxu0
  %v5301 = vadd.f32 %v5238, %v5300
  %5302 = vmatmul.bf16.gmra.mxu0 %v1766
  %v5303 = vpop.f32.mrf.mxu0
  %v5304 = vadd.f32 %v5241, %v5303
  %v5305 = vpop.f32.mrf.mxu0
  %5306 = vdwg.mxu0
  %5307 = vmatpush.bf16.msra.mxu0 %v3581
  %5308 = vmatpush.bf16.msra.mxu0 %v3579
  %5309 = vmatpush.bf16.msra.mxu0 %v3577
  %5310 = vmatpush.bf16.msra.mxu0 %v3575
  %5311 = vmatpush.bf16.msra.mxu0 %v3573
  %5312 = vmatpush.bf16.msra.mxu0 %v3571
  %5313 = vmatpush.bf16.msra.mxu0 %v3569
  %5314 = vmatpush.bf16.msra.mxu0 %v3567
  %5315 = vmatmul.bf16.gmra.mxu0 %v1517
  %v5316 = vpop.f32.mrf.mxu0
  %v5317 = vadd.f32 %v5254, %v5316
  %v5318 = vpop.f32.mrf.mxu0
  %v5319 = vadd.f32 %v5256, %v5318
  %5320 = vmatmul.bf16.gmra.mxu0 %v1542
  %v5321 = vpop.f32.mrf.mxu0
  %v5322 = vadd.f32 %v5259, %v5321
  %v5323 = vpop.f32.mrf.mxu0
  %v5324 = vadd.f32 %v5261, %v5323
  %5325 = vmatmul.bf16.gmra.mxu0 %v1567
  %v5326 = vpop.f32.mrf.mxu0
  %v5327 = vadd.f32 %v5264, %v5326
  %v5328 = vpop.f32.mrf.mxu0
  %v5329 = vadd.f32 %v5266, %v5328
  %5330 = vmatmul.bf16.gmra.mxu0 %v1592
  %v5331 = vpop.f32.mrf.mxu0
  %v5332 = vadd.f32 %v5269, %v5331
  %v5333 = vpop.f32.mrf.mxu0
  %v5334 = vadd.f32 %v5271, %v5333
  %5335 = vmatmul.bf16.gmra.mxu0 %v1617
  %v5336 = vpop.f32.mrf.mxu0
  %v5337 = vadd.f32 %v5274, %v5336
  %v5338 = vpop.f32.mrf.mxu0
  %v5339 = vadd.f32 %v5276, %v5338
  %5340 = vmatmul.bf16.gmra.mxu0 %v1642
  %v5341 = vpop.f32.mrf.mxu0
  %v5342 = vadd.f32 %v5279, %v5341
  %v5343 = vpop.f32.mrf.mxu0
  %v5344 = vadd.f32 %v5281, %v5343
  %5345 = vmatmul.bf16.gmra.mxu0 %v1667
  %v5346 = vpop.f32.mrf.mxu0
  %v5347 = vadd.f32 %v5284, %v5346
  %v5348 = vpop.f32.mrf.mxu0
  %v5349 = vadd.f32 %v5286, %v5348
  %5350 = vmatmul.bf16.gmra.mxu0 %v1692
  %v5351 = vpop.f32.mrf.mxu0
  %v5352 = vadd.f32 %v5289, %v5351
  %v5353 = vpop.f32.mrf.mxu0
  %v5354 = vadd.f32 %v5291, %v5353
  %5355 = vmatmul.bf16.gmra.mxu0 %v1717
  %v5356 = vpop.f32.mrf.mxu0
  %v5357 = vadd.f32 %v5294, %v5356
  %v5358 = vpop.f32.mrf.mxu0
  %v5359 = vadd.f32 %v5296, %v5358
  %5360 = vmatmul.bf16.gmra.mxu0 %v1742
  %v5361 = vpop.f32.mrf.mxu0
  %v5362 = vadd.f32 %v5299, %v5361
  %v5363 = vpop.f32.mrf.mxu0
  %v5364 = vadd.f32 %v5301, %v5363
  %5365 = vmatmul.bf16.gmra.mxu0 %v1767
  %v5366 = vpop.f32.mrf.mxu0
  %v5367 = vadd.f32 %v5304, %v5366
  %v5368 = vpop.f32.mrf.mxu0
  %5369 = vdwg.mxu0
  %5370 = vmatpush.bf16.msra.mxu0 %v3597
  %5371 = vmatpush.bf16.msra.mxu0 %v3595
  %5372 = vmatpush.bf16.msra.mxu0 %v3593
  %5373 = vmatpush.bf16.msra.mxu0 %v3591
  %5374 = vmatpush.bf16.msra.mxu0 %v3589
  %5375 = vmatpush.bf16.msra.mxu0 %v3587
  %5376 = vmatpush.bf16.msra.mxu0 %v3585
  %5377 = vmatpush.bf16.msra.mxu0 %v3583
  %5378 = vmatmul.bf16.gmra.mxu0 %v1518
  %v5379 = vpop.f32.mrf.mxu0
  %v5380 = vadd.f32 %v5317, %v5379
  %v5381 = vpop.f32.mrf.mxu0
  %v5382 = vadd.f32 %v5319, %v5381
  %5383 = vmatmul.bf16.gmra.mxu0 %v1543
  %v5384 = vpop.f32.mrf.mxu0
  %v5385 = vadd.f32 %v5322, %v5384
  %v5386 = vpop.f32.mrf.mxu0
  %v5387 = vadd.f32 %v5324, %v5386
  %5388 = vmatmul.bf16.gmra.mxu0 %v1568
  %v5389 = vpop.f32.mrf.mxu0
  %v5390 = vadd.f32 %v5327, %v5389
  %v5391 = vpop.f32.mrf.mxu0
  %v5392 = vadd.f32 %v5329, %v5391
  %5393 = vmatmul.bf16.gmra.mxu0 %v1593
  %v5394 = vpop.f32.mrf.mxu0
  %v5395 = vadd.f32 %v5332, %v5394
  %v5396 = vpop.f32.mrf.mxu0
  %v5397 = vadd.f32 %v5334, %v5396
  %5398 = vmatmul.bf16.gmra.mxu0 %v1618
  %v5399 = vpop.f32.mrf.mxu0
  %v5400 = vadd.f32 %v5337, %v5399
  %v5401 = vpop.f32.mrf.mxu0
  %v5402 = vadd.f32 %v5339, %v5401
  %5403 = vmatmul.bf16.gmra.mxu0 %v1643
  %v5404 = vpop.f32.mrf.mxu0
  %v5405 = vadd.f32 %v5342, %v5404
  %v5406 = vpop.f32.mrf.mxu0
  %v5407 = vadd.f32 %v5344, %v5406
  %5408 = vmatmul.bf16.gmra.mxu0 %v1668
  %v5409 = vpop.f32.mrf.mxu0
  %v5410 = vadd.f32 %v5347, %v5409
  %v5411 = vpop.f32.mrf.mxu0
  %v5412 = vadd.f32 %v5349, %v5411
  %5413 = vmatmul.bf16.gmra.mxu0 %v1693
  %v5414 = vpop.f32.mrf.mxu0
  %v5415 = vadd.f32 %v5352, %v5414
  %v5416 = vpop.f32.mrf.mxu0
  %v5417 = vadd.f32 %v5354, %v5416
  %5418 = vmatmul.bf16.gmra.mxu0 %v1718
  %v5419 = vpop.f32.mrf.mxu0
  %v5420 = vadd.f32 %v5357, %v5419
  %v5421 = vpop.f32.mrf.mxu0
  %v5422 = vadd.f32 %v5359, %v5421
  %5423 = vmatmul.bf16.gmra.mxu0 %v1743
  %v5424 = vpop.f32.mrf.mxu0
  %v5425 = vadd.f32 %v5362, %v5424
  %v5426 = vpop.f32.mrf.mxu0
  %v5427 = vadd.f32 %v5364, %v5426
  %5428 = vmatmul.bf16.gmra.mxu0 %v1768
  %v5429 = vpop.f32.mrf.mxu0
  %v5430 = vadd.f32 %v5367, %v5429
  %v5431 = vpop.f32.mrf.mxu0
  %5432 = vdwg.mxu0
  %5433 = vmatpush.bf16.msra.mxu0 %v3613
  %5434 = vmatpush.bf16.msra.mxu0 %v3611
  %5435 = vmatpush.bf16.msra.mxu0 %v3609
  %5436 = vmatpush.bf16.msra.mxu0 %v3607
  %5437 = vmatpush.bf16.msra.mxu0 %v3605
  %5438 = vmatpush.bf16.msra.mxu0 %v3603
  %5439 = vmatpush.bf16.msra.mxu0 %v3601
  %5440 = vmatpush.bf16.msra.mxu0 %v3599
  %5441 = vmatmul.bf16.gmra.mxu0 %v1519
  %v5442 = vpop.f32.mrf.mxu0
  %v5443 = vadd.f32 %v5380, %v5442
  %v5444 = vpop.f32.mrf.mxu0
  %v5445 = vadd.f32 %v5382, %v5444
  %5446 = vmatmul.bf16.gmra.mxu0 %v1544
  %v5447 = vpop.f32.mrf.mxu0
  %v5448 = vadd.f32 %v5385, %v5447
  %v5449 = vpop.f32.mrf.mxu0
  %v5450 = vadd.f32 %v5387, %v5449
  %5451 = vmatmul.bf16.gmra.mxu0 %v1569
  %v5452 = vpop.f32.mrf.mxu0
  %v5453 = vadd.f32 %v5390, %v5452
  %v5454 = vpop.f32.mrf.mxu0
  %v5455 = vadd.f32 %v5392, %v5454
  %5456 = vmatmul.bf16.gmra.mxu0 %v1594
  %v5457 = vpop.f32.mrf.mxu0
  %v5458 = vadd.f32 %v5395, %v5457
  %v5459 = vpop.f32.mrf.mxu0
  %v5460 = vadd.f32 %v5397, %v5459
  %5461 = vmatmul.bf16.gmra.mxu0 %v1619
  %v5462 = vpop.f32.mrf.mxu0
  %v5463 = vadd.f32 %v5400, %v5462
  %v5464 = vpop.f32.mrf.mxu0
  %v5465 = vadd.f32 %v5402, %v5464
  %5466 = vmatmul.bf16.gmra.mxu0 %v1644
  %v5467 = vpop.f32.mrf.mxu0
  %v5468 = vadd.f32 %v5405, %v5467
  %v5469 = vpop.f32.mrf.mxu0
  %v5470 = vadd.f32 %v5407, %v5469
  %5471 = vmatmul.bf16.gmra.mxu0 %v1669
  %v5472 = vpop.f32.mrf.mxu0
  %v5473 = vadd.f32 %v5410, %v5472
  %v5474 = vpop.f32.mrf.mxu0
  %v5475 = vadd.f32 %v5412, %v5474
  %5476 = vmatmul.bf16.gmra.mxu0 %v1694
  %v5477 = vpop.f32.mrf.mxu0
  %v5478 = vadd.f32 %v5415, %v5477
  %v5479 = vpop.f32.mrf.mxu0
  %v5480 = vadd.f32 %v5417, %v5479
  %5481 = vmatmul.bf16.gmra.mxu0 %v1719
  %v5482 = vpop.f32.mrf.mxu0
  %v5483 = vadd.f32 %v5420, %v5482
  %v5484 = vpop.f32.mrf.mxu0
  %v5485 = vadd.f32 %v5422, %v5484
  %5486 = vmatmul.bf16.gmra.mxu0 %v1744
  %v5487 = vpop.f32.mrf.mxu0
  %v5488 = vadd.f32 %v5425, %v5487
  %v5489 = vpop.f32.mrf.mxu0
  %v5490 = vadd.f32 %v5427, %v5489
  %5491 = vmatmul.bf16.gmra.mxu0 %v1769
  %v5492 = vpop.f32.mrf.mxu0
  %v5493 = vadd.f32 %v5430, %v5492
  %v5494 = vpop.f32.mrf.mxu0
  %5495 = vdwg.mxu0
  %5496 = vmatpush.bf16.msra.mxu0 %v3629
  %5497 = vmatpush.bf16.msra.mxu0 %v3627
  %5498 = vmatpush.bf16.msra.mxu0 %v3625
  %5499 = vmatpush.bf16.msra.mxu0 %v3623
  %5500 = vmatpush.bf16.msra.mxu0 %v3621
  %5501 = vmatpush.bf16.msra.mxu0 %v3619
  %5502 = vmatpush.bf16.msra.mxu0 %v3617
  %5503 = vmatpush.bf16.msra.mxu0 %v3615
  %5504 = vmatmul.bf16.gmra.mxu0 %v1520
  %v5505 = vpop.f32.mrf.mxu0
  %v5506 = vadd.f32 %v5443, %v5505
  %v5507 = vpop.f32.mrf.mxu0
  %v5508 = vadd.f32 %v5445, %v5507
  %5509 = vmatmul.bf16.gmra.mxu0 %v1545
  %v5510 = vpop.f32.mrf.mxu0
  %v5511 = vadd.f32 %v5448, %v5510
  %v5512 = vpop.f32.mrf.mxu0
  %v5513 = vadd.f32 %v5450, %v5512
  %5514 = vmatmul.bf16.gmra.mxu0 %v1570
  %v5515 = vpop.f32.mrf.mxu0
  %v5516 = vadd.f32 %v5453, %v5515
  %v5517 = vpop.f32.mrf.mxu0
  %v5518 = vadd.f32 %v5455, %v5517
  %5519 = vmatmul.bf16.gmra.mxu0 %v1595
  %v5520 = vpop.f32.mrf.mxu0
  %v5521 = vadd.f32 %v5458, %v5520
  %v5522 = vpop.f32.mrf.mxu0
  %v5523 = vadd.f32 %v5460, %v5522
  %5524 = vmatmul.bf16.gmra.mxu0 %v1620
  %v5525 = vpop.f32.mrf.mxu0
  %v5526 = vadd.f32 %v5463, %v5525
  %v5527 = vpop.f32.mrf.mxu0
  %v5528 = vadd.f32 %v5465, %v5527
  %5529 = vmatmul.bf16.gmra.mxu0 %v1645
  %v5530 = vpop.f32.mrf.mxu0
  %v5531 = vadd.f32 %v5468, %v5530
  %v5532 = vpop.f32.mrf.mxu0
  %v5533 = vadd.f32 %v5470, %v5532
  %5534 = vmatmul.bf16.gmra.mxu0 %v1670
  %v5535 = vpop.f32.mrf.mxu0
  %v5536 = vadd.f32 %v5473, %v5535
  %v5537 = vpop.f32.mrf.mxu0
  %v5538 = vadd.f32 %v5475, %v5537
  %5539 = vmatmul.bf16.gmra.mxu0 %v1695
  %v5540 = vpop.f32.mrf.mxu0
  %v5541 = vadd.f32 %v5478, %v5540
  %v5542 = vpop.f32.mrf.mxu0
  %v5543 = vadd.f32 %v5480, %v5542
  %5544 = vmatmul.bf16.gmra.mxu0 %v1720
  %v5545 = vpop.f32.mrf.mxu0
  %v5546 = vadd.f32 %v5483, %v5545
  %v5547 = vpop.f32.mrf.mxu0
  %v5548 = vadd.f32 %v5485, %v5547
  %5549 = vmatmul.bf16.gmra.mxu0 %v1745
  %v5550 = vpop.f32.mrf.mxu0
  %v5551 = vadd.f32 %v5488, %v5550
  %v5552 = vpop.f32.mrf.mxu0
  %v5553 = vadd.f32 %v5490, %v5552
  %5554 = vmatmul.bf16.gmra.mxu0 %v1770
  %v5555 = vpop.f32.mrf.mxu0
  %v5556 = vadd.f32 %v5493, %v5555
  %v5557 = vpop.f32.mrf.mxu0
  %5558 = vdwg.mxu0
  %5559 = vmatpush.bf16.msra.mxu0 %v3645
  %5560 = vmatpush.bf16.msra.mxu0 %v3643
  %5561 = vmatpush.bf16.msra.mxu0 %v3641
  %5562 = vmatpush.bf16.msra.mxu0 %v3639
  %5563 = vmatpush.bf16.msra.mxu0 %v3637
  %5564 = vmatpush.bf16.msra.mxu0 %v3635
  %5565 = vmatpush.bf16.msra.mxu0 %v3633
  %5566 = vmatpush.bf16.msra.mxu0 %v3631
  %5567 = vmatmul.bf16.gmra.mxu0 %v1521
  %v5568 = vpop.f32.mrf.mxu0
  %v5569 = vadd.f32 %v5506, %v5568
  %v5570 = vpop.f32.mrf.mxu0
  %v5571 = vadd.f32 %v5508, %v5570
  %5572 = vmatmul.bf16.gmra.mxu0 %v1546
  %v5573 = vpop.f32.mrf.mxu0
  %v5574 = vadd.f32 %v5511, %v5573
  %v5575 = vpop.f32.mrf.mxu0
  %v5576 = vadd.f32 %v5513, %v5575
  %5577 = vmatmul.bf16.gmra.mxu0 %v1571
  %v5578 = vpop.f32.mrf.mxu0
  %v5579 = vadd.f32 %v5516, %v5578
  %v5580 = vpop.f32.mrf.mxu0
  %v5581 = vadd.f32 %v5518, %v5580
  %5582 = vmatmul.bf16.gmra.mxu0 %v1596
  %v5583 = vpop.f32.mrf.mxu0
  %v5584 = vadd.f32 %v5521, %v5583
  %v5585 = vpop.f32.mrf.mxu0
  %v5586 = vadd.f32 %v5523, %v5585
  %5587 = vmatmul.bf16.gmra.mxu0 %v1621
  %v5588 = vpop.f32.mrf.mxu0
  %v5589 = vadd.f32 %v5526, %v5588
  %v5590 = vpop.f32.mrf.mxu0
  %v5591 = vadd.f32 %v5528, %v5590
  %5592 = vmatmul.bf16.gmra.mxu0 %v1646
  %v5593 = vpop.f32.mrf.mxu0
  %v5594 = vadd.f32 %v5531, %v5593
  %v5595 = vpop.f32.mrf.mxu0
  %v5596 = vadd.f32 %v5533, %v5595
  %5597 = vmatmul.bf16.gmra.mxu0 %v1671
  %v5598 = vpop.f32.mrf.mxu0
  %v5599 = vadd.f32 %v5536, %v5598
  %v5600 = vpop.f32.mrf.mxu0
  %v5601 = vadd.f32 %v5538, %v5600
  %5602 = vmatmul.bf16.gmra.mxu0 %v1696
  %v5603 = vpop.f32.mrf.mxu0
  %v5604 = vadd.f32 %v5541, %v5603
  %v5605 = vpop.f32.mrf.mxu0
  %v5606 = vadd.f32 %v5543, %v5605
  %5607 = vmatmul.bf16.gmra.mxu0 %v1721
  %v5608 = vpop.f32.mrf.mxu0
  %v5609 = vadd.f32 %v5546, %v5608
  %v5610 = vpop.f32.mrf.mxu0
  %v5611 = vadd.f32 %v5548, %v5610
  %5612 = vmatmul.bf16.gmra.mxu0 %v1746
  %v5613 = vpop.f32.mrf.mxu0
  %v5614 = vadd.f32 %v5551, %v5613
  %v5615 = vpop.f32.mrf.mxu0
  %v5616 = vadd.f32 %v5553, %v5615
  %5617 = vmatmul.bf16.gmra.mxu0 %v1771
  %v5618 = vpop.f32.mrf.mxu0
  %v5619 = vadd.f32 %v5556, %v5618
  %v5620 = vpop.f32.mrf.mxu0
  %5621 = vdwg.mxu0
  %5622 = vmatpush.bf16.msra.mxu0 %v3262
  %5623 = vmatpush.bf16.msra.mxu0 %v3260
  %5624 = vmatpush.bf16.msra.mxu0 %v3258
  %5625 = vmatpush.bf16.msra.mxu0 %v3256
  %5626 = vmatpush.bf16.msra.mxu0 %v3254
  %5627 = vmatpush.bf16.msra.mxu0 %v3252
  %5628 = vmatpush.bf16.msra.mxu0 %v3250
  %5629 = vmatpush.bf16.msra.mxu0 %v3248
  %5630 = vmatmul.bf16.gmra.mxu0 %v1497
  %v5631 = vpop.f32.mrf.mxu0
  %v5632 = vadd.f32 %v696, %v5631
  %v5633 = vpop.f32.mrf.mxu0
  %v5634 = vadd.f32 %v696, %v5633
  %5635 = vmatmul.bf16.gmra.mxu0 %v1522
  %v5636 = vpop.f32.mrf.mxu0
  %v5637 = vadd.f32 %v696, %v5636
  %v5638 = vpop.f32.mrf.mxu0
  %v5639 = vadd.f32 %v696, %v5638
  %5640 = vmatmul.bf16.gmra.mxu0 %v1547
  %v5641 = vpop.f32.mrf.mxu0
  %v5642 = vadd.f32 %v696, %v5641
  %v5643 = vpop.f32.mrf.mxu0
  %v5644 = vadd.f32 %v696, %v5643
  %5645 = vmatmul.bf16.gmra.mxu0 %v1572
  %v5646 = vpop.f32.mrf.mxu0
  %v5647 = vadd.f32 %v696, %v5646
  %v5648 = vpop.f32.mrf.mxu0
  %v5649 = vadd.f32 %v696, %v5648
  %5650 = vmatmul.bf16.gmra.mxu0 %v1597
  %v5651 = vpop.f32.mrf.mxu0
  %v5652 = vadd.f32 %v696, %v5651
  %v5653 = vpop.f32.mrf.mxu0
  %v5654 = vadd.f32 %v696, %v5653
  %5655 = vmatmul.bf16.gmra.mxu0 %v1622
  %v5656 = vpop.f32.mrf.mxu0
  %v5657 = vadd.f32 %v696, %v5656
  %v5658 = vpop.f32.mrf.mxu0
  %v5659 = vadd.f32 %v696, %v5658
  %5660 = vmatmul.bf16.gmra.mxu0 %v1647
  %v5661 = vpop.f32.mrf.mxu0
  %v5662 = vadd.f32 %v696, %v5661
  %v5663 = vpop.f32.mrf.mxu0
  %v5664 = vadd.f32 %v696, %v5663
  %5665 = vmatmul.bf16.gmra.mxu0 %v1672
  %v5666 = vpop.f32.mrf.mxu0
  %v5667 = vadd.f32 %v696, %v5666
  %v5668 = vpop.f32.mrf.mxu0
  %v5669 = vadd.f32 %v696, %v5668
  %5670 = vmatmul.bf16.gmra.mxu0 %v1697
  %v5671 = vpop.f32.mrf.mxu0
  %v5672 = vadd.f32 %v696, %v5671
  %v5673 = vpop.f32.mrf.mxu0
  %v5674 = vadd.f32 %v696, %v5673
  %5675 = vmatmul.bf16.gmra.mxu0 %v1722
  %v5676 = vpop.f32.mrf.mxu0
  %v5677 = vadd.f32 %v696, %v5676
  %v5678 = vpop.f32.mrf.mxu0
  %v5679 = vadd.f32 %v696, %v5678
  %5680 = vmatmul.bf16.gmra.mxu0 %v1747
  %v5681 = vpop.f32.mrf.mxu0
  %v5682 = vadd.f32 %v696, %v5681
  %v5683 = vpop.f32.mrf.mxu0
  %5684 = vdwg.mxu0
  %5685 = vmatpush.bf16.msra.mxu0 %v3278
  %5686 = vmatpush.bf16.msra.mxu0 %v3276
  %5687 = vmatpush.bf16.msra.mxu0 %v3274
  %5688 = vmatpush.bf16.msra.mxu0 %v3272
  %5689 = vmatpush.bf16.msra.mxu0 %v3270
  %5690 = vmatpush.bf16.msra.mxu0 %v3268
  %5691 = vmatpush.bf16.msra.mxu0 %v3266
  %5692 = vmatpush.bf16.msra.mxu0 %v3264
  %5693 = vmatmul.bf16.gmra.mxu0 %v1498
  %v5694 = vpop.f32.mrf.mxu0
  %v5695 = vadd.f32 %v5632, %v5694
  %v5696 = vpop.f32.mrf.mxu0
  %v5697 = vadd.f32 %v5634, %v5696
  %5698 = vmatmul.bf16.gmra.mxu0 %v1523
  %v5699 = vpop.f32.mrf.mxu0
  %v5700 = vadd.f32 %v5637, %v5699
  %v5701 = vpop.f32.mrf.mxu0
  %v5702 = vadd.f32 %v5639, %v5701
  %5703 = vmatmul.bf16.gmra.mxu0 %v1548
  %v5704 = vpop.f32.mrf.mxu0
  %v5705 = vadd.f32 %v5642, %v5704
  %v5706 = vpop.f32.mrf.mxu0
  %v5707 = vadd.f32 %v5644, %v5706
  %5708 = vmatmul.bf16.gmra.mxu0 %v1573
  %v5709 = vpop.f32.mrf.mxu0
  %v5710 = vadd.f32 %v5647, %v5709
  %v5711 = vpop.f32.mrf.mxu0
  %v5712 = vadd.f32 %v5649, %v5711
  %5713 = vmatmul.bf16.gmra.mxu0 %v1598
  %v5714 = vpop.f32.mrf.mxu0
  %v5715 = vadd.f32 %v5652, %v5714
  %v5716 = vpop.f32.mrf.mxu0
  %v5717 = vadd.f32 %v5654, %v5716
  %5718 = vmatmul.bf16.gmra.mxu0 %v1623
  %v5719 = vpop.f32.mrf.mxu0
  %v5720 = vadd.f32 %v5657, %v5719
  %v5721 = vpop.f32.mrf.mxu0
  %v5722 = vadd.f32 %v5659, %v5721
  %5723 = vmatmul.bf16.gmra.mxu0 %v1648
  %v5724 = vpop.f32.mrf.mxu0
  %v5725 = vadd.f32 %v5662, %v5724
  %v5726 = vpop.f32.mrf.mxu0
  %v5727 = vadd.f32 %v5664, %v5726
  %5728 = vmatmul.bf16.gmra.mxu0 %v1673
  %v5729 = vpop.f32.mrf.mxu0
  %v5730 = vadd.f32 %v5667, %v5729
  %v5731 = vpop.f32.mrf.mxu0
  %v5732 = vadd.f32 %v5669, %v5731
  %5733 = vmatmul.bf16.gmra.mxu0 %v1698
  %v5734 = vpop.f32.mrf.mxu0
  %v5735 = vadd.f32 %v5672, %v5734
  %v5736 = vpop.f32.mrf.mxu0
  %v5737 = vadd.f32 %v5674, %v5736
  %5738 = vmatmul.bf16.gmra.mxu0 %v1723
  %v5739 = vpop.f32.mrf.mxu0
  %v5740 = vadd.f32 %v5677, %v5739
  %v5741 = vpop.f32.mrf.mxu0
  %v5742 = vadd.f32 %v5679, %v5741
  %5743 = vmatmul.bf16.gmra.mxu0 %v1748
  %v5744 = vpop.f32.mrf.mxu0
  %v5745 = vadd.f32 %v5682, %v5744
  %v5746 = vpop.f32.mrf.mxu0
  %5747 = vdwg.mxu0
  %5748 = vmatpush.bf16.msra.mxu0 %v3294
  %5749 = vmatpush.bf16.msra.mxu0 %v3292
  %5750 = vmatpush.bf16.msra.mxu0 %v3290
  %5751 = vmatpush.bf16.msra.mxu0 %v3288
  %5752 = vmatpush.bf16.msra.mxu0 %v3286
  %5753 = vmatpush.bf16.msra.mxu0 %v3284
  %5754 = vmatpush.bf16.msra.mxu0 %v3282
  %5755 = vmatpush.bf16.msra.mxu0 %v3280
  %5756 = vmatmul.bf16.gmra.mxu0 %v1499
  %v5757 = vpop.f32.mrf.mxu0
  %v5758 = vadd.f32 %v5695, %v5757
  %v5759 = vpop.f32.mrf.mxu0
  %v5760 = vadd.f32 %v5697, %v5759
  %5761 = vmatmul.bf16.gmra.mxu0 %v1524
  %v5762 = vpop.f32.mrf.mxu0
  %v5763 = vadd.f32 %v5700, %v5762
  %v5764 = vpop.f32.mrf.mxu0
  %v5765 = vadd.f32 %v5702, %v5764
  %5766 = vmatmul.bf16.gmra.mxu0 %v1549
  %v5767 = vpop.f32.mrf.mxu0
  %v5768 = vadd.f32 %v5705, %v5767
  %v5769 = vpop.f32.mrf.mxu0
  %v5770 = vadd.f32 %v5707, %v5769
  %5771 = vmatmul.bf16.gmra.mxu0 %v1574
  %v5772 = vpop.f32.mrf.mxu0
  %v5773 = vadd.f32 %v5710, %v5772
  %v5774 = vpop.f32.mrf.mxu0
  %v5775 = vadd.f32 %v5712, %v5774
  %5776 = vmatmul.bf16.gmra.mxu0 %v1599
  %v5777 = vpop.f32.mrf.mxu0
  %v5778 = vadd.f32 %v5715, %v5777
  %v5779 = vpop.f32.mrf.mxu0
  %v5780 = vadd.f32 %v5717, %v5779
  %5781 = vmatmul.bf16.gmra.mxu0 %v1624
  %v5782 = vpop.f32.mrf.mxu0
  %v5783 = vadd.f32 %v5720, %v5782
  %v5784 = vpop.f32.mrf.mxu0
  %v5785 = vadd.f32 %v5722, %v5784
  %5786 = vmatmul.bf16.gmra.mxu0 %v1649
  %v5787 = vpop.f32.mrf.mxu0
  %v5788 = vadd.f32 %v5725, %v5787
  %v5789 = vpop.f32.mrf.mxu0
  %v5790 = vadd.f32 %v5727, %v5789
  %5791 = vmatmul.bf16.gmra.mxu0 %v1674
  %v5792 = vpop.f32.mrf.mxu0
  %v5793 = vadd.f32 %v5730, %v5792
  %v5794 = vpop.f32.mrf.mxu0
  %v5795 = vadd.f32 %v5732, %v5794
  %5796 = vmatmul.bf16.gmra.mxu0 %v1699
  %v5797 = vpop.f32.mrf.mxu0
  %v5798 = vadd.f32 %v5735, %v5797
  %v5799 = vpop.f32.mrf.mxu0
  %v5800 = vadd.f32 %v5737, %v5799
  %5801 = vmatmul.bf16.gmra.mxu0 %v1724
  %v5802 = vpop.f32.mrf.mxu0
  %v5803 = vadd.f32 %v5740, %v5802
  %v5804 = vpop.f32.mrf.mxu0
  %v5805 = vadd.f32 %v5742, %v5804
  %5806 = vmatmul.bf16.gmra.mxu0 %v1749
  %v5807 = vpop.f32.mrf.mxu0
  %v5808 = vadd.f32 %v5745, %v5807
  %v5809 = vpop.f32.mrf.mxu0
  %5810 = vdwg.mxu0
  %5811 = vmatpush.bf16.msra.mxu0 %v3310
  %5812 = vmatpush.bf16.msra.mxu0 %v3308
  %5813 = vmatpush.bf16.msra.mxu0 %v3306
  %5814 = vmatpush.bf16.msra.mxu0 %v3304
  %5815 = vmatpush.bf16.msra.mxu0 %v3302
  %5816 = vmatpush.bf16.msra.mxu0 %v3300
  %5817 = vmatpush.bf16.msra.mxu0 %v3298
  %5818 = vmatpush.bf16.msra.mxu0 %v3296
  %5819 = vmatmul.bf16.gmra.mxu0 %v1500
  %v5820 = vpop.f32.mrf.mxu0
  %v5821 = vadd.f32 %v5758, %v5820
  %v5822 = vpop.f32.mrf.mxu0
  %v5823 = vadd.f32 %v5760, %v5822
  %5824 = vmatmul.bf16.gmra.mxu0 %v1525
  %v5825 = vpop.f32.mrf.mxu0
  %v5826 = vadd.f32 %v5763, %v5825
  %v5827 = vpop.f32.mrf.mxu0
  %v5828 = vadd.f32 %v5765, %v5827
  %5829 = vmatmul.bf16.gmra.mxu0 %v1550
  %v5830 = vpop.f32.mrf.mxu0
  %v5831 = vadd.f32 %v5768, %v5830
  %v5832 = vpop.f32.mrf.mxu0
  %v5833 = vadd.f32 %v5770, %v5832
  %5834 = vmatmul.bf16.gmra.mxu0 %v1575
  %v5835 = vpop.f32.mrf.mxu0
  %v5836 = vadd.f32 %v5773, %v5835
  %v5837 = vpop.f32.mrf.mxu0
  %v5838 = vadd.f32 %v5775, %v5837
  %5839 = vmatmul.bf16.gmra.mxu0 %v1600
  %v5840 = vpop.f32.mrf.mxu0
  %v5841 = vadd.f32 %v5778, %v5840
  %v5842 = vpop.f32.mrf.mxu0
  %v5843 = vadd.f32 %v5780, %v5842
  %5844 = vmatmul.bf16.gmra.mxu0 %v1625
  %v5845 = vpop.f32.mrf.mxu0
  %v5846 = vadd.f32 %v5783, %v5845
  %v5847 = vpop.f32.mrf.mxu0
  %v5848 = vadd.f32 %v5785, %v5847
  %5849 = vmatmul.bf16.gmra.mxu0 %v1650
  %v5850 = vpop.f32.mrf.mxu0
  %v5851 = vadd.f32 %v5788, %v5850
  %v5852 = vpop.f32.mrf.mxu0
  %v5853 = vadd.f32 %v5790, %v5852
  %5854 = vmatmul.bf16.gmra.mxu0 %v1675
  %v5855 = vpop.f32.mrf.mxu0
  %v5856 = vadd.f32 %v5793, %v5855
  %v5857 = vpop.f32.mrf.mxu0
  %v5858 = vadd.f32 %v5795, %v5857
  %5859 = vmatmul.bf16.gmra.mxu0 %v1700
  %v5860 = vpop.f32.mrf.mxu0
  %v5861 = vadd.f32 %v5798, %v5860
  %v5862 = vpop.f32.mrf.mxu0
  %v5863 = vadd.f32 %v5800, %v5862
  %5864 = vmatmul.bf16.gmra.mxu0 %v1725
  %v5865 = vpop.f32.mrf.mxu0
  %v5866 = vadd.f32 %v5803, %v5865
  %v5867 = vpop.f32.mrf.mxu0
  %v5868 = vadd.f32 %v5805, %v5867
  %5869 = vmatmul.bf16.gmra.mxu0 %v1750
  %v5870 = vpop.f32.mrf.mxu0
  %v5871 = vadd.f32 %v5808, %v5870
  %v5872 = vpop.f32.mrf.mxu0
  %5873 = vdwg.mxu0
  %5874 = vmatpush.bf16.msra.mxu0 %v3326
  %5875 = vmatpush.bf16.msra.mxu0 %v3324
  %5876 = vmatpush.bf16.msra.mxu0 %v3322
  %5877 = vmatpush.bf16.msra.mxu0 %v3320
  %5878 = vmatpush.bf16.msra.mxu0 %v3318
  %5879 = vmatpush.bf16.msra.mxu0 %v3316
  %5880 = vmatpush.bf16.msra.mxu0 %v3314
  %5881 = vmatpush.bf16.msra.mxu0 %v3312
  %5882 = vmatmul.bf16.gmra.mxu0 %v1501
  %v5883 = vpop.f32.mrf.mxu0
  %v5884 = vadd.f32 %v5821, %v5883
  %v5885 = vpop.f32.mrf.mxu0
  %v5886 = vadd.f32 %v5823, %v5885
  %5887 = vmatmul.bf16.gmra.mxu0 %v1526
  %v5888 = vpop.f32.mrf.mxu0
  %v5889 = vadd.f32 %v5826, %v5888
  %v5890 = vpop.f32.mrf.mxu0
  %v5891 = vadd.f32 %v5828, %v5890
  %5892 = vmatmul.bf16.gmra.mxu0 %v1551
  %v5893 = vpop.f32.mrf.mxu0
  %v5894 = vadd.f32 %v5831, %v5893
  %v5895 = vpop.f32.mrf.mxu0
  %v5896 = vadd.f32 %v5833, %v5895
  %5897 = vmatmul.bf16.gmra.mxu0 %v1576
  %v5898 = vpop.f32.mrf.mxu0
  %v5899 = vadd.f32 %v5836, %v5898
  %v5900 = vpop.f32.mrf.mxu0
  %v5901 = vadd.f32 %v5838, %v5900
  %5902 = vmatmul.bf16.gmra.mxu0 %v1601
  %v5903 = vpop.f32.mrf.mxu0
  %v5904 = vadd.f32 %v5841, %v5903
  %v5905 = vpop.f32.mrf.mxu0
  %v5906 = vadd.f32 %v5843, %v5905
  %5907 = vmatmul.bf16.gmra.mxu0 %v1626
  %v5908 = vpop.f32.mrf.mxu0
  %v5909 = vadd.f32 %v5846, %v5908
  %v5910 = vpop.f32.mrf.mxu0
  %v5911 = vadd.f32 %v5848, %v5910
  %5912 = vmatmul.bf16.gmra.mxu0 %v1651
  %v5913 = vpop.f32.mrf.mxu0
  %v5914 = vadd.f32 %v5851, %v5913
  %v5915 = vpop.f32.mrf.mxu0
  %v5916 = vadd.f32 %v5853, %v5915
  %5917 = vmatmul.bf16.gmra.mxu0 %v1676
  %v5918 = vpop.f32.mrf.mxu0
  %v5919 = vadd.f32 %v5856, %v5918
  %v5920 = vpop.f32.mrf.mxu0
  %v5921 = vadd.f32 %v5858, %v5920
  %5922 = vmatmul.bf16.gmra.mxu0 %v1701
  %v5923 = vpop.f32.mrf.mxu0
  %v5924 = vadd.f32 %v5861, %v5923
  %v5925 = vpop.f32.mrf.mxu0
  %v5926 = vadd.f32 %v5863, %v5925
  %5927 = vmatmul.bf16.gmra.mxu0 %v1726
  %v5928 = vpop.f32.mrf.mxu0
  %v5929 = vadd.f32 %v5866, %v5928
  %v5930 = vpop.f32.mrf.mxu0
  %v5931 = vadd.f32 %v5868, %v5930
  %5932 = vmatmul.bf16.gmra.mxu0 %v1751
  %v5933 = vpop.f32.mrf.mxu0
  %v5934 = vadd.f32 %v5871, %v5933
  %v5935 = vpop.f32.mrf.mxu0
  %5936 = vdwg.mxu0
  %5937 = vmatpush.bf16.msra.mxu0 %v3342
  %5938 = vmatpush.bf16.msra.mxu0 %v3340
  %5939 = vmatpush.bf16.msra.mxu0 %v3338
  %5940 = vmatpush.bf16.msra.mxu0 %v3336
  %5941 = vmatpush.bf16.msra.mxu0 %v3334
  %5942 = vmatpush.bf16.msra.mxu0 %v3332
  %5943 = vmatpush.bf16.msra.mxu0 %v3330
  %5944 = vmatpush.bf16.msra.mxu0 %v3328
  %5945 = vmatmul.bf16.gmra.mxu0 %v1502
  %v5946 = vpop.f32.mrf.mxu0
  %v5947 = vadd.f32 %v5884, %v5946
  %v5948 = vpop.f32.mrf.mxu0
  %v5949 = vadd.f32 %v5886, %v5948
  %5950 = vmatmul.bf16.gmra.mxu0 %v1527
  %v5951 = vpop.f32.mrf.mxu0
  %v5952 = vadd.f32 %v5889, %v5951
  %v5953 = vpop.f32.mrf.mxu0
  %v5954 = vadd.f32 %v5891, %v5953
  %5955 = vmatmul.bf16.gmra.mxu0 %v1552
  %v5956 = vpop.f32.mrf.mxu0
  %v5957 = vadd.f32 %v5894, %v5956
  %v5958 = vpop.f32.mrf.mxu0
  %v5959 = vadd.f32 %v5896, %v5958
  %5960 = vmatmul.bf16.gmra.mxu0 %v1577
  %v5961 = vpop.f32.mrf.mxu0
  %v5962 = vadd.f32 %v5899, %v5961
  %v5963 = vpop.f32.mrf.mxu0
  %v5964 = vadd.f32 %v5901, %v5963
  %5965 = vmatmul.bf16.gmra.mxu0 %v1602
  %v5966 = vpop.f32.mrf.mxu0
  %v5967 = vadd.f32 %v5904, %v5966
  %v5968 = vpop.f32.mrf.mxu0
  %v5969 = vadd.f32 %v5906, %v5968
  %5970 = vmatmul.bf16.gmra.mxu0 %v1627
  %v5971 = vpop.f32.mrf.mxu0
  %v5972 = vadd.f32 %v5909, %v5971
  %v5973 = vpop.f32.mrf.mxu0
  %v5974 = vadd.f32 %v5911, %v5973
  %5975 = vmatmul.bf16.gmra.mxu0 %v1652
  %v5976 = vpop.f32.mrf.mxu0
  %v5977 = vadd.f32 %v5914, %v5976
  %v5978 = vpop.f32.mrf.mxu0
  %v5979 = vadd.f32 %v5916, %v5978
  %5980 = vmatmul.bf16.gmra.mxu0 %v1677
  %v5981 = vpop.f32.mrf.mxu0
  %v5982 = vadd.f32 %v5919, %v5981
  %v5983 = vpop.f32.mrf.mxu0
  %v5984 = vadd.f32 %v5921, %v5983
  %5985 = vmatmul.bf16.gmra.mxu0 %v1702
  %v5986 = vpop.f32.mrf.mxu0
  %v5987 = vadd.f32 %v5924, %v5986
  %v5988 = vpop.f32.mrf.mxu0
  %v5989 = vadd.f32 %v5926, %v5988
  %5990 = vmatmul.bf16.gmra.mxu0 %v1727
  %v5991 = vpop.f32.mrf.mxu0
  %v5992 = vadd.f32 %v5929, %v5991
  %v5993 = vpop.f32.mrf.mxu0
  %v5994 = vadd.f32 %v5931, %v5993
  %5995 = vmatmul.bf16.gmra.mxu0 %v1752
  %v5996 = vpop.f32.mrf.mxu0
  %v5997 = vadd.f32 %v5934, %v5996
  %v5998 = vpop.f32.mrf.mxu0
  %5999 = vdwg.mxu0
  %6000 = vmatpush.bf16.msra.mxu0 %v3358
  %6001 = vmatpush.bf16.msra.mxu0 %v3356
  %6002 = vmatpush.bf16.msra.mxu0 %v3354
  %6003 = vmatpush.bf16.msra.mxu0 %v3352
  %6004 = vmatpush.bf16.msra.mxu0 %v3350
  %6005 = vmatpush.bf16.msra.mxu0 %v3348
  %6006 = vmatpush.bf16.msra.mxu0 %v3346
  %6007 = vmatpush.bf16.msra.mxu0 %v3344
  %6008 = vmatmul.bf16.gmra.mxu0 %v1503
  %v6009 = vpop.f32.mrf.mxu0
  %v6010 = vadd.f32 %v5947, %v6009
  %v6011 = vpop.f32.mrf.mxu0
  %v6012 = vadd.f32 %v5949, %v6011
  %6013 = vmatmul.bf16.gmra.mxu0 %v1528
  %v6014 = vpop.f32.mrf.mxu0
  %v6015 = vadd.f32 %v5952, %v6014
  %v6016 = vpop.f32.mrf.mxu0
  %v6017 = vadd.f32 %v5954, %v6016
  %6018 = vmatmul.bf16.gmra.mxu0 %v1553
  %v6019 = vpop.f32.mrf.mxu0
  %v6020 = vadd.f32 %v5957, %v6019
  %v6021 = vpop.f32.mrf.mxu0
  %v6022 = vadd.f32 %v5959, %v6021
  %6023 = vmatmul.bf16.gmra.mxu0 %v1578
  %v6024 = vpop.f32.mrf.mxu0
  %v6025 = vadd.f32 %v5962, %v6024
  %v6026 = vpop.f32.mrf.mxu0
  %v6027 = vadd.f32 %v5964, %v6026
  %6028 = vmatmul.bf16.gmra.mxu0 %v1603
  %v6029 = vpop.f32.mrf.mxu0
  %v6030 = vadd.f32 %v5967, %v6029
  %v6031 = vpop.f32.mrf.mxu0
  %v6032 = vadd.f32 %v5969, %v6031
  %6033 = vmatmul.bf16.gmra.mxu0 %v1628
  %v6034 = vpop.f32.mrf.mxu0
  %v6035 = vadd.f32 %v5972, %v6034
  %v6036 = vpop.f32.mrf.mxu0
  %v6037 = vadd.f32 %v5974, %v6036
  %6038 = vmatmul.bf16.gmra.mxu0 %v1653
  %v6039 = vpop.f32.mrf.mxu0
  %v6040 = vadd.f32 %v5977, %v6039
  %v6041 = vpop.f32.mrf.mxu0
  %v6042 = vadd.f32 %v5979, %v6041
  %6043 = vmatmul.bf16.gmra.mxu0 %v1678
  %v6044 = vpop.f32.mrf.mxu0
  %v6045 = vadd.f32 %v5982, %v6044
  %v6046 = vpop.f32.mrf.mxu0
  %v6047 = vadd.f32 %v5984, %v6046
  %6048 = vmatmul.bf16.gmra.mxu0 %v1703
  %v6049 = vpop.f32.mrf.mxu0
  %v6050 = vadd.f32 %v5987, %v6049
  %v6051 = vpop.f32.mrf.mxu0
  %v6052 = vadd.f32 %v5989, %v6051
  %6053 = vmatmul.bf16.gmra.mxu0 %v1728
  %v6054 = vpop.f32.mrf.mxu0
  %v6055 = vadd.f32 %v5992, %v6054
  %v6056 = vpop.f32.mrf.mxu0
  %v6057 = vadd.f32 %v5994, %v6056
  %6058 = vmatmul.bf16.gmra.mxu0 %v1753
  %v6059 = vpop.f32.mrf.mxu0
  %v6060 = vadd.f32 %v5997, %v6059
  %v6061 = vpop.f32.mrf.mxu0
  %6062 = vdwg.mxu0
  %6063 = vmatpush.bf16.msra.mxu0 %v3374
  %6064 = vmatpush.bf16.msra.mxu0 %v3372
  %6065 = vmatpush.bf16.msra.mxu0 %v3370
  %6066 = vmatpush.bf16.msra.mxu0 %v3368
  %6067 = vmatpush.bf16.msra.mxu0 %v3366
  %6068 = vmatpush.bf16.msra.mxu0 %v3364
  %6069 = vmatpush.bf16.msra.mxu0 %v3362
  %6070 = vmatpush.bf16.msra.mxu0 %v3360
  %6071 = vmatmul.bf16.gmra.mxu0 %v1504
  %v6072 = vpop.f32.mrf.mxu0
  %v6073 = vadd.f32 %v6010, %v6072
  %v6074 = vpop.f32.mrf.mxu0
  %v6075 = vadd.f32 %v6012, %v6074
  %6076 = vmatmul.bf16.gmra.mxu0 %v1529
  %v6077 = vpop.f32.mrf.mxu0
  %v6078 = vadd.f32 %v6015, %v6077
  %v6079 = vpop.f32.mrf.mxu0
  %v6080 = vadd.f32 %v6017, %v6079
  %6081 = vmatmul.bf16.gmra.mxu0 %v1554
  %v6082 = vpop.f32.mrf.mxu0
  %v6083 = vadd.f32 %v6020, %v6082
  %v6084 = vpop.f32.mrf.mxu0
  %v6085 = vadd.f32 %v6022, %v6084
  %6086 = vmatmul.bf16.gmra.mxu0 %v1579
  %v6087 = vpop.f32.mrf.mxu0
  %v6088 = vadd.f32 %v6025, %v6087
  %v6089 = vpop.f32.mrf.mxu0
  %v6090 = vadd.f32 %v6027, %v6089
  %6091 = vmatmul.bf16.gmra.mxu0 %v1604
  %v6092 = vpop.f32.mrf.mxu0
  %v6093 = vadd.f32 %v6030, %v6092
  %v6094 = vpop.f32.mrf.mxu0
  %v6095 = vadd.f32 %v6032, %v6094
  %6096 = vmatmul.bf16.gmra.mxu0 %v1629
  %v6097 = vpop.f32.mrf.mxu0
  %v6098 = vadd.f32 %v6035, %v6097
  %v6099 = vpop.f32.mrf.mxu0
  %v6100 = vadd.f32 %v6037, %v6099
  %6101 = vmatmul.bf16.gmra.mxu0 %v1654
  %v6102 = vpop.f32.mrf.mxu0
  %v6103 = vadd.f32 %v6040, %v6102
  %v6104 = vpop.f32.mrf.mxu0
  %v6105 = vadd.f32 %v6042, %v6104
  %6106 = vmatmul.bf16.gmra.mxu0 %v1679
  %v6107 = vpop.f32.mrf.mxu0
  %v6108 = vadd.f32 %v6045, %v6107
  %v6109 = vpop.f32.mrf.mxu0
  %v6110 = vadd.f32 %v6047, %v6109
  %6111 = vmatmul.bf16.gmra.mxu0 %v1704
  %v6112 = vpop.f32.mrf.mxu0
  %v6113 = vadd.f32 %v6050, %v6112
  %v6114 = vpop.f32.mrf.mxu0
  %v6115 = vadd.f32 %v6052, %v6114
  %6116 = vmatmul.bf16.gmra.mxu0 %v1729
  %v6117 = vpop.f32.mrf.mxu0
  %v6118 = vadd.f32 %v6055, %v6117
  %v6119 = vpop.f32.mrf.mxu0
  %v6120 = vadd.f32 %v6057, %v6119
  %6121 = vmatmul.bf16.gmra.mxu0 %v1754
  %v6122 = vpop.f32.mrf.mxu0
  %v6123 = vadd.f32 %v6060, %v6122
  %v6124 = vpop.f32.mrf.mxu0
  %6125 = vdwg.mxu0
  %6126 = vmatpush.bf16.msra.mxu0 %v3390
  %6127 = vmatpush.bf16.msra.mxu0 %v3388
  %6128 = vmatpush.bf16.msra.mxu0 %v3386
  %6129 = vmatpush.bf16.msra.mxu0 %v3384
  %6130 = vmatpush.bf16.msra.mxu0 %v3382
  %6131 = vmatpush.bf16.msra.mxu0 %v3380
  %6132 = vmatpush.bf16.msra.mxu0 %v3378
  %6133 = vmatpush.bf16.msra.mxu0 %v3376
  %6134 = vmatmul.bf16.gmra.mxu0 %v1505
  %v6135 = vpop.f32.mrf.mxu0
  %v6136 = vadd.f32 %v6073, %v6135
  %v6137 = vpop.f32.mrf.mxu0
  %v6138 = vadd.f32 %v6075, %v6137
  %6139 = vmatmul.bf16.gmra.mxu0 %v1530
  %v6140 = vpop.f32.mrf.mxu0
  %v6141 = vadd.f32 %v6078, %v6140
  %v6142 = vpop.f32.mrf.mxu0
  %v6143 = vadd.f32 %v6080, %v6142
  %6144 = vmatmul.bf16.gmra.mxu0 %v1555
  %v6145 = vpop.f32.mrf.mxu0
  %v6146 = vadd.f32 %v6083, %v6145
  %v6147 = vpop.f32.mrf.mxu0
  %v6148 = vadd.f32 %v6085, %v6147
  %6149 = vmatmul.bf16.gmra.mxu0 %v1580
  %v6150 = vpop.f32.mrf.mxu0
  %v6151 = vadd.f32 %v6088, %v6150
  %v6152 = vpop.f32.mrf.mxu0
  %v6153 = vadd.f32 %v6090, %v6152
  %6154 = vmatmul.bf16.gmra.mxu0 %v1605
  %v6155 = vpop.f32.mrf.mxu0
  %v6156 = vadd.f32 %v6093, %v6155
  %v6157 = vpop.f32.mrf.mxu0
  %v6158 = vadd.f32 %v6095, %v6157
  %6159 = vmatmul.bf16.gmra.mxu0 %v1630
  %v6160 = vpop.f32.mrf.mxu0
  %v6161 = vadd.f32 %v6098, %v6160
  %v6162 = vpop.f32.mrf.mxu0
  %v6163 = vadd.f32 %v6100, %v6162
  %6164 = vmatmul.bf16.gmra.mxu0 %v1655
  %v6165 = vpop.f32.mrf.mxu0
  %v6166 = vadd.f32 %v6103, %v6165
  %v6167 = vpop.f32.mrf.mxu0
  %v6168 = vadd.f32 %v6105, %v6167
  %6169 = vmatmul.bf16.gmra.mxu0 %v1680
  %v6170 = vpop.f32.mrf.mxu0
  %v6171 = vadd.f32 %v6108, %v6170
  %v6172 = vpop.f32.mrf.mxu0
  %v6173 = vadd.f32 %v6110, %v6172
  %6174 = vmatmul.bf16.gmra.mxu0 %v1705
  %v6175 = vpop.f32.mrf.mxu0
  %v6176 = vadd.f32 %v6113, %v6175
  %v6177 = vpop.f32.mrf.mxu0
  %v6178 = vadd.f32 %v6115, %v6177
  %6179 = vmatmul.bf16.gmra.mxu0 %v1730
  %v6180 = vpop.f32.mrf.mxu0
  %v6181 = vadd.f32 %v6118, %v6180
  %v6182 = vpop.f32.mrf.mxu0
  %v6183 = vadd.f32 %v6120, %v6182
  %6184 = vmatmul.bf16.gmra.mxu0 %v1755
  %v6185 = vpop.f32.mrf.mxu0
  %v6186 = vadd.f32 %v6123, %v6185
  %v6187 = vpop.f32.mrf.mxu0
  %6188 = vdwg.mxu0
  %6189 = vmatpush.bf16.msra.mxu0 %v3406
  %6190 = vmatpush.bf16.msra.mxu0 %v3404
  %6191 = vmatpush.bf16.msra.mxu0 %v3402
  %6192 = vmatpush.bf16.msra.mxu0 %v3400
  %6193 = vmatpush.bf16.msra.mxu0 %v3398
  %6194 = vmatpush.bf16.msra.mxu0 %v3396
  %6195 = vmatpush.bf16.msra.mxu0 %v3394
  %6196 = vmatpush.bf16.msra.mxu0 %v3392
  %6197 = vmatmul.bf16.gmra.mxu0 %v1506
  %v6198 = vpop.f32.mrf.mxu0
  %v6199 = vadd.f32 %v6136, %v6198
  %v6200 = vpop.f32.mrf.mxu0
  %v6201 = vadd.f32 %v6138, %v6200
  %6202 = vmatmul.bf16.gmra.mxu0 %v1531
  %v6203 = vpop.f32.mrf.mxu0
  %v6204 = vadd.f32 %v6141, %v6203
  %v6205 = vpop.f32.mrf.mxu0
  %v6206 = vadd.f32 %v6143, %v6205
  %6207 = vmatmul.bf16.gmra.mxu0 %v1556
  %v6208 = vpop.f32.mrf.mxu0
  %v6209 = vadd.f32 %v6146, %v6208
  %v6210 = vpop.f32.mrf.mxu0
  %v6211 = vadd.f32 %v6148, %v6210
  %6212 = vmatmul.bf16.gmra.mxu0 %v1581
  %v6213 = vpop.f32.mrf.mxu0
  %v6214 = vadd.f32 %v6151, %v6213
  %v6215 = vpop.f32.mrf.mxu0
  %v6216 = vadd.f32 %v6153, %v6215
  %6217 = vmatmul.bf16.gmra.mxu0 %v1606
  %v6218 = vpop.f32.mrf.mxu0
  %v6219 = vadd.f32 %v6156, %v6218
  %v6220 = vpop.f32.mrf.mxu0
  %v6221 = vadd.f32 %v6158, %v6220
  %6222 = vmatmul.bf16.gmra.mxu0 %v1631
  %v6223 = vpop.f32.mrf.mxu0
  %v6224 = vadd.f32 %v6161, %v6223
  %v6225 = vpop.f32.mrf.mxu0
  %v6226 = vadd.f32 %v6163, %v6225
  %6227 = vmatmul.bf16.gmra.mxu0 %v1656
  %v6228 = vpop.f32.mrf.mxu0
  %v6229 = vadd.f32 %v6166, %v6228
  %v6230 = vpop.f32.mrf.mxu0
  %v6231 = vadd.f32 %v6168, %v6230
  %6232 = vmatmul.bf16.gmra.mxu0 %v1681
  %v6233 = vpop.f32.mrf.mxu0
  %v6234 = vadd.f32 %v6171, %v6233
  %v6235 = vpop.f32.mrf.mxu0
  %v6236 = vadd.f32 %v6173, %v6235
  %6237 = vmatmul.bf16.gmra.mxu0 %v1706
  %v6238 = vpop.f32.mrf.mxu0
  %v6239 = vadd.f32 %v6176, %v6238
  %v6240 = vpop.f32.mrf.mxu0
  %v6241 = vadd.f32 %v6178, %v6240
  %6242 = vmatmul.bf16.gmra.mxu0 %v1731
  %v6243 = vpop.f32.mrf.mxu0
  %v6244 = vadd.f32 %v6181, %v6243
  %v6245 = vpop.f32.mrf.mxu0
  %v6246 = vadd.f32 %v6183, %v6245
  %6247 = vmatmul.bf16.gmra.mxu0 %v1756
  %v6248 = vpop.f32.mrf.mxu0
  %v6249 = vadd.f32 %v6186, %v6248
  %v6250 = vpop.f32.mrf.mxu0
  %6251 = vdwg.mxu0
  %6252 = vmatpush.bf16.msra.mxu0 %v3422
  %6253 = vmatpush.bf16.msra.mxu0 %v3420
  %6254 = vmatpush.bf16.msra.mxu0 %v3418
  %6255 = vmatpush.bf16.msra.mxu0 %v3416
  %6256 = vmatpush.bf16.msra.mxu0 %v3414
  %6257 = vmatpush.bf16.msra.mxu0 %v3412
  %6258 = vmatpush.bf16.msra.mxu0 %v3410
  %6259 = vmatpush.bf16.msra.mxu0 %v3408
  %6260 = vmatmul.bf16.gmra.mxu0 %v1507
  %v6261 = vpop.f32.mrf.mxu0
  %v6262 = vadd.f32 %v6199, %v6261
  %v6263 = vpop.f32.mrf.mxu0
  %v6264 = vadd.f32 %v6201, %v6263
  %6265 = vmatmul.bf16.gmra.mxu0 %v1532
  %v6266 = vpop.f32.mrf.mxu0
  %v6267 = vadd.f32 %v6204, %v6266
  %v6268 = vpop.f32.mrf.mxu0
  %v6269 = vadd.f32 %v6206, %v6268
  %6270 = vmatmul.bf16.gmra.mxu0 %v1557
  %v6271 = vpop.f32.mrf.mxu0
  %v6272 = vadd.f32 %v6209, %v6271
  %v6273 = vpop.f32.mrf.mxu0
  %v6274 = vadd.f32 %v6211, %v6273
  %6275 = vmatmul.bf16.gmra.mxu0 %v1582
  %v6276 = vpop.f32.mrf.mxu0
  %v6277 = vadd.f32 %v6214, %v6276
  %v6278 = vpop.f32.mrf.mxu0
  %v6279 = vadd.f32 %v6216, %v6278
  %6280 = vmatmul.bf16.gmra.mxu0 %v1607
  %v6281 = vpop.f32.mrf.mxu0
  %v6282 = vadd.f32 %v6219, %v6281
  %v6283 = vpop.f32.mrf.mxu0
  %v6284 = vadd.f32 %v6221, %v6283
  %6285 = vmatmul.bf16.gmra.mxu0 %v1632
  %v6286 = vpop.f32.mrf.mxu0
  %v6287 = vadd.f32 %v6224, %v6286
  %v6288 = vpop.f32.mrf.mxu0
  %v6289 = vadd.f32 %v6226, %v6288
  %6290 = vmatmul.bf16.gmra.mxu0 %v1657
  %v6291 = vpop.f32.mrf.mxu0
  %v6292 = vadd.f32 %v6229, %v6291
  %v6293 = vpop.f32.mrf.mxu0
  %v6294 = vadd.f32 %v6231, %v6293
  %6295 = vmatmul.bf16.gmra.mxu0 %v1682
  %v6296 = vpop.f32.mrf.mxu0
  %v6297 = vadd.f32 %v6234, %v6296
  %v6298 = vpop.f32.mrf.mxu0
  %v6299 = vadd.f32 %v6236, %v6298
  %6300 = vmatmul.bf16.gmra.mxu0 %v1707
  %v6301 = vpop.f32.mrf.mxu0
  %v6302 = vadd.f32 %v6239, %v6301
  %v6303 = vpop.f32.mrf.mxu0
  %v6304 = vadd.f32 %v6241, %v6303
  %6305 = vmatmul.bf16.gmra.mxu0 %v1732
  %v6306 = vpop.f32.mrf.mxu0
  %v6307 = vadd.f32 %v6244, %v6306
  %v6308 = vpop.f32.mrf.mxu0
  %v6309 = vadd.f32 %v6246, %v6308
  %6310 = vmatmul.bf16.gmra.mxu0 %v1757
  %v6311 = vpop.f32.mrf.mxu0
  %v6312 = vadd.f32 %v6249, %v6311
  %v6313 = vpop.f32.mrf.mxu0
  %6314 = vdwg.mxu0
  %6315 = vmatpush.bf16.msra.mxu0 %v3438
  %6316 = vmatpush.bf16.msra.mxu0 %v3436
  %6317 = vmatpush.bf16.msra.mxu0 %v3434
  %6318 = vmatpush.bf16.msra.mxu0 %v3432
  %6319 = vmatpush.bf16.msra.mxu0 %v3430
  %6320 = vmatpush.bf16.msra.mxu0 %v3428
  %6321 = vmatpush.bf16.msra.mxu0 %v3426
  %6322 = vmatpush.bf16.msra.mxu0 %v3424
  %6323 = vmatmul.bf16.gmra.mxu0 %v1508
  %v6324 = vpop.f32.mrf.mxu0
  %v6325 = vadd.f32 %v6262, %v6324
  %v6326 = vpop.f32.mrf.mxu0
  %v6327 = vadd.f32 %v6264, %v6326
  %6328 = vmatmul.bf16.gmra.mxu0 %v1533
  %v6329 = vpop.f32.mrf.mxu0
  %v6330 = vadd.f32 %v6267, %v6329
  %v6331 = vpop.f32.mrf.mxu0
  %v6332 = vadd.f32 %v6269, %v6331
  %6333 = vmatmul.bf16.gmra.mxu0 %v1558
  %v6334 = vpop.f32.mrf.mxu0
  %v6335 = vadd.f32 %v6272, %v6334
  %v6336 = vpop.f32.mrf.mxu0
  %v6337 = vadd.f32 %v6274, %v6336
  %6338 = vmatmul.bf16.gmra.mxu0 %v1583
  %v6339 = vpop.f32.mrf.mxu0
  %v6340 = vadd.f32 %v6277, %v6339
  %v6341 = vpop.f32.mrf.mxu0
  %v6342 = vadd.f32 %v6279, %v6341
  %6343 = vmatmul.bf16.gmra.mxu0 %v1608
  %v6344 = vpop.f32.mrf.mxu0
  %v6345 = vadd.f32 %v6282, %v6344
  %v6346 = vpop.f32.mrf.mxu0
  %v6347 = vadd.f32 %v6284, %v6346
  %6348 = vmatmul.bf16.gmra.mxu0 %v1633
  %v6349 = vpop.f32.mrf.mxu0
  %v6350 = vadd.f32 %v6287, %v6349
  %v6351 = vpop.f32.mrf.mxu0
  %v6352 = vadd.f32 %v6289, %v6351
  %6353 = vmatmul.bf16.gmra.mxu0 %v1658
  %v6354 = vpop.f32.mrf.mxu0
  %v6355 = vadd.f32 %v6292, %v6354
  %v6356 = vpop.f32.mrf.mxu0
  %v6357 = vadd.f32 %v6294, %v6356
  %6358 = vmatmul.bf16.gmra.mxu0 %v1683
  %v6359 = vpop.f32.mrf.mxu0
  %v6360 = vadd.f32 %v6297, %v6359
  %v6361 = vpop.f32.mrf.mxu0
  %v6362 = vadd.f32 %v6299, %v6361
  %6363 = vmatmul.bf16.gmra.mxu0 %v1708
  %v6364 = vpop.f32.mrf.mxu0
  %v6365 = vadd.f32 %v6302, %v6364
  %v6366 = vpop.f32.mrf.mxu0
  %v6367 = vadd.f32 %v6304, %v6366
  %6368 = vmatmul.bf16.gmra.mxu0 %v1733
  %v6369 = vpop.f32.mrf.mxu0
  %v6370 = vadd.f32 %v6307, %v6369
  %v6371 = vpop.f32.mrf.mxu0
  %v6372 = vadd.f32 %v6309, %v6371
  %6373 = vmatmul.bf16.gmra.mxu0 %v1758
  %v6374 = vpop.f32.mrf.mxu0
  %v6375 = vadd.f32 %v6312, %v6374
  %v6376 = vpop.f32.mrf.mxu0
  %6377 = vdwg.mxu0
  %6378 = vmatpush.bf16.msra.mxu0 %v3454
  %6379 = vmatpush.bf16.msra.mxu0 %v3452
  %6380 = vmatpush.bf16.msra.mxu0 %v3450
  %6381 = vmatpush.bf16.msra.mxu0 %v3448
  %6382 = vmatpush.bf16.msra.mxu0 %v3446
  %6383 = vmatpush.bf16.msra.mxu0 %v3444
  %6384 = vmatpush.bf16.msra.mxu0 %v3442
  %6385 = vmatpush.bf16.msra.mxu0 %v3440
  %6386 = vmatmul.bf16.gmra.mxu0 %v1509
  %v6387 = vpop.f32.mrf.mxu0
  %v6388 = vadd.f32 %v6325, %v6387
  %v6389 = vpop.f32.mrf.mxu0
  %v6390 = vadd.f32 %v6327, %v6389
  %6391 = vmatmul.bf16.gmra.mxu0 %v1534
  %v6392 = vpop.f32.mrf.mxu0
  %v6393 = vadd.f32 %v6330, %v6392
  %v6394 = vpop.f32.mrf.mxu0
  %v6395 = vadd.f32 %v6332, %v6394
  %6396 = vmatmul.bf16.gmra.mxu0 %v1559
  %v6397 = vpop.f32.mrf.mxu0
  %v6398 = vadd.f32 %v6335, %v6397
  %v6399 = vpop.f32.mrf.mxu0
  %v6400 = vadd.f32 %v6337, %v6399
  %6401 = vmatmul.bf16.gmra.mxu0 %v1584
  %v6402 = vpop.f32.mrf.mxu0
  %v6403 = vadd.f32 %v6340, %v6402
  %v6404 = vpop.f32.mrf.mxu0
  %v6405 = vadd.f32 %v6342, %v6404
  %6406 = vmatmul.bf16.gmra.mxu0 %v1609
  %v6407 = vpop.f32.mrf.mxu0
  %v6408 = vadd.f32 %v6345, %v6407
  %v6409 = vpop.f32.mrf.mxu0
  %v6410 = vadd.f32 %v6347, %v6409
  %6411 = vmatmul.bf16.gmra.mxu0 %v1634
  %v6412 = vpop.f32.mrf.mxu0
  %v6413 = vadd.f32 %v6350, %v6412
  %v6414 = vpop.f32.mrf.mxu0
  %v6415 = vadd.f32 %v6352, %v6414
  %6416 = vmatmul.bf16.gmra.mxu0 %v1659
  %v6417 = vpop.f32.mrf.mxu0
  %v6418 = vadd.f32 %v6355, %v6417
  %v6419 = vpop.f32.mrf.mxu0
  %v6420 = vadd.f32 %v6357, %v6419
  %6421 = vmatmul.bf16.gmra.mxu0 %v1684
  %v6422 = vpop.f32.mrf.mxu0
  %v6423 = vadd.f32 %v6360, %v6422
  %v6424 = vpop.f32.mrf.mxu0
  %v6425 = vadd.f32 %v6362, %v6424
  %6426 = vmatmul.bf16.gmra.mxu0 %v1709
  %v6427 = vpop.f32.mrf.mxu0
  %v6428 = vadd.f32 %v6365, %v6427
  %v6429 = vpop.f32.mrf.mxu0
  %v6430 = vadd.f32 %v6367, %v6429
  %6431 = vmatmul.bf16.gmra.mxu0 %v1734
  %v6432 = vpop.f32.mrf.mxu0
  %v6433 = vadd.f32 %v6370, %v6432
  %v6434 = vpop.f32.mrf.mxu0
  %v6435 = vadd.f32 %v6372, %v6434
  %6436 = vmatmul.bf16.gmra.mxu0 %v1759
  %v6437 = vpop.f32.mrf.mxu0
  %v6438 = vadd.f32 %v6375, %v6437
  %v6439 = vpop.f32.mrf.mxu0
  %6440 = vdwg.mxu0
  %6441 = vmatpush.bf16.msra.mxu0 %v3470
  %6442 = vmatpush.bf16.msra.mxu0 %v3468
  %6443 = vmatpush.bf16.msra.mxu0 %v3466
  %6444 = vmatpush.bf16.msra.mxu0 %v3464
  %6445 = vmatpush.bf16.msra.mxu0 %v3462
  %6446 = vmatpush.bf16.msra.mxu0 %v3460
  %6447 = vmatpush.bf16.msra.mxu0 %v3458
  %6448 = vmatpush.bf16.msra.mxu0 %v3456
  %6449 = vmatmul.bf16.gmra.mxu0 %v1510
  %v6450 = vpop.f32.mrf.mxu0
  %v6451 = vadd.f32 %v6388, %v6450
  %v6452 = vpop.f32.mrf.mxu0
  %v6453 = vadd.f32 %v6390, %v6452
  %6454 = vmatmul.bf16.gmra.mxu0 %v1535
  %v6455 = vpop.f32.mrf.mxu0
  %v6456 = vadd.f32 %v6393, %v6455
  %v6457 = vpop.f32.mrf.mxu0
  %v6458 = vadd.f32 %v6395, %v6457
  %6459 = vmatmul.bf16.gmra.mxu0 %v1560
  %v6460 = vpop.f32.mrf.mxu0
  %v6461 = vadd.f32 %v6398, %v6460
  %v6462 = vpop.f32.mrf.mxu0
  %v6463 = vadd.f32 %v6400, %v6462
  %6464 = vmatmul.bf16.gmra.mxu0 %v1585
  %v6465 = vpop.f32.mrf.mxu0
  %v6466 = vadd.f32 %v6403, %v6465
  %v6467 = vpop.f32.mrf.mxu0
  %v6468 = vadd.f32 %v6405, %v6467
  %6469 = vmatmul.bf16.gmra.mxu0 %v1610
  %v6470 = vpop.f32.mrf.mxu0
  %v6471 = vadd.f32 %v6408, %v6470
  %v6472 = vpop.f32.mrf.mxu0
  %v6473 = vadd.f32 %v6410, %v6472
  %6474 = vmatmul.bf16.gmra.mxu0 %v1635
  %v6475 = vpop.f32.mrf.mxu0
  %v6476 = vadd.f32 %v6413, %v6475
  %v6477 = vpop.f32.mrf.mxu0
  %v6478 = vadd.f32 %v6415, %v6477
  %6479 = vmatmul.bf16.gmra.mxu0 %v1660
  %v6480 = vpop.f32.mrf.mxu0
  %v6481 = vadd.f32 %v6418, %v6480
  %v6482 = vpop.f32.mrf.mxu0
  %v6483 = vadd.f32 %v6420, %v6482
  %6484 = vmatmul.bf16.gmra.mxu0 %v1685
  %v6485 = vpop.f32.mrf.mxu0
  %v6486 = vadd.f32 %v6423, %v6485
  %v6487 = vpop.f32.mrf.mxu0
  %v6488 = vadd.f32 %v6425, %v6487
  %6489 = vmatmul.bf16.gmra.mxu0 %v1710
  %v6490 = vpop.f32.mrf.mxu0
  %v6491 = vadd.f32 %v6428, %v6490
  %v6492 = vpop.f32.mrf.mxu0
  %v6493 = vadd.f32 %v6430, %v6492
  %6494 = vmatmul.bf16.gmra.mxu0 %v1735
  %v6495 = vpop.f32.mrf.mxu0
  %v6496 = vadd.f32 %v6433, %v6495
  %v6497 = vpop.f32.mrf.mxu0
  %v6498 = vadd.f32 %v6435, %v6497
  %6499 = vmatmul.bf16.gmra.mxu0 %v1760
  %v6500 = vpop.f32.mrf.mxu0
  %v6501 = vadd.f32 %v6438, %v6500
  %v6502 = vpop.f32.mrf.mxu0
  %6503 = vdwg.mxu0
  %6504 = vmatpush.bf16.msra.mxu0 %v3486
  %6505 = vmatpush.bf16.msra.mxu0 %v3484
  %6506 = vmatpush.bf16.msra.mxu0 %v3482
  %6507 = vmatpush.bf16.msra.mxu0 %v3480
  %6508 = vmatpush.bf16.msra.mxu0 %v3478
  %6509 = vmatpush.bf16.msra.mxu0 %v3476
  %6510 = vmatpush.bf16.msra.mxu0 %v3474
  %6511 = vmatpush.bf16.msra.mxu0 %v3472
  %6512 = vmatmul.bf16.gmra.mxu0 %v1511
  %v6513 = vpop.f32.mrf.mxu0
  %v6514 = vadd.f32 %v6451, %v6513
  %v6515 = vpop.f32.mrf.mxu0
  %v6516 = vadd.f32 %v6453, %v6515
  %6517 = vmatmul.bf16.gmra.mxu0 %v1536
  %v6518 = vpop.f32.mrf.mxu0
  %v6519 = vadd.f32 %v6456, %v6518
  %v6520 = vpop.f32.mrf.mxu0
  %v6521 = vadd.f32 %v6458, %v6520
  %6522 = vmatmul.bf16.gmra.mxu0 %v1561
  %v6523 = vpop.f32.mrf.mxu0
  %v6524 = vadd.f32 %v6461, %v6523
  %v6525 = vpop.f32.mrf.mxu0
  %v6526 = vadd.f32 %v6463, %v6525
  %6527 = vmatmul.bf16.gmra.mxu0 %v1586
  %v6528 = vpop.f32.mrf.mxu0
  %v6529 = vadd.f32 %v6466, %v6528
  %v6530 = vpop.f32.mrf.mxu0
  %v6531 = vadd.f32 %v6468, %v6530
  %6532 = vmatmul.bf16.gmra.mxu0 %v1611
  %v6533 = vpop.f32.mrf.mxu0
  %v6534 = vadd.f32 %v6471, %v6533
  %v6535 = vpop.f32.mrf.mxu0
  %v6536 = vadd.f32 %v6473, %v6535
  %6537 = vmatmul.bf16.gmra.mxu0 %v1636
  %v6538 = vpop.f32.mrf.mxu0
  %v6539 = vadd.f32 %v6476, %v6538
  %v6540 = vpop.f32.mrf.mxu0
  %v6541 = vadd.f32 %v6478, %v6540
  %6542 = vmatmul.bf16.gmra.mxu0 %v1661
  %v6543 = vpop.f32.mrf.mxu0
  %v6544 = vadd.f32 %v6481, %v6543
  %v6545 = vpop.f32.mrf.mxu0
  %v6546 = vadd.f32 %v6483, %v6545
  %6547 = vmatmul.bf16.gmra.mxu0 %v1686
  %v6548 = vpop.f32.mrf.mxu0
  %v6549 = vadd.f32 %v6486, %v6548
  %v6550 = vpop.f32.mrf.mxu0
  %v6551 = vadd.f32 %v6488, %v6550
  %6552 = vmatmul.bf16.gmra.mxu0 %v1711
  %v6553 = vpop.f32.mrf.mxu0
  %v6554 = vadd.f32 %v6491, %v6553
  %v6555 = vpop.f32.mrf.mxu0
  %v6556 = vadd.f32 %v6493, %v6555
  %6557 = vmatmul.bf16.gmra.mxu0 %v1736
  %v6558 = vpop.f32.mrf.mxu0
  %v6559 = vadd.f32 %v6496, %v6558
  %v6560 = vpop.f32.mrf.mxu0
  %v6561 = vadd.f32 %v6498, %v6560
  %6562 = vmatmul.bf16.gmra.mxu0 %v1761
  %v6563 = vpop.f32.mrf.mxu0
  %v6564 = vadd.f32 %v6501, %v6563
  %v6565 = vpop.f32.mrf.mxu0
  %6566 = vdwg.mxu0
  %6567 = vmatpush.bf16.msra.mxu0 %v3502
  %6568 = vmatpush.bf16.msra.mxu0 %v3500
  %6569 = vmatpush.bf16.msra.mxu0 %v3498
  %6570 = vmatpush.bf16.msra.mxu0 %v3496
  %6571 = vmatpush.bf16.msra.mxu0 %v3494
  %6572 = vmatpush.bf16.msra.mxu0 %v3492
  %6573 = vmatpush.bf16.msra.mxu0 %v3490
  %6574 = vmatpush.bf16.msra.mxu0 %v3488
  %6575 = vmatmul.bf16.gmra.mxu0 %v1512
  %v6576 = vpop.f32.mrf.mxu0
  %v6577 = vadd.f32 %v6514, %v6576
  %v6578 = vpop.f32.mrf.mxu0
  %v6579 = vadd.f32 %v6516, %v6578
  %6580 = vmatmul.bf16.gmra.mxu0 %v1537
  %v6581 = vpop.f32.mrf.mxu0
  %v6582 = vadd.f32 %v6519, %v6581
  %v6583 = vpop.f32.mrf.mxu0
  %v6584 = vadd.f32 %v6521, %v6583
  %6585 = vmatmul.bf16.gmra.mxu0 %v1562
  %v6586 = vpop.f32.mrf.mxu0
  %v6587 = vadd.f32 %v6524, %v6586
  %v6588 = vpop.f32.mrf.mxu0
  %v6589 = vadd.f32 %v6526, %v6588
  %6590 = vmatmul.bf16.gmra.mxu0 %v1587
  %v6591 = vpop.f32.mrf.mxu0
  %v6592 = vadd.f32 %v6529, %v6591
  %v6593 = vpop.f32.mrf.mxu0
  %v6594 = vadd.f32 %v6531, %v6593
  %6595 = vmatmul.bf16.gmra.mxu0 %v1612
  %v6596 = vpop.f32.mrf.mxu0
  %v6597 = vadd.f32 %v6534, %v6596
  %v6598 = vpop.f32.mrf.mxu0
  %v6599 = vadd.f32 %v6536, %v6598
  %6600 = vmatmul.bf16.gmra.mxu0 %v1637
  %v6601 = vpop.f32.mrf.mxu0
  %v6602 = vadd.f32 %v6539, %v6601
  %v6603 = vpop.f32.mrf.mxu0
  %v6604 = vadd.f32 %v6541, %v6603
  %6605 = vmatmul.bf16.gmra.mxu0 %v1662
  %v6606 = vpop.f32.mrf.mxu0
  %v6607 = vadd.f32 %v6544, %v6606
  %v6608 = vpop.f32.mrf.mxu0
  %v6609 = vadd.f32 %v6546, %v6608
  %6610 = vmatmul.bf16.gmra.mxu0 %v1687
  %v6611 = vpop.f32.mrf.mxu0
  %v6612 = vadd.f32 %v6549, %v6611
  %v6613 = vpop.f32.mrf.mxu0
  %v6614 = vadd.f32 %v6551, %v6613
  %6615 = vmatmul.bf16.gmra.mxu0 %v1712
  %v6616 = vpop.f32.mrf.mxu0
  %v6617 = vadd.f32 %v6554, %v6616
  %v6618 = vpop.f32.mrf.mxu0
  %v6619 = vadd.f32 %v6556, %v6618
  %6620 = vmatmul.bf16.gmra.mxu0 %v1737
  %v6621 = vpop.f32.mrf.mxu0
  %v6622 = vadd.f32 %v6559, %v6621
  %v6623 = vpop.f32.mrf.mxu0
  %v6624 = vadd.f32 %v6561, %v6623
  %6625 = vmatmul.bf16.gmra.mxu0 %v1762
  %v6626 = vpop.f32.mrf.mxu0
  %v6627 = vadd.f32 %v6564, %v6626
  %v6628 = vpop.f32.mrf.mxu0
  %6629 = vdwg.mxu0
  %6630 = vmatpush.bf16.msra.mxu0 %v3518
  %6631 = vmatpush.bf16.msra.mxu0 %v3516
  %6632 = vmatpush.bf16.msra.mxu0 %v3514
  %6633 = vmatpush.bf16.msra.mxu0 %v3512
  %6634 = vmatpush.bf16.msra.mxu0 %v3510
  %6635 = vmatpush.bf16.msra.mxu0 %v3508
  %6636 = vmatpush.bf16.msra.mxu0 %v3506
  %6637 = vmatpush.bf16.msra.mxu0 %v3504
  %6638 = vmatmul.bf16.gmra.mxu0 %v1513
  %v6639 = vpop.f32.mrf.mxu0
  %v6640 = vadd.f32 %v6577, %v6639
  %v6641 = vpop.f32.mrf.mxu0
  %v6642 = vadd.f32 %v6579, %v6641
  %6643 = vmatmul.bf16.gmra.mxu0 %v1538
  %v6644 = vpop.f32.mrf.mxu0
  %v6645 = vadd.f32 %v6582, %v6644
  %v6646 = vpop.f32.mrf.mxu0
  %v6647 = vadd.f32 %v6584, %v6646
  %6648 = vmatmul.bf16.gmra.mxu0 %v1563
  %v6649 = vpop.f32.mrf.mxu0
  %v6650 = vadd.f32 %v6587, %v6649
  %v6651 = vpop.f32.mrf.mxu0
  %v6652 = vadd.f32 %v6589, %v6651
  %6653 = vmatmul.bf16.gmra.mxu0 %v1588
  %v6654 = vpop.f32.mrf.mxu0
  %v6655 = vadd.f32 %v6592, %v6654
  %v6656 = vpop.f32.mrf.mxu0
  %v6657 = vadd.f32 %v6594, %v6656
  %6658 = vmatmul.bf16.gmra.mxu0 %v1613
  %v6659 = vpop.f32.mrf.mxu0
  %v6660 = vadd.f32 %v6597, %v6659
  %v6661 = vpop.f32.mrf.mxu0
  %v6662 = vadd.f32 %v6599, %v6661
  %6663 = vmatmul.bf16.gmra.mxu0 %v1638
  %v6664 = vpop.f32.mrf.mxu0
  %v6665 = vadd.f32 %v6602, %v6664
  %v6666 = vpop.f32.mrf.mxu0
  %v6667 = vadd.f32 %v6604, %v6666
  %6668 = vmatmul.bf16.gmra.mxu0 %v1663
  %v6669 = vpop.f32.mrf.mxu0
  %v6670 = vadd.f32 %v6607, %v6669
  %v6671 = vpop.f32.mrf.mxu0
  %v6672 = vadd.f32 %v6609, %v6671
  %6673 = vmatmul.bf16.gmra.mxu0 %v1688
  %v6674 = vpop.f32.mrf.mxu0
  %v6675 = vadd.f32 %v6612, %v6674
  %v6676 = vpop.f32.mrf.mxu0
  %v6677 = vadd.f32 %v6614, %v6676
  %6678 = vmatmul.bf16.gmra.mxu0 %v1713
  %v6679 = vpop.f32.mrf.mxu0
  %v6680 = vadd.f32 %v6617, %v6679
  %v6681 = vpop.f32.mrf.mxu0
  %v6682 = vadd.f32 %v6619, %v6681
  %6683 = vmatmul.bf16.gmra.mxu0 %v1738
  %v6684 = vpop.f32.mrf.mxu0
  %v6685 = vadd.f32 %v6622, %v6684
  %v6686 = vpop.f32.mrf.mxu0
  %v6687 = vadd.f32 %v6624, %v6686
  %6688 = vmatmul.bf16.gmra.mxu0 %v1763
  %v6689 = vpop.f32.mrf.mxu0
  %v6690 = vadd.f32 %v6627, %v6689
  %v6691 = vpop.f32.mrf.mxu0
  %6692 = vdwg.mxu0
  %6693 = vmatpush.bf16.msra.mxu0 %v3534
  %6694 = vmatpush.bf16.msra.mxu0 %v3532
  %6695 = vmatpush.bf16.msra.mxu0 %v3530
  %6696 = vmatpush.bf16.msra.mxu0 %v3528
  %6697 = vmatpush.bf16.msra.mxu0 %v3526
  %6698 = vmatpush.bf16.msra.mxu0 %v3524
  %6699 = vmatpush.bf16.msra.mxu0 %v3522
  %6700 = vmatpush.bf16.msra.mxu0 %v3520
  %6701 = vmatmul.bf16.gmra.mxu0 %v1514
  %v6702 = vpop.f32.mrf.mxu0
  %v6703 = vadd.f32 %v6640, %v6702
  %v6704 = vpop.f32.mrf.mxu0
  %v6705 = vadd.f32 %v6642, %v6704
  %6706 = vmatmul.bf16.gmra.mxu0 %v1539
  %v6707 = vpop.f32.mrf.mxu0
  %v6708 = vadd.f32 %v6645, %v6707
  %v6709 = vpop.f32.mrf.mxu0
  %v6710 = vadd.f32 %v6647, %v6709
  %6711 = vmatmul.bf16.gmra.mxu0 %v1564
  %v6712 = vpop.f32.mrf.mxu0
  %v6713 = vadd.f32 %v6650, %v6712
  %v6714 = vpop.f32.mrf.mxu0
  %v6715 = vadd.f32 %v6652, %v6714
  %6716 = vmatmul.bf16.gmra.mxu0 %v1589
  %v6717 = vpop.f32.mrf.mxu0
  %v6718 = vadd.f32 %v6655, %v6717
  %v6719 = vpop.f32.mrf.mxu0
  %v6720 = vadd.f32 %v6657, %v6719
  %6721 = vmatmul.bf16.gmra.mxu0 %v1614
  %v6722 = vpop.f32.mrf.mxu0
  %v6723 = vadd.f32 %v6660, %v6722
  %v6724 = vpop.f32.mrf.mxu0
  %v6725 = vadd.f32 %v6662, %v6724
  %6726 = vmatmul.bf16.gmra.mxu0 %v1639
  %v6727 = vpop.f32.mrf.mxu0
  %v6728 = vadd.f32 %v6665, %v6727
  %v6729 = vpop.f32.mrf.mxu0
  %v6730 = vadd.f32 %v6667, %v6729
  %6731 = vmatmul.bf16.gmra.mxu0 %v1664
  %v6732 = vpop.f32.mrf.mxu0
  %v6733 = vadd.f32 %v6670, %v6732
  %v6734 = vpop.f32.mrf.mxu0
  %v6735 = vadd.f32 %v6672, %v6734
  %6736 = vmatmul.bf16.gmra.mxu0 %v1689
  %v6737 = vpop.f32.mrf.mxu0
  %v6738 = vadd.f32 %v6675, %v6737
  %v6739 = vpop.f32.mrf.mxu0
  %v6740 = vadd.f32 %v6677, %v6739
  %6741 = vmatmul.bf16.gmra.mxu0 %v1714
  %v6742 = vpop.f32.mrf.mxu0
  %v6743 = vadd.f32 %v6680, %v6742
  %v6744 = vpop.f32.mrf.mxu0
  %v6745 = vadd.f32 %v6682, %v6744
  %6746 = vmatmul.bf16.gmra.mxu0 %v1739
  %v6747 = vpop.f32.mrf.mxu0
  %v6748 = vadd.f32 %v6685, %v6747
  %v6749 = vpop.f32.mrf.mxu0
  %v6750 = vadd.f32 %v6687, %v6749
  %6751 = vmatmul.bf16.gmra.mxu0 %v1764
  %v6752 = vpop.f32.mrf.mxu0
  %v6753 = vadd.f32 %v6690, %v6752
  %v6754 = vpop.f32.mrf.mxu0
  %6755 = vdwg.mxu0
  %6756 = vmatpush.bf16.msra.mxu0 %v3550
  %6757 = vmatpush.bf16.msra.mxu0 %v3548
  %6758 = vmatpush.bf16.msra.mxu0 %v3546
  %6759 = vmatpush.bf16.msra.mxu0 %v3544
  %6760 = vmatpush.bf16.msra.mxu0 %v3542
  %6761 = vmatpush.bf16.msra.mxu0 %v3540
  %6762 = vmatpush.bf16.msra.mxu0 %v3538
  %6763 = vmatpush.bf16.msra.mxu0 %v3536
  %6764 = vmatmul.bf16.gmra.mxu0 %v1515
  %v6765 = vpop.f32.mrf.mxu0
  %v6766 = vadd.f32 %v6703, %v6765
  %v6767 = vpop.f32.mrf.mxu0
  %v6768 = vadd.f32 %v6705, %v6767
  %6769 = vmatmul.bf16.gmra.mxu0 %v1540
  %v6770 = vpop.f32.mrf.mxu0
  %v6771 = vadd.f32 %v6708, %v6770
  %v6772 = vpop.f32.mrf.mxu0
  %v6773 = vadd.f32 %v6710, %v6772
  %6774 = vmatmul.bf16.gmra.mxu0 %v1565
  %v6775 = vpop.f32.mrf.mxu0
  %v6776 = vadd.f32 %v6713, %v6775
  %v6777 = vpop.f32.mrf.mxu0
  %v6778 = vadd.f32 %v6715, %v6777
  %6779 = vmatmul.bf16.gmra.mxu0 %v1590
  %v6780 = vpop.f32.mrf.mxu0
  %v6781 = vadd.f32 %v6718, %v6780
  %v6782 = vpop.f32.mrf.mxu0
  %v6783 = vadd.f32 %v6720, %v6782
  %6784 = vmatmul.bf16.gmra.mxu0 %v1615
  %v6785 = vpop.f32.mrf.mxu0
  %v6786 = vadd.f32 %v6723, %v6785
  %v6787 = vpop.f32.mrf.mxu0
  %v6788 = vadd.f32 %v6725, %v6787
  %6789 = vmatmul.bf16.gmra.mxu0 %v1640
  %v6790 = vpop.f32.mrf.mxu0
  %v6791 = vadd.f32 %v6728, %v6790
  %v6792 = vpop.f32.mrf.mxu0
  %v6793 = vadd.f32 %v6730, %v6792
  %6794 = vmatmul.bf16.gmra.mxu0 %v1665
  %v6795 = vpop.f32.mrf.mxu0
  %v6796 = vadd.f32 %v6733, %v6795
  %v6797 = vpop.f32.mrf.mxu0
  %v6798 = vadd.f32 %v6735, %v6797
  %6799 = vmatmul.bf16.gmra.mxu0 %v1690
  %v6800 = vpop.f32.mrf.mxu0
  %v6801 = vadd.f32 %v6738, %v6800
  %v6802 = vpop.f32.mrf.mxu0
  %v6803 = vadd.f32 %v6740, %v6802
  %6804 = vmatmul.bf16.gmra.mxu0 %v1715
  %v6805 = vpop.f32.mrf.mxu0
  %v6806 = vadd.f32 %v6743, %v6805
  %v6807 = vpop.f32.mrf.mxu0
  %v6808 = vadd.f32 %v6745, %v6807
  %6809 = vmatmul.bf16.gmra.mxu0 %v1740
  %v6810 = vpop.f32.mrf.mxu0
  %v6811 = vadd.f32 %v6748, %v6810
  %v6812 = vpop.f32.mrf.mxu0
  %v6813 = vadd.f32 %v6750, %v6812
  %6814 = vmatmul.bf16.gmra.mxu0 %v1765
  %v6815 = vpop.f32.mrf.mxu0
  %v6816 = vadd.f32 %v6753, %v6815
  %v6817 = vpop.f32.mrf.mxu0
  %6818 = vdwg.mxu0
  %6819 = vmatpush.bf16.msra.mxu0 %v3566
  %6820 = vmatpush.bf16.msra.mxu0 %v3564
  %6821 = vmatpush.bf16.msra.mxu0 %v3562
  %6822 = vmatpush.bf16.msra.mxu0 %v3560
  %6823 = vmatpush.bf16.msra.mxu0 %v3558
  %6824 = vmatpush.bf16.msra.mxu0 %v3556
  %6825 = vmatpush.bf16.msra.mxu0 %v3554
  %6826 = vmatpush.bf16.msra.mxu0 %v3552
  %6827 = vmatmul.bf16.gmra.mxu0 %v1516
  %v6828 = vpop.f32.mrf.mxu0
  %v6829 = vadd.f32 %v6766, %v6828
  %v6830 = vpop.f32.mrf.mxu0
  %v6831 = vadd.f32 %v6768, %v6830
  %6832 = vmatmul.bf16.gmra.mxu0 %v1541
  %v6833 = vpop.f32.mrf.mxu0
  %v6834 = vadd.f32 %v6771, %v6833
  %v6835 = vpop.f32.mrf.mxu0
  %v6836 = vadd.f32 %v6773, %v6835
  %6837 = vmatmul.bf16.gmra.mxu0 %v1566
  %v6838 = vpop.f32.mrf.mxu0
  %v6839 = vadd.f32 %v6776, %v6838
  %v6840 = vpop.f32.mrf.mxu0
  %v6841 = vadd.f32 %v6778, %v6840
  %6842 = vmatmul.bf16.gmra.mxu0 %v1591
  %v6843 = vpop.f32.mrf.mxu0
  %v6844 = vadd.f32 %v6781, %v6843
  %v6845 = vpop.f32.mrf.mxu0
  %v6846 = vadd.f32 %v6783, %v6845
  %6847 = vmatmul.bf16.gmra.mxu0 %v1616
  %v6848 = vpop.f32.mrf.mxu0
  %v6849 = vadd.f32 %v6786, %v6848
  %v6850 = vpop.f32.mrf.mxu0
  %v6851 = vadd.f32 %v6788, %v6850
  %6852 = vmatmul.bf16.gmra.mxu0 %v1641
  %v6853 = vpop.f32.mrf.mxu0
  %v6854 = vadd.f32 %v6791, %v6853
  %v6855 = vpop.f32.mrf.mxu0
  %v6856 = vadd.f32 %v6793, %v6855
  %6857 = vmatmul.bf16.gmra.mxu0 %v1666
  %v6858 = vpop.f32.mrf.mxu0
  %v6859 = vadd.f32 %v6796, %v6858
  %v6860 = vpop.f32.mrf.mxu0
  %v6861 = vadd.f32 %v6798, %v6860
  %6862 = vmatmul.bf16.gmra.mxu0 %v1691
  %v6863 = vpop.f32.mrf.mxu0
  %v6864 = vadd.f32 %v6801, %v6863
  %v6865 = vpop.f32.mrf.mxu0
  %v6866 = vadd.f32 %v6803, %v6865
  %6867 = vmatmul.bf16.gmra.mxu0 %v1716
  %v6868 = vpop.f32.mrf.mxu0
  %v6869 = vadd.f32 %v6806, %v6868
  %v6870 = vpop.f32.mrf.mxu0
  %v6871 = vadd.f32 %v6808, %v6870
  %6872 = vmatmul.bf16.gmra.mxu0 %v1741
  %v6873 = vpop.f32.mrf.mxu0
  %v6874 = vadd.f32 %v6811, %v6873
  %v6875 = vpop.f32.mrf.mxu0
  %v6876 = vadd.f32 %v6813, %v6875
  %6877 = vmatmul.bf16.gmra.mxu0 %v1766
  %v6878 = vpop.f32.mrf.mxu0
  %v6879 = vadd.f32 %v6816, %v6878
  %v6880 = vpop.f32.mrf.mxu0
  %6881 = vdwg.mxu0
  %6882 = vmatpush.bf16.msra.mxu0 %v3582
  %6883 = vmatpush.bf16.msra.mxu0 %v3580
  %6884 = vmatpush.bf16.msra.mxu0 %v3578
  %6885 = vmatpush.bf16.msra.mxu0 %v3576
  %6886 = vmatpush.bf16.msra.mxu0 %v3574
  %6887 = vmatpush.bf16.msra.mxu0 %v3572
  %6888 = vmatpush.bf16.msra.mxu0 %v3570
  %6889 = vmatpush.bf16.msra.mxu0 %v3568
  %6890 = vmatmul.bf16.gmra.mxu0 %v1517
  %v6891 = vpop.f32.mrf.mxu0
  %v6892 = vadd.f32 %v6829, %v6891
  %v6893 = vpop.f32.mrf.mxu0
  %v6894 = vadd.f32 %v6831, %v6893
  %6895 = vmatmul.bf16.gmra.mxu0 %v1542
  %v6896 = vpop.f32.mrf.mxu0
  %v6897 = vadd.f32 %v6834, %v6896
  %v6898 = vpop.f32.mrf.mxu0
  %v6899 = vadd.f32 %v6836, %v6898
  %6900 = vmatmul.bf16.gmra.mxu0 %v1567
  %v6901 = vpop.f32.mrf.mxu0
  %v6902 = vadd.f32 %v6839, %v6901
  %v6903 = vpop.f32.mrf.mxu0
  %v6904 = vadd.f32 %v6841, %v6903
  %6905 = vmatmul.bf16.gmra.mxu0 %v1592
  %v6906 = vpop.f32.mrf.mxu0
  %v6907 = vadd.f32 %v6844, %v6906
  %v6908 = vpop.f32.mrf.mxu0
  %v6909 = vadd.f32 %v6846, %v6908
  %6910 = vmatmul.bf16.gmra.mxu0 %v1617
  %v6911 = vpop.f32.mrf.mxu0
  %v6912 = vadd.f32 %v6849, %v6911
  %v6913 = vpop.f32.mrf.mxu0
  %v6914 = vadd.f32 %v6851, %v6913
  %6915 = vmatmul.bf16.gmra.mxu0 %v1642
  %v6916 = vpop.f32.mrf.mxu0
  %v6917 = vadd.f32 %v6854, %v6916
  %v6918 = vpop.f32.mrf.mxu0
  %v6919 = vadd.f32 %v6856, %v6918
  %6920 = vmatmul.bf16.gmra.mxu0 %v1667
  %v6921 = vpop.f32.mrf.mxu0
  %v6922 = vadd.f32 %v6859, %v6921
  %v6923 = vpop.f32.mrf.mxu0
  %v6924 = vadd.f32 %v6861, %v6923
  %6925 = vmatmul.bf16.gmra.mxu0 %v1692
  %v6926 = vpop.f32.mrf.mxu0
  %v6927 = vadd.f32 %v6864, %v6926
  %v6928 = vpop.f32.mrf.mxu0
  %v6929 = vadd.f32 %v6866, %v6928
  %6930 = vmatmul.bf16.gmra.mxu0 %v1717
  %v6931 = vpop.f32.mrf.mxu0
  %v6932 = vadd.f32 %v6869, %v6931
  %v6933 = vpop.f32.mrf.mxu0
  %v6934 = vadd.f32 %v6871, %v6933
  %6935 = vmatmul.bf16.gmra.mxu0 %v1742
  %v6936 = vpop.f32.mrf.mxu0
  %v6937 = vadd.f32 %v6874, %v6936
  %v6938 = vpop.f32.mrf.mxu0
  %v6939 = vadd.f32 %v6876, %v6938
  %6940 = vmatmul.bf16.gmra.mxu0 %v1767
  %v6941 = vpop.f32.mrf.mxu0
  %v6942 = vadd.f32 %v6879, %v6941
  %v6943 = vpop.f32.mrf.mxu0
  %6944 = vdwg.mxu0
  %6945 = vmatpush.bf16.msra.mxu0 %v3598
  %6946 = vmatpush.bf16.msra.mxu0 %v3596
  %6947 = vmatpush.bf16.msra.mxu0 %v3594
  %6948 = vmatpush.bf16.msra.mxu0 %v3592
  %6949 = vmatpush.bf16.msra.mxu0 %v3590
  %6950 = vmatpush.bf16.msra.mxu0 %v3588
  %6951 = vmatpush.bf16.msra.mxu0 %v3586
  %6952 = vmatpush.bf16.msra.mxu0 %v3584
  %6953 = vmatmul.bf16.gmra.mxu0 %v1518
  %v6954 = vpop.f32.mrf.mxu0
  %v6955 = vadd.f32 %v6892, %v6954
  %v6956 = vpop.f32.mrf.mxu0
  %v6957 = vadd.f32 %v6894, %v6956
  %6958 = vmatmul.bf16.gmra.mxu0 %v1543
  %v6959 = vpop.f32.mrf.mxu0
  %v6960 = vadd.f32 %v6897, %v6959
  %v6961 = vpop.f32.mrf.mxu0
  %v6962 = vadd.f32 %v6899, %v6961
  %6963 = vmatmul.bf16.gmra.mxu0 %v1568
  %v6964 = vpop.f32.mrf.mxu0
  %v6965 = vadd.f32 %v6902, %v6964
  %v6966 = vpop.f32.mrf.mxu0
  %v6967 = vadd.f32 %v6904, %v6966
  %6968 = vmatmul.bf16.gmra.mxu0 %v1593
  %v6969 = vpop.f32.mrf.mxu0
  %v6970 = vadd.f32 %v6907, %v6969
  %v6971 = vpop.f32.mrf.mxu0
  %v6972 = vadd.f32 %v6909, %v6971
  %6973 = vmatmul.bf16.gmra.mxu0 %v1618
  %v6974 = vpop.f32.mrf.mxu0
  %v6975 = vadd.f32 %v6912, %v6974
  %v6976 = vpop.f32.mrf.mxu0
  %v6977 = vadd.f32 %v6914, %v6976
  %6978 = vmatmul.bf16.gmra.mxu0 %v1643
  %v6979 = vpop.f32.mrf.mxu0
  %v6980 = vadd.f32 %v6917, %v6979
  %v6981 = vpop.f32.mrf.mxu0
  %v6982 = vadd.f32 %v6919, %v6981
  %6983 = vmatmul.bf16.gmra.mxu0 %v1668
  %v6984 = vpop.f32.mrf.mxu0
  %v6985 = vadd.f32 %v6922, %v6984
  %v6986 = vpop.f32.mrf.mxu0
  %v6987 = vadd.f32 %v6924, %v6986
  %6988 = vmatmul.bf16.gmra.mxu0 %v1693
  %v6989 = vpop.f32.mrf.mxu0
  %v6990 = vadd.f32 %v6927, %v6989
  %v6991 = vpop.f32.mrf.mxu0
  %v6992 = vadd.f32 %v6929, %v6991
  %6993 = vmatmul.bf16.gmra.mxu0 %v1718
  %v6994 = vpop.f32.mrf.mxu0
  %v6995 = vadd.f32 %v6932, %v6994
  %v6996 = vpop.f32.mrf.mxu0
  %v6997 = vadd.f32 %v6934, %v6996
  %6998 = vmatmul.bf16.gmra.mxu0 %v1743
  %v6999 = vpop.f32.mrf.mxu0
  %v7000 = vadd.f32 %v6937, %v6999
  %v7001 = vpop.f32.mrf.mxu0
  %v7002 = vadd.f32 %v6939, %v7001
  %7003 = vmatmul.bf16.gmra.mxu0 %v1768
  %v7004 = vpop.f32.mrf.mxu0
  %v7005 = vadd.f32 %v6942, %v7004
  %v7006 = vpop.f32.mrf.mxu0
  %7007 = vdwg.mxu0
  %7008 = vmatpush.bf16.msra.mxu0 %v3614
  %7009 = vmatpush.bf16.msra.mxu0 %v3612
  %7010 = vmatpush.bf16.msra.mxu0 %v3610
  %7011 = vmatpush.bf16.msra.mxu0 %v3608
  %7012 = vmatpush.bf16.msra.mxu0 %v3606
  %7013 = vmatpush.bf16.msra.mxu0 %v3604
  %7014 = vmatpush.bf16.msra.mxu0 %v3602
  %7015 = vmatpush.bf16.msra.mxu0 %v3600
  %7016 = vmatmul.bf16.gmra.mxu0 %v1519
  %v7017 = vpop.f32.mrf.mxu0
  %v7018 = vadd.f32 %v6955, %v7017
  %v7019 = vpop.f32.mrf.mxu0
  %v7020 = vadd.f32 %v6957, %v7019
  %7021 = vmatmul.bf16.gmra.mxu0 %v1544
  %v7022 = vpop.f32.mrf.mxu0
  %v7023 = vadd.f32 %v6960, %v7022
  %v7024 = vpop.f32.mrf.mxu0
  %v7025 = vadd.f32 %v6962, %v7024
  %7026 = vmatmul.bf16.gmra.mxu0 %v1569
  %v7027 = vpop.f32.mrf.mxu0
  %v7028 = vadd.f32 %v6965, %v7027
  %v7029 = vpop.f32.mrf.mxu0
  %v7030 = vadd.f32 %v6967, %v7029
  %7031 = vmatmul.bf16.gmra.mxu0 %v1594
  %v7032 = vpop.f32.mrf.mxu0
  %v7033 = vadd.f32 %v6970, %v7032
  %v7034 = vpop.f32.mrf.mxu0
  %v7035 = vadd.f32 %v6972, %v7034
  %7036 = vmatmul.bf16.gmra.mxu0 %v1619
  %v7037 = vpop.f32.mrf.mxu0
  %v7038 = vadd.f32 %v6975, %v7037
  %v7039 = vpop.f32.mrf.mxu0
  %v7040 = vadd.f32 %v6977, %v7039
  %7041 = vmatmul.bf16.gmra.mxu0 %v1644
  %v7042 = vpop.f32.mrf.mxu0
  %v7043 = vadd.f32 %v6980, %v7042
  %v7044 = vpop.f32.mrf.mxu0
  %v7045 = vadd.f32 %v6982, %v7044
  %7046 = vmatmul.bf16.gmra.mxu0 %v1669
  %v7047 = vpop.f32.mrf.mxu0
  %v7048 = vadd.f32 %v6985, %v7047
  %v7049 = vpop.f32.mrf.mxu0
  %v7050 = vadd.f32 %v6987, %v7049
  %7051 = vmatmul.bf16.gmra.mxu0 %v1694
  %v7052 = vpop.f32.mrf.mxu0
  %v7053 = vadd.f32 %v6990, %v7052
  %v7054 = vpop.f32.mrf.mxu0
  %v7055 = vadd.f32 %v6992, %v7054
  %7056 = vmatmul.bf16.gmra.mxu0 %v1719
  %v7057 = vpop.f32.mrf.mxu0
  %v7058 = vadd.f32 %v6995, %v7057
  %v7059 = vpop.f32.mrf.mxu0
  %v7060 = vadd.f32 %v6997, %v7059
  %7061 = vmatmul.bf16.gmra.mxu0 %v1744
  %v7062 = vpop.f32.mrf.mxu0
  %v7063 = vadd.f32 %v7000, %v7062
  %v7064 = vpop.f32.mrf.mxu0
  %v7065 = vadd.f32 %v7002, %v7064
  %7066 = vmatmul.bf16.gmra.mxu0 %v1769
  %v7067 = vpop.f32.mrf.mxu0
  %v7068 = vadd.f32 %v7005, %v7067
  %v7069 = vpop.f32.mrf.mxu0
  %7070 = vdwg.mxu0
  %7071 = vmatpush.bf16.msra.mxu0 %v3630
  %7072 = vmatpush.bf16.msra.mxu0 %v3628
  %7073 = vmatpush.bf16.msra.mxu0 %v3626
  %7074 = vmatpush.bf16.msra.mxu0 %v3624
  %7075 = vmatpush.bf16.msra.mxu0 %v3622
  %7076 = vmatpush.bf16.msra.mxu0 %v3620
  %7077 = vmatpush.bf16.msra.mxu0 %v3618
  %7078 = vmatpush.bf16.msra.mxu0 %v3616
  %7079 = vmatmul.bf16.gmra.mxu0 %v1520
  %v7080 = vpop.f32.mrf.mxu0
  %v7081 = vadd.f32 %v7018, %v7080
  %v7082 = vpop.f32.mrf.mxu0
  %v7083 = vadd.f32 %v7020, %v7082
  %7084 = vmatmul.bf16.gmra.mxu0 %v1545
  %v7085 = vpop.f32.mrf.mxu0
  %v7086 = vadd.f32 %v7023, %v7085
  %v7087 = vpop.f32.mrf.mxu0
  %v7088 = vadd.f32 %v7025, %v7087
  %7089 = vmatmul.bf16.gmra.mxu0 %v1570
  %v7090 = vpop.f32.mrf.mxu0
  %v7091 = vadd.f32 %v7028, %v7090
  %v7092 = vpop.f32.mrf.mxu0
  %v7093 = vadd.f32 %v7030, %v7092
  %7094 = vmatmul.bf16.gmra.mxu0 %v1595
  %v7095 = vpop.f32.mrf.mxu0
  %v7096 = vadd.f32 %v7033, %v7095
  %v7097 = vpop.f32.mrf.mxu0
  %v7098 = vadd.f32 %v7035, %v7097
  %7099 = vmatmul.bf16.gmra.mxu0 %v1620
  %v7100 = vpop.f32.mrf.mxu0
  %v7101 = vadd.f32 %v7038, %v7100
  %v7102 = vpop.f32.mrf.mxu0
  %v7103 = vadd.f32 %v7040, %v7102
  %7104 = vmatmul.bf16.gmra.mxu0 %v1645
  %v7105 = vpop.f32.mrf.mxu0
  %v7106 = vadd.f32 %v7043, %v7105
  %v7107 = vpop.f32.mrf.mxu0
  %v7108 = vadd.f32 %v7045, %v7107
  %7109 = vmatmul.bf16.gmra.mxu0 %v1670
  %v7110 = vpop.f32.mrf.mxu0
  %v7111 = vadd.f32 %v7048, %v7110
  %v7112 = vpop.f32.mrf.mxu0
  %v7113 = vadd.f32 %v7050, %v7112
  %7114 = vmatmul.bf16.gmra.mxu0 %v1695
  %v7115 = vpop.f32.mrf.mxu0
  %v7116 = vadd.f32 %v7053, %v7115
  %v7117 = vpop.f32.mrf.mxu0
  %v7118 = vadd.f32 %v7055, %v7117
  %7119 = vmatmul.bf16.gmra.mxu0 %v1720
  %v7120 = vpop.f32.mrf.mxu0
  %v7121 = vadd.f32 %v7058, %v7120
  %v7122 = vpop.f32.mrf.mxu0
  %v7123 = vadd.f32 %v7060, %v7122
  %7124 = vmatmul.bf16.gmra.mxu0 %v1745
  %v7125 = vpop.f32.mrf.mxu0
  %v7126 = vadd.f32 %v7063, %v7125
  %v7127 = vpop.f32.mrf.mxu0
  %v7128 = vadd.f32 %v7065, %v7127
  %7129 = vmatmul.bf16.gmra.mxu0 %v1770
  %v7130 = vpop.f32.mrf.mxu0
  %v7131 = vadd.f32 %v7068, %v7130
  %v7132 = vpop.f32.mrf.mxu0
  %7133 = vdwg.mxu0
  %7134 = vmatpush.bf16.msra.mxu0 %v3646
  %7135 = vmatpush.bf16.msra.mxu0 %v3644
  %7136 = vmatpush.bf16.msra.mxu0 %v3642
  %7137 = vmatpush.bf16.msra.mxu0 %v3640
  %7138 = vmatpush.bf16.msra.mxu0 %v3638
  %7139 = vmatpush.bf16.msra.mxu0 %v3636
  %7140 = vmatpush.bf16.msra.mxu0 %v3634
  %7141 = vmatpush.bf16.msra.mxu0 %v3632
  %7142 = vmatmul.bf16.gmra.mxu0 %v1521
  %v7143 = vpop.f32.mrf.mxu0
  %v7144 = vadd.f32 %v7081, %v7143
  %v7145 = vpop.f32.mrf.mxu0
  %v7146 = vadd.f32 %v7083, %v7145
  %7147 = vmatmul.bf16.gmra.mxu0 %v1546
  %v7148 = vpop.f32.mrf.mxu0
  %v7149 = vadd.f32 %v7086, %v7148
  %v7150 = vpop.f32.mrf.mxu0
  %v7151 = vadd.f32 %v7088, %v7150
  %7152 = vmatmul.bf16.gmra.mxu0 %v1571
  %v7153 = vpop.f32.mrf.mxu0
  %v7154 = vadd.f32 %v7091, %v7153
  %v7155 = vpop.f32.mrf.mxu0
  %v7156 = vadd.f32 %v7093, %v7155
  %7157 = vmatmul.bf16.gmra.mxu0 %v1596
  %v7158 = vpop.f32.mrf.mxu0
  %v7159 = vadd.f32 %v7096, %v7158
  %v7160 = vpop.f32.mrf.mxu0
  %v7161 = vadd.f32 %v7098, %v7160
  %7162 = vmatmul.bf16.gmra.mxu0 %v1621
  %v7163 = vpop.f32.mrf.mxu0
  %v7164 = vadd.f32 %v7101, %v7163
  %v7165 = vpop.f32.mrf.mxu0
  %v7166 = vadd.f32 %v7103, %v7165
  %7167 = vmatmul.bf16.gmra.mxu0 %v1646
  %v7168 = vpop.f32.mrf.mxu0
  %v7169 = vadd.f32 %v7106, %v7168
  %v7170 = vpop.f32.mrf.mxu0
  %v7171 = vadd.f32 %v7108, %v7170
  %7172 = vmatmul.bf16.gmra.mxu0 %v1671
  %v7173 = vpop.f32.mrf.mxu0
  %v7174 = vadd.f32 %v7111, %v7173
  %v7175 = vpop.f32.mrf.mxu0
  %v7176 = vadd.f32 %v7113, %v7175
  %7177 = vmatmul.bf16.gmra.mxu0 %v1696
  %v7178 = vpop.f32.mrf.mxu0
  %v7179 = vadd.f32 %v7116, %v7178
  %v7180 = vpop.f32.mrf.mxu0
  %v7181 = vadd.f32 %v7118, %v7180
  %7182 = vmatmul.bf16.gmra.mxu0 %v1721
  %v7183 = vpop.f32.mrf.mxu0
  %v7184 = vadd.f32 %v7121, %v7183
  %v7185 = vpop.f32.mrf.mxu0
  %v7186 = vadd.f32 %v7123, %v7185
  %7187 = vmatmul.bf16.gmra.mxu0 %v1746
  %v7188 = vpop.f32.mrf.mxu0
  %v7189 = vadd.f32 %v7126, %v7188
  %v7190 = vpop.f32.mrf.mxu0
  %v7191 = vadd.f32 %v7128, %v7190
  %7192 = vmatmul.bf16.gmra.mxu0 %v1771
  %v7193 = vpop.f32.mrf.mxu0
  %v7194 = vadd.f32 %v7131, %v7193
  %v7195 = vpop.f32.mrf.mxu0
  %7196 = vdwg.mxu0
  %v7197 = vmax.f32 %v5569, 0.0
  %v7198 = vmax.f32 %v7144, 0.0
  %v7199 = vmax.f32 %v5571, 0.0
  %v7200 = vmax.f32 %v7146, 0.0
  %v7201 = vmax.f32 %v5574, 0.0
  %v7202 = vmax.f32 %v7149, 0.0
  %v7203 = vmax.f32 %v5576, 0.0
  %v7204 = vmax.f32 %v7151, 0.0
  %v7205 = vmax.f32 %v5579, 0.0
  %v7206 = vmax.f32 %v7154, 0.0
  %v7207 = vmax.f32 %v5581, 0.0
  %v7208 = vmax.f32 %v7156, 0.0
  %v7209 = vmax.f32 %v5584, 0.0
  %v7210 = vmax.f32 %v7159, 0.0
  %v7211 = vmax.f32 %v5586, 0.0
  %v7212 = vmax.f32 %v7161, 0.0
  %v7213 = vmax.f32 %v5589, 0.0
  %v7214 = vmax.f32 %v7164, 0.0
  %v7215 = vmax.f32 %v5591, 0.0
  %v7216 = vmax.f32 %v7166, 0.0
  %v7217 = vmax.f32 %v5594, 0.0
  %v7218 = vmax.f32 %v7169, 0.0
  %v7219 = vmax.f32 %v5596, 0.0
  %v7220 = vmax.f32 %v7171, 0.0
  %v7221 = vmax.f32 %v5599, 0.0
  %v7222 = vmax.f32 %v7174, 0.0
  %v7223 = vmax.f32 %v5601, 0.0
  %v7224 = vmax.f32 %v7176, 0.0
  %v7225 = vmax.f32 %v5604, 0.0
  %v7226 = vmax.f32 %v7179, 0.0
  %v7227 = vmax.f32 %v5606, 0.0
  %v7228 = vmax.f32 %v7181, 0.0
  %v7229 = vmax.f32 %v5609, 0.0
  %v7230 = vmax.f32 %v7184, 0.0
  %v7231 = vmax.f32 %v5611, 0.0
  %v7232 = vmax.f32 %v7186, 0.0
  %v7233 = vmax.f32 %v5614, 0.0
  %v7234 = vmax.f32 %v7189, 0.0
  %v7235 = vmax.f32 %v5616, 0.0
  %v7236 = vmax.f32 %v7191, 0.0
  %v7237 = vmax.f32 %v5619, 0.0
  %v7238 = vmax.f32 %v7194, 0.0
  %v7239 = vpack.c.bf16 %v7199, %v7197
  %v7240 = vpack.c.bf16 %v7200, %v7198
  %v7241 = vpack.c.bf16 %v7203, %v7201
  %v7242 = vpack.c.bf16 %v7204, %v7202
  %v7243 = vpack.c.bf16 %v7207, %v7205
  %v7244 = vpack.c.bf16 %v7208, %v7206
  %v7245 = vpack.c.bf16 %v7211, %v7209
  %v7246 = vpack.c.bf16 %v7212, %v7210
  %v7247 = vpack.c.bf16 %v7215, %v7213
  %v7248 = vpack.c.bf16 %v7216, %v7214
  %v7249 = vpack.c.bf16 %v7219, %v7217
  %v7250 = vpack.c.bf16 %v7220, %v7218
  %v7251 = vpack.c.bf16 %v7223, %v7221
  %v7252 = vpack.c.bf16 %v7224, %v7222
  %v7253 = vpack.c.bf16 %v7227, %v7225
  %v7254 = vpack.c.bf16 %v7228, %v7226
  %v7255 = vpack.c.bf16 %v7231, %v7229
  %v7256 = vpack.c.bf16 %v7232, %v7230
  %v7257 = vpack.c.bf16 %v7235, %v7233
  %v7258 = vpack.c.bf16 %v7236, %v7234
  %v7259 = vpack.c.bf16 %v7237, %v7237
  %v7260 = vpack.c.bf16 %v7238, %v7238
  %v7261 = vld [vmem:[%s3] sm:$0xff]
  %v7262 = vld [vmem:[%s3 + $0x8] sm:$0xff]
  %v7263 = vld [vmem:[%s3 + $0x10] sm:$0xff]
  %v7264 = vld [vmem:[%s3 + $0x18] sm:$0xff]
  %v7265 = vld [vmem:[%s3 + $0x20] sm:$0xff]
  %v7266 = vld [vmem:[%s3 + $0x28] sm:$0xff]
  %v7267 = vld [vmem:[%s3 + $0x30] sm:$0xff]
  %v7268 = vld [vmem:[%s3 + $0x38] sm:$0xff]
  %v7269 = vld [vmem:[%s3 + $0x40] sm:$0xff]
  %v7270 = vld [vmem:[%s3 + $0x48] sm:$0xff]
  %v7271 = vld [vmem:[%s3 + $0x50] sm:$0xff]
  %v7272 = vld [vmem:[%s3 + $0x58] sm:$0xff]
  %v7273 = vld [vmem:[%s3 + $0x60] sm:$0xff]
  %v7274 = vld [vmem:[%s3 + $0x68] sm:$0xff]
  %v7275 = vld [vmem:[%s3 + $0x70] sm:$0xff]
  %v7276 = vld [vmem:[%s3 + $0x78] sm:$0xff]
  %v7277 = vld [vmem:[%s3 + $0x80] sm:$0xff]
  %v7278 = vld [vmem:[%s3 + $0x88] sm:$0xff]
  %v7279 = vld [vmem:[%s3 + $0x90] sm:$0xff]
  %v7280 = vld [vmem:[%s3 + $0x98] sm:$0xff]
  %v7281 = vld [vmem:[%s3 + $0xa0] sm:$0xff]
  %v7282 = vld [vmem:[%s3 + $0xa8] sm:$0xff]
  %v7283 = vld [vmem:[%s3 + $0xb0] sm:$0xff]
  %v7284 = vld [vmem:[%s3 + $0xb8] sm:$0xff]
  %v7285 = vld [vmem:[%s3 + $0xc0] sm:$0xff]
  %v7286 = vld [vmem:[%s3 + $0xc8] sm:$0xff]
  %v7287 = vld [vmem:[%s3 + $0xd0] sm:$0xff]
  %v7288 = vld [vmem:[%s3 + $0xd8] sm:$0xff]
  %v7289 = vld [vmem:[%s3 + $0xe0] sm:$0xff]
  %v7290 = vld [vmem:[%s3 + $0xe8] sm:$0xff]
  %v7291 = vld [vmem:[%s3 + $0xf0] sm:$0xff]
  %v7292 = vld [vmem:[%s3 + $0xf8] sm:$0xff]
  %v7293 = vld [vmem:[%s4] sm:$0x3]
  %v7295 = vperm.slane %v7293, 0
  %v7296 = vperm.slane %v7293, 1
  %v7331 = vunpack.c.l.b16 %v7261
  %v7332 = vunpack.c.h.b16 %v7261
  %v7333 = vunpack.c.l.b16 %v7262
  %v7334 = vunpack.c.h.b16 %v7262
  %v7335 = vunpack.c.l.b16 %v7263
  %v7336 = vunpack.c.h.b16 %v7263
  %v7337 = vunpack.c.l.b16 %v7264
  %v7338 = vunpack.c.h.b16 %v7264
  %v7339 = vunpack.c.l.b16 %v7265
  %v7340 = vunpack.c.h.b16 %v7265
  %v7341 = vunpack.c.l.b16 %v7266
  %v7342 = vunpack.c.h.b16 %v7266
  %v7343 = vunpack.c.l.b16 %v7267
  %v7344 = vunpack.c.h.b16 %v7267
  %v7345 = vunpack.c.l.b16 %v7268
  %v7346 = vunpack.c.h.b16 %v7268
  %v7347 = vunpack.c.l.b16 %v7269
  %v7348 = vunpack.c.h.b16 %v7269
  %v7349 = vunpack.c.l.b16 %v7270
  %v7350 = vunpack.c.h.b16 %v7270
  %v7351 = vunpack.c.l.b16 %v7271
  %v7352 = vunpack.c.h.b16 %v7271
  %v7353 = vunpack.c.l.b16 %v7272
  %v7354 = vunpack.c.h.b16 %v7272
  %v7355 = vunpack.c.l.b16 %v7273
  %v7356 = vunpack.c.h.b16 %v7273
  %v7357 = vunpack.c.l.b16 %v7274
  %v7358 = vunpack.c.h.b16 %v7274
  %v7359 = vunpack.c.l.b16 %v7275
  %v7360 = vunpack.c.h.b16 %v7275
  %v7361 = vunpack.c.l.b16 %v7276
  %v7362 = vunpack.c.h.b16 %v7276
  %v7363 = vunpack.c.l.b16 %v7277
  %v7364 = vunpack.c.h.b16 %v7277
  %v7365 = vunpack.c.l.b16 %v7278
  %v7366 = vunpack.c.h.b16 %v7278
  %v7367 = vunpack.c.l.b16 %v7279
  %v7368 = vunpack.c.h.b16 %v7279
  %v7369 = vunpack.c.l.b16 %v7280
  %v7370 = vunpack.c.h.b16 %v7280
  %v7371 = vunpack.c.l.b16 %v7281
  %v7372 = vunpack.c.h.b16 %v7281
  %v7373 = vunpack.c.l.b16 %v7282
  %v7374 = vunpack.c.h.b16 %v7282
  %v7375 = vunpack.c.l.b16 %v7283
  %v7376 = vunpack.c.h.b16 %v7283
  %v7377 = vunpack.c.l.b16 %v7284
  %v7378 = vunpack.c.h.b16 %v7284
  %v7379 = vunpack.c.l.b16 %v7285
  %v7380 = vunpack.c.h.b16 %v7285
  %v7381 = vunpack.c.l.b16 %v7286
  %v7382 = vunpack.c.h.b16 %v7286
  %v7383 = vunpack.c.l.b16 %v7287
  %v7384 = vunpack.c.h.b16 %v7287
  %v7385 = vunpack.c.l.b16 %v7288
  %v7386 = vunpack.c.h.b16 %v7288
  %v7387 = vunpack.c.l.b16 %v7289
  %v7388 = vunpack.c.h.b16 %v7289
  %v7389 = vunpack.c.l.b16 %v7290
  %v7390 = vunpack.c.h.b16 %v7290
  %v7391 = vunpack.c.l.b16 %v7291
  %v7392 = vunpack.c.h.b16 %v7291
  %v7393 = vunpack.c.l.b16 %v7292
  %v7394 = vunpack.c.h.b16 %v7292
  %v7395 = vpack.c.b16 %v7333, %v7331
  %v7396 = vpack.c.b16 %v7334, %v7332
  %v7397 = vpack.c.b16 %v7337, %v7335
  %v7398 = vpack.c.b16 %v7338, %v7336
  %v7399 = vpack.c.b16 %v7341, %v7339
  %v7400 = vpack.c.b16 %v7342, %v7340
  %v7401 = vpack.c.b16 %v7345, %v7343
  %v7402 = vpack.c.b16 %v7346, %v7344
  %v7403 = vpack.c.b16 %v7349, %v7347
  %v7404 = vpack.c.b16 %v7350, %v7348
  %v7405 = vpack.c.b16 %v7353, %v7351
  %v7406 = vpack.c.b16 %v7354, %v7352
  %v7407 = vpack.c.b16 %v7357, %v7355
  %v7408 = vpack.c.b16 %v7358, %v7356
  %v7409 = vpack.c.b16 %v7361, %v7359
  %v7410 = vpack.c.b16 %v7362, %v7360
  %v7411 = vpack.c.b16 %v7365, %v7363
  %v7412 = vpack.c.b16 %v7366, %v7364
  %v7413 = vpack.c.b16 %v7369, %v7367
  %v7414 = vpack.c.b16 %v7370, %v7368
  %v7415 = vpack.c.b16 %v7373, %v7371
  %v7416 = vpack.c.b16 %v7374, %v7372
  %v7417 = vpack.c.b16 %v7377, %v7375
  %v7418 = vpack.c.b16 %v7378, %v7376
  %v7419 = vpack.c.b16 %v7381, %v7379
  %v7420 = vpack.c.b16 %v7382, %v7380
  %v7421 = vpack.c.b16 %v7385, %v7383
  %v7422 = vpack.c.b16 %v7386, %v7384
  %v7423 = vpack.c.b16 %v7389, %v7387
  %v7424 = vpack.c.b16 %v7390, %v7388
  %v7425 = vpack.c.b16 %v7393, %v7391
  %v7426 = vpack.c.b16 %v7394, %v7392
  %7459 = vmatpush.bf16.msra.mxu0 %v7409
  %7460 = vmatpush.bf16.msra.mxu0 %v7407
  %7461 = vmatpush.bf16.msra.mxu0 %v7405
  %7462 = vmatpush.bf16.msra.mxu0 %v7403
  %7463 = vmatpush.bf16.msra.mxu0 %v7401
  %7464 = vmatpush.bf16.msra.mxu0 %v7399
  %7465 = vmatpush.bf16.msra.mxu0 %v7397
  %7466 = vmatpush.bf16.msra.mxu0 %v7395
  %7467 = vmatmul.bf16.gmra.mxu0 %v7239
  %v7468 = vpop.f32.mrf.mxu0
  %v7469 = vadd.f32 %v7295, %v7468
  %v7470 = vpop.f32.mrf.mxu0
  %v7471 = vadd.f32 %v7295, %v7470
  %7472 = vmatmul.bf16.gmra.mxu0 %v7241
  %v7473 = vpop.f32.mrf.mxu0
  %v7474 = vadd.f32 %v7295, %v7473
  %v7475 = vpop.f32.mrf.mxu0
  %v7476 = vadd.f32 %v7295, %v7475
  %7477 = vmatmul.bf16.gmra.mxu0 %v7243
  %v7478 = vpop.f32.mrf.mxu0
  %v7479 = vadd.f32 %v7295, %v7478
  %v7480 = vpop.f32.mrf.mxu0
  %v7481 = vadd.f32 %v7295, %v7480
  %7482 = vmatmul.bf16.gmra.mxu0 %v7245
  %v7483 = vpop.f32.mrf.mxu0
  %v7484 = vadd.f32 %v7295, %v7483
  %v7485 = vpop.f32.mrf.mxu0
  %v7486 = vadd.f32 %v7295, %v7485
  %7487 = vmatmul.bf16.gmra.mxu0 %v7247
  %v7488 = vpop.f32.mrf.mxu0
  %v7489 = vadd.f32 %v7295, %v7488
  %v7490 = vpop.f32.mrf.mxu0
  %v7491 = vadd.f32 %v7295, %v7490
  %7492 = vmatmul.bf16.gmra.mxu0 %v7249
  %v7493 = vpop.f32.mrf.mxu0
  %v7494 = vadd.f32 %v7295, %v7493
  %v7495 = vpop.f32.mrf.mxu0
  %v7496 = vadd.f32 %v7295, %v7495
  %7497 = vmatmul.bf16.gmra.mxu0 %v7251
  %v7498 = vpop.f32.mrf.mxu0
  %v7499 = vadd.f32 %v7295, %v7498
  %v7500 = vpop.f32.mrf.mxu0
  %v7501 = vadd.f32 %v7295, %v7500
  %7502 = vmatmul.bf16.gmra.mxu0 %v7253
  %v7503 = vpop.f32.mrf.mxu0
  %v7504 = vadd.f32 %v7295, %v7503
  %v7505 = vpop.f32.mrf.mxu0
  %v7506 = vadd.f32 %v7295, %v7505
  %7507 = vmatmul.bf16.gmra.mxu0 %v7255
  %v7508 = vpop.f32.mrf.mxu0
  %v7509 = vadd.f32 %v7295, %v7508
  %v7510 = vpop.f32.mrf.mxu0
  %v7511 = vadd.f32 %v7295, %v7510
  %7512 = vmatmul.bf16.gmra.mxu0 %v7257
  %v7513 = vpop.f32.mrf.mxu0
  %v7514 = vadd.f32 %v7295, %v7513
  %v7515 = vpop.f32.mrf.mxu0
  %v7516 = vadd.f32 %v7295, %v7515
  %7517 = vmatmul.bf16.gmra.mxu0 %v7259
  %v7518 = vpop.f32.mrf.mxu0
  %v7519 = vadd.f32 %v7295, %v7518
  %v7520 = vpop.f32.mrf.mxu0
  %7521 = vdwg.mxu0
  %7522 = vmatpush.bf16.msra.mxu0 %v7425
  %7523 = vmatpush.bf16.msra.mxu0 %v7423
  %7524 = vmatpush.bf16.msra.mxu0 %v7421
  %7525 = vmatpush.bf16.msra.mxu0 %v7419
  %7526 = vmatpush.bf16.msra.mxu0 %v7417
  %7527 = vmatpush.bf16.msra.mxu0 %v7415
  %7528 = vmatpush.bf16.msra.mxu0 %v7413
  %7529 = vmatpush.bf16.msra.mxu0 %v7411
  %7530 = vmatmul.bf16.gmra.mxu0 %v7240
  %v7531 = vpop.f32.mrf.mxu0
  %v7532 = vadd.f32 %v7469, %v7531
  %v7533 = vpop.f32.mrf.mxu0
  %v7534 = vadd.f32 %v7471, %v7533
  %7535 = vmatmul.bf16.gmra.mxu0 %v7242
  %v7536 = vpop.f32.mrf.mxu0
  %v7537 = vadd.f32 %v7474, %v7536
  %v7538 = vpop.f32.mrf.mxu0
  %v7539 = vadd.f32 %v7476, %v7538
  %7540 = vmatmul.bf16.gmra.mxu0 %v7244
  %v7541 = vpop.f32.mrf.mxu0
  %v7542 = vadd.f32 %v7479, %v7541
  %v7543 = vpop.f32.mrf.mxu0
  %v7544 = vadd.f32 %v7481, %v7543
  %7545 = vmatmul.bf16.gmra.mxu0 %v7246
  %v7546 = vpop.f32.mrf.mxu0
  %v7547 = vadd.f32 %v7484, %v7546
  %v7548 = vpop.f32.mrf.mxu0
  %v7549 = vadd.f32 %v7486, %v7548
  %7550 = vmatmul.bf16.gmra.mxu0 %v7248
  %v7551 = vpop.f32.mrf.mxu0
  %v7552 = vadd.f32 %v7489, %v7551
  %v7553 = vpop.f32.mrf.mxu0
  %v7554 = vadd.f32 %v7491, %v7553
  %7555 = vmatmul.bf16.gmra.mxu0 %v7250
  %v7556 = vpop.f32.mrf.mxu0
  %v7557 = vadd.f32 %v7494, %v7556
  %v7558 = vpop.f32.mrf.mxu0
  %v7559 = vadd.f32 %v7496, %v7558
  %7560 = vmatmul.bf16.gmra.mxu0 %v7252
  %v7561 = vpop.f32.mrf.mxu0
  %v7562 = vadd.f32 %v7499, %v7561
  %v7563 = vpop.f32.mrf.mxu0
  %v7564 = vadd.f32 %v7501, %v7563
  %7565 = vmatmul.bf16.gmra.mxu0 %v7254
  %v7566 = vpop.f32.mrf.mxu0
  %v7567 = vadd.f32 %v7504, %v7566
  %v7568 = vpop.f32.mrf.mxu0
  %v7569 = vadd.f32 %v7506, %v7568
  %7570 = vmatmul.bf16.gmra.mxu0 %v7256
  %v7571 = vpop.f32.mrf.mxu0
  %v7572 = vadd.f32 %v7509, %v7571
  %v7573 = vpop.f32.mrf.mxu0
  %v7574 = vadd.f32 %v7511, %v7573
  %7575 = vmatmul.bf16.gmra.mxu0 %v7258
  %v7576 = vpop.f32.mrf.mxu0
  %v7577 = vadd.f32 %v7514, %v7576
  %v7578 = vpop.f32.mrf.mxu0
  %v7579 = vadd.f32 %v7516, %v7578
  %7580 = vmatmul.bf16.gmra.mxu0 %v7260
  %v7581 = vpop.f32.mrf.mxu0
  %v7582 = vadd.f32 %v7519, %v7581
  %v7583 = vpop.f32.mrf.mxu0
  %7584 = vdwg.mxu0
  %7585 = vmatpush.bf16.msra.mxu0 %v7410
  %7586 = vmatpush.bf16.msra.mxu0 %v7408
  %7587 = vmatpush.bf16.msra.mxu0 %v7406
  %7588 = vmatpush.bf16.msra.mxu0 %v7404
  %7589 = vmatpush.bf16.msra.mxu0 %v7402
  %7590 = vmatpush.bf16.msra.mxu0 %v7400
  %7591 = vmatpush.bf16.msra.mxu0 %v7398
  %7592 = vmatpush.bf16.msra.mxu0 %v7396
  %7593 = vmatmul.bf16.gmra.mxu0 %v7239
  %v7594 = vpop.f32.mrf.mxu0
  %v7595 = vadd.f32 %v7296, %v7594
  %v7596 = vpop.f32.mrf.mxu0
  %v7597 = vadd.f32 %v7296, %v7596
  %7598 = vmatmul.bf16.gmra.mxu0 %v7241
  %v7599 = vpop.f32.mrf.mxu0
  %v7600 = vadd.f32 %v7296, %v7599
  %v7601 = vpop.f32.mrf.mxu0
  %v7602 = vadd.f32 %v7296, %v7601
  %7603 = vmatmul.bf16.gmra.mxu0 %v7243
  %v7604 = vpop.f32.mrf.mxu0
  %v7605 = vadd.f32 %v7296, %v7604
  %v7606 = vpop.f32.mrf.mxu0
  %v7607 = vadd.f32 %v7296, %v7606
  %7608 = vmatmul.bf16.gmra.mxu0 %v7245
  %v7609 = vpop.f32.mrf.mxu0
  %v7610 = vadd.f32 %v7296, %v7609
  %v7611 = vpop.f32.mrf.mxu0
  %v7612 = vadd.f32 %v7296, %v7611
  %7613 = vmatmul.bf16.gmra.mxu0 %v7247
  %v7614 = vpop.f32.mrf.mxu0
  %v7615 = vadd.f32 %v7296, %v7614
  %v7616 = vpop.f32.mrf.mxu0
  %v7617 = vadd.f32 %v7296, %v7616
  %7618 = vmatmul.bf16.gmra.mxu0 %v7249
  %v7619 = vpop.f32.mrf.mxu0
  %v7620 = vadd.f32 %v7296, %v7619
  %v7621 = vpop.f32.mrf.mxu0
  %v7622 = vadd.f32 %v7296, %v7621
  %7623 = vmatmul.bf16.gmra.mxu0 %v7251
  %v7624 = vpop.f32.mrf.mxu0
  %v7625 = vadd.f32 %v7296, %v7624
  %v7626 = vpop.f32.mrf.mxu0
  %v7627 = vadd.f32 %v7296, %v7626
  %7628 = vmatmul.bf16.gmra.mxu0 %v7253
  %v7629 = vpop.f32.mrf.mxu0
  %v7630 = vadd.f32 %v7296, %v7629
  %v7631 = vpop.f32.mrf.mxu0
  %v7632 = vadd.f32 %v7296, %v7631
  %7633 = vmatmul.bf16.gmra.mxu0 %v7255
  %v7634 = vpop.f32.mrf.mxu0
  %v7635 = vadd.f32 %v7296, %v7634
  %v7636 = vpop.f32.mrf.mxu0
  %v7637 = vadd.f32 %v7296, %v7636
  %7638 = vmatmul.bf16.gmra.mxu0 %v7257
  %v7639 = vpop.f32.mrf.mxu0
  %v7640 = vadd.f32 %v7296, %v7639
  %v7641 = vpop.f32.mrf.mxu0
  %v7642 = vadd.f32 %v7296, %v7641
  %7643 = vmatmul.bf16.gmra.mxu0 %v7259
  %v7644 = vpop.f32.mrf.mxu0
  %v7645 = vadd.f32 %v7296, %v7644
  %v7646 = vpop.f32.mrf.mxu0
  %7647 = vdwg.mxu0
  %7648 = vmatpush.bf16.msra.mxu0 %v7426
  %7649 = vmatpush.bf16.msra.mxu0 %v7424
  %7650 = vmatpush.bf16.msra.mxu0 %v7422
  %7651 = vmatpush.bf16.msra.mxu0 %v7420
  %7652 = vmatpush.bf16.msra.mxu0 %v7418
  %7653 = vmatpush.bf16.msra.mxu0 %v7416
  %7654 = vmatpush.bf16.msra.mxu0 %v7414
  %7655 = vmatpush.bf16.msra.mxu0 %v7412
  %7656 = vmatmul.bf16.gmra.mxu0 %v7240
  %v7657 = vpop.f32.mrf.mxu0
  %v7658 = vadd.f32 %v7595, %v7657
  %v7659 = vpop.f32.mrf.mxu0
  %v7660 = vadd.f32 %v7597, %v7659
  %7661 = vmatmul.bf16.gmra.mxu0 %v7242
  %v7662 = vpop.f32.mrf.mxu0
  %v7663 = vadd.f32 %v7600, %v7662
  %v7664 = vpop.f32.mrf.mxu0
  %v7665 = vadd.f32 %v7602, %v7664
  %7666 = vmatmul.bf16.gmra.mxu0 %v7244
  %v7667 = vpop.f32.mrf.mxu0
  %v7668 = vadd.f32 %v7605, %v7667
  %v7669 = vpop.f32.mrf.mxu0
  %v7670 = vadd.f32 %v7607, %v7669
  %7671 = vmatmul.bf16.gmra.mxu0 %v7246
  %v7672 = vpop.f32.mrf.mxu0
  %v7673 = vadd.f32 %v7610, %v7672
  %v7674 = vpop.f32.mrf.mxu0
  %v7675 = vadd.f32 %v7612, %v7674
  %7676 = vmatmul.bf16.gmra.mxu0 %v7248
  %v7677 = vpop.f32.mrf.mxu0
  %v7678 = vadd.f32 %v7615, %v7677
  %v7679 = vpop.f32.mrf.mxu0
  %v7680 = vadd.f32 %v7617, %v7679
  %7681 = vmatmul.bf16.gmra.mxu0 %v7250
  %v7682 = vpop.f32.mrf.mxu0
  %v7683 = vadd.f32 %v7620, %v7682
  %v7684 = vpop.f32.mrf.mxu0
  %v7685 = vadd.f32 %v7622, %v7684
  %7686 = vmatmul.bf16.gmra.mxu0 %v7252
  %v7687 = vpop.f32.mrf.mxu0
  %v7688 = vadd.f32 %v7625, %v7687
  %v7689 = vpop.f32.mrf.mxu0
  %v7690 = vadd.f32 %v7627, %v7689
  %7691 = vmatmul.bf16.gmra.mxu0 %v7254
  %v7692 = vpop.f32.mrf.mxu0
  %v7693 = vadd.f32 %v7630, %v7692
  %v7694 = vpop.f32.mrf.mxu0
  %v7695 = vadd.f32 %v7632, %v7694
  %7696 = vmatmul.bf16.gmra.mxu0 %v7256
  %v7697 = vpop.f32.mrf.mxu0
  %v7698 = vadd.f32 %v7635, %v7697
  %v7699 = vpop.f32.mrf.mxu0
  %v7700 = vadd.f32 %v7637, %v7699
  %7701 = vmatmul.bf16.gmra.mxu0 %v7258
  %v7702 = vpop.f32.mrf.mxu0
  %v7703 = vadd.f32 %v7640, %v7702
  %v7704 = vpop.f32.mrf.mxu0
  %v7705 = vadd.f32 %v7642, %v7704
  %7706 = vmatmul.bf16.gmra.mxu0 %v7260
  %v7707 = vpop.f32.mrf.mxu0
  %v7708 = vadd.f32 %v7645, %v7707
  %v7709 = vpop.f32.mrf.mxu0
  %7710 = vdwg.mxu0
  %v7711 = vmax.f32 %v7532, 0.0
  %v7712 = vmax.f32 %v7658, 0.0
  %v7713 = vmax.f32 %v7534, 0.0
  %v7714 = vmax.f32 %v7660, 0.0
  %v7715 = vmax.f32 %v7537, 0.0
  %v7716 = vmax.f32 %v7663, 0.0
  %v7717 = vmax.f32 %v7539, 0.0
  %v7718 = vmax.f32 %v7665, 0.0
  %v7719 = vmax.f32 %v7542, 0.0
  %v7720 = vmax.f32 %v7668, 0.0
  %v7721 = vmax.f32 %v7544, 0.0
  %v7722 = vmax.f32 %v7670, 0.0
  %v7723 = vmax.f32 %v7547, 0.0
  %v7724 = vmax.f32 %v7673, 0.0
  %v7725 = vmax.f32 %v7549, 0.0
  %v7726 = vmax.f32 %v7675, 0.0
  %v7727 = vmax.f32 %v7552, 0.0
  %v7728 = vmax.f32 %v7678, 0.0
  %v7729 = vmax.f32 %v7554, 0.0
  %v7730 = vmax.f32 %v7680, 0.0
  %v7731 = vmax.f32 %v7557, 0.0
  %v7732 = vmax.f32 %v7683, 0.0
  %v7733 = vmax.f32 %v7559, 0.0
  %v7734 = vmax.f32 %v7685, 0.0
  %v7735 = vmax.f32 %v7562, 0.0
  %v7736 = vmax.f32 %v7688, 0.0
  %v7737 = vmax.f32 %v7564, 0.0
  %v7738 = vmax.f32 %v7690, 0.0
  %v7739 = vmax.f32 %v7567, 0.0
  %v7740 = vmax.f32 %v7693, 0.0
  %v7741 = vmax.f32 %v7569, 0.0
  %v7742 = vmax.f32 %v7695, 0.0
  %v7743 = vmax.f32 %v7572, 0.0
  %v7744 = vmax.f32 %v7698, 0.0
  %v7745 = vmax.f32 %v7574, 0.0
  %v7746 = vmax.f32 %v7700, 0.0
  %v7747 = vmax.f32 %v7577, 0.0
  %v7748 = vmax.f32 %v7703, 0.0
  %v7749 = vmax.f32 %v7579, 0.0
  %v7750 = vmax.f32 %v7705, 0.0
  %v7751 = vmax.f32 %v7582, 0.0
  %v7752 = vmax.f32 %v7708, 0.0
  %7753 = vst [vmem:[%s5] sm:$0xff] %v7711
  %7754 = vst [vmem:[%s5 + $0x8] sm:$0xff] %v7712
  %7755 = vst [vmem:[%s5 + $0x10] sm:$0xff] %v7713
  %7756 = vst [vmem:[%s5 + $0x18] sm:$0xff] %v7714
  %7757 = vst [vmem:[%s5 + $0x20] sm:$0xff] %v7715
  %7758 = vst [vmem:[%s5 + $0x28] sm:$0xff] %v7716
  %7759 = vst [vmem:[%s5 + $0x30] sm:$0xff] %v7717
  %7760 = vst [vmem:[%s5 + $0x38] sm:$0xff] %v7718
  %7761 = vst [vmem:[%s5 + $0x40] sm:$0xff] %v7719
  %7762 = vst [vmem:[%s5 + $0x48] sm:$0xff] %v7720
  %7763 = vst [vmem:[%s5 + $0x50] sm:$0xff] %v7721
  %7764 = vst [vmem:[%s5 + $0x58] sm:$0xff] %v7722
  %7765 = vst [vmem:[%s5 + $0x60] sm:$0xff] %v7723
  %7766 = vst [vmem:[%s5 + $0x68] sm:$0xff] %v7724
  %7767 = vst [vmem:[%s5 + $0x70] sm:$0xff] %v7725
  %7768 = vst [vmem:[%s5 + $0x78] sm:$0xff] %v7726
  %7769 = vst [vmem:[%s5 + $0x80] sm:$0xff] %v7727
  %7770 = vst [vmem:[%s5 + $0x88] sm:$0xff] %v7728
  %7771 = vst [vmem:[%s5 + $0x90] sm:$0xff] %v7729
  %7772 = vst [vmem:[%s5 + $0x98] sm:$0xff] %v7730
  %7773 = vst [vmem:[%s5 + $0xa0] sm:$0xff] %v7731
  %7774 = vst [vmem:[%s5 + $0xa8] sm:$0xff] %v7732
  %7775 = vst [vmem:[%s5 + $0xb0] sm:$0xff] %v7733
  %7776 = vst [vmem:[%s5 + $0xb8] sm:$0xff] %v7734
  %7777 = vst [vmem:[%s5 + $0xc0] sm:$0xff] %v7735
  %7778 = vst [vmem:[%s5 + $0xc8] sm:$0xff] %v7736
  %7779 = vst [vmem:[%s5 + $0xd0] sm:$0xff] %v7737
  %7780 = vst [vmem:[%s5 + $0xd8] sm:$0xff] %v7738
  %7781 = vst [vmem:[%s5 + $0xe0] sm:$0xff] %v7739
  %7782 = vst [vmem:[%s5 + $0xe8] sm:$0xff] %v7740
  %7783 = vst [vmem:[%s5 + $0xf0] sm:$0xff] %v7741
  %7784 = vst [vmem:[%s5 + $0xf8] sm:$0xff] %v7742
  %7785 = vst [vmem:[%s5 + $0x100] sm:$0xff] %v7743
  %7786 = vst [vmem:[%s5 + $0x108] sm:$0xff] %v7744
  %7787 = vst [vmem:[%s5 + $0x110] sm:$0xff] %v7745
  %7788 = vst [vmem:[%s5 + $0x118] sm:$0xff] %v7746
  %7789 = vst [vmem:[%s5 + $0x120] sm:$0xff] %v7747
  %7790 = vst [vmem:[%s5 + $0x128] sm:$0xff] %v7748
  %7791 = vst [vmem:[%s5 + $0x130] sm:$0xff] %v7749
  %7792 = vst [vmem:[%s5 + $0x138] sm:$0xff] %v7750
  %7793 = vst [vmem:[%s5 + $0x140] sm:$0x3] %v7751
  %7794 = vst [vmem:[%s5 + $0x148] sm:$0x3] %v7752
  // Predicated region
  $region22: #{net_b_forward.7} parent=0 // pred_check
    _
  $region23: #{net_b_forward.7} parent=0 // pred_check_branch
    %7796 = sbr.rel (0) target = $region25
  $region24: #{net_b_forward.7} parent=0 // pred_region
    _
  $region25: #{net_b_forward.7} parent=0 // pred_fallthru
    _
  // Predicated region
  $region26: #{net_b_forward.7} parent=0 // pred_check
    _
  $region27: #{net_b_forward.7} parent=0 // pred_check_branch
    %7798 = sbr.rel (0) target = $region29
  $region28: #{net_b_forward.7} parent=0 // pred_region
    _
  $region29: #{net_b_forward.7} parent=0 // pred_fallthru
    _

// kernel: net_b_forward.9
$region0: #{net_b_forward.9}
  #allocation0 [shape = 'u32[]', space=smem, size = 0x4, offset = 0x4, fixed_abs, tag = 'smem constant byte address 0x4 - core index']
  #allocation1 [shape = 'u32[72,128]{1,0:T(1,128)}', space=vmem, size = 0x9000, scoped, tag = 'internal scratch']
  %s0 = inlined_call_operand.vmem [shape: bf16[8,2304], index: 0, kind: input, shape index: {}]
  %s1 = inlined_call_operand.vmem [shape: bf16[2304,256], index: 1, kind: input, shape index: {}]
  %s2 = inlined_call_operand.vmem [shape: f32[1,256], index: 2, kind: input, shape index: {}]
  %s3 = inlined_call_operand.vmem [shape: bf16[256,256], index: 3, kind: input, shape index: {}]
  %s4 = inlined_call_operand.vmem [shape: f32[1,256], index: 4, kind: input, shape index: {}]
  %s5 = inlined_call_operand.vmem [shape: bf16[256,128], index: 5, kind: input, shape index: {}]
  %s6 = inlined_call_operand.vmem [shape: f32[1,128], index: 6, kind: input, shape index: {}]
  %s7 = inlined_call_operand.hbm [shape: f32[2,128], index: 7, kind: output, shape index: {}]
  %s8 = sld [smem:[#allocation0]]
  $region38: #{net_b_forward.9} parent=0
    _
  %s10 = ssub.s32 1, %s8
  %s11 = scalar_select 0, %s10, %s8
  $region1: #{net_b_forward.9} parent=0
    #allocation2 [shape = 'u8[1024]{0}', space=vmem, size = 0x400, scoped, tag = 'output window, operand 0, single buffered']
    #allocation3 [shape = 's32[1]{0}', space=sflag, size = 0x4, scoped, tag = 'scoped memory for net_b_forward.9']
    %12 = vsyncpa [#allocation3], 0
    // Predicated region
    $region2: #{net_b_forward.9} parent=1 // pred_check
      _
    $region3: #{net_b_forward.9} parent=1 // pred_check_branch
      %14 = sbr.rel (0) target = $region5
    $region4: #{net_b_forward.9} parent=1 // pred_region
      _
    $region5: #{net_b_forward.9} parent=1 // pred_fallthru
      _
    // Predicated region
    $region6: #{net_b_forward.9} parent=1 // pred_check
      _
    $region7: #{net_b_forward.9} parent=1 // pred_check_branch
      %16 = sbr.rel (0) target = $region9
    $region8: #{net_b_forward.9} parent=1 // pred_region
      _
    $region9: #{net_b_forward.9} parent=1 // pred_fallthru
      _
    // Predicated region
    $region10: #{net_b_forward.9} parent=1 // pred_check
      _
    $region11: #{net_b_forward.9} parent=1 // pred_check_branch
      %18 = sbr.rel (0) target = $region13
    $region12: #{net_b_forward.9} parent=1 // pred_region
      _
    $region13: #{net_b_forward.9} parent=1 // pred_fallthru
      _
    // Predicated region
    $region14: #{net_b_forward.9} parent=1 // pred_check
      _
    $region15: #{net_b_forward.9} parent=1 // pred_check_branch
      %20 = sbr.rel (0) target = $region17
    $region16: #{net_b_forward.9} parent=1 // pred_region
      _
    $region17: #{net_b_forward.9} parent=1 // pred_fallthru
      _
    // Predicated region
    $region18: #{net_b_forward.9} parent=1 // pred_check
      _
    $region19: #{net_b_forward.9} parent=1 // pred_check_branch
      %22 = sbr.rel (0) target = $region21
    $region20: #{net_b_forward.9} parent=1 // pred_region
      _
    $region21: #{net_b_forward.9} parent=1 // pred_fallthru
      _
    // Predicated region
    $region22: #{net_b_forward.9} parent=1 // pred_check
      _
    $region23: #{net_b_forward.9} parent=1 // pred_check_branch
      %24 = sbr.rel (0) target = $region25
    $region24: #{net_b_forward.9} parent=1 // pred_region
      _
    $region25: #{net_b_forward.9} parent=1 // pred_fallthru
      _
    // Predicated region
    $region26: #{net_b_forward.9} parent=1 // pred_check
      _
    $region27: #{net_b_forward.9} parent=1 // pred_check_branch
      %26 = sbr.rel (0) target = $region29
    $region28: #{net_b_forward.9} parent=1 // pred_region
      _
    $region29: #{net_b_forward.9} parent=1 // pred_fallthru
      _
    %v27 = vld [vmem:[%s0] sm:$0xff]
    %v28 = vld [vmem:[%s0 + $0x8] sm:$0xff]
    %v29 = vld [vmem:[%s0 + $0x10] sm:$0xff]
    %v30 = vld [vmem:[%s0 + $0x18] sm:$0xff]
    %v31 = vld [vmem:[%s0 + $0x20] sm:$0xff]
    %v32 = vld [vmem:[%s0 + $0x28] sm:$0xff]
    %v33 = vld [vmem:[%s0 + $0x30] sm:$0xff]
    %v34 = vld [vmem:[%s0 + $0x38] sm:$0xff]
    %v35 = vld [vmem:[%s0 + $0x40] sm:$0xff]
    %v36 = vld [vmem:[%s1] sm:$0xff]
    %v37 = vld [vmem:[%s1 + $0x8] sm:$0xff]
    %v38 = vld [vmem:[%s1 + $0x10] sm:$0xff]
    %v39 = vld [vmem:[%s1 + $0x18] sm:$0xff]
    %v40 = vld [vmem:[%s1 + $0x20] sm:$0xff]
    %v41 = vld [vmem:[%s1 + $0x28] sm:$0xff]
    %v42 = vld [vmem:[%s1 + $0x30] sm:$0xff]
    %v43 = vld [vmem:[%s1 + $0x38] sm:$0xff]
    %v44 = vld [vmem:[%s1 + $0x40] sm:$0xff]
    %v45 = vld [vmem:[%s1 + $0x48] sm:$0xff]
    %v46 = vld [vmem:[%s1 + $0x50] sm:$0xff]
    %v47 = vld [vmem:[%s1 + $0x58] sm:$0xff]
    %v48 = vld [vmem:[%s1 + $0x60] sm:$0xff]
    %v49 = vld [vmem:[%s1 + $0x68] sm:$0xff]
    %v50 = vld [vmem:[%s1 + $0x70] sm:$0xff]
    %v51 = vld [vmem:[%s1 + $0x78] sm:$0xff]
    %v52 = vld [vmem:[%s1 + $0x80] sm:$0xff]
    %v53 = vld [vmem:[%s1 + $0x88] sm:$0xff]
    %v54 = vld [vmem:[%s1 + $0x90] sm:$0xff]
    %v55 = vld [vmem:[%s1 + $0x98] sm:$0xff]
    %v56 = vld [vmem:[%s1 + $0xa0] sm:$0xff]
    %v57 = vld [vmem:[%s1 + $0xa8] sm:$0xff]
    %v58 = vld [vmem:[%s1 + $0xb0] sm:$0xff]
    %v59 = vld [vmem:[%s1 + $0xb8] sm:$0xff]
    %v60 = vld [vmem:[%s1 + $0xc0] sm:$0xff]
    %v61 = vld [vmem:[%s1 + $0xc8] sm:$0xff]
    %v62 = vld [vmem:[%s1 + $0xd0] sm:$0xff]
    %v63 = vld [vmem:[%s1 + $0xd8] sm:$0xff]
    %v64 = vld [vmem:[%s1 + $0xe0] sm:$0xff]
    %v65 = vld [vmem:[%s1 + $0xe8] sm:$0xff]
    %v66 = vld [vmem:[%s1 + $0xf0] sm:$0xff]
    %v67 = vld [vmem:[%s1 + $0xf8] sm:$0xff]
    %v68 = vld [vmem:[%s1 + $0x100] sm:$0xff]
    %v69 = vld [vmem:[%s1 + $0x108] sm:$0xff]
    %v70 = vld [vmem:[%s1 + $0x110] sm:$0xff]
    %v71 = vld [vmem:[%s1 + $0x118] sm:$0xff]
    %v72 = vld [vmem:[%s1 + $0x120] sm:$0xff]
    %v73 = vld [vmem:[%s1 + $0x128] sm:$0xff]
    %v74 = vld [vmem:[%s1 + $0x130] sm:$0xff]
    %v75 = vld [vmem:[%s1 + $0x138] sm:$0xff]
    %v76 = vld [vmem:[%s1 + $0x140] sm:$0xff]
    %v77 = vld [vmem:[%s1 + $0x148] sm:$0xff]
    %v78 = vld [vmem:[%s1 + $0x150] sm:$0xff]
    %v79 = vld [vmem:[%s1 + $0x158] sm:$0xff]
    %v80 = vld [vmem:[%s1 + $0x160] sm:$0xff]
    %v81 = vld [vmem:[%s1 + $0x168] sm:$0xff]
    %v82 = vld [vmem:[%s1 + $0x170] sm:$0xff]
    %v83 = vld [vmem:[%s1 + $0x178] sm:$0xff]
    %v84 = vld [vmem:[%s1 + $0x180] sm:$0xff]
    %v85 = vld [vmem:[%s1 + $0x188] sm:$0xff]
    %v86 = vld [vmem:[%s1 + $0x190] sm:$0xff]
    %v87 = vld [vmem:[%s1 + $0x198] sm:$0xff]
    %v88 = vld [vmem:[%s1 + $0x1a0] sm:$0xff]
    %v89 = vld [vmem:[%s1 + $0x1a8] sm:$0xff]
    %v90 = vld [vmem:[%s1 + $0x1b0] sm:$0xff]
    %v91 = vld [vmem:[%s1 + $0x1b8] sm:$0xff]
    %v92 = vld [vmem:[%s1 + $0x1c0] sm:$0xff]
    %v93 = vld [vmem:[%s1 + $0x1c8] sm:$0xff]
    %v94 = vld [vmem:[%s1 + $0x1d0] sm:$0xff]
    %v95 = vld [vmem:[%s1 + $0x1d8] sm:$0xff]
    %v96 = vld [vmem:[%s1 + $0x1e0] sm:$0xff]
    %v97 = vld [vmem:[%s1 + $0x1e8] sm:$0xff]
    %v98 = vld [vmem:[%s1 + $0x1f0] sm:$0xff]
    %v99 = vld [vmem:[%s1 + $0x1f8] sm:$0xff]
    %v100 = vld [vmem:[%s1 + $0x200] sm:$0xff]
    %v101 = vld [vmem:[%s1 + $0x208] sm:$0xff]
    %v102 = vld [vmem:[%s1 + $0x210] sm:$0xff]
    %v103 = vld [vmem:[%s1 + $0x218] sm:$0xff]
    %v104 = vld [vmem:[%s1 + $0x220] sm:$0xff]
    %v105 = vld [vmem:[%s1 + $0x228] sm:$0xff]
    %v106 = vld [vmem:[%s1 + $0x230] sm:$0xff]
    %v107 = vld [vmem:[%s1 + $0x238] sm:$0xff]
    %v108 = vld [vmem:[%s1 + $0x240] sm:$0xff]
    %v109 = vld [vmem:[%s1 + $0x248] sm:$0xff]
    %v110 = vld [vmem:[%s1 + $0x250] sm:$0xff]
    %v111 = vld [vmem:[%s1 + $0x258] sm:$0xff]
    %v112 = vld [vmem:[%s1 + $0x260] sm:$0xff]
    %v113 = vld [vmem:[%s1 + $0x268] sm:$0xff]
    %v114 = vld [vmem:[%s1 + $0x270] sm:$0xff]
    %v115 = vld [vmem:[%s1 + $0x278] sm:$0xff]
    %v116 = vld [vmem:[%s1 + $0x280] sm:$0xff]
    %v117 = vld [vmem:[%s1 + $0x288] sm:$0xff]
    %v118 = vld [vmem:[%s1 + $0x290] sm:$0xff]
    %v119 = vld [vmem:[%s1 + $0x298] sm:$0xff]
    %v120 = vld [vmem:[%s1 + $0x2a0] sm:$0xff]
    %v121 = vld [vmem:[%s1 + $0x2a8] sm:$0xff]
    %v122 = vld [vmem:[%s1 + $0x2b0] sm:$0xff]
    %v123 = vld [vmem:[%s1 + $0x2b8] sm:$0xff]
    %v124 = vld [vmem:[%s1 + $0x2c0] sm:$0xff]
    %v125 = vld [vmem:[%s1 + $0x2c8] sm:$0xff]
    %v126 = vld [vmem:[%s1 + $0x2d0] sm:$0xff]
    %v127 = vld [vmem:[%s1 + $0x2d8] sm:$0xff]
    %v128 = vld [vmem:[%s1 + $0x2e0] sm:$0xff]
    %v129 = vld [vmem:[%s1 + $0x2e8] sm:$0xff]
    %v130 = vld [vmem:[%s1 + $0x2f0] sm:$0xff]
    %v131 = vld [vmem:[%s1 + $0x2f8] sm:$0xff]
    %v132 = vld [vmem:[%s1 + $0x300] sm:$0xff]
    %v133 = vld [vmem:[%s1 + $0x308] sm:$0xff]
    %v134 = vld [vmem:[%s1 + $0x310] sm:$0xff]
    %v135 = vld [vmem:[%s1 + $0x318] sm:$0xff]
    %v136 = vld [vmem:[%s1 + $0x320] sm:$0xff]
    %v137 = vld [vmem:[%s1 + $0x328] sm:$0xff]
    %v138 = vld [vmem:[%s1 + $0x330] sm:$0xff]
    %v139 = vld [vmem:[%s1 + $0x338] sm:$0xff]
    %v140 = vld [vmem:[%s1 + $0x340] sm:$0xff]
    %v141 = vld [vmem:[%s1 + $0x348] sm:$0xff]
    %v142 = vld [vmem:[%s1 + $0x350] sm:$0xff]
    %v143 = vld [vmem:[%s1 + $0x358] sm:$0xff]
    %v144 = vld [vmem:[%s1 + $0x360] sm:$0xff]
    %v145 = vld [vmem:[%s1 + $0x368] sm:$0xff]
    %v146 = vld [vmem:[%s1 + $0x370] sm:$0xff]
    %v147 = vld [vmem:[%s1 + $0x378] sm:$0xff]
    %v148 = vld [vmem:[%s1 + $0x380] sm:$0xff]
    %v149 = vld [vmem:[%s1 + $0x388] sm:$0xff]
    %v150 = vld [vmem:[%s1 + $0x390] sm:$0xff]
    %v151 = vld [vmem:[%s1 + $0x398] sm:$0xff]
    %v152 = vld [vmem:[%s1 + $0x3a0] sm:$0xff]
    %v153 = vld [vmem:[%s1 + $0x3a8] sm:$0xff]
    %v154 = vld [vmem:[%s1 + $0x3b0] sm:$0xff]
    %v155 = vld [vmem:[%s1 + $0x3b8] sm:$0xff]
    %v156 = vld [vmem:[%s1 + $0x3c0] sm:$0xff]
    %v157 = vld [vmem:[%s1 + $0x3c8] sm:$0xff]
    %v158 = vld [vmem:[%s1 + $0x3d0] sm:$0xff]
    %v159 = vld [vmem:[%s1 + $0x3d8] sm:$0xff]
    %v160 = vld [vmem:[%s1 + $0x3e0] sm:$0xff]
    %v161 = vld [vmem:[%s1 + $0x3e8] sm:$0xff]
    %v162 = vld [vmem:[%s1 + $0x3f0] sm:$0xff]
    %v163 = vld [vmem:[%s1 + $0x3f8] sm:$0xff]
    %v164 = vld [vmem:[%s1 + $0x400] sm:$0xff]
    %v165 = vld [vmem:[%s1 + $0x408] sm:$0xff]
    %v166 = vld [vmem:[%s1 + $0x410] sm:$0xff]
    %v167 = vld [vmem:[%s1 + $0x418] sm:$0xff]
    %v168 = vld [vmem:[%s1 + $0x420] sm:$0xff]
    %v169 = vld [vmem:[%s1 + $0x428] sm:$0xff]
    %v170 = vld [vmem:[%s1 + $0x430] sm:$0xff]
    %v171 = vld [vmem:[%s1 + $0x438] sm:$0xff]
    %v172 = vld [vmem:[%s1 + $0x440] sm:$0xff]
    %v173 = vld [vmem:[%s1 + $0x448] sm:$0xff]
    %v174 = vld [vmem:[%s1 + $0x450] sm:$0xff]
    %v175 = vld [vmem:[%s1 + $0x458] sm:$0xff]
    %v176 = vld [vmem:[%s1 + $0x460] sm:$0xff]
    %v177 = vld [vmem:[%s1 + $0x468] sm:$0xff]
    %v178 = vld [vmem:[%s1 + $0x470] sm:$0xff]
    %v179 = vld [vmem:[%s1 + $0x478] sm:$0xff]
    %v180 = vld [vmem:[%s1 + $0x480] sm:$0xff]
    %v181 = vld [vmem:[%s1 + $0x488] sm:$0xff]
    %v182 = vld [vmem:[%s1 + $0x490] sm:$0xff]
    %v183 = vld [vmem:[%s1 + $0x498] sm:$0xff]
    %v184 = vld [vmem:[%s1 + $0x4a0] sm:$0xff]
    %v185 = vld [vmem:[%s1 + $0x4a8] sm:$0xff]
    %v186 = vld [vmem:[%s1 + $0x4b0] sm:$0xff]
    %v187 = vld [vmem:[%s1 + $0x4b8] sm:$0xff]
    %v188 = vld [vmem:[%s1 + $0x4c0] sm:$0xff]
    %v189 = vld [vmem:[%s1 + $0x4c8] sm:$0xff]
    %v190 = vld [vmem:[%s1 + $0x4d0] sm:$0xff]
    %v191 = vld [vmem:[%s1 + $0x4d8] sm:$0xff]
    %v192 = vld [vmem:[%s1 + $0x4e0] sm:$0xff]
    %v193 = vld [vmem:[%s1 + $0x4e8] sm:$0xff]
    %v194 = vld [vmem:[%s1 + $0x4f0] sm:$0xff]
    %v195 = vld [vmem:[%s1 + $0x4f8] sm:$0xff]
    %v196 = vld [vmem:[%s1 + $0x500] sm:$0xff]
    %v197 = vld [vmem:[%s1 + $0x508] sm:$0xff]
    %v198 = vld [vmem:[%s1 + $0x510] sm:$0xff]
    %v199 = vld [vmem:[%s1 + $0x518] sm:$0xff]
    %v200 = vld [vmem:[%s1 + $0x520] sm:$0xff]
    %v201 = vld [vmem:[%s1 + $0x528] sm:$0xff]
    %v202 = vld [vmem:[%s1 + $0x530] sm:$0xff]
    %v203 = vld [vmem:[%s1 + $0x538] sm:$0xff]
    %v204 = vld [vmem:[%s1 + $0x540] sm:$0xff]
    %v205 = vld [vmem:[%s1 + $0x548] sm:$0xff]
    %v206 = vld [vmem:[%s1 + $0x550] sm:$0xff]
    %v207 = vld [vmem:[%s1 + $0x558] sm:$0xff]
    %v208 = vld [vmem:[%s1 + $0x560] sm:$0xff]
    %v209 = vld [vmem:[%s1 + $0x568] sm:$0xff]
    %v210 = vld [vmem:[%s1 + $0x570] sm:$0xff]
    %v211 = vld [vmem:[%s1 + $0x578] sm:$0xff]
    %v212 = vld [vmem:[%s1 + $0x580] sm:$0xff]
    %v213 = vld [vmem:[%s1 + $0x588] sm:$0xff]
    %v214 = vld [vmem:[%s1 + $0x590] sm:$0xff]
    %v215 = vld [vmem:[%s1 + $0x598] sm:$0xff]
    %v216 = vld [vmem:[%s1 + $0x5a0] sm:$0xff]
    %v217 = vld [vmem:[%s1 + $0x5a8] sm:$0xff]
    %v218 = vld [vmem:[%s1 + $0x5b0] sm:$0xff]
    %v219 = vld [vmem:[%s1 + $0x5b8] sm:$0xff]
    %v220 = vld [vmem:[%s1 + $0x5c0] sm:$0xff]
    %v221 = vld [vmem:[%s1 + $0x5c8] sm:$0xff]
    %v222 = vld [vmem:[%s1 + $0x5d0] sm:$0xff]
    %v223 = vld [vmem:[%s1 + $0x5d8] sm:$0xff]
    %v224 = vld [vmem:[%s1 + $0x5e0] sm:$0xff]
    %v225 = vld [vmem:[%s1 + $0x5e8] sm:$0xff]
    %v226 = vld [vmem:[%s1 + $0x5f0] sm:$0xff]
    %v227 = vld [vmem:[%s1 + $0x5f8] sm:$0xff]
    %v228 = vld [vmem:[%s1 + $0x600] sm:$0xff]
    %v229 = vld [vmem:[%s1 + $0x608] sm:$0xff]
    %v230 = vld [vmem:[%s1 + $0x610] sm:$0xff]
    %v231 = vld [vmem:[%s1 + $0x618] sm:$0xff]
    %v232 = vld [vmem:[%s1 + $0x620] sm:$0xff]
    %v233 = vld [vmem:[%s1 + $0x628] sm:$0xff]
    %v234 = vld [vmem:[%s1 + $0x630] sm:$0xff]
    %v235 = vld [vmem:[%s1 + $0x638] sm:$0xff]
    %v236 = vld [vmem:[%s1 + $0x640] sm:$0xff]
    %v237 = vld [vmem:[%s1 + $0x648] sm:$0xff]
    %v238 = vld [vmem:[%s1 + $0x650] sm:$0xff]
    %v239 = vld [vmem:[%s1 + $0x658] sm:$0xff]
    %v240 = vld [vmem:[%s1 + $0x660] sm:$0xff]
    %v241 = vld [vmem:[%s1 + $0x668] sm:$0xff]
    %v242 = vld [vmem:[%s1 + $0x670] sm:$0xff]
    %v243 = vld [vmem:[%s1 + $0x678] sm:$0xff]
    %v244 = vld [vmem:[%s1 + $0x680] sm:$0xff]
    %v245 = vld [vmem:[%s1 + $0x688] sm:$0xff]
    %v246 = vld [vmem:[%s1 + $0x690] sm:$0xff]
    %v247 = vld [vmem:[%s1 + $0x698] sm:$0xff]
    %v248 = vld [vmem:[%s1 + $0x6a0] sm:$0xff]
    %v249 = vld [vmem:[%s1 + $0x6a8] sm:$0xff]
    %v250 = vld [vmem:[%s1 + $0x6b0] sm:$0xff]
    %v251 = vld [vmem:[%s1 + $0x6b8] sm:$0xff]
    %v252 = vld [vmem:[%s1 + $0x6c0] sm:$0xff]
    %v253 = vld [vmem:[%s1 + $0x6c8] sm:$0xff]
    %v254 = vld [vmem:[%s1 + $0x6d0] sm:$0xff]
    %v255 = vld [vmem:[%s1 + $0x6d8] sm:$0xff]
    %v256 = vld [vmem:[%s1 + $0x6e0] sm:$0xff]
    %v257 = vld [vmem:[%s1 + $0x6e8] sm:$0xff]
    %v258 = vld [vmem:[%s1 + $0x6f0] sm:$0xff]
    %v259 = vld [vmem:[%s1 + $0x6f8] sm:$0xff]
    %v260 = vld [vmem:[%s1 + $0x700] sm:$0xff]
    %v261 = vld [vmem:[%s1 + $0x708] sm:$0xff]
    %v262 = vld [vmem:[%s1 + $0x710] sm:$0xff]
    %v263 = vld [vmem:[%s1 + $0x718] sm:$0xff]
    %v264 = vld [vmem:[%s1 + $0x720] sm:$0xff]
    %v265 = vld [vmem:[%s1 + $0x728] sm:$0xff]
    %v266 = vld [vmem:[%s1 + $0x730] sm:$0xff]
    %v267 = vld [vmem:[%s1 + $0x738] sm:$0xff]
    %v268 = vld [vmem:[%s1 + $0x740] sm:$0xff]
    %v269 = vld [vmem:[%s1 + $0x748] sm:$0xff]
    %v270 = vld [vmem:[%s1 + $0x750] sm:$0xff]
    %v271 = vld [vmem:[%s1 + $0x758] sm:$0xff]
    %v272 = vld [vmem:[%s1 + $0x760] sm:$0xff]
    %v273 = vld [vmem:[%s1 + $0x768] sm:$0xff]
    %v274 = vld [vmem:[%s1 + $0x770] sm:$0xff]
    %v275 = vld [vmem:[%s1 + $0x778] sm:$0xff]
    %v276 = vld [vmem:[%s1 + $0x780] sm:$0xff]
    %v277 = vld [vmem:[%s1 + $0x788] sm:$0xff]
    %v278 = vld [vmem:[%s1 + $0x790] sm:$0xff]
    %v279 = vld [vmem:[%s1 + $0x798] sm:$0xff]
    %v280 = vld [vmem:[%s1 + $0x7a0] sm:$0xff]
    %v281 = vld [vmem:[%s1 + $0x7a8] sm:$0xff]
    %v282 = vld [vmem:[%s1 + $0x7b0] sm:$0xff]
    %v283 = vld [vmem:[%s1 + $0x7b8] sm:$0xff]
    %v284 = vld [vmem:[%s1 + $0x7c0] sm:$0xff]
    %v285 = vld [vmem:[%s1 + $0x7c8] sm:$0xff]
    %v286 = vld [vmem:[%s1 + $0x7d0] sm:$0xff]
    %v287 = vld [vmem:[%s1 + $0x7d8] sm:$0xff]
    %v288 = vld [vmem:[%s1 + $0x7e0] sm:$0xff]
    %v289 = vld [vmem:[%s1 + $0x7e8] sm:$0xff]
    %v290 = vld [vmem:[%s1 + $0x7f0] sm:$0xff]
    %v291 = vld [vmem:[%s1 + $0x7f8] sm:$0xff]
    %v292 = vld [vmem:[%s1 + $0x800] sm:$0xff]
    %v293 = vld [vmem:[%s1 + $0x808] sm:$0xff]
    %v294 = vld [vmem:[%s1 + $0x810] sm:$0xff]
    %v295 = vld [vmem:[%s1 + $0x818] sm:$0xff]
    %v296 = vld [vmem:[%s1 + $0x820] sm:$0xff]
    %v297 = vld [vmem:[%s1 + $0x828] sm:$0xff]
    %v298 = vld [vmem:[%s1 + $0x830] sm:$0xff]
    %v299 = vld [vmem:[%s1 + $0x838] sm:$0xff]
    %v300 = vld [vmem:[%s1 + $0x840] sm:$0xff]
    %v301 = vld [vmem:[%s1 + $0x848] sm:$0xff]
    %v302 = vld [vmem:[%s1 + $0x850] sm:$0xff]
    %v303 = vld [vmem:[%s1 + $0x858] sm:$0xff]
    %v304 = vld [vmem:[%s1 + $0x860] sm:$0xff]
    %v305 = vld [vmem:[%s1 + $0x868] sm:$0xff]
    %v306 = vld [vmem:[%s1 + $0x870] sm:$0xff]
    %v307 = vld [vmem:[%s1 + $0x878] sm:$0xff]
    %v308 = vld [vmem:[%s1 + $0x880] sm:$0xff]
    %v309 = vld [vmem:[%s1 + $0x888] sm:$0xff]
    %v310 = vld [vmem:[%s1 + $0x890] sm:$0xff]
    %v311 = vld [vmem:[%s1 + $0x898] sm:$0xff]
    %v312 = vld [vmem:[%s1 + $0x8a0] sm:$0xff]
    %v313 = vld [vmem:[%s1 + $0x8a8] sm:$0xff]
    %v314 = vld [vmem:[%s1 + $0x8b0] sm:$0xff]
    %v315 = vld [vmem:[%s1 + $0x8b8] sm:$0xff]
    %v316 = vld [vmem:[%s1 + $0x8c0] sm:$0xff]
    %v317 = vld [vmem:[%s1 + $0x8c8] sm:$0xff]
    %v318 = vld [vmem:[%s1 + $0x8d0] sm:$0xff]
    %v319 = vld [vmem:[%s1 + $0x8d8] sm:$0xff]
    %v320 = vld [vmem:[%s1 + $0x8e0] sm:$0xff]
    %v321 = vld [vmem:[%s1 + $0x8e8] sm:$0xff]
    %v322 = vld [vmem:[%s1 + $0x8f0] sm:$0xff]
    %v323 = vld [vmem:[%s1 + $0x8f8] sm:$0xff]
    %v324 = vld [vmem:[%s2] sm:$0x3]
    %v326 = vperm.slane %v324, 0
    %v327 = vperm.slane %v324, 1
    %v339 = vunpack.c.l.b16 %v27
    %v340 = vunpack.c.h.b16 %v27
    %v341 = vunpack.c.l.b16 %v28
    %v342 = vunpack.c.h.b16 %v28
    %v343 = vunpack.c.l.b16 %v29
    %v344 = vunpack.c.h.b16 %v29
    %v345 = vunpack.c.l.b16 %v30
    %v346 = vunpack.c.h.b16 %v30
    %v347 = vunpack.c.l.b16 %v31
    %v348 = vunpack.c.h.b16 %v31
    %v349 = vunpack.c.l.b16 %v32
    %v350 = vunpack.c.h.b16 %v32
    %v351 = vunpack.c.l.b16 %v33
    %v352 = vunpack.c.h.b16 %v33
    %v353 = vunpack.c.l.b16 %v34
    %v354 = vunpack.c.h.b16 %v34
    %v355 = vunpack.c.l.b16 %v35
    %v356 = vunpack.c.h.b16 %v35
    %v357 = vpack.c.b16 %v339, %v339
    %v358 = vpack.c.b16 %v340, %v340
    %v359 = vpack.c.b16 %v341, %v341
    %v360 = vpack.c.b16 %v342, %v342
    %v361 = vpack.c.b16 %v343, %v343
    %v362 = vpack.c.b16 %v344, %v344
    %v363 = vpack.c.b16 %v345, %v345
    %v364 = vpack.c.b16 %v346, %v346
    %v365 = vpack.c.b16 %v347, %v347
    %v366 = vpack.c.b16 %v348, %v348
    %v367 = vpack.c.b16 %v349, %v349
    %v368 = vpack.c.b16 %v350, %v350
    %v369 = vpack.c.b16 %v351, %v351
    %v370 = vpack.c.b16 %v352, %v352
    %v371 = vpack.c.b16 %v353, %v353
    %v372 = vpack.c.b16 %v354, %v354
    %v373 = vpack.c.b16 %v355, %v355
    %v374 = vpack.c.b16 %v356, %v356
    %v681 = vunpack.c.l.b16 %v36
    %v682 = vunpack.c.h.b16 %v36
    %v683 = vunpack.c.l.b16 %v37
    %v684 = vunpack.c.h.b16 %v37
    %v685 = vunpack.c.l.b16 %v38
    %v686 = vunpack.c.h.b16 %v38
    %v687 = vunpack.c.l.b16 %v39
    %v688 = vunpack.c.h.b16 %v39
    %v689 = vunpack.c.l.b16 %v40
    %v690 = vunpack.c.h.b16 %v40
    %v691 = vunpack.c.l.b16 %v41
    %v692 = vunpack.c.h.b16 %v41
    %v693 = vunpack.c.l.b16 %v42
    %v694 = vunpack.c.h.b16 %v42
    %v695 = vunpack.c.l.b16 %v43
    %v696 = vunpack.c.h.b16 %v43
    %v697 = vunpack.c.l.b16 %v44
    %v698 = vunpack.c.h.b16 %v44
    %v699 = vunpack.c.l.b16 %v45
    %v700 = vunpack.c.h.b16 %v45
    %v701 = vunpack.c.l.b16 %v46
    %v702 = vunpack.c.h.b16 %v46
    %v703 = vunpack.c.l.b16 %v47
    %v704 = vunpack.c.h.b16 %v47
    %v705 = vunpack.c.l.b16 %v48
    %v706 = vunpack.c.h.b16 %v48
    %v707 = vunpack.c.l.b16 %v49
    %v708 = vunpack.c.h.b16 %v49
    %v709 = vunpack.c.l.b16 %v50
    %v710 = vunpack.c.h.b16 %v50
    %v711 = vunpack.c.l.b16 %v51
    %v712 = vunpack.c.h.b16 %v51
    %v713 = vunpack.c.l.b16 %v52
    %v714 = vunpack.c.h.b16 %v52
    %v715 = vunpack.c.l.b16 %v53
    %v716 = vunpack.c.h.b16 %v53
    %v717 = vunpack.c.l.b16 %v54
    %v718 = vunpack.c.h.b16 %v54
    %v719 = vunpack.c.l.b16 %v55
    %v720 = vunpack.c.h.b16 %v55
    %v721 = vunpack.c.l.b16 %v56
    %v722 = vunpack.c.h.b16 %v56
    %v723 = vunpack.c.l.b16 %v57
    %v724 = vunpack.c.h.b16 %v57
    %v725 = vunpack.c.l.b16 %v58
    %v726 = vunpack.c.h.b16 %v58
    %v727 = vunpack.c.l.b16 %v59
    %v728 = vunpack.c.h.b16 %v59
    %v729 = vunpack.c.l.b16 %v60
    %v730 = vunpack.c.h.b16 %v60
    %v731 = vunpack.c.l.b16 %v61
    %v732 = vunpack.c.h.b16 %v61
    %v733 = vunpack.c.l.b16 %v62
    %v734 = vunpack.c.h.b16 %v62
    %v735 = vunpack.c.l.b16 %v63
    %v736 = vunpack.c.h.b16 %v63
    %v737 = vunpack.c.l.b16 %v64
    %v738 = vunpack.c.h.b16 %v64
    %v739 = vunpack.c.l.b16 %v65
    %v740 = vunpack.c.h.b16 %v65
    %v741 = vunpack.c.l.b16 %v66
    %v742 = vunpack.c.h.b16 %v66
    %v743 = vunpack.c.l.b16 %v67
    %v744 = vunpack.c.h.b16 %v67
    %v745 = vunpack.c.l.b16 %v68
    %v746 = vunpack.c.h.b16 %v68
    %v747 = vunpack.c.l.b16 %v69
    %v748 = vunpack.c.h.b16 %v69
    %v749 = vunpack.c.l.b16 %v70
    %v750 = vunpack.c.h.b16 %v70
    %v751 = vunpack.c.l.b16 %v71
    %v752 = vunpack.c.h.b16 %v71
    %v753 = vunpack.c.l.b16 %v72
    %v754 = vunpack.c.h.b16 %v72
    %v755 = vunpack.c.l.b16 %v73
    %v756 = vunpack.c.h.b16 %v73
    %v757 = vunpack.c.l.b16 %v74
    %v758 = vunpack.c.h.b16 %v74
    %v759 = vunpack.c.l.b16 %v75
    %v760 = vunpack.c.h.b16 %v75
    %v761 = vunpack.c.l.b16 %v76
    %v762 = vunpack.c.h.b16 %v76
    %v763 = vunpack.c.l.b16 %v77
    %v764 = vunpack.c.h.b16 %v77
    %v765 = vunpack.c.l.b16 %v78
    %v766 = vunpack.c.h.b16 %v78
    %v767 = vunpack.c.l.b16 %v79
    %v768 = vunpack.c.h.b16 %v79
    %v769 = vunpack.c.l.b16 %v80
    %v770 = vunpack.c.h.b16 %v80
    %v771 = vunpack.c.l.b16 %v81
    %v772 = vunpack.c.h.b16 %v81
    %v773 = vunpack.c.l.b16 %v82
    %v774 = vunpack.c.h.b16 %v82
    %v775 = vunpack.c.l.b16 %v83
    %v776 = vunpack.c.h.b16 %v83
    %v777 = vunpack.c.l.b16 %v84
    %v778 = vunpack.c.h.b16 %v84
    %v779 = vunpack.c.l.b16 %v85
    %v780 = vunpack.c.h.b16 %v85
    %v781 = vunpack.c.l.b16 %v86
    %v782 = vunpack.c.h.b16 %v86
    %v783 = vunpack.c.l.b16 %v87
    %v784 = vunpack.c.h.b16 %v87
    %v785 = vunpack.c.l.b16 %v88
    %v786 = vunpack.c.h.b16 %v88
    %v787 = vunpack.c.l.b16 %v89
    %v788 = vunpack.c.h.b16 %v89
    %v789 = vunpack.c.l.b16 %v90
    %v790 = vunpack.c.h.b16 %v90
    %v791 = vunpack.c.l.b16 %v91
    %v792 = vunpack.c.h.b16 %v91
    %v793 = vunpack.c.l.b16 %v92
    %v794 = vunpack.c.h.b16 %v92
    %v795 = vunpack.c.l.b16 %v93
    %v796 = vunpack.c.h.b16 %v93
    %v797 = vunpack.c.l.b16 %v94
    %v798 = vunpack.c.h.b16 %v94
    %v799 = vunpack.c.l.b16 %v95
    %v800 = vunpack.c.h.b16 %v95
    %v801 = vunpack.c.l.b16 %v96
    %v802 = vunpack.c.h.b16 %v96
    %v803 = vunpack.c.l.b16 %v97
    %v804 = vunpack.c.h.b16 %v97
    %v805 = vunpack.c.l.b16 %v98
    %v806 = vunpack.c.h.b16 %v98
    %v807 = vunpack.c.l.b16 %v99
    %v808 = vunpack.c.h.b16 %v99
    %v809 = vunpack.c.l.b16 %v100
    %v810 = vunpack.c.h.b16 %v100
    %v811 = vunpack.c.l.b16 %v101
    %v812 = vunpack.c.h.b16 %v101
    %v813 = vunpack.c.l.b16 %v102
    %v814 = vunpack.c.h.b16 %v102
    %v815 = vunpack.c.l.b16 %v103
    %v816 = vunpack.c.h.b16 %v103
    %v817 = vunpack.c.l.b16 %v104
    %v818 = vunpack.c.h.b16 %v104
    %v819 = vunpack.c.l.b16 %v105
    %v820 = vunpack.c.h.b16 %v105
    %v821 = vunpack.c.l.b16 %v106
    %v822 = vunpack.c.h.b16 %v106
    %v823 = vunpack.c.l.b16 %v107
    %v824 = vunpack.c.h.b16 %v107
    %v825 = vunpack.c.l.b16 %v108
    %v826 = vunpack.c.h.b16 %v108
    %v827 = vunpack.c.l.b16 %v109
    %v828 = vunpack.c.h.b16 %v109
    %v829 = vunpack.c.l.b16 %v110
    %v830 = vunpack.c.h.b16 %v110
    %v831 = vunpack.c.l.b16 %v111
    %v832 = vunpack.c.h.b16 %v111
    %v833 = vunpack.c.l.b16 %v112
    %v834 = vunpack.c.h.b16 %v112
    %v835 = vunpack.c.l.b16 %v113
    %v836 = vunpack.c.h.b16 %v113
    %v837 = vunpack.c.l.b16 %v114
    %v838 = vunpack.c.h.b16 %v114
    %v839 = vunpack.c.l.b16 %v115
    %v840 = vunpack.c.h.b16 %v115
    %v841 = vunpack.c.l.b16 %v116
    %v842 = vunpack.c.h.b16 %v116
    %v843 = vunpack.c.l.b16 %v117
    %v844 = vunpack.c.h.b16 %v117
    %v845 = vunpack.c.l.b16 %v118
    %v846 = vunpack.c.h.b16 %v118
    %v847 = vunpack.c.l.b16 %v119
    %v848 = vunpack.c.h.b16 %v119
    %v849 = vunpack.c.l.b16 %v120
    %v850 = vunpack.c.h.b16 %v120
    %v851 = vunpack.c.l.b16 %v121
    %v852 = vunpack.c.h.b16 %v121
    %v853 = vunpack.c.l.b16 %v122
    %v854 = vunpack.c.h.b16 %v122
    %v855 = vunpack.c.l.b16 %v123
    %v856 = vunpack.c.h.b16 %v123
    %v857 = vunpack.c.l.b16 %v124
    %v858 = vunpack.c.h.b16 %v124
    %v859 = vunpack.c.l.b16 %v125
    %v860 = vunpack.c.h.b16 %v125
    %v861 = vunpack.c.l.b16 %v126
    %v862 = vunpack.c.h.b16 %v126
    %v863 = vunpack.c.l.b16 %v127
    %v864 = vunpack.c.h.b16 %v127
    %v865 = vunpack.c.l.b16 %v128
    %v866 = vunpack.c.h.b16 %v128
    %v867 = vunpack.c.l.b16 %v129
    %v868 = vunpack.c.h.b16 %v129
    %v869 = vunpack.c.l.b16 %v130
    %v870 = vunpack.c.h.b16 %v130
    %v871 = vunpack.c.l.b16 %v131
    %v872 = vunpack.c.h.b16 %v131
    %v873 = vunpack.c.l.b16 %v132
    %v874 = vunpack.c.h.b16 %v132
    %v875 = vunpack.c.l.b16 %v133
    %v876 = vunpack.c.h.b16 %v133
    %v877 = vunpack.c.l.b16 %v134
    %v878 = vunpack.c.h.b16 %v134
    %v879 = vunpack.c.l.b16 %v135
    %v880 = vunpack.c.h.b16 %v135
    %v881 = vunpack.c.l.b16 %v136
    %v882 = vunpack.c.h.b16 %v136
    %v883 = vunpack.c.l.b16 %v137
    %v884 = vunpack.c.h.b16 %v137
    %v885 = vunpack.c.l.b16 %v138
    %v886 = vunpack.c.h.b16 %v138
    %v887 = vunpack.c.l.b16 %v139
    %v888 = vunpack.c.h.b16 %v139
    %v889 = vunpack.c.l.b16 %v140
    %v890 = vunpack.c.h.b16 %v140
    %v891 = vunpack.c.l.b16 %v141
    %v892 = vunpack.c.h.b16 %v141
    %v893 = vunpack.c.l.b16 %v142
    %v894 = vunpack.c.h.b16 %v142
    %v895 = vunpack.c.l.b16 %v143
    %v896 = vunpack.c.h.b16 %v143
    %v897 = vunpack.c.l.b16 %v144
    %v898 = vunpack.c.h.b16 %v144
    %v899 = vunpack.c.l.b16 %v145
    %v900 = vunpack.c.h.b16 %v145
    %v901 = vunpack.c.l.b16 %v146
    %v902 = vunpack.c.h.b16 %v146
    %v903 = vunpack.c.l.b16 %v147
    %v904 = vunpack.c.h.b16 %v147
    %v905 = vunpack.c.l.b16 %v148
    %v906 = vunpack.c.h.b16 %v148
    %v907 = vunpack.c.l.b16 %v149
    %v908 = vunpack.c.h.b16 %v149
    %v909 = vunpack.c.l.b16 %v150
    %v910 = vunpack.c.h.b16 %v150
    %v911 = vunpack.c.l.b16 %v151
    %v912 = vunpack.c.h.b16 %v151
    %v913 = vunpack.c.l.b16 %v152
    %v914 = vunpack.c.h.b16 %v152
    %v915 = vunpack.c.l.b16 %v153
    %v916 = vunpack.c.h.b16 %v153
    %v917 = vunpack.c.l.b16 %v154
    %v918 = vunpack.c.h.b16 %v154
    %v919 = vunpack.c.l.b16 %v155
    %v920 = vunpack.c.h.b16 %v155
    %v921 = vunpack.c.l.b16 %v156
    %v922 = vunpack.c.h.b16 %v156
    %v923 = vunpack.c.l.b16 %v157
    %v924 = vunpack.c.h.b16 %v157
    %v925 = vunpack.c.l.b16 %v158
    %v926 = vunpack.c.h.b16 %v158
    %v927 = vunpack.c.l.b16 %v159
    %v928 = vunpack.c.h.b16 %v159
    %v929 = vunpack.c.l.b16 %v160
    %v930 = vunpack.c.h.b16 %v160
    %v931 = vunpack.c.l.b16 %v161
    %v932 = vunpack.c.h.b16 %v161
    %v933 = vunpack.c.l.b16 %v162
    %v934 = vunpack.c.h.b16 %v162
    %v935 = vunpack.c.l.b16 %v163
    %v936 = vunpack.c.h.b16 %v163
    %v937 = vunpack.c.l.b16 %v164
    %v938 = vunpack.c.h.b16 %v164
    %v939 = vunpack.c.l.b16 %v165
    %v940 = vunpack.c.h.b16 %v165
    %v941 = vunpack.c.l.b16 %v166
    %v942 = vunpack.c.h.b16 %v166
    %v943 = vunpack.c.l.b16 %v167
    %v944 = vunpack.c.h.b16 %v167
    %v945 = vunpack.c.l.b16 %v168
    %v946 = vunpack.c.h.b16 %v168
    %v947 = vunpack.c.l.b16 %v169
    %v948 = vunpack.c.h.b16 %v169
    %v949 = vunpack.c.l.b16 %v170
    %v950 = vunpack.c.h.b16 %v170
    %v951 = vunpack.c.l.b16 %v171
    %v952 = vunpack.c.h.b16 %v171
    %v953 = vunpack.c.l.b16 %v172
    %v954 = vunpack.c.h.b16 %v172
    %v955 = vunpack.c.l.b16 %v173
    %v956 = vunpack.c.h.b16 %v173
    %v957 = vunpack.c.l.b16 %v174
    %v958 = vunpack.c.h.b16 %v174
    %v959 = vunpack.c.l.b16 %v175
    %v960 = vunpack.c.h.b16 %v175
    %v961 = vunpack.c.l.b16 %v176
    %v962 = vunpack.c.h.b16 %v176
    %v963 = vunpack.c.l.b16 %v177
    %v964 = vunpack.c.h.b16 %v177
    %v965 = vunpack.c.l.b16 %v178
    %v966 = vunpack.c.h.b16 %v178
    %v967 = vunpack.c.l.b16 %v179
    %v968 = vunpack.c.h.b16 %v179
    %v969 = vunpack.c.l.b16 %v180
    %v970 = vunpack.c.h.b16 %v180
    %v971 = vunpack.c.l.b16 %v181
    %v972 = vunpack.c.h.b16 %v181
    %v973 = vunpack.c.l.b16 %v182
    %v974 = vunpack.c.h.b16 %v182
    %v975 = vunpack.c.l.b16 %v183
    %v976 = vunpack.c.h.b16 %v183
    %v977 = vunpack.c.l.b16 %v184
    %v978 = vunpack.c.h.b16 %v184
    %v979 = vunpack.c.l.b16 %v185
    %v980 = vunpack.c.h.b16 %v185
    %v981 = vunpack.c.l.b16 %v186
    %v982 = vunpack.c.h.b16 %v186
    %v983 = vunpack.c.l.b16 %v187
    %v984 = vunpack.c.h.b16 %v187
    %v985 = vunpack.c.l.b16 %v188
    %v986 = vunpack.c.h.b16 %v188
    %v987 = vunpack.c.l.b16 %v189
    %v988 = vunpack.c.h.b16 %v189
    %v989 = vunpack.c.l.b16 %v190
    %v990 = vunpack.c.h.b16 %v190
    %v991 = vunpack.c.l.b16 %v191
    %v992 = vunpack.c.h.b16 %v191
    %v993 = vunpack.c.l.b16 %v192
    %v994 = vunpack.c.h.b16 %v192
    %v995 = vunpack.c.l.b16 %v193
    %v996 = vunpack.c.h.b16 %v193
    %v997 = vunpack.c.l.b16 %v194
    %v998 = vunpack.c.h.b16 %v194
    %v999 = vunpack.c.l.b16 %v195
    %v1000 = vunpack.c.h.b16 %v195
    %v1001 = vunpack.c.l.b16 %v196
    %v1002 = vunpack.c.h.b16 %v196
    %v1003 = vunpack.c.l.b16 %v197
    %v1004 = vunpack.c.h.b16 %v197
    %v1005 = vunpack.c.l.b16 %v198
    %v1006 = vunpack.c.h.b16 %v198
    %v1007 = vunpack.c.l.b16 %v199
    %v1008 = vunpack.c.h.b16 %v199
    %v1009 = vunpack.c.l.b16 %v200
    %v1010 = vunpack.c.h.b16 %v200
    %v1011 = vunpack.c.l.b16 %v201
    %v1012 = vunpack.c.h.b16 %v201
    %v1013 = vunpack.c.l.b16 %v202
    %v1014 = vunpack.c.h.b16 %v202
    %v1015 = vunpack.c.l.b16 %v203
    %v1016 = vunpack.c.h.b16 %v203
    %v1017 = vunpack.c.l.b16 %v204
    %v1018 = vunpack.c.h.b16 %v204
    %v1019 = vunpack.c.l.b16 %v205
    %v1020 = vunpack.c.h.b16 %v205
    %v1021 = vunpack.c.l.b16 %v206
    %v1022 = vunpack.c.h.b16 %v206
    %v1023 = vunpack.c.l.b16 %v207
    %v1024 = vunpack.c.h.b16 %v207
    %v1025 = vunpack.c.l.b16 %v208
    %v1026 = vunpack.c.h.b16 %v208
    %v1027 = vunpack.c.l.b16 %v209
    %v1028 = vunpack.c.h.b16 %v209
    %v1029 = vunpack.c.l.b16 %v210
    %v1030 = vunpack.c.h.b16 %v210
    %v1031 = vunpack.c.l.b16 %v211
    %v1032 = vunpack.c.h.b16 %v211
    %v1033 = vunpack.c.l.b16 %v212
    %v1034 = vunpack.c.h.b16 %v212
    %v1035 = vunpack.c.l.b16 %v213
    %v1036 = vunpack.c.h.b16 %v213
    %v1037 = vunpack.c.l.b16 %v214
    %v1038 = vunpack.c.h.b16 %v214
    %v1039 = vunpack.c.l.b16 %v215
    %v1040 = vunpack.c.h.b16 %v215
    %v1041 = vunpack.c.l.b16 %v216
    %v1042 = vunpack.c.h.b16 %v216
    %v1043 = vunpack.c.l.b16 %v217
    %v1044 = vunpack.c.h.b16 %v217
    %v1045 = vunpack.c.l.b16 %v218
    %v1046 = vunpack.c.h.b16 %v218
    %v1047 = vunpack.c.l.b16 %v219
    %v1048 = vunpack.c.h.b16 %v219
    %v1049 = vunpack.c.l.b16 %v220
    %v1050 = vunpack.c.h.b16 %v220
    %v1051 = vunpack.c.l.b16 %v221
    %v1052 = vunpack.c.h.b16 %v221
    %v1053 = vunpack.c.l.b16 %v222
    %v1054 = vunpack.c.h.b16 %v222
    %v1055 = vunpack.c.l.b16 %v223
    %v1056 = vunpack.c.h.b16 %v223
    %v1057 = vunpack.c.l.b16 %v224
    %v1058 = vunpack.c.h.b16 %v224
    %v1059 = vunpack.c.l.b16 %v225
    %v1060 = vunpack.c.h.b16 %v225
    %v1061 = vunpack.c.l.b16 %v226
    %v1062 = vunpack.c.h.b16 %v226
    %v1063 = vunpack.c.l.b16 %v227
    %v1064 = vunpack.c.h.b16 %v227
    %v1065 = vunpack.c.l.b16 %v228
    %v1066 = vunpack.c.h.b16 %v228
    %v1067 = vunpack.c.l.b16 %v229
    %v1068 = vunpack.c.h.b16 %v229
    %v1069 = vunpack.c.l.b16 %v230
    %v1070 = vunpack.c.h.b16 %v230
    %v1071 = vunpack.c.l.b16 %v231
    %v1072 = vunpack.c.h.b16 %v231
    %v1073 = vunpack.c.l.b16 %v232
    %v1074 = vunpack.c.h.b16 %v232
    %v1075 = vunpack.c.l.b16 %v233
    %v1076 = vunpack.c.h.b16 %v233
    %v1077 = vunpack.c.l.b16 %v234
    %v1078 = vunpack.c.h.b16 %v234
    %v1079 = vunpack.c.l.b16 %v235
    %v1080 = vunpack.c.h.b16 %v235
    %v1081 = vunpack.c.l.b16 %v236
    %v1082 = vunpack.c.h.b16 %v236
    %v1083 = vunpack.c.l.b16 %v237
    %v1084 = vunpack.c.h.b16 %v237
    %v1085 = vunpack.c.l.b16 %v238
    %v1086 = vunpack.c.h.b16 %v238
    %v1087 = vunpack.c.l.b16 %v239
    %v1088 = vunpack.c.h.b16 %v239
    %v1089 = vunpack.c.l.b16 %v240
    %v1090 = vunpack.c.h.b16 %v240
    %v1091 = vunpack.c.l.b16 %v241
    %v1092 = vunpack.c.h.b16 %v241
    %v1093 = vunpack.c.l.b16 %v242
    %v1094 = vunpack.c.h.b16 %v242
    %v1095 = vunpack.c.l.b16 %v243
    %v1096 = vunpack.c.h.b16 %v243
    %v1097 = vunpack.c.l.b16 %v244
    %v1098 = vunpack.c.h.b16 %v244
    %v1099 = vunpack.c.l.b16 %v245
    %v1100 = vunpack.c.h.b16 %v245
    %v1101 = vunpack.c.l.b16 %v246
    %v1102 = vunpack.c.h.b16 %v246
    %v1103 = vunpack.c.l.b16 %v247
    %v1104 = vunpack.c.h.b16 %v247
    %v1105 = vunpack.c.l.b16 %v248
    %v1106 = vunpack.c.h.b16 %v248
    %v1107 = vunpack.c.l.b16 %v249
    %v1108 = vunpack.c.h.b16 %v249
    %v1109 = vunpack.c.l.b16 %v250
    %v1110 = vunpack.c.h.b16 %v250
    %v1111 = vunpack.c.l.b16 %v251
    %v1112 = vunpack.c.h.b16 %v251
    %v1113 = vunpack.c.l.b16 %v252
    %v1114 = vunpack.c.h.b16 %v252
    %v1115 = vunpack.c.l.b16 %v253
    %v1116 = vunpack.c.h.b16 %v253
    %v1117 = vunpack.c.l.b16 %v254
    %v1118 = vunpack.c.h.b16 %v254
    %v1119 = vunpack.c.l.b16 %v255
    %v1120 = vunpack.c.h.b16 %v255
    %v1121 = vunpack.c.l.b16 %v256
    %v1122 = vunpack.c.h.b16 %v256
    %v1123 = vunpack.c.l.b16 %v257
    %v1124 = vunpack.c.h.b16 %v257
    %v1125 = vunpack.c.l.b16 %v258
    %v1126 = vunpack.c.h.b16 %v258
    %v1127 = vunpack.c.l.b16 %v259
    %v1128 = vunpack.c.h.b16 %v259
    %v1129 = vunpack.c.l.b16 %v260
    %v1130 = vunpack.c.h.b16 %v260
    %v1131 = vunpack.c.l.b16 %v261
    %v1132 = vunpack.c.h.b16 %v261
    %v1133 = vunpack.c.l.b16 %v262
    %v1134 = vunpack.c.h.b16 %v262
    %v1135 = vunpack.c.l.b16 %v263
    %v1136 = vunpack.c.h.b16 %v263
    %v1137 = vunpack.c.l.b16 %v264
    %v1138 = vunpack.c.h.b16 %v264
    %v1139 = vunpack.c.l.b16 %v265
    %v1140 = vunpack.c.h.b16 %v265
    %v1141 = vunpack.c.l.b16 %v266
    %v1142 = vunpack.c.h.b16 %v266
    %v1143 = vunpack.c.l.b16 %v267
    %v1144 = vunpack.c.h.b16 %v267
    %v1145 = vunpack.c.l.b16 %v268
    %v1146 = vunpack.c.h.b16 %v268
    %v1147 = vunpack.c.l.b16 %v269
    %v1148 = vunpack.c.h.b16 %v269
    %v1149 = vunpack.c.l.b16 %v270
    %v1150 = vunpack.c.h.b16 %v270
    %v1151 = vunpack.c.l.b16 %v271
    %v1152 = vunpack.c.h.b16 %v271
    %v1153 = vunpack.c.l.b16 %v272
    %v1154 = vunpack.c.h.b16 %v272
    %v1155 = vunpack.c.l.b16 %v273
    %v1156 = vunpack.c.h.b16 %v273
    %v1157 = vunpack.c.l.b16 %v274
    %v1158 = vunpack.c.h.b16 %v274
    %v1159 = vunpack.c.l.b16 %v275
    %v1160 = vunpack.c.h.b16 %v275
    %v1161 = vunpack.c.l.b16 %v276
    %v1162 = vunpack.c.h.b16 %v276
    %v1163 = vunpack.c.l.b16 %v277
    %v1164 = vunpack.c.h.b16 %v277
    %v1165 = vunpack.c.l.b16 %v278
    %v1166 = vunpack.c.h.b16 %v278
    %v1167 = vunpack.c.l.b16 %v279
    %v1168 = vunpack.c.h.b16 %v279
    %v1169 = vunpack.c.l.b16 %v280
    %v1170 = vunpack.c.h.b16 %v280
    %v1171 = vunpack.c.l.b16 %v281
    %v1172 = vunpack.c.h.b16 %v281
    %v1173 = vunpack.c.l.b16 %v282
    %v1174 = vunpack.c.h.b16 %v282
    %v1175 = vunpack.c.l.b16 %v283
    %v1176 = vunpack.c.h.b16 %v283
    %v1177 = vunpack.c.l.b16 %v284
    %v1178 = vunpack.c.h.b16 %v284
    %v1179 = vunpack.c.l.b16 %v285
    %v1180 = vunpack.c.h.b16 %v285
    %v1181 = vunpack.c.l.b16 %v286
    %v1182 = vunpack.c.h.b16 %v286
    %v1183 = vunpack.c.l.b16 %v287
    %v1184 = vunpack.c.h.b16 %v287
    %v1185 = vunpack.c.l.b16 %v288
    %v1186 = vunpack.c.h.b16 %v288
    %v1187 = vunpack.c.l.b16 %v289
    %v1188 = vunpack.c.h.b16 %v289
    %v1189 = vunpack.c.l.b16 %v290
    %v1190 = vunpack.c.h.b16 %v290
    %v1191 = vunpack.c.l.b16 %v291
    %v1192 = vunpack.c.h.b16 %v291
    %v1193 = vunpack.c.l.b16 %v292
    %v1194 = vunpack.c.h.b16 %v292
    %v1195 = vunpack.c.l.b16 %v293
    %v1196 = vunpack.c.h.b16 %v293
    %v1197 = vunpack.c.l.b16 %v294
    %v1198 = vunpack.c.h.b16 %v294
    %v1199 = vunpack.c.l.b16 %v295
    %v1200 = vunpack.c.h.b16 %v295
    %v1201 = vunpack.c.l.b16 %v296
    %v1202 = vunpack.c.h.b16 %v296
    %v1203 = vunpack.c.l.b16 %v297
    %v1204 = vunpack.c.h.b16 %v297
    %v1205 = vunpack.c.l.b16 %v298
    %v1206 = vunpack.c.h.b16 %v298
    %v1207 = vunpack.c.l.b16 %v299
    %v1208 = vunpack.c.h.b16 %v299
    %v1209 = vunpack.c.l.b16 %v300
    %v1210 = vunpack.c.h.b16 %v300
    %v1211 = vunpack.c.l.b16 %v301
    %v1212 = vunpack.c.h.b16 %v301
    %v1213 = vunpack.c.l.b16 %v302
    %v1214 = vunpack.c.h.b16 %v302
    %v1215 = vunpack.c.l.b16 %v303
    %v1216 = vunpack.c.h.b16 %v303
    %v1217 = vunpack.c.l.b16 %v304
    %v1218 = vunpack.c.h.b16 %v304
    %v1219 = vunpack.c.l.b16 %v305
    %v1220 = vunpack.c.h.b16 %v305
    %v1221 = vunpack.c.l.b16 %v306
    %v1222 = vunpack.c.h.b16 %v306
    %v1223 = vunpack.c.l.b16 %v307
    %v1224 = vunpack.c.h.b16 %v307
    %v1225 = vunpack.c.l.b16 %v308
    %v1226 = vunpack.c.h.b16 %v308
    %v1227 = vunpack.c.l.b16 %v309
    %v1228 = vunpack.c.h.b16 %v309
    %v1229 = vunpack.c.l.b16 %v310
    %v1230 = vunpack.c.h.b16 %v310
    %v1231 = vunpack.c.l.b16 %v311
    %v1232 = vunpack.c.h.b16 %v311
    %v1233 = vunpack.c.l.b16 %v312
    %v1234 = vunpack.c.h.b16 %v312
    %v1235 = vunpack.c.l.b16 %v313
    %v1236 = vunpack.c.h.b16 %v313
    %v1237 = vunpack.c.l.b16 %v314
    %v1238 = vunpack.c.h.b16 %v314
    %v1239 = vunpack.c.l.b16 %v315
    %v1240 = vunpack.c.h.b16 %v315
    %v1241 = vunpack.c.l.b16 %v316
    %v1242 = vunpack.c.h.b16 %v316
    %v1243 = vunpack.c.l.b16 %v317
    %v1244 = vunpack.c.h.b16 %v317
    %v1245 = vunpack.c.l.b16 %v318
    %v1246 = vunpack.c.h.b16 %v318
    %v1247 = vunpack.c.l.b16 %v319
    %v1248 = vunpack.c.h.b16 %v319
    %v1249 = vunpack.c.l.b16 %v320
    %v1250 = vunpack.c.h.b16 %v320
    %v1251 = vunpack.c.l.b16 %v321
    %v1252 = vunpack.c.h.b16 %v321
    %v1253 = vunpack.c.l.b16 %v322
    %v1254 = vunpack.c.h.b16 %v322
    %v1255 = vunpack.c.l.b16 %v323
    %v1256 = vunpack.c.h.b16 %v323
    %v1257 = vpack.c.b16 %v683, %v681
    %v1258 = vpack.c.b16 %v684, %v682
    %v1259 = vpack.c.b16 %v687, %v685
    %v1260 = vpack.c.b16 %v688, %v686
    %v1261 = vpack.c.b16 %v691, %v689
    %v1262 = vpack.c.b16 %v692, %v690
    %v1263 = vpack.c.b16 %v695, %v693
    %v1264 = vpack.c.b16 %v696, %v694
    %v1265 = vpack.c.b16 %v699, %v697
    %v1266 = vpack.c.b16 %v700, %v698
    %v1267 = vpack.c.b16 %v703, %v701
    %v1268 = vpack.c.b16 %v704, %v702
    %v1269 = vpack.c.b16 %v707, %v705
    %v1270 = vpack.c.b16 %v708, %v706
    %v1271 = vpack.c.b16 %v711, %v709
    %v1272 = vpack.c.b16 %v712, %v710
    %v1273 = vpack.c.b16 %v715, %v713
    %v1274 = vpack.c.b16 %v716, %v714
    %v1275 = vpack.c.b16 %v719, %v717
    %v1276 = vpack.c.b16 %v720, %v718
    %v1277 = vpack.c.b16 %v723, %v721
    %v1278 = vpack.c.b16 %v724, %v722
    %v1279 = vpack.c.b16 %v727, %v725
    %v1280 = vpack.c.b16 %v728, %v726
    %v1281 = vpack.c.b16 %v731, %v729
    %v1282 = vpack.c.b16 %v732, %v730
    %v1283 = vpack.c.b16 %v735, %v733
    %v1284 = vpack.c.b16 %v736, %v734
    %v1285 = vpack.c.b16 %v739, %v737
    %v1286 = vpack.c.b16 %v740, %v738
    %v1287 = vpack.c.b16 %v743, %v741
    %v1288 = vpack.c.b16 %v744, %v742
    %v1289 = vpack.c.b16 %v747, %v745
    %v1290 = vpack.c.b16 %v748, %v746
    %v1291 = vpack.c.b16 %v751, %v749
    %v1292 = vpack.c.b16 %v752, %v750
    %v1293 = vpack.c.b16 %v755, %v753
    %v1294 = vpack.c.b16 %v756, %v754
    %v1295 = vpack.c.b16 %v759, %v757
    %v1296 = vpack.c.b16 %v760, %v758
    %v1297 = vpack.c.b16 %v763, %v761
    %v1298 = vpack.c.b16 %v764, %v762
    %v1299 = vpack.c.b16 %v767, %v765
    %v1300 = vpack.c.b16 %v768, %v766
    %v1301 = vpack.c.b16 %v771, %v769
    %v1302 = vpack.c.b16 %v772, %v770
    %v1303 = vpack.c.b16 %v775, %v773
    %v1304 = vpack.c.b16 %v776, %v774
    %v1305 = vpack.c.b16 %v779, %v777
    %v1306 = vpack.c.b16 %v780, %v778
    %v1307 = vpack.c.b16 %v783, %v781
    %v1308 = vpack.c.b16 %v784, %v782
    %v1309 = vpack.c.b16 %v787, %v785
    %v1310 = vpack.c.b16 %v788, %v786
    %v1311 = vpack.c.b16 %v791, %v789
    %v1312 = vpack.c.b16 %v792, %v790
    %v1313 = vpack.c.b16 %v795, %v793
    %v1314 = vpack.c.b16 %v796, %v794
    %v1315 = vpack.c.b16 %v799, %v797
    %v1316 = vpack.c.b16 %v800, %v798
    %v1317 = vpack.c.b16 %v803, %v801
    %v1318 = vpack.c.b16 %v804, %v802
    %v1319 = vpack.c.b16 %v807, %v805
    %v1320 = vpack.c.b16 %v808, %v806
    %v1321 = vpack.c.b16 %v811, %v809
    %v1322 = vpack.c.b16 %v812, %v810
    %v1323 = vpack.c.b16 %v815, %v813
    %v1324 = vpack.c.b16 %v816, %v814
    %v1325 = vpack.c.b16 %v819, %v817
    %v1326 = vpack.c.b16 %v820, %v818
    %v1327 = vpack.c.b16 %v823, %v821
    %v1328 = vpack.c.b16 %v824, %v822
    %v1329 = vpack.c.b16 %v827, %v825
    %v1330 = vpack.c.b16 %v828, %v826
    %v1331 = vpack.c.b16 %v831, %v829
    %v1332 = vpack.c.b16 %v832, %v830
    %v1333 = vpack.c.b16 %v835, %v833
    %v1334 = vpack.c.b16 %v836, %v834
    %v1335 = vpack.c.b16 %v839, %v837
    %v1336 = vpack.c.b16 %v840, %v838
    %v1337 = vpack.c.b16 %v843, %v841
    %v1338 = vpack.c.b16 %v844, %v842
    %v1339 = vpack.c.b16 %v847, %v845
    %v1340 = vpack.c.b16 %v848, %v846
    %v1341 = vpack.c.b16 %v851, %v849
    %v1342 = vpack.c.b16 %v852, %v850
    %v1343 = vpack.c.b16 %v855, %v853
    %v1344 = vpack.c.b16 %v856, %v854
    %v1345 = vpack.c.b16 %v859, %v857
    %v1346 = vpack.c.b16 %v860, %v858
    %v1347 = vpack.c.b16 %v863, %v861
    %v1348 = vpack.c.b16 %v864, %v862
    %v1349 = vpack.c.b16 %v867, %v865
    %v1350 = vpack.c.b16 %v868, %v866
    %v1351 = vpack.c.b16 %v871, %v869
    %v1352 = vpack.c.b16 %v872, %v870
    %v1353 = vpack.c.b16 %v875, %v873
    %v1354 = vpack.c.b16 %v876, %v874
    %v1355 = vpack.c.b16 %v879, %v877
    %v1356 = vpack.c.b16 %v880, %v878
    %v1357 = vpack.c.b16 %v883, %v881
    %v1358 = vpack.c.b16 %v884, %v882
    %v1359 = vpack.c.b16 %v887, %v885
    %v1360 = vpack.c.b16 %v888, %v886
    %v1361 = vpack.c.b16 %v891, %v889
    %v1362 = vpack.c.b16 %v892, %v890
    %v1363 = vpack.c.b16 %v895, %v893
    %v1364 = vpack.c.b16 %v896, %v894
    %v1365 = vpack.c.b16 %v899, %v897
    %v1366 = vpack.c.b16 %v900, %v898
    %v1367 = vpack.c.b16 %v903, %v901
    %v1368 = vpack.c.b16 %v904, %v902
    %v1369 = vpack.c.b16 %v907, %v905
    %v1370 = vpack.c.b16 %v908, %v906
    %v1371 = vpack.c.b16 %v911, %v909
    %v1372 = vpack.c.b16 %v912, %v910
    %v1373 = vpack.c.b16 %v915, %v913
    %v1374 = vpack.c.b16 %v916, %v914
    %v1375 = vpack.c.b16 %v919, %v917
    %v1376 = vpack.c.b16 %v920, %v918
    %v1377 = vpack.c.b16 %v923, %v921
    %v1378 = vpack.c.b16 %v924, %v922
    %v1379 = vpack.c.b16 %v927, %v925
    %v1380 = vpack.c.b16 %v928, %v926
    %v1381 = vpack.c.b16 %v931, %v929
    %v1382 = vpack.c.b16 %v932, %v930
    %v1383 = vpack.c.b16 %v935, %v933
    %v1384 = vpack.c.b16 %v936, %v934
    %v1385 = vpack.c.b16 %v939, %v937
    %v1386 = vpack.c.b16 %v940, %v938
    %v1387 = vpack.c.b16 %v943, %v941
    %v1388 = vpack.c.b16 %v944, %v942
    %v1389 = vpack.c.b16 %v947, %v945
    %v1390 = vpack.c.b16 %v948, %v946
    %v1391 = vpack.c.b16 %v951, %v949
    %v1392 = vpack.c.b16 %v952, %v950
    %v1393 = vpack.c.b16 %v955, %v953
    %v1394 = vpack.c.b16 %v956, %v954
    %v1395 = vpack.c.b16 %v959, %v957
    %v1396 = vpack.c.b16 %v960, %v958
    %v1397 = vpack.c.b16 %v963, %v961
    %v1398 = vpack.c.b16 %v964, %v962
    %v1399 = vpack.c.b16 %v967, %v965
    %v1400 = vpack.c.b16 %v968, %v966
    %v1401 = vpack.c.b16 %v971, %v969
    %v1402 = vpack.c.b16 %v972, %v970
    %v1403 = vpack.c.b16 %v975, %v973
    %v1404 = vpack.c.b16 %v976, %v974
    %v1405 = vpack.c.b16 %v979, %v977
    %v1406 = vpack.c.b16 %v980, %v978
    %v1407 = vpack.c.b16 %v983, %v981
    %v1408 = vpack.c.b16 %v984, %v982
    %v1409 = vpack.c.b16 %v987, %v985
    %v1410 = vpack.c.b16 %v988, %v986
    %v1411 = vpack.c.b16 %v991, %v989
    %v1412 = vpack.c.b16 %v992, %v990
    %v1413 = vpack.c.b16 %v995, %v993
    %v1414 = vpack.c.b16 %v996, %v994
    %v1415 = vpack.c.b16 %v999, %v997
    %v1416 = vpack.c.b16 %v1000, %v998
    %v1417 = vpack.c.b16 %v1003, %v1001
    %v1418 = vpack.c.b16 %v1004, %v1002
    %v1419 = vpack.c.b16 %v1007, %v1005
    %v1420 = vpack.c.b16 %v1008, %v1006
    %v1421 = vpack.c.b16 %v1011, %v1009
    %v1422 = vpack.c.b16 %v1012, %v1010
    %v1423 = vpack.c.b16 %v1015, %v1013
    %v1424 = vpack.c.b16 %v1016, %v1014
    %v1425 = vpack.c.b16 %v1019, %v1017
    %v1426 = vpack.c.b16 %v1020, %v1018
    %v1427 = vpack.c.b16 %v1023, %v1021
    %v1428 = vpack.c.b16 %v1024, %v1022
    %v1429 = vpack.c.b16 %v1027, %v1025
    %v1430 = vpack.c.b16 %v1028, %v1026
    %v1431 = vpack.c.b16 %v1031, %v1029
    %v1432 = vpack.c.b16 %v1032, %v1030
    %v1433 = vpack.c.b16 %v1035, %v1033
    %v1434 = vpack.c.b16 %v1036, %v1034
    %v1435 = vpack.c.b16 %v1039, %v1037
    %v1436 = vpack.c.b16 %v1040, %v1038
    %v1437 = vpack.c.b16 %v1043, %v1041
    %v1438 = vpack.c.b16 %v1044, %v1042
    %v1439 = vpack.c.b16 %v1047, %v1045
    %v1440 = vpack.c.b16 %v1048, %v1046
    %v1441 = vpack.c.b16 %v1051, %v1049
    %v1442 = vpack.c.b16 %v1052, %v1050
    %v1443 = vpack.c.b16 %v1055, %v1053
    %v1444 = vpack.c.b16 %v1056, %v1054
    %v1445 = vpack.c.b16 %v1059, %v1057
    %v1446 = vpack.c.b16 %v1060, %v1058
    %v1447 = vpack.c.b16 %v1063, %v1061
    %v1448 = vpack.c.b16 %v1064, %v1062
    %v1449 = vpack.c.b16 %v1067, %v1065
    %v1450 = vpack.c.b16 %v1068, %v1066
    %v1451 = vpack.c.b16 %v1071, %v1069
    %v1452 = vpack.c.b16 %v1072, %v1070
    %v1453 = vpack.c.b16 %v1075, %v1073
    %v1454 = vpack.c.b16 %v1076, %v1074
    %v1455 = vpack.c.b16 %v1079, %v1077
    %v1456 = vpack.c.b16 %v1080, %v1078
    %v1457 = vpack.c.b16 %v1083, %v1081
    %v1458 = vpack.c.b16 %v1084, %v1082
    %v1459 = vpack.c.b16 %v1087, %v1085
    %v1460 = vpack.c.b16 %v1088, %v1086
    %v1461 = vpack.c.b16 %v1091, %v1089
    %v1462 = vpack.c.b16 %v1092, %v1090
    %v1463 = vpack.c.b16 %v1095, %v1093
    %v1464 = vpack.c.b16 %v1096, %v1094
    %v1465 = vpack.c.b16 %v1099, %v1097
    %v1466 = vpack.c.b16 %v1100, %v1098
    %v1467 = vpack.c.b16 %v1103, %v1101
    %v1468 = vpack.c.b16 %v1104, %v1102
    %v1469 = vpack.c.b16 %v1107, %v1105
    %v1470 = vpack.c.b16 %v1108, %v1106
    %v1471 = vpack.c.b16 %v1111, %v1109
    %v1472 = vpack.c.b16 %v1112, %v1110
    %v1473 = vpack.c.b16 %v1115, %v1113
    %v1474 = vpack.c.b16 %v1116, %v1114
    %v1475 = vpack.c.b16 %v1119, %v1117
    %v1476 = vpack.c.b16 %v1120, %v1118
    %v1477 = vpack.c.b16 %v1123, %v1121
    %v1478 = vpack.c.b16 %v1124, %v1122
    %v1479 = vpack.c.b16 %v1127, %v1125
    %v1480 = vpack.c.b16 %v1128, %v1126
    %v1481 = vpack.c.b16 %v1131, %v1129
    %v1482 = vpack.c.b16 %v1132, %v1130
    %v1483 = vpack.c.b16 %v1135, %v1133
    %v1484 = vpack.c.b16 %v1136, %v1134
    %v1485 = vpack.c.b16 %v1139, %v1137
    %v1486 = vpack.c.b16 %v1140, %v1138
    %v1487 = vpack.c.b16 %v1143, %v1141
    %v1488 = vpack.c.b16 %v1144, %v1142
    %v1489 = vpack.c.b16 %v1147, %v1145
    %v1490 = vpack.c.b16 %v1148, %v1146
    %v1491 = vpack.c.b16 %v1151, %v1149
    %v1492 = vpack.c.b16 %v1152, %v1150
    %v1493 = vpack.c.b16 %v1155, %v1153
    %v1494 = vpack.c.b16 %v1156, %v1154
    %v1495 = vpack.c.b16 %v1159, %v1157
    %v1496 = vpack.c.b16 %v1160, %v1158
    %v1497 = vpack.c.b16 %v1163, %v1161
    %v1498 = vpack.c.b16 %v1164, %v1162
    %v1499 = vpack.c.b16 %v1167, %v1165
    %v1500 = vpack.c.b16 %v1168, %v1166
    %v1501 = vpack.c.b16 %v1171, %v1169
    %v1502 = vpack.c.b16 %v1172, %v1170
    %v1503 = vpack.c.b16 %v1175, %v1173
    %v1504 = vpack.c.b16 %v1176, %v1174
    %v1505 = vpack.c.b16 %v1179, %v1177
    %v1506 = vpack.c.b16 %v1180, %v1178
    %v1507 = vpack.c.b16 %v1183, %v1181
    %v1508 = vpack.c.b16 %v1184, %v1182
    %v1509 = vpack.c.b16 %v1187, %v1185
    %v1510 = vpack.c.b16 %v1188, %v1186
    %v1511 = vpack.c.b16 %v1191, %v1189
    %v1512 = vpack.c.b16 %v1192, %v1190
    %v1513 = vpack.c.b16 %v1195, %v1193
    %v1514 = vpack.c.b16 %v1196, %v1194
    %v1515 = vpack.c.b16 %v1199, %v1197
    %v1516 = vpack.c.b16 %v1200, %v1198
    %v1517 = vpack.c.b16 %v1203, %v1201
    %v1518 = vpack.c.b16 %v1204, %v1202
    %v1519 = vpack.c.b16 %v1207, %v1205
    %v1520 = vpack.c.b16 %v1208, %v1206
    %v1521 = vpack.c.b16 %v1211, %v1209
    %v1522 = vpack.c.b16 %v1212, %v1210
    %v1523 = vpack.c.b16 %v1215, %v1213
    %v1524 = vpack.c.b16 %v1216, %v1214
    %v1525 = vpack.c.b16 %v1219, %v1217
    %v1526 = vpack.c.b16 %v1220, %v1218
    %v1527 = vpack.c.b16 %v1223, %v1221
    %v1528 = vpack.c.b16 %v1224, %v1222
    %v1529 = vpack.c.b16 %v1227, %v1225
    %v1530 = vpack.c.b16 %v1228, %v1226
    %v1531 = vpack.c.b16 %v1231, %v1229
    %v1532 = vpack.c.b16 %v1232, %v1230
    %v1533 = vpack.c.b16 %v1235, %v1233
    %v1534 = vpack.c.b16 %v1236, %v1234
    %v1535 = vpack.c.b16 %v1239, %v1237
    %v1536 = vpack.c.b16 %v1240, %v1238
    %v1537 = vpack.c.b16 %v1243, %v1241
    %v1538 = vpack.c.b16 %v1244, %v1242
    %v1539 = vpack.c.b16 %v1247, %v1245
    %v1540 = vpack.c.b16 %v1248, %v1246
    %v1541 = vpack.c.b16 %v1251, %v1249
    %v1542 = vpack.c.b16 %v1252, %v1250
    %v1543 = vpack.c.b16 %v1255, %v1253
    %v1544 = vpack.c.b16 %v1256, %v1254
    %1833 = vmatpush.bf16.msra.mxu0 %v1271
    %1834 = vmatpush.bf16.msra.mxu0 %v1269
    %1835 = vmatpush.bf16.msra.mxu0 %v1267
    %1836 = vmatpush.bf16.msra.mxu0 %v1265
    %1837 = vmatpush.bf16.msra.mxu0 %v1263
    %1838 = vmatpush.bf16.msra.mxu0 %v1261
    %1839 = vmatpush.bf16.msra.mxu0 %v1259
    %1840 = vmatpush.bf16.msra.mxu0 %v1257
    %1841 = vmatmul.bf16.gmra.mxu0 %v357
    %v1842 = vpop.f32.mrf.mxu0
    %v1843 = vadd.f32 %v326, %v1842
    %v1844 = vpop.f32.mrf.mxu0
    %1845 = vdwg.mxu0
    %1846 = vmatpush.bf16.msra.mxu0 %v1287
    %1847 = vmatpush.bf16.msra.mxu0 %v1285
    %1848 = vmatpush.bf16.msra.mxu0 %v1283
    %1849 = vmatpush.bf16.msra.mxu0 %v1281
    %1850 = vmatpush.bf16.msra.mxu0 %v1279
    %1851 = vmatpush.bf16.msra.mxu0 %v1277
    %1852 = vmatpush.bf16.msra.mxu0 %v1275
    %1853 = vmatpush.bf16.msra.mxu0 %v1273
    %1854 = vmatmul.bf16.gmra.mxu0 %v358
    %v1855 = vpop.f32.mrf.mxu0
    %v1856 = vadd.f32 %v1843, %v1855
    %v1857 = vpop.f32.mrf.mxu0
    %1858 = vdwg.mxu0
    %1859 = vmatpush.bf16.msra.mxu0 %v1303
    %1860 = vmatpush.bf16.msra.mxu0 %v1301
    %1861 = vmatpush.bf16.msra.mxu0 %v1299
    %1862 = vmatpush.bf16.msra.mxu0 %v1297
    %1863 = vmatpush.bf16.msra.mxu0 %v1295
    %1864 = vmatpush.bf16.msra.mxu0 %v1293
    %1865 = vmatpush.bf16.msra.mxu0 %v1291
    %1866 = vmatpush.bf16.msra.mxu0 %v1289
    %1867 = vmatmul.bf16.gmra.mxu0 %v359
    %v1868 = vpop.f32.mrf.mxu0
    %v1869 = vadd.f32 %v1856, %v1868
    %v1870 = vpop.f32.mrf.mxu0
    %1871 = vdwg.mxu0
    %1872 = vmatpush.bf16.msra.mxu0 %v1319
    %1873 = vmatpush.bf16.msra.mxu0 %v1317
    %1874 = vmatpush.bf16.msra.mxu0 %v1315
    %1875 = vmatpush.bf16.msra.mxu0 %v1313
    %1876 = vmatpush.bf16.msra.mxu0 %v1311
    %1877 = vmatpush.bf16.msra.mxu0 %v1309
    %1878 = vmatpush.bf16.msra.mxu0 %v1307
    %1879 = vmatpush.bf16.msra.mxu0 %v1305
    %1880 = vmatmul.bf16.gmra.mxu0 %v360
    %v1881 = vpop.f32.mrf.mxu0
    %v1882 = vadd.f32 %v1869, %v1881
    %v1883 = vpop.f32.mrf.mxu0
    %1884 = vdwg.mxu0
    %1885 = vmatpush.bf16.msra.mxu0 %v1335
    %1886 = vmatpush.bf16.msra.mxu0 %v1333
    %1887 = vmatpush.bf16.msra.mxu0 %v1331
    %1888 = vmatpush.bf16.msra.mxu0 %v1329
    %1889 = vmatpush.bf16.msra.mxu0 %v1327
    %1890 = vmatpush.bf16.msra.mxu0 %v1325
    %1891 = vmatpush.bf16.msra.mxu0 %v1323
    %1892 = vmatpush.bf16.msra.mxu0 %v1321
    %1893 = vmatmul.bf16.gmra.mxu0 %v361
    %v1894 = vpop.f32.mrf.mxu0
    %v1895 = vadd.f32 %v1882, %v1894
    %v1896 = vpop.f32.mrf.mxu0
    %1897 = vdwg.mxu0
    %1898 = vmatpush.bf16.msra.mxu0 %v1351
    %1899 = vmatpush.bf16.msra.mxu0 %v1349
    %1900 = vmatpush.bf16.msra.mxu0 %v1347
    %1901 = vmatpush.bf16.msra.mxu0 %v1345
    %1902 = vmatpush.bf16.msra.mxu0 %v1343
    %1903 = vmatpush.bf16.msra.mxu0 %v1341
    %1904 = vmatpush.bf16.msra.mxu0 %v1339
    %1905 = vmatpush.bf16.msra.mxu0 %v1337
    %1906 = vmatmul.bf16.gmra.mxu0 %v362
    %v1907 = vpop.f32.mrf.mxu0
    %v1908 = vadd.f32 %v1895, %v1907
    %v1909 = vpop.f32.mrf.mxu0
    %1910 = vdwg.mxu0
    %1911 = vmatpush.bf16.msra.mxu0 %v1367
    %1912 = vmatpush.bf16.msra.mxu0 %v1365
    %1913 = vmatpush.bf16.msra.mxu0 %v1363
    %1914 = vmatpush.bf16.msra.mxu0 %v1361
    %1915 = vmatpush.bf16.msra.mxu0 %v1359
    %1916 = vmatpush.bf16.msra.mxu0 %v1357
    %1917 = vmatpush.bf16.msra.mxu0 %v1355
    %1918 = vmatpush.bf16.msra.mxu0 %v1353
    %1919 = vmatmul.bf16.gmra.mxu0 %v363
    %v1920 = vpop.f32.mrf.mxu0
    %v1921 = vadd.f32 %v1908, %v1920
    %v1922 = vpop.f32.mrf.mxu0
    %1923 = vdwg.mxu0
    %1924 = vmatpush.bf16.msra.mxu0 %v1383
    %1925 = vmatpush.bf16.msra.mxu0 %v1381
    %1926 = vmatpush.bf16.msra.mxu0 %v1379
    %1927 = vmatpush.bf16.msra.mxu0 %v1377
    %1928 = vmatpush.bf16.msra.mxu0 %v1375
    %1929 = vmatpush.bf16.msra.mxu0 %v1373
    %1930 = vmatpush.bf16.msra.mxu0 %v1371
    %1931 = vmatpush.bf16.msra.mxu0 %v1369
    %1932 = vmatmul.bf16.gmra.mxu0 %v364
    %v1933 = vpop.f32.mrf.mxu0
    %v1934 = vadd.f32 %v1921, %v1933
    %v1935 = vpop.f32.mrf.mxu0
    %1936 = vdwg.mxu0
    %1937 = vmatpush.bf16.msra.mxu0 %v1399
    %1938 = vmatpush.bf16.msra.mxu0 %v1397
    %1939 = vmatpush.bf16.msra.mxu0 %v1395
    %1940 = vmatpush.bf16.msra.mxu0 %v1393
    %1941 = vmatpush.bf16.msra.mxu0 %v1391
    %1942 = vmatpush.bf16.msra.mxu0 %v1389
    %1943 = vmatpush.bf16.msra.mxu0 %v1387
    %1944 = vmatpush.bf16.msra.mxu0 %v1385
    %1945 = vmatmul.bf16.gmra.mxu0 %v365
    %v1946 = vpop.f32.mrf.mxu0
    %v1947 = vadd.f32 %v1934, %v1946
    %v1948 = vpop.f32.mrf.mxu0
    %1949 = vdwg.mxu0
    %1950 = vmatpush.bf16.msra.mxu0 %v1415
    %1951 = vmatpush.bf16.msra.mxu0 %v1413
    %1952 = vmatpush.bf16.msra.mxu0 %v1411
    %1953 = vmatpush.bf16.msra.mxu0 %v1409
    %1954 = vmatpush.bf16.msra.mxu0 %v1407
    %1955 = vmatpush.bf16.msra.mxu0 %v1405
    %1956 = vmatpush.bf16.msra.mxu0 %v1403
    %1957 = vmatpush.bf16.msra.mxu0 %v1401
    %1958 = vmatmul.bf16.gmra.mxu0 %v366
    %v1959 = vpop.f32.mrf.mxu0
    %v1960 = vadd.f32 %v1947, %v1959
    %v1961 = vpop.f32.mrf.mxu0
    %1962 = vdwg.mxu0
    %1963 = vmatpush.bf16.msra.mxu0 %v1431
    %1964 = vmatpush.bf16.msra.mxu0 %v1429
    %1965 = vmatpush.bf16.msra.mxu0 %v1427
    %1966 = vmatpush.bf16.msra.mxu0 %v1425
    %1967 = vmatpush.bf16.msra.mxu0 %v1423
    %1968 = vmatpush.bf16.msra.mxu0 %v1421
    %1969 = vmatpush.bf16.msra.mxu0 %v1419
    %1970 = vmatpush.bf16.msra.mxu0 %v1417
    %1971 = vmatmul.bf16.gmra.mxu0 %v367
    %v1972 = vpop.f32.mrf.mxu0
    %v1973 = vadd.f32 %v1960, %v1972
    %v1974 = vpop.f32.mrf.mxu0
    %1975 = vdwg.mxu0
    %1976 = vmatpush.bf16.msra.mxu0 %v1447
    %1977 = vmatpush.bf16.msra.mxu0 %v1445
    %1978 = vmatpush.bf16.msra.mxu0 %v1443
    %1979 = vmatpush.bf16.msra.mxu0 %v1441
    %1980 = vmatpush.bf16.msra.mxu0 %v1439
    %1981 = vmatpush.bf16.msra.mxu0 %v1437
    %1982 = vmatpush.bf16.msra.mxu0 %v1435
    %1983 = vmatpush.bf16.msra.mxu0 %v1433
    %1984 = vmatmul.bf16.gmra.mxu0 %v368
    %v1985 = vpop.f32.mrf.mxu0
    %v1986 = vadd.f32 %v1973, %v1985
    %v1987 = vpop.f32.mrf.mxu0
    %1988 = vdwg.mxu0
    %1989 = vmatpush.bf16.msra.mxu0 %v1463
    %1990 = vmatpush.bf16.msra.mxu0 %v1461
    %1991 = vmatpush.bf16.msra.mxu0 %v1459
    %1992 = vmatpush.bf16.msra.mxu0 %v1457
    %1993 = vmatpush.bf16.msra.mxu0 %v1455
    %1994 = vmatpush.bf16.msra.mxu0 %v1453
    %1995 = vmatpush.bf16.msra.mxu0 %v1451
    %1996 = vmatpush.bf16.msra.mxu0 %v1449
    %1997 = vmatmul.bf16.gmra.mxu0 %v369
    %v1998 = vpop.f32.mrf.mxu0
    %v1999 = vadd.f32 %v1986, %v1998
    %v2000 = vpop.f32.mrf.mxu0
    %2001 = vdwg.mxu0
    %2002 = vmatpush.bf16.msra.mxu0 %v1479
    %2003 = vmatpush.bf16.msra.mxu0 %v1477
    %2004 = vmatpush.bf16.msra.mxu0 %v1475
    %2005 = vmatpush.bf16.msra.mxu0 %v1473
    %2006 = vmatpush.bf16.msra.mxu0 %v1471
    %2007 = vmatpush.bf16.msra.mxu0 %v1469
    %2008 = vmatpush.bf16.msra.mxu0 %v1467
    %2009 = vmatpush.bf16.msra.mxu0 %v1465
    %2010 = vmatmul.bf16.gmra.mxu0 %v370
    %v2011 = vpop.f32.mrf.mxu0
    %v2012 = vadd.f32 %v1999, %v2011
    %v2013 = vpop.f32.mrf.mxu0
    %2014 = vdwg.mxu0
    %2015 = vmatpush.bf16.msra.mxu0 %v1495
    %2016 = vmatpush.bf16.msra.mxu0 %v1493
    %2017 = vmatpush.bf16.msra.mxu0 %v1491
    %2018 = vmatpush.bf16.msra.mxu0 %v1489
    %2019 = vmatpush.bf16.msra.mxu0 %v1487
    %2020 = vmatpush.bf16.msra.mxu0 %v1485
    %2021 = vmatpush.bf16.msra.mxu0 %v1483
    %2022 = vmatpush.bf16.msra.mxu0 %v1481
    %2023 = vmatmul.bf16.gmra.mxu0 %v371
    %v2024 = vpop.f32.mrf.mxu0
    %v2025 = vadd.f32 %v2012, %v2024
    %v2026 = vpop.f32.mrf.mxu0
    %2027 = vdwg.mxu0
    %2028 = vmatpush.bf16.msra.mxu0 %v1511
    %2029 = vmatpush.bf16.msra.mxu0 %v1509
    %2030 = vmatpush.bf16.msra.mxu0 %v1507
    %2031 = vmatpush.bf16.msra.mxu0 %v1505
    %2032 = vmatpush.bf16.msra.mxu0 %v1503
    %2033 = vmatpush.bf16.msra.mxu0 %v1501
    %2034 = vmatpush.bf16.msra.mxu0 %v1499
    %2035 = vmatpush.bf16.msra.mxu0 %v1497
    %2036 = vmatmul.bf16.gmra.mxu0 %v372
    %v2037 = vpop.f32.mrf.mxu0
    %v2038 = vadd.f32 %v2025, %v2037
    %v2039 = vpop.f32.mrf.mxu0
    %2040 = vdwg.mxu0
    %2041 = vmatpush.bf16.msra.mxu0 %v1527
    %2042 = vmatpush.bf16.msra.mxu0 %v1525
    %2043 = vmatpush.bf16.msra.mxu0 %v1523
    %2044 = vmatpush.bf16.msra.mxu0 %v1521
    %2045 = vmatpush.bf16.msra.mxu0 %v1519
    %2046 = vmatpush.bf16.msra.mxu0 %v1517
    %2047 = vmatpush.bf16.msra.mxu0 %v1515
    %2048 = vmatpush.bf16.msra.mxu0 %v1513
    %2049 = vmatmul.bf16.gmra.mxu0 %v373
    %v2050 = vpop.f32.mrf.mxu0
    %v2051 = vadd.f32 %v2038, %v2050
    %v2052 = vpop.f32.mrf.mxu0
    %2053 = vdwg.mxu0
    %2054 = vmatpush.bf16.msra.mxu0 %v1543
    %2055 = vmatpush.bf16.msra.mxu0 %v1541
    %2056 = vmatpush.bf16.msra.mxu0 %v1539
    %2057 = vmatpush.bf16.msra.mxu0 %v1537
    %2058 = vmatpush.bf16.msra.mxu0 %v1535
    %2059 = vmatpush.bf16.msra.mxu0 %v1533
    %2060 = vmatpush.bf16.msra.mxu0 %v1531
    %2061 = vmatpush.bf16.msra.mxu0 %v1529
    %2062 = vmatmul.bf16.gmra.mxu0 %v374
    %v2063 = vpop.f32.mrf.mxu0
    %v2064 = vadd.f32 %v2051, %v2063
    %v2065 = vpop.f32.mrf.mxu0
    %2066 = vdwg.mxu0
    %2067 = vmatpush.bf16.msra.mxu0 %v1272
    %2068 = vmatpush.bf16.msra.mxu0 %v1270
    %2069 = vmatpush.bf16.msra.mxu0 %v1268
    %2070 = vmatpush.bf16.msra.mxu0 %v1266
    %2071 = vmatpush.bf16.msra.mxu0 %v1264
    %2072 = vmatpush.bf16.msra.mxu0 %v1262
    %2073 = vmatpush.bf16.msra.mxu0 %v1260
    %2074 = vmatpush.bf16.msra.mxu0 %v1258
    %2075 = vmatmul.bf16.gmra.mxu0 %v357
    %v2076 = vpop.f32.mrf.mxu0
    %v2077 = vadd.f32 %v327, %v2076
    %v2078 = vpop.f32.mrf.mxu0
    %2079 = vdwg.mxu0
    %2080 = vmatpush.bf16.msra.mxu0 %v1288
    %2081 = vmatpush.bf16.msra.mxu0 %v1286
    %2082 = vmatpush.bf16.msra.mxu0 %v1284
    %2083 = vmatpush.bf16.msra.mxu0 %v1282
    %2084 = vmatpush.bf16.msra.mxu0 %v1280
    %2085 = vmatpush.bf16.msra.mxu0 %v1278
    %2086 = vmatpush.bf16.msra.mxu0 %v1276
    %2087 = vmatpush.bf16.msra.mxu0 %v1274
    %2088 = vmatmul.bf16.gmra.mxu0 %v358
    %v2089 = vpop.f32.mrf.mxu0
    %v2090 = vadd.f32 %v2077, %v2089
    %v2091 = vpop.f32.mrf.mxu0
    %2092 = vdwg.mxu0
    %2093 = vmatpush.bf16.msra.mxu0 %v1304
    %2094 = vmatpush.bf16.msra.mxu0 %v1302
    %2095 = vmatpush.bf16.msra.mxu0 %v1300
    %2096 = vmatpush.bf16.msra.mxu0 %v1298
    %2097 = vmatpush.bf16.msra.mxu0 %v1296
    %2098 = vmatpush.bf16.msra.mxu0 %v1294
    %2099 = vmatpush.bf16.msra.mxu0 %v1292
    %2100 = vmatpush.bf16.msra.mxu0 %v1290
    %2101 = vmatmul.bf16.gmra.mxu0 %v359
    %v2102 = vpop.f32.mrf.mxu0
    %v2103 = vadd.f32 %v2090, %v2102
    %v2104 = vpop.f32.mrf.mxu0
    %2105 = vdwg.mxu0
    %2106 = vmatpush.bf16.msra.mxu0 %v1320
    %2107 = vmatpush.bf16.msra.mxu0 %v1318
    %2108 = vmatpush.bf16.msra.mxu0 %v1316
    %2109 = vmatpush.bf16.msra.mxu0 %v1314
    %2110 = vmatpush.bf16.msra.mxu0 %v1312
    %2111 = vmatpush.bf16.msra.mxu0 %v1310
    %2112 = vmatpush.bf16.msra.mxu0 %v1308
    %2113 = vmatpush.bf16.msra.mxu0 %v1306
    %2114 = vmatmul.bf16.gmra.mxu0 %v360
    %v2115 = vpop.f32.mrf.mxu0
    %v2116 = vadd.f32 %v2103, %v2115
    %v2117 = vpop.f32.mrf.mxu0
    %2118 = vdwg.mxu0
    %2119 = vmatpush.bf16.msra.mxu0 %v1336
    %2120 = vmatpush.bf16.msra.mxu0 %v1334
    %2121 = vmatpush.bf16.msra.mxu0 %v1332
    %2122 = vmatpush.bf16.msra.mxu0 %v1330
    %2123 = vmatpush.bf16.msra.mxu0 %v1328
    %2124 = vmatpush.bf16.msra.mxu0 %v1326
    %2125 = vmatpush.bf16.msra.mxu0 %v1324
    %2126 = vmatpush.bf16.msra.mxu0 %v1322
    %2127 = vmatmul.bf16.gmra.mxu0 %v361
    %v2128 = vpop.f32.mrf.mxu0
    %v2129 = vadd.f32 %v2116, %v2128
    %v2130 = vpop.f32.mrf.mxu0
    %2131 = vdwg.mxu0
    %2132 = vmatpush.bf16.msra.mxu0 %v1352
    %2133 = vmatpush.bf16.msra.mxu0 %v1350
    %2134 = vmatpush.bf16.msra.mxu0 %v1348
    %2135 = vmatpush.bf16.msra.mxu0 %v1346
    %2136 = vmatpush.bf16.msra.mxu0 %v1344
    %2137 = vmatpush.bf16.msra.mxu0 %v1342
    %2138 = vmatpush.bf16.msra.mxu0 %v1340
    %2139 = vmatpush.bf16.msra.mxu0 %v1338
    %2140 = vmatmul.bf16.gmra.mxu0 %v362
    %v2141 = vpop.f32.mrf.mxu0
    %v2142 = vadd.f32 %v2129, %v2141
    %v2143 = vpop.f32.mrf.mxu0
    %2144 = vdwg.mxu0
    %2145 = vmatpush.bf16.msra.mxu0 %v1368
    %2146 = vmatpush.bf16.msra.mxu0 %v1366
    %2147 = vmatpush.bf16.msra.mxu0 %v1364
    %2148 = vmatpush.bf16.msra.mxu0 %v1362
    %2149 = vmatpush.bf16.msra.mxu0 %v1360
    %2150 = vmatpush.bf16.msra.mxu0 %v1358
    %2151 = vmatpush.bf16.msra.mxu0 %v1356
    %2152 = vmatpush.bf16.msra.mxu0 %v1354
    %2153 = vmatmul.bf16.gmra.mxu0 %v363
    %v2154 = vpop.f32.mrf.mxu0
    %v2155 = vadd.f32 %v2142, %v2154
    %v2156 = vpop.f32.mrf.mxu0
    %2157 = vdwg.mxu0
    %2158 = vmatpush.bf16.msra.mxu0 %v1384
    %2159 = vmatpush.bf16.msra.mxu0 %v1382
    %2160 = vmatpush.bf16.msra.mxu0 %v1380
    %2161 = vmatpush.bf16.msra.mxu0 %v1378
    %2162 = vmatpush.bf16.msra.mxu0 %v1376
    %2163 = vmatpush.bf16.msra.mxu0 %v1374
    %2164 = vmatpush.bf16.msra.mxu0 %v1372
    %2165 = vmatpush.bf16.msra.mxu0 %v1370
    %2166 = vmatmul.bf16.gmra.mxu0 %v364
    %v2167 = vpop.f32.mrf.mxu0
    %v2168 = vadd.f32 %v2155, %v2167
    %v2169 = vpop.f32.mrf.mxu0
    %2170 = vdwg.mxu0
    %2171 = vmatpush.bf16.msra.mxu0 %v1400
    %2172 = vmatpush.bf16.msra.mxu0 %v1398
    %2173 = vmatpush.bf16.msra.mxu0 %v1396
    %2174 = vmatpush.bf16.msra.mxu0 %v1394
    %2175 = vmatpush.bf16.msra.mxu0 %v1392
    %2176 = vmatpush.bf16.msra.mxu0 %v1390
    %2177 = vmatpush.bf16.msra.mxu0 %v1388
    %2178 = vmatpush.bf16.msra.mxu0 %v1386
    %2179 = vmatmul.bf16.gmra.mxu0 %v365
    %v2180 = vpop.f32.mrf.mxu0
    %v2181 = vadd.f32 %v2168, %v2180
    %v2182 = vpop.f32.mrf.mxu0
    %2183 = vdwg.mxu0
    %2184 = vmatpush.bf16.msra.mxu0 %v1416
    %2185 = vmatpush.bf16.msra.mxu0 %v1414
    %2186 = vmatpush.bf16.msra.mxu0 %v1412
    %2187 = vmatpush.bf16.msra.mxu0 %v1410
    %2188 = vmatpush.bf16.msra.mxu0 %v1408
    %2189 = vmatpush.bf16.msra.mxu0 %v1406
    %2190 = vmatpush.bf16.msra.mxu0 %v1404
    %2191 = vmatpush.bf16.msra.mxu0 %v1402
    %2192 = vmatmul.bf16.gmra.mxu0 %v366
    %v2193 = vpop.f32.mrf.mxu0
    %v2194 = vadd.f32 %v2181, %v2193
    %v2195 = vpop.f32.mrf.mxu0
    %2196 = vdwg.mxu0
    %2197 = vmatpush.bf16.msra.mxu0 %v1432
    %2198 = vmatpush.bf16.msra.mxu0 %v1430
    %2199 = vmatpush.bf16.msra.mxu0 %v1428
    %2200 = vmatpush.bf16.msra.mxu0 %v1426
    %2201 = vmatpush.bf16.msra.mxu0 %v1424
    %2202 = vmatpush.bf16.msra.mxu0 %v1422
    %2203 = vmatpush.bf16.msra.mxu0 %v1420
    %2204 = vmatpush.bf16.msra.mxu0 %v1418
    %2205 = vmatmul.bf16.gmra.mxu0 %v367
    %v2206 = vpop.f32.mrf.mxu0
    %v2207 = vadd.f32 %v2194, %v2206
    %v2208 = vpop.f32.mrf.mxu0
    %2209 = vdwg.mxu0
    %2210 = vmatpush.bf16.msra.mxu0 %v1448
    %2211 = vmatpush.bf16.msra.mxu0 %v1446
    %2212 = vmatpush.bf16.msra.mxu0 %v1444
    %2213 = vmatpush.bf16.msra.mxu0 %v1442
    %2214 = vmatpush.bf16.msra.mxu0 %v1440
    %2215 = vmatpush.bf16.msra.mxu0 %v1438
    %2216 = vmatpush.bf16.msra.mxu0 %v1436
    %2217 = vmatpush.bf16.msra.mxu0 %v1434
    %2218 = vmatmul.bf16.gmra.mxu0 %v368
    %v2219 = vpop.f32.mrf.mxu0
    %v2220 = vadd.f32 %v2207, %v2219
    %v2221 = vpop.f32.mrf.mxu0
    %2222 = vdwg.mxu0
    %2223 = vmatpush.bf16.msra.mxu0 %v1464
    %2224 = vmatpush.bf16.msra.mxu0 %v1462
    %2225 = vmatpush.bf16.msra.mxu0 %v1460
    %2226 = vmatpush.bf16.msra.mxu0 %v1458
    %2227 = vmatpush.bf16.msra.mxu0 %v1456
    %2228 = vmatpush.bf16.msra.mxu0 %v1454
    %2229 = vmatpush.bf16.msra.mxu0 %v1452
    %2230 = vmatpush.bf16.msra.mxu0 %v1450
    %2231 = vmatmul.bf16.gmra.mxu0 %v369
    %v2232 = vpop.f32.mrf.mxu0
    %v2233 = vadd.f32 %v2220, %v2232
    %v2234 = vpop.f32.mrf.mxu0
    %2235 = vdwg.mxu0
    %2236 = vmatpush.bf16.msra.mxu0 %v1480
    %2237 = vmatpush.bf16.msra.mxu0 %v1478
    %2238 = vmatpush.bf16.msra.mxu0 %v1476
    %2239 = vmatpush.bf16.msra.mxu0 %v1474
    %2240 = vmatpush.bf16.msra.mxu0 %v1472
    %2241 = vmatpush.bf16.msra.mxu0 %v1470
    %2242 = vmatpush.bf16.msra.mxu0 %v1468
    %2243 = vmatpush.bf16.msra.mxu0 %v1466
    %2244 = vmatmul.bf16.gmra.mxu0 %v370
    %v2245 = vpop.f32.mrf.mxu0
    %v2246 = vadd.f32 %v2233, %v2245
    %v2247 = vpop.f32.mrf.mxu0
    %2248 = vdwg.mxu0
    %2249 = vmatpush.bf16.msra.mxu0 %v1496
    %2250 = vmatpush.bf16.msra.mxu0 %v1494
    %2251 = vmatpush.bf16.msra.mxu0 %v1492
    %2252 = vmatpush.bf16.msra.mxu0 %v1490
    %2253 = vmatpush.bf16.msra.mxu0 %v1488
    %2254 = vmatpush.bf16.msra.mxu0 %v1486
    %2255 = vmatpush.bf16.msra.mxu0 %v1484
    %2256 = vmatpush.bf16.msra.mxu0 %v1482
    %2257 = vmatmul.bf16.gmra.mxu0 %v371
    %v2258 = vpop.f32.mrf.mxu0
    %v2259 = vadd.f32 %v2246, %v2258
    %v2260 = vpop.f32.mrf.mxu0
    %2261 = vdwg.mxu0
    %2262 = vmatpush.bf16.msra.mxu0 %v1512
    %2263 = vmatpush.bf16.msra.mxu0 %v1510
    %2264 = vmatpush.bf16.msra.mxu0 %v1508
    %2265 = vmatpush.bf16.msra.mxu0 %v1506
    %2266 = vmatpush.bf16.msra.mxu0 %v1504
    %2267 = vmatpush.bf16.msra.mxu0 %v1502
    %2268 = vmatpush.bf16.msra.mxu0 %v1500
    %2269 = vmatpush.bf16.msra.mxu0 %v1498
    %2270 = vmatmul.bf16.gmra.mxu0 %v372
    %v2271 = vpop.f32.mrf.mxu0
    %v2272 = vadd.f32 %v2259, %v2271
    %v2273 = vpop.f32.mrf.mxu0
    %2274 = vdwg.mxu0
    %2275 = vmatpush.bf16.msra.mxu0 %v1528
    %2276 = vmatpush.bf16.msra.mxu0 %v1526
    %2277 = vmatpush.bf16.msra.mxu0 %v1524
    %2278 = vmatpush.bf16.msra.mxu0 %v1522
    %2279 = vmatpush.bf16.msra.mxu0 %v1520
    %2280 = vmatpush.bf16.msra.mxu0 %v1518
    %2281 = vmatpush.bf16.msra.mxu0 %v1516
    %2282 = vmatpush.bf16.msra.mxu0 %v1514
    %2283 = vmatmul.bf16.gmra.mxu0 %v373
    %v2284 = vpop.f32.mrf.mxu0
    %v2285 = vadd.f32 %v2272, %v2284
    %v2286 = vpop.f32.mrf.mxu0
    %2287 = vdwg.mxu0
    %2288 = vmatpush.bf16.msra.mxu0 %v1544
    %2289 = vmatpush.bf16.msra.mxu0 %v1542
    %2290 = vmatpush.bf16.msra.mxu0 %v1540
    %2291 = vmatpush.bf16.msra.mxu0 %v1538
    %2292 = vmatpush.bf16.msra.mxu0 %v1536
    %2293 = vmatpush.bf16.msra.mxu0 %v1534
    %2294 = vmatpush.bf16.msra.mxu0 %v1532
    %2295 = vmatpush.bf16.msra.mxu0 %v1530
    %2296 = vmatmul.bf16.gmra.mxu0 %v374
    %v2297 = vpop.f32.mrf.mxu0
    %v2298 = vadd.f32 %v2285, %v2297
    %v2299 = vpop.f32.mrf.mxu0
    %2300 = vdwg.mxu0
    %v2301 = vmax.f32 %v2064, 0.0
    %v2302 = vmax.f32 %v2298, 0.0
    %v2303 = vpack.c.bf16 %v2301, %v2301
    %v2304 = vpack.c.bf16 %v2302, %v2302
    %v2305 = vld [vmem:[%s3] sm:$0xff]
    %v2306 = vld [vmem:[%s3 + $0x8] sm:$0xff]
    %v2307 = vld [vmem:[%s3 + $0x10] sm:$0xff]
    %v2308 = vld [vmem:[%s3 + $0x18] sm:$0xff]
    %v2309 = vld [vmem:[%s3 + $0x20] sm:$0xff]
    %v2310 = vld [vmem:[%s3 + $0x28] sm:$0xff]
    %v2311 = vld [vmem:[%s3 + $0x30] sm:$0xff]
    %v2312 = vld [vmem:[%s3 + $0x38] sm:$0xff]
    %v2313 = vld [vmem:[%s3 + $0x40] sm:$0xff]
    %v2314 = vld [vmem:[%s3 + $0x48] sm:$0xff]
    %v2315 = vld [vmem:[%s3 + $0x50] sm:$0xff]
    %v2316 = vld [vmem:[%s3 + $0x58] sm:$0xff]
    %v2317 = vld [vmem:[%s3 + $0x60] sm:$0xff]
    %v2318 = vld [vmem:[%s3 + $0x68] sm:$0xff]
    %v2319 = vld [vmem:[%s3 + $0x70] sm:$0xff]
    %v2320 = vld [vmem:[%s3 + $0x78] sm:$0xff]
    %v2321 = vld [vmem:[%s3 + $0x80] sm:$0xff]
    %v2322 = vld [vmem:[%s3 + $0x88] sm:$0xff]
    %v2323 = vld [vmem:[%s3 + $0x90] sm:$0xff]
    %v2324 = vld [vmem:[%s3 + $0x98] sm:$0xff]
    %v2325 = vld [vmem:[%s3 + $0xa0] sm:$0xff]
    %v2326 = vld [vmem:[%s3 + $0xa8] sm:$0xff]
    %v2327 = vld [vmem:[%s3 + $0xb0] sm:$0xff]
    %v2328 = vld [vmem:[%s3 + $0xb8] sm:$0xff]
    %v2329 = vld [vmem:[%s3 + $0xc0] sm:$0xff]
    %v2330 = vld [vmem:[%s3 + $0xc8] sm:$0xff]
    %v2331 = vld [vmem:[%s3 + $0xd0] sm:$0xff]
    %v2332 = vld [vmem:[%s3 + $0xd8] sm:$0xff]
    %v2333 = vld [vmem:[%s3 + $0xe0] sm:$0xff]
    %v2334 = vld [vmem:[%s3 + $0xe8] sm:$0xff]
    %v2335 = vld [vmem:[%s3 + $0xf0] sm:$0xff]
    %v2336 = vld [vmem:[%s3 + $0xf8] sm:$0xff]
    %v2337 = vld [vmem:[%s4] sm:$0x3]
    %v2339 = vperm.slane %v2337, 0
    %v2340 = vperm.slane %v2337, 1
    %v2375 = vunpack.c.l.b16 %v2305
    %v2376 = vunpack.c.h.b16 %v2305
    %v2377 = vunpack.c.l.b16 %v2306
    %v2378 = vunpack.c.h.b16 %v2306
    %v2379 = vunpack.c.l.b16 %v2307
    %v2380 = vunpack.c.h.b16 %v2307
    %v2381 = vunpack.c.l.b16 %v2308
    %v2382 = vunpack.c.h.b16 %v2308
    %v2383 = vunpack.c.l.b16 %v2309
    %v2384 = vunpack.c.h.b16 %v2309
    %v2385 = vunpack.c.l.b16 %v2310
    %v2386 = vunpack.c.h.b16 %v2310
    %v2387 = vunpack.c.l.b16 %v2311
    %v2388 = vunpack.c.h.b16 %v2311
    %v2389 = vunpack.c.l.b16 %v2312
    %v2390 = vunpack.c.h.b16 %v2312
    %v2391 = vunpack.c.l.b16 %v2313
    %v2392 = vunpack.c.h.b16 %v2313
    %v2393 = vunpack.c.l.b16 %v2314
    %v2394 = vunpack.c.h.b16 %v2314
    %v2395 = vunpack.c.l.b16 %v2315
    %v2396 = vunpack.c.h.b16 %v2315
    %v2397 = vunpack.c.l.b16 %v2316
    %v2398 = vunpack.c.h.b16 %v2316
    %v2399 = vunpack.c.l.b16 %v2317
    %v2400 = vunpack.c.h.b16 %v2317
    %v2401 = vunpack.c.l.b16 %v2318
    %v2402 = vunpack.c.h.b16 %v2318
    %v2403 = vunpack.c.l.b16 %v2319
    %v2404 = vunpack.c.h.b16 %v2319
    %v2405 = vunpack.c.l.b16 %v2320
    %v2406 = vunpack.c.h.b16 %v2320
    %v2407 = vunpack.c.l.b16 %v2321
    %v2408 = vunpack.c.h.b16 %v2321
    %v2409 = vunpack.c.l.b16 %v2322
    %v2410 = vunpack.c.h.b16 %v2322
    %v2411 = vunpack.c.l.b16 %v2323
    %v2412 = vunpack.c.h.b16 %v2323
    %v2413 = vunpack.c.l.b16 %v2324
    %v2414 = vunpack.c.h.b16 %v2324
    %v2415 = vunpack.c.l.b16 %v2325
    %v2416 = vunpack.c.h.b16 %v2325
    %v2417 = vunpack.c.l.b16 %v2326
    %v2418 = vunpack.c.h.b16 %v2326
    %v2419 = vunpack.c.l.b16 %v2327
    %v2420 = vunpack.c.h.b16 %v2327
    %v2421 = vunpack.c.l.b16 %v2328
    %v2422 = vunpack.c.h.b16 %v2328
    %v2423 = vunpack.c.l.b16 %v2329
    %v2424 = vunpack.c.h.b16 %v2329
    %v2425 = vunpack.c.l.b16 %v2330
    %v2426 = vunpack.c.h.b16 %v2330
    %v2427 = vunpack.c.l.b16 %v2331
    %v2428 = vunpack.c.h.b16 %v2331
    %v2429 = vunpack.c.l.b16 %v2332
    %v2430 = vunpack.c.h.b16 %v2332
    %v2431 = vunpack.c.l.b16 %v2333
    %v2432 = vunpack.c.h.b16 %v2333
    %v2433 = vunpack.c.l.b16 %v2334
    %v2434 = vunpack.c.h.b16 %v2334
    %v2435 = vunpack.c.l.b16 %v2335
    %v2436 = vunpack.c.h.b16 %v2335
    %v2437 = vunpack.c.l.b16 %v2336
    %v2438 = vunpack.c.h.b16 %v2336
    %v2439 = vpack.c.b16 %v2377, %v2375
    %v2440 = vpack.c.b16 %v2378, %v2376
    %v2441 = vpack.c.b16 %v2381, %v2379
    %v2442 = vpack.c.b16 %v2382, %v2380
    %v2443 = vpack.c.b16 %v2385, %v2383
    %v2444 = vpack.c.b16 %v2386, %v2384
    %v2445 = vpack.c.b16 %v2389, %v2387
    %v2446 = vpack.c.b16 %v2390, %v2388
    %v2447 = vpack.c.b16 %v2393, %v2391
    %v2448 = vpack.c.b16 %v2394, %v2392
    %v2449 = vpack.c.b16 %v2397, %v2395
    %v2450 = vpack.c.b16 %v2398, %v2396
    %v2451 = vpack.c.b16 %v2401, %v2399
    %v2452 = vpack.c.b16 %v2402, %v2400
    %v2453 = vpack.c.b16 %v2405, %v2403
    %v2454 = vpack.c.b16 %v2406, %v2404
    %v2455 = vpack.c.b16 %v2409, %v2407
    %v2456 = vpack.c.b16 %v2410, %v2408
    %v2457 = vpack.c.b16 %v2413, %v2411
    %v2458 = vpack.c.b16 %v2414, %v2412
    %v2459 = vpack.c.b16 %v2417, %v2415
    %v2460 = vpack.c.b16 %v2418, %v2416
    %v2461 = vpack.c.b16 %v2421, %v2419
    %v2462 = vpack.c.b16 %v2422, %v2420
    %v2463 = vpack.c.b16 %v2425, %v2423
    %v2464 = vpack.c.b16 %v2426, %v2424
    %v2465 = vpack.c.b16 %v2429, %v2427
    %v2466 = vpack.c.b16 %v2430, %v2428
    %v2467 = vpack.c.b16 %v2433, %v2431
    %v2468 = vpack.c.b16 %v2434, %v2432
    %v2469 = vpack.c.b16 %v2437, %v2435
    %v2470 = vpack.c.b16 %v2438, %v2436
    %2503 = vmatpush.bf16.msra.mxu0 %v2453
    %2504 = vmatpush.bf16.msra.mxu0 %v2451
    %2505 = vmatpush.bf16.msra.mxu0 %v2449
    %2506 = vmatpush.bf16.msra.mxu0 %v2447
    %2507 = vmatpush.bf16.msra.mxu0 %v2445
    %2508 = vmatpush.bf16.msra.mxu0 %v2443
    %2509 = vmatpush.bf16.msra.mxu0 %v2441
    %2510 = vmatpush.bf16.msra.mxu0 %v2439
    %2511 = vmatmul.bf16.gmra.mxu0 %v2303
    %v2512 = vpop.f32.mrf.mxu0
    %v2513 = vadd.f32 %v2339, %v2512
    %v2514 = vpop.f32.mrf.mxu0
    %2515 = vdwg.mxu0
    %2516 = vmatpush.bf16.msra.mxu0 %v2469
    %2517 = vmatpush.bf16.msra.mxu0 %v2467
    %2518 = vmatpush.bf16.msra.mxu0 %v2465
    %2519 = vmatpush.bf16.msra.mxu0 %v2463
    %2520 = vmatpush.bf16.msra.mxu0 %v2461
    %2521 = vmatpush.bf16.msra.mxu0 %v2459
    %2522 = vmatpush.bf16.msra.mxu0 %v2457
    %2523 = vmatpush.bf16.msra.mxu0 %v2455
    %2524 = vmatmul.bf16.gmra.mxu0 %v2304
    %v2525 = vpop.f32.mrf.mxu0
    %v2526 = vadd.f32 %v2513, %v2525
    %v2527 = vpop.f32.mrf.mxu0
    %2528 = vdwg.mxu0
    %2529 = vmatpush.bf16.msra.mxu0 %v2454
    %2530 = vmatpush.bf16.msra.mxu0 %v2452
    %2531 = vmatpush.bf16.msra.mxu0 %v2450
    %2532 = vmatpush.bf16.msra.mxu0 %v2448
    %2533 = vmatpush.bf16.msra.mxu0 %v2446
    %2534 = vmatpush.bf16.msra.mxu0 %v2444
    %2535 = vmatpush.bf16.msra.mxu0 %v2442
    %2536 = vmatpush.bf16.msra.mxu0 %v2440
    %2537 = vmatmul.bf16.gmra.mxu0 %v2303
    %v2538 = vpop.f32.mrf.mxu0
    %v2539 = vadd.f32 %v2340, %v2538
    %v2540 = vpop.f32.mrf.mxu0
    %2541 = vdwg.mxu0
    %2542 = vmatpush.bf16.msra.mxu0 %v2470
    %2543 = vmatpush.bf16.msra.mxu0 %v2468
    %2544 = vmatpush.bf16.msra.mxu0 %v2466
    %2545 = vmatpush.bf16.msra.mxu0 %v2464
    %2546 = vmatpush.bf16.msra.mxu0 %v2462
    %2547 = vmatpush.bf16.msra.mxu0 %v2460
    %2548 = vmatpush.bf16.msra.mxu0 %v2458
    %2549 = vmatpush.bf16.msra.mxu0 %v2456
    %2550 = vmatmul.bf16.gmra.mxu0 %v2304
    %v2551 = vpop.f32.mrf.mxu0
    %v2552 = vadd.f32 %v2539, %v2551
    %v2553 = vpop.f32.mrf.mxu0
    %2554 = vdwg.mxu0
    %v2555 = vmax.f32 %v2526, 0.0
    %v2556 = vmax.f32 %v2552, 0.0
    %v2557 = vpack.c.bf16 %v2555, %v2555
    %v2558 = vpack.c.bf16 %v2556, %v2556
    %v2559 = vld [vmem:[%s5] sm:$0xf]
    %v2560 = vld [vmem:[%s5 + $0x4] sm:$0xf]
    %v2561 = vld [vmem:[%s5 + $0x8] sm:$0xf]
    %v2562 = vld [vmem:[%s5 + $0xc] sm:$0xf]
    %v2563 = vld [vmem:[%s5 + $0x10] sm:$0xf]
    %v2564 = vld [vmem:[%s5 + $0x14] sm:$0xf]
    %v2565 = vld [vmem:[%s5 + $0x18] sm:$0xf]
    %v2566 = vld [vmem:[%s5 + $0x1c] sm:$0xf]
    %v2567 = vld [vmem:[%s5 + $0x20] sm:$0xf]
    %v2568 = vld [vmem:[%s5 + $0x24] sm:$0xf]
    %v2569 = vld [vmem:[%s5 + $0x28] sm:$0xf]
    %v2570 = vld [vmem:[%s5 + $0x2c] sm:$0xf]
    %v2571 = vld [vmem:[%s5 + $0x30] sm:$0xf]
    %v2572 = vld [vmem:[%s5 + $0x34] sm:$0xf]
    %v2573 = vld [vmem:[%s5 + $0x38] sm:$0xf]
    %v2574 = vld [vmem:[%s5 + $0x3c] sm:$0xf]
    %v2575 = vld [vmem:[%s5 + $0x40] sm:$0xf]
    %v2576 = vld [vmem:[%s5 + $0x44] sm:$0xf]
    %v2577 = vld [vmem:[%s5 + $0x48] sm:$0xf]
    %v2578 = vld [vmem:[%s5 + $0x4c] sm:$0xf]
    %v2579 = vld [vmem:[%s5 + $0x50] sm:$0xf]
    %v2580 = vld [vmem:[%s5 + $0x54] sm:$0xf]
    %v2581 = vld [vmem:[%s5 + $0x58] sm:$0xf]
    %v2582 = vld [vmem:[%s5 + $0x5c] sm:$0xf]
    %v2583 = vld [vmem:[%s5 + $0x60] sm:$0xf]
    %v2584 = vld [vmem:[%s5 + $0x64] sm:$0xf]
    %v2585 = vld [vmem:[%s5 + $0x68] sm:$0xf]
    %v2586 = vld [vmem:[%s5 + $0x6c] sm:$0xf]
    %v2587 = vld [vmem:[%s5 + $0x70] sm:$0xf]
    %v2588 = vld [vmem:[%s5 + $0x74] sm:$0xf]
    %v2589 = vld [vmem:[%s5 + $0x78] sm:$0xf]
    %v2590 = vld [vmem:[%s5 + $0x7c] sm:$0xf]
    %v2591 = vld [vmem:[%s6] sm:$0x1]
    %v2593 = vperm.slane %v2591, 0
    %v2627 = vunpack.c.l.b16 %v2559
    %v2628 = vunpack.c.l.b16 %v2560
    %v2629 = vunpack.c.l.b16 %v2561
    %v2630 = vunpack.c.l.b16 %v2562
    %v2631 = vunpack.c.l.b16 %v2563
    %v2632 = vunpack.c.l.b16 %v2564
    %v2633 = vunpack.c.l.b16 %v2565
    %v2634 = vunpack.c.l.b16 %v2566
    %v2635 = vunpack.c.l.b16 %v2567
    %v2636 = vunpack.c.l.b16 %v2568
    %v2637 = vunpack.c.l.b16 %v2569
    %v2638 = vunpack.c.l.b16 %v2570
    %v2639 = vunpack.c.l.b16 %v2571
    %v2640 = vunpack.c.l.b16 %v2572
    %v2641 = vunpack.c.l.b16 %v2573
    %v2642 = vunpack.c.l.b16 %v2574
    %v2643 = vunpack.c.l.b16 %v2575
    %v2644 = vunpack.c.l.b16 %v2576
    %v2645 = vunpack.c.l.b16 %v2577
    %v2646 = vunpack.c.l.b16 %v2578
    %v2647 = vunpack.c.l.b16 %v2579
    %v2648 = vunpack.c.l.b16 %v2580
    %v2649 = vunpack.c.l.b16 %v2581
    %v2650 = vunpack.c.l.b16 %v2582
    %v2651 = vunpack.c.l.b16 %v2583
    %v2652 = vunpack.c.l.b16 %v2584
    %v2653 = vunpack.c.l.b16 %v2585
    %v2654 = vunpack.c.l.b16 %v2586
    %v2655 = vunpack.c.l.b16 %v2587
    %v2656 = vunpack.c.l.b16 %v2588
    %v2657 = vunpack.c.l.b16 %v2589
    %v2658 = vunpack.c.l.b16 %v2590
    %v2659 = vpack.c.b16 %v2628, %v2627
    %v2660 = vpack.c.b16 %v2630, %v2629
    %v2661 = vpack.c.b16 %v2632, %v2631
    %v2662 = vpack.c.b16 %v2634, %v2633
    %v2663 = vpack.c.b16 %v2636, %v2635
    %v2664 = vpack.c.b16 %v2638, %v2637
    %v2665 = vpack.c.b16 %v2640, %v2639
    %v2666 = vpack.c.b16 %v2642, %v2641
    %v2667 = vpack.c.b16 %v2644, %v2643
    %v2668 = vpack.c.b16 %v2646, %v2645
    %v2669 = vpack.c.b16 %v2648, %v2647
    %v2670 = vpack.c.b16 %v2650, %v2649
    %v2671 = vpack.c.b16 %v2652, %v2651
    %v2672 = vpack.c.b16 %v2654, %v2653
    %v2673 = vpack.c.b16 %v2656, %v2655
    %v2674 = vpack.c.b16 %v2658, %v2657
    %2691 = vmatpush.bf16.msra.mxu0 %v2666
    %2692 = vmatpush.bf16.msra.mxu0 %v2665
    %2693 = vmatpush.bf16.msra.mxu0 %v2664
    %2694 = vmatpush.bf16.msra.mxu0 %v2663
    %2695 = vmatpush.bf16.msra.mxu0 %v2662
    %2696 = vmatpush.bf16.msra.mxu0 %v2661
    %2697 = vmatpush.bf16.msra.mxu0 %v2660
    %2698 = vmatpush.bf16.msra.mxu0 %v2659
    %2699 = vmatmul.bf16.gmra.mxu0 %v2557
    %v2700 = vpop.f32.mrf.mxu0
    %v2701 = vadd.f32 %v2593, %v2700
    %v2702 = vpop.f32.mrf.mxu0
    %2703 = vdwg.mxu0
    %2704 = vmatpush.bf16.msra.mxu0 %v2674
    %2705 = vmatpush.bf16.msra.mxu0 %v2673
    %2706 = vmatpush.bf16.msra.mxu0 %v2672
    %2707 = vmatpush.bf16.msra.mxu0 %v2671
    %2708 = vmatpush.bf16.msra.mxu0 %v2670
    %2709 = vmatpush.bf16.msra.mxu0 %v2669
    %2710 = vmatpush.bf16.msra.mxu0 %v2668
    %2711 = vmatpush.bf16.msra.mxu0 %v2667
    %2712 = vmatmul.bf16.gmra.mxu0 %v2558
    %v2713 = vpop.f32.mrf.mxu0
    %v2714 = vadd.f32 %v2701, %v2713
    %v2715 = vpop.f32.mrf.mxu0
    %2716 = vdwg.mxu0
    %v2717 = vmax.f32 %v2714, 0.0
    %v2718 = vlaneseq
    %v2719 = vand.u32 %v2718, 127
    %vm2720 = vcmp.lt.s32.totalorder %v2719, 10
    %vm2721 = vcmask 1043456
    %v2722 = vsel %vm2721, %v2717, 0.0
    %v2723 = vrot.slane %v2722, 4
    %v2724 = vadd.f32 %v2722, %v2723
    %v2725 = vrot.slane %v2724, 2
    %v2726 = vadd.f32 %v2724, %v2725
    %v2727 = vrot.slane %v2726, 1
    %v2728 = vadd.f32 %v2726, %v2727
    %v2729 = vrcp.pop 4.0
    %v2730 = vmul.f32 4.0, %v2729
    %v2731 = vsub.f32 1.0, %v2730
    %v2732 = vmul.f32 %v2729, %v2731
    %v2733 = vadd.f32 %v2729, %v2732
    %vm2734 = vweird.f32 %v2729
    %v2735 = vsel %vm2734, %v2729, %v2733
    %v2736 = vmul.f32 %v2728, %v2735
    %v2737 = vsel %vm2720, %v2736, -1e+30
    %2738 = vmax.xlane.f32.xlu0 %v2737
    %v2739 = vpop.xlane.xlu0 %2738
    %v2740 = vsub.f32 %v2737, %v2739
    %v2741 = vmul.f32 %v2740, 1.442695
    %v2742 = vpow.pop %v2741
    %v2743 = vsel %vm2720, %v2742, 0.0
    %2744 = vadd.xlane.f32.xlu0 %v2743
    %v2745 = vpop.xlane.xlu0 %2744
    %v2746 = vrcp.pop %v2745
    %v2747 = vmul.f32 %v2745, %v2746
    %v2748 = vsub.f32 1.0, %v2747
    %v2749 = vmul.f32 %v2746, %v2748
    %v2750 = vadd.f32 %v2746, %v2749
    %vm2751 = vweird.f32 %v2745
    %vm2752 = vweird.f32 %v2746
    %vm2753 = vmor %vm2751, %vm2752
    %v2754 = vsel %vm2753, %v2746, %v2750
    %v2755 = vand.u32 2147483647, %v2745
    %vm2756 = vcmp.eq.f32.partialorder %v2755, 8.507059e+37
    %v2757 = vand.u32 %v2745, 2147483648
    %v2758 = vor.u32 1.1754944e-38, %v2757
    %v2759 = vsel %vm2756, %v2758, %v2754
    %v2760 = vmul.f32 %v2743, %v2759
    %2761 = vst [vmem:[#allocation2] sm:$0x1] %v2760
    %v2763 = vrot.slane %v2717, 4
    %v2765 = vsel %vm2721, %v2763, 0.0
    %v2766 = vrot.slane %v2765, 4
    %v2767 = vadd.f32 %v2765, %v2766
    %v2768 = vrot.slane %v2767, 2
    %v2769 = vadd.f32 %v2767, %v2768
    %v2770 = vrot.slane %v2769, 1
    %v2771 = vadd.f32 %v2769, %v2770
    %v2772 = vmul.f32 %v2771, %v2735
    %v2773 = vsel %vm2720, %v2772, -1e+30
    %2774 = vmax.xlane.f32.xlu0 %v2773
    %v2775 = vpop.xlane.xlu0 %2774
    %v2776 = vsub.f32 %v2773, %v2775
    %v2777 = vmul.f32 %v2776, 1.442695
    %v2778 = vpow.pop %v2777
    %v2779 = vsel %vm2720, %v2778, 0.0
    %2780 = vadd.xlane.f32.xlu0 %v2779
    %v2781 = vpop.xlane.xlu0 %2780
    %v2782 = vrcp.pop %v2781
    %v2783 = vmul.f32 %v2781, %v2782
    %v2784 = vsub.f32 1.0, %v2783
    %v2785 = vmul.f32 %v2782, %v2784
    %v2786 = vadd.f32 %v2782, %v2785
    %vm2787 = vweird.f32 %v2781
    %vm2788 = vweird.f32 %v2782
    %vm2789 = vmor %vm2787, %vm2788
    %v2790 = vsel %vm2789, %v2782, %v2786
    %v2791 = vand.u32 2147483647, %v2781
    %vm2792 = vcmp.eq.f32.partialorder %v2791, 8.507059e+37
    %v2793 = vand.u32 %v2781, 2147483648
    %v2794 = vor.u32 1.1754944e-38, %v2793
    %v2795 = vsel %vm2792, %v2794, %v2790
    %v2796 = vmul.f32 %v2779, %v2795
    %2797 = vst [vmem:[#allocation2 + $0x1] sm:$0x1] %v2796
    // Predicated region
    $region30: #{net_b_forward.9} parent=1 // pred_check
      _
    $region31: #{net_b_forward.9} parent=1 // pred_check_branch
      %2799 = sbr.rel (0) target = $region33
    $region32: #{net_b_forward.9} parent=1 // pred_region
      %2801 = vsyncadd [#allocation3], 0
      %s2803 = sshll.u32 [#allocation2], 4
      %s2804 = int_to_ptr.vmem [resolvable:$true] %s2803
      %s2805 = sshll.u32 %s7, 4
      %s2806 = int_to_ptr.hbm [resolvable:$true] %s2805
      %2808 = dma.vmem_to_hbm [thread:$0]  %s2804, 32, %s2806, [#allocation3]
    $region33: #{net_b_forward.9} parent=1 // pred_fallthru
      _
    // Predicated region
    $region34: #{net_b_forward.9} parent=1 // pred_check
      _
    $region35: #{net_b_forward.9} parent=1 // pred_check_branch
      %2810 = sbr.rel (0) target = $region37
    $region36: #{net_b_forward.9} parent=1 // pred_region
      %2812 = dma.done [#allocation3], 32
    $region37: #{net_b_forward.9} parent=1 // pred_fallthru
      _
    %2813 = vsyncpa [#allocation3], 1

</llo_original>
